<compile_context>
chip_gen: v7x
topology: tpu7x:2x2x1
jax: 0.10.0
libtpu: 0.0.40
codegen_flags: <defaults>
</compile_context>

<pallas_src>
import jax
import jax.numpy as jnp
from jax.experimental import pallas as pl
from jax.experimental.pallas import tpu as pltpu


def _round_up(x, m):
    return (x + m - 1) // m * m


# ----------------------------------------------------------------------------
# Pallas kernel: 3x3 conv (valid, on replicate-padded input) + bias + ReLU (+skip)
# ----------------------------------------------------------------------------
def _make_conv3x3_kernel(has_skip: bool):
    def kernel(*refs):
        if has_skip:
            xp_ref, w_ref, b_ref, skip_ref, o_ref, a0_ref, a1_ref, a2_ref = refs
        else:
            xp_ref, w_ref, b_ref, o_ref, a0_ref, a1_ref, a2_ref = refs
            skip_ref = None

        N, H, W, Cout = o_ref.shape           # Cout here == the Cout tile (tco)
        Wp = xp_ref.shape[2]                  # padded width, multiple of 8
        Cin = xp_ref.shape[3]
        NH = N * H
        acc_refs = (a0_ref, a1_ref, a2_ref)   # one accumulator per dx tap

        for dy in range(3):
            # Contiguous row-band; (N, H, Wp, Cin) -> (N*H*Wp, Cin) is tile-aligned
            # because Wp % 8 == 0, so no patch relayout copies are generated.
            band = xp_ref[:, dy:dy + H, :, :].reshape(NH * Wp, Cin)
            for dx in range(3):
                r = jnp.dot(band, w_ref[dy, dx],
                            preferred_element_type=jnp.float32)
                r = r.reshape(NH, Wp, Cout)
                if dy == 0:
                    acc_refs[dx][...] = r          # first tap: assign (skip zero-init)
                else:
                    acc_refs[dx][...] += r         # in-place VMEM accumulate

        # Combine the three dx taps: out[:, w] = a0[:, w] + a1[:, w+1] + a2[:, w+2].
        out = (a0_ref[:, 0:W, :]
               + a1_ref[:, 1:W + 1, :]
               + a2_ref[:, 2:W + 2, :]
               + b_ref[0, :][None, None, :])
        out = jnp.maximum(out, 0.0)
        if has_skip:
            out = out + skip_ref[...].reshape(NH, W, Cout).astype(jnp.float32)
        o_ref[...] = out.astype(o_ref.dtype).reshape(N, H, W, Cout)

    return kernel


# Single-GEMM kernel used for the Cin=3 (im2col) first layer.
def _gemm_bias_relu_kernel(x_ref, w_ref, b_ref, o_ref):
    acc = jnp.dot(x_ref[...], w_ref[...], preferred_element_type=jnp.float32)
    acc = acc + b_ref[0, :][None, :]
    o_ref[...] = jnp.maximum(acc, 0.0).astype(o_ref.dtype)


def _conv3x3_relu_im2col(x, w, b, out_dtype):
    """enc1 path (tiny Cin): one K=9*Cin GEMM instead of 9 nearly-empty MXU pushes."""
    N, H, W, Cin = x.shape
    Cout = w.shape[-1]
    xp = jnp.pad(x.astype(jnp.bfloat16), ((0, 0), (1, 1), (1, 1), (0, 0)),
                 mode="edge")
    patches = jnp.concatenate(
        [xp[:, dy:dy + H, dx:dx + W, :] for dy in range(3) for dx in range(3)],
        axis=-1).reshape(N * H * W, 9 * Cin)
    w2 = w.astype(jnp.bfloat16).reshape(9 * Cin, Cout)   # (dy,dx,c) order matches
    b2 = b.reshape(1, Cout).astype(jnp.float32)
    out = pl.pallas_call(
        _gemm_bias_relu_kernel,
        out_shape=jax.ShapeDtypeStruct((N * H * W, Cout), out_dtype),
    )(patches, w2, b2)
    return out.reshape(N, H, W, Cout)


def conv3x3_relu(x, w, b, *, skip=None, out_dtype=jnp.bfloat16):
    """Fused replicate-pad 3x3 conv + bias + ReLU (+ optional residual add).

    x: (N, H, W, Cin); w: (3, 3, Cin, Cout); b: (Cout,); skip: (N, H, W, Cout)|None.
    """
    N, H, W, Cin = x.shape
    Cout = w.shape[-1]

    if Cin < 16:
        assert skip is None
        return _conv3x3_relu_im2col(x, w, b, out_dtype)

    # Lane-dense stores: pad a tiny Cout (dec7: 3) up to 128; caller slices back.
    cout_p = Cout if Cout >= 64 else 128
    if cout_p != Cout:
        w = jnp.pad(w, ((0, 0), (0, 0), (0, 0), (0, cout_p - Cout)))
        b = jnp.pad(b, ((0, cout_p - Cout),))

    tco = 128 if cout_p > 128 else cout_p
    n_co = cout_p // tco

    # Replicate padding (H: +1/+1, W: +1/+...); width is additionally padded up to a
    # multiple of 8 so the in-kernel band reshape is tile-aligned.  The extra columns
    # only feed discarded padded output columns.
    hp = H + 2
    wp = _round_up(W + 2, 8)
    xp = jnp.pad(x.astype(jnp.bfloat16),
                 ((0, 0), (1, 1), (1, wp - W - 1), (0, 0)), mode="edge")
    wq = w.astype(jnp.bfloat16)
    b2 = b.reshape(1, cout_p).astype(jnp.float32)

    inputs = [xp, wq, b2]
    in_specs = [
        pl.BlockSpec((N, hp, wp, Cin), lambda co: (0, 0, 0, 0)),
        pl.BlockSpec((3, 3, Cin, tco), lambda co: (0, 0, 0, co)),
        pl.BlockSpec((1, tco), lambda co: (0, co)),
    ]
    if skip is not None:
        inputs.append(skip.astype(jnp.bfloat16))
        in_specs.append(pl.BlockSpec((N, H, W, tco), lambda co: (0, 0, 0, co)))

    # TODO(synk): for large resolutions, add an H-row grid axis (halo'd row tiles)
    # and shrink blocks so double-buffered tiles fit v7x's 64 MiB VMEM.
    out = pl.pallas_call(
        _make_conv3x3_kernel(skip is not None),
        out_shape=jax.ShapeDtypeStruct((N, H, W, cout_p), out_dtype),
        grid_spec=pltpu.PrefetchScalarGridSpec(
            num_scalar_prefetch=0,
            grid=(n_co,),
            in_specs=in_specs,
            out_specs=pl.BlockSpec((N, H, W, tco), lambda co: (0, 0, 0, co)),
            scratch_shapes=[pltpu.VMEM((N * H, wp, tco), jnp.float32)
                            for _ in range(3)],
        ),
        compiler_params=pltpu.CompilerParams(
            dimension_semantics=("parallel",)),
    )(*inputs)

    if cout_p != Cout:
        out = out[..., :Cout]
    return out


# ----------------------------------------------------------------------------
# XLA glue: maxpool 2x2, bicubic x2 upsample (PyTorch a=-0.75, align_corners=False)
# TODO(synk): fold maxpool/upsample into the neighbouring conv kernels if profiles
# show these HBM round trips mattering at larger resolutions.
# ----------------------------------------------------------------------------
def maxpool2x2(x):
    N, H, W, C = x.shape
    return x.reshape(N, H // 2, 2, W // 2, 2, C).max(axis=(2, 4))


_W_EVEN = (-0.03515625, 0.26171875, 0.87890625, -0.10546875)  # frac = 0.75
_W_ODD = (-0.10546875, 0.87890625, 0.26171875, -0.03515625)   # frac = 0.25


def _upsample2x_axis(x, axis):
    n = x.shape[axis]
    idx = jnp.arange(n)

    def taps(offsets):
        return [jnp.take(x, jnp.clip(idx + o, 0, n - 1), axis=axis)
                for o in offsets]

    even = sum(wgt * t for wgt, t in zip(_W_EVEN, taps([-2, -1, 0, 1])))
    odd = sum(wgt * t for wgt, t in zip(_W_ODD, taps([-1, 0, 1, 2])))
    out = jnp.stack([even, odd], axis=axis + 1)
    new_shape = list(x.shape)
    new_shape[axis] = 2 * n
    return out.reshape(new_shape)


def upsample_bicubic_2x(x):
    x = _upsample2x_axis(x, axis=1)
    x = _upsample2x_axis(x, axis=2)
    return x


# ----------------------------------------------------------------------------
# Parameters (deterministic synthetic init)
# ----------------------------------------------------------------------------
_LAYER_CHANNELS = {
    "enc1": (3, 64), "enc2": (64, 64),
    "enc3": (64, 128), "enc4": (128, 128),
    "enc5": (128, 128), "enc6": (128, 128),
    "enc7": (128, 256),
    "dec1": (256, 128), "dec2": (128, 128),
    "dec3": (128, 128), "dec4": (128, 128),
    "dec5": (128, 64), "dec6": (64, 64),
    "dec7": (64, 3),
}


def init_params(key):
    params = {}
    for name, (cin, cout) in _LAYER_CHANNELS.items():
        key, kw, kb = jax.random.split(key, 3)
        scale = 1.0 / jnp.sqrt(9.0 * cin)
        params[name] = {
            "w": jax.random.normal(kw, (3, 3, cin, cout), jnp.float32) * scale,
            "b": jax.random.normal(kb, (cout,), jnp.float32) * 0.01,
        }
    return params


# ----------------------------------------------------------------------------
# Forward pass (mirrors Autoencoder_Deep_3.forward)
# ----------------------------------------------------------------------------
@jax.jit
def autoencoder_deep_3(params, x_nchw):
    x = jnp.transpose(x_nchw, (0, 2, 3, 1)).astype(jnp.float32)  # NCHW -> NHWC

    def c(name, t, skip=None, out_dtype=jnp.bfloat16):
        return conv3x3_relu(t, params[name]["w"], params[name]["b"],
                            skip=skip, out_dtype=out_dtype)

    # Encoder
    x = c("enc1", x)
    e2 = c("enc2", x)
    x = maxpool2x2(e2)
    x = c("enc3", x)
    e4 = c("enc4", x)
    x = maxpool2x2(e4)
    x = c("enc5", x)
    e6 = c("enc6", x)
    x = maxpool2x2(e6)
    encoder = c("enc7", x)

    # Decoder (skip adds fused into the producing conv's epilogue)
    x = upsample_bicubic_2x(encoder)
    x = c("dec1", x)
    add = c("dec2", x, skip=e6)          # relu(conv) + e6
    x = upsample_bicubic_2x(add)
    x = c("dec3", x)
    add = c("dec4", x, skip=e4)          # relu(conv) + e4
    x = upsample_bicubic_2x(add)
    x = c("dec5", x)
    add = c("dec6", x, skip=e2)          # relu(conv) + e2
    decoder = c("dec7", add, out_dtype=jnp.float32)

    return jnp.transpose(decoder, (0, 3, 1, 2))  # back to NCHW


# ----------------------------------------------------------------------------
if __name__ == "__main__":
    key = jax.random.PRNGKey(0)
    kp, kx, kcw, kcx, kcb, kcs, k3w = jax.random.split(key, 7)

    # ---- numerical self-check of the fused conv kernels vs lax.conv -------
    def conv_ref(x, w, b):
        xp = jnp.pad(x, ((0, 0), (1, 1), (1, 1), (0, 0)), mode="edge")
        y = jax.lax.conv_general_dilated(
            xp, w, window_strides=(1, 1), padding="VALID",
            dimension_numbers=("NHWC", "HWIO", "NHWC"))
        return jnp.maximum(y + b[None, None, None, :], 0.0)

    xt = jax.random.normal(kcx, (2, 16, 16, 64), jnp.float32)
    wt = jax.random.normal(kcw, (3, 3, 64, 128), jnp.float32) / jnp.sqrt(9.0 * 64)
    bt = jax.random.normal(kcb, (128,), jnp.float32) * 0.01
    st = jax.random.normal(kcs, (2, 16, 16, 128), jnp.float32).astype(jnp.bfloat16)

    got = conv3x3_relu(xt, wt, bt, out_dtype=jnp.float32)
    err = float(jnp.max(jnp.abs(got - conv_ref(xt, wt, bt))))
    assert err < 0.08, f"conv3x3 kernel mismatch vs lax.conv: {err}"

    got_s = conv3x3_relu(xt, wt, bt, skip=st, out_dtype=jnp.float32)
    want_s = conv_ref(xt, wt, bt) + st.astype(jnp.float32)
    err_s = float(jnp.max(jnp.abs(got_s - want_s)))
    assert err_s < 0.08, f"fused skip-add mismatch: {err_s}"

    xt3 = jax.random.normal(kcx, (2, 16, 16, 3), jnp.float32)
    wt3 = jax.random.normal(k3w, (3, 3, 3, 64), jnp.float32) / jnp.sqrt(27.0)
    got3 = conv3x3_relu(xt3, wt3, bt[:64], out_dtype=jnp.float32)
    err3 = float(jnp.max(jnp.abs(got3 - conv_ref(xt3, wt3, bt[:64]))))
    assert err3 < 0.08, f"im2col conv kernel mismatch: {err3}"

    # ---- full forward pass (small NCHW input; spatial divisible by 8) -----
    params = init_params(kp)
    x = jax.random.normal(kx, (2, 3, 32, 32), jnp.float32)
    out = jax.block_until_ready(autoencoder_deep_3(params, x))

    assert out.shape == (2, 3, 32, 32), out.shape
    assert out.dtype == jnp.float32
    assert bool(jnp.all(jnp.isfinite(out)))
    assert bool(jnp.all(out >= 0.0))  # decoder_relu_7
    print("KERNEL_OK")
</pallas_src>

<mosaic_0001>
module attributes {stable_mosaic.version = 11 : i64} {
  func.func @kernel(%arg0: i32, %arg1: memref<2x18x24x64xbf16, #tpu.memory_space<vmem>>, %arg2: memref<3x3x64x128xbf16, #tpu.memory_space<vmem>>, %arg3: memref<1x128xf32, #tpu.memory_space<vmem>>, %arg4: memref<2x16x16x128xf32, #tpu.memory_space<vmem>>, %arg5: memref<32x24x128xf32, #tpu.memory_space<vmem>>, %arg6: memref<32x24x128xf32, #tpu.memory_space<vmem>>, %arg7: memref<32x24x128xf32, #tpu.memory_space<vmem>>) attributes {dimension_semantics = [#tpu.dimension_semantics<parallel>], iteration_bounds = array<i64: 1>, scalar_prefetch = 0 : i64, scratch_operands = 3 : i64, tpu.core_type = #tpu.core_type<tc>, window_params = [{pipeline_mode = #tpu.pipeline_mode<synchronous>, transform_indices = @transform_0, window_bounds = array<i64: 2, 18, 24, 64>}, {transform_indices = @transform_1, window_bounds = array<i64: 3, 3, 64, 128>}, {transform_indices = @transform_2, window_bounds = array<i64: 1, 128>}, {transform_indices = @transform_3, window_bounds = array<i64: 2, 16, 16, 128>}]} {
    %c0 = arith.constant 0 : index
    %c0_0 = arith.constant 0 : index
    %c0_1 = arith.constant 0 : index
    %c0_2 = arith.constant 0 : index
    %0 = vector.load %arg1[%c0, %c0_0, %c0_1, %c0_2] : memref<2x18x24x64xbf16, #tpu.memory_space<vmem>>, vector<2x16x24x64xbf16>
    %1 = vector.shape_cast %0 : vector<2x16x24x64xbf16> to vector<768x64xbf16>
    %c0_3 = arith.constant 0 : index
    %c0_4 = arith.constant 0 : index
    %c0_5 = arith.constant 0 : index
    %c0_6 = arith.constant 0 : index
    %2 = vector.load %arg2[%c0_3, %c0_4, %c0_5, %c0_6] : memref<3x3x64x128xbf16, #tpu.memory_space<vmem>>, vector<1x1x64x128xbf16>
    %3 = vector.shape_cast %2 : vector<1x1x64x128xbf16> to vector<64x128xbf16>
    %cst = arith.constant dense<0.000000e+00> : vector<768x128xf32>
    %4 = tpu.matmul %1, %3, %cst {dimension_numbers = #tpu.dot_dimension_numbers<[1], [0], [0], [1], [0, 0, 1, 1], [], []>} : vector<768x64xbf16>, vector<64x128xbf16>, vector<768x128xf32> -> vector<768x128xf32>
    %5 = vector.shape_cast %4 : vector<768x128xf32> to vector<32x24x128xf32>
    %c0_7 = arith.constant 0 : index
    %c0_8 = arith.constant 0 : index
    %c0_9 = arith.constant 0 : index
    %6 = vector.load %arg5[%c0_7, %c0_8, %c0_9] : memref<32x24x128xf32, #tpu.memory_space<vmem>>, vector<32x24x128xf32>
    tpu.vector_store %arg5[%c0_7, %c0_8, %c0_9], %5 {strides = array<i32>} : memref<32x24x128xf32, #tpu.memory_space<vmem>>, vector<32x24x128xf32>,
    %c0_10 = arith.constant 0 : index
    %c1 = arith.constant 1 : index
    %c0_11 = arith.constant 0 : index
    %c0_12 = arith.constant 0 : index
    %7 = vector.load %arg2[%c0_10, %c1, %c0_11, %c0_12] : memref<3x3x64x128xbf16, #tpu.memory_space<vmem>>, vector<1x1x64x128xbf16>
    %8 = vector.shape_cast %7 : vector<1x1x64x128xbf16> to vector<64x128xbf16>
    %cst_13 = arith.constant dense<0.000000e+00> : vector<768x128xf32>
    %9 = tpu.matmul %1, %8, %cst_13 {dimension_numbers = #tpu.dot_dimension_numbers<[1], [0], [0], [1], [0, 0, 1, 1], [], []>} : vector<768x64xbf16>, vector<64x128xbf16>, vector<768x128xf32> -> vector<768x128xf32>
    %10 = vector.shape_cast %9 : vector<768x128xf32> to vector<32x24x128xf32>
    %c0_14 = arith.constant 0 : index
    %c0_15 = arith.constant 0 : index
    %c0_16 = arith.constant 0 : index
    %11 = vector.load %arg6[%c0_14, %c0_15, %c0_16] : memref<32x24x128xf32, #tpu.memory_space<vmem>>, vector<32x24x128xf32>
    tpu.vector_store %arg6[%c0_14, %c0_15, %c0_16], %10 {strides = array<i32>} : memref<32x24x128xf32, #tpu.memory_space<vmem>>, vector<32x24x128xf32>,
    %c0_17 = arith.constant 0 : index
    %c2 = arith.constant 2 : index
    %c0_18 = arith.constant 0 : index
    %c0_19 = arith.constant 0 : index
    %12 = vector.load %arg2[%c0_17, %c2, %c0_18, %c0_19] : memref<3x3x64x128xbf16, #tpu.memory_space<vmem>>, vector<1x1x64x128xbf16>
    %13 = vector.shape_cast %12 : vector<1x1x64x128xbf16> to vector<64x128xbf16>
    %cst_20 = arith.constant dense<0.000000e+00> : vector<768x128xf32>
    %14 = tpu.matmul %1, %13, %cst_20 {dimension_numbers = #tpu.dot_dimension_numbers<[1], [0], [0], [1], [0, 0, 1, 1], [], []>} : vector<768x64xbf16>, vector<64x128xbf16>, vector<768x128xf32> -> vector<768x128xf32>
    %15 = vector.shape_cast %14 : vector<768x128xf32> to vector<32x24x128xf32>
    %c0_21 = arith.constant 0 : index
    %c0_22 = arith.constant 0 : index
    %c0_23 = arith.constant 0 : index
    %16 = vector.load %arg7[%c0_21, %c0_22, %c0_23] : memref<32x24x128xf32, #tpu.memory_space<vmem>>, vector<32x24x128xf32>
    tpu.vector_store %arg7[%c0_21, %c0_22, %c0_23], %15 {strides = array<i32>} : memref<32x24x128xf32, #tpu.memory_space<vmem>>, vector<32x24x128xf32>,
    %c0_24 = arith.constant 0 : index
    %c1_25 = arith.constant 1 : index
    %c0_26 = arith.constant 0 : index
    %c0_27 = arith.constant 0 : index
    %17 = vector.load %arg1[%c0_24, %c1_25, %c0_26, %c0_27] : memref<2x18x24x64xbf16, #tpu.memory_space<vmem>>, vector<2x16x24x64xbf16>
    %18 = vector.shape_cast %17 : vector<2x16x24x64xbf16> to vector<768x64xbf16>
    %c1_28 = arith.constant 1 : index
    %c0_29 = arith.constant 0 : index
    %c0_30 = arith.constant 0 : index
    %c0_31 = arith.constant 0 : index
    %19 = vector.load %arg2[%c1_28, %c0_29, %c0_30, %c0_31] : memref<3x3x64x128xbf16, #tpu.memory_space<vmem>>, vector<1x1x64x128xbf16>
    %20 = vector.shape_cast %19 : vector<1x1x64x128xbf16> to vector<64x128xbf16>
    %cst_32 = arith.constant dense<0.000000e+00> : vector<768x128xf32>
    %21 = tpu.matmul %18, %20, %cst_32 {dimension_numbers = #tpu.dot_dimension_numbers<[1], [0], [0], [1], [0, 0, 1, 1], [], []>} : vector<768x64xbf16>, vector<64x128xbf16>, vector<768x128xf32> -> vector<768x128xf32>
    %22 = vector.shape_cast %21 : vector<768x128xf32> to vector<32x24x128xf32>
    %c0_33 = arith.constant 0 : index
    %c0_34 = arith.constant 0 : index
    %c0_35 = arith.constant 0 : index
    %23 = vector.load %arg5[%c0_33, %c0_34, %c0_35] : memref<32x24x128xf32, #tpu.memory_space<vmem>>, vector<32x24x128xf32>
    %24 = arith.addf %23, %22 : vector<32x24x128xf32>
    %c0_36 = arith.constant 0 : index
    %c0_37 = arith.constant 0 : index
    %c0_38 = arith.constant 0 : index
    %25 = vector.load %arg5[%c0_36, %c0_37, %c0_38] : memref<32x24x128xf32, #tpu.memory_space<vmem>>, vector<32x24x128xf32>
    tpu.vector_store %arg5[%c0_36, %c0_37, %c0_38], %24 {strides = array<i32>} : memref<32x24x128xf32, #tpu.memory_space<vmem>>, vector<32x24x128xf32>,
    %c1_39 = arith.constant 1 : index
    %c1_40 = arith.constant 1 : index
    %c0_41 = arith.constant 0 : index
    %c0_42 = arith.constant 0 : index
    %26 = vector.load %arg2[%c1_39, %c1_40, %c0_41, %c0_42] : memref<3x3x64x128xbf16, #tpu.memory_space<vmem>>, vector<1x1x64x128xbf16>
    %27 = vector.shape_cast %26 : vector<1x1x64x128xbf16> to vector<64x128xbf16>
    %cst_43 = arith.constant dense<0.000000e+00> : vector<768x128xf32>
    %28 = tpu.matmul %18, %27, %cst_43 {dimension_numbers = #tpu.dot_dimension_numbers<[1], [0], [0], [1], [0, 0, 1, 1], [], []>} : vector<768x64xbf16>, vector<64x128xbf16>, vector<768x128xf32> -> vector<768x128xf32>
    %29 = vector.shape_cast %28 : vector<768x128xf32> to vector<32x24x128xf32>
    %c0_44 = arith.constant 0 : index
    %c0_45 = arith.constant 0 : index
    %c0_46 = arith.constant 0 : index
    %30 = vector.load %arg6[%c0_44, %c0_45, %c0_46] : memref<32x24x128xf32, #tpu.memory_space<vmem>>, vector<32x24x128xf32>
    %31 = arith.addf %30, %29 : vector<32x24x128xf32>
    %c0_47 = arith.constant 0 : index
    %c0_48 = arith.constant 0 : index
    %c0_49 = arith.constant 0 : index
    %32 = vector.load %arg6[%c0_47, %c0_48, %c0_49] : memref<32x24x128xf32, #tpu.memory_space<vmem>>, vector<32x24x128xf32>
    tpu.vector_store %arg6[%c0_47, %c0_48, %c0_49], %31 {strides = array<i32>} : memref<32x24x128xf32, #tpu.memory_space<vmem>>, vector<32x24x128xf32>,
    %c1_50 = arith.constant 1 : index
    %c2_51 = arith.constant 2 : index
    %c0_52 = arith.constant 0 : index
    %c0_53 = arith.constant 0 : index
    %33 = vector.load %arg2[%c1_50, %c2_51, %c0_52, %c0_53] : memref<3x3x64x128xbf16, #tpu.memory_space<vmem>>, vector<1x1x64x128xbf16>
    %34 = vector.shape_cast %33 : vector<1x1x64x128xbf16> to vector<64x128xbf16>
    %cst_54 = arith.constant dense<0.000000e+00> : vector<768x128xf32>
    %35 = tpu.matmul %18, %34, %cst_54 {dimension_numbers = #tpu.dot_dimension_numbers<[1], [0], [0], [1], [0, 0, 1, 1], [], []>} : vector<768x64xbf16>, vector<64x128xbf16>, vector<768x128xf32> -> vector<768x128xf32>
    %36 = vector.shape_cast %35 : vector<768x128xf32> to vector<32x24x128xf32>
    %c0_55 = arith.constant 0 : index
    %c0_56 = arith.constant 0 : index
    %c0_57 = arith.constant 0 : index
    %37 = vector.load %arg7[%c0_55, %c0_56, %c0_57] : memref<32x24x128xf32, #tpu.memory_space<vmem>>, vector<32x24x128xf32>
    %38 = arith.addf %37, %36 : vector<32x24x128xf32>
    %c0_58 = arith.constant 0 : index
    %c0_59 = arith.constant 0 : index
    %c0_60 = arith.constant 0 : index
    %39 = vector.load %arg7[%c0_58, %c0_59, %c0_60] : memref<32x24x128xf32, #tpu.memory_space<vmem>>, vector<32x24x128xf32>
    tpu.vector_store %arg7[%c0_58, %c0_59, %c0_60], %38 {strides = array<i32>} : memref<32x24x128xf32, #tpu.memory_space<vmem>>, vector<32x24x128xf32>,
    %c0_61 = arith.constant 0 : index
    %c2_62 = arith.constant 2 : index
    %c0_63 = arith.constant 0 : index
    %c0_64 = arith.constant 0 : index
    %40 = vector.load %arg1[%c0_61, %c2_62, %c0_63, %c0_64] : memref<2x18x24x64xbf16, #tpu.memory_space<vmem>>, vector<2x16x24x64xbf16>
    %41 = vector.shape_cast %40 : vector<2x16x24x64xbf16> to vector<768x64xbf16>
    %c2_65 = arith.constant 2 : index
    %c0_66 = arith.constant 0 : index
    %c0_67 = arith.constant 0 : index
    %c0_68 = arith.constant 0 : index
    %42 = vector.load %arg2[%c2_65, %c0_66, %c0_67, %c0_68] : memref<3x3x64x128xbf16, #tpu.memory_space<vmem>>, vector<1x1x64x128xbf16>
    %43 = vector.shape_cast %42 : vector<1x1x64x128xbf16> to vector<64x128xbf16>
    %cst_69 = arith.constant dense<0.000000e+00> : vector<768x128xf32>
    %44 = tpu.matmul %41, %43, %cst_69 {dimension_numbers = #tpu.dot_dimension_numbers<[1], [0], [0], [1], [0, 0, 1, 1], [], []>} : vector<768x64xbf16>, vector<64x128xbf16>, vector<768x128xf32> -> vector<768x128xf32>
    %45 = vector.shape_cast %44 : vector<768x128xf32> to vector<32x24x128xf32>
    %c0_70 = arith.constant 0 : index
    %c0_71 = arith.constant 0 : index
    %c0_72 = arith.constant 0 : index
    %46 = vector.load %arg5[%c0_70, %c0_71, %c0_72] : memref<32x24x128xf32, #tpu.memory_space<vmem>>, vector<32x24x128xf32>
    %47 = arith.addf %46, %45 : vector<32x24x128xf32>
    %c0_73 = arith.constant 0 : index
    %c0_74 = arith.constant 0 : index
    %c0_75 = arith.constant 0 : index
    %48 = vector.load %arg5[%c0_73, %c0_74, %c0_75] : memref<32x24x128xf32, #tpu.memory_space<vmem>>, vector<32x24x128xf32>
    tpu.vector_store %arg5[%c0_73, %c0_74, %c0_75], %47 {strides = array<i32>} : memref<32x24x128xf32, #tpu.memory_space<vmem>>, vector<32x24x128xf32>,
    %c2_76 = arith.constant 2 : index
    %c1_77 = arith.constant 1 : index
    %c0_78 = arith.constant 0 : index
    %c0_79 = arith.constant 0 : index
    %49 = vector.load %arg2[%c2_76, %c1_77, %c0_78, %c0_79] : memref<3x3x64x128xbf16, #tpu.memory_space<vmem>>, vector<1x1x64x128xbf16>
    %50 = vector.shape_cast %49 : vector<1x1x64x128xbf16> to vector<64x128xbf16>
    %cst_80 = arith.constant dense<0.000000e+00> : vector<768x128xf32>
    %51 = tpu.matmul %41, %50, %cst_80 {dimension_numbers = #tpu.dot_dimension_numbers<[1], [0], [0], [1], [0, 0, 1, 1], [], []>} : vector<768x64xbf16>, vector<64x128xbf16>, vector<768x128xf32> -> vector<768x128xf32>
    %52 = vector.shape_cast %51 : vector<768x128xf32> to vector<32x24x128xf32>
    %c0_81 = arith.constant 0 : index
    %c0_82 = arith.constant 0 : index
    %c0_83 = arith.constant 0 : index
    %53 = vector.load %arg6[%c0_81, %c0_82, %c0_83] : memref<32x24x128xf32, #tpu.memory_space<vmem>>, vector<32x24x128xf32>
    %54 = arith.addf %53, %52 : vector<32x24x128xf32>
    %c0_84 = arith.constant 0 : index
    %c0_85 = arith.constant 0 : index
    %c0_86 = arith.constant 0 : index
    %55 = vector.load %arg6[%c0_84, %c0_85, %c0_86] : memref<32x24x128xf32, #tpu.memory_space<vmem>>, vector<32x24x128xf32>
    tpu.vector_store %arg6[%c0_84, %c0_85, %c0_86], %54 {strides = array<i32>} : memref<32x24x128xf32, #tpu.memory_space<vmem>>, vector<32x24x128xf32>,
    %c2_87 = arith.constant 2 : index
    %c2_88 = arith.constant 2 : index
    %c0_89 = arith.constant 0 : index
    %c0_90 = arith.constant 0 : index
    %56 = vector.load %arg2[%c2_87, %c2_88, %c0_89, %c0_90] : memref<3x3x64x128xbf16, #tpu.memory_space<vmem>>, vector<1x1x64x128xbf16>
    %57 = vector.shape_cast %56 : vector<1x1x64x128xbf16> to vector<64x128xbf16>
    %cst_91 = arith.constant dense<0.000000e+00> : vector<768x128xf32>
    %58 = tpu.matmul %41, %57, %cst_91 {dimension_numbers = #tpu.dot_dimension_numbers<[1], [0], [0], [1], [0, 0, 1, 1], [], []>} : vector<768x64xbf16>, vector<64x128xbf16>, vector<768x128xf32> -> vector<768x128xf32>
    %59 = vector.shape_cast %58 : vector<768x128xf32> to vector<32x24x128xf32>
    %c0_92 = arith.constant 0 : index
    %c0_93 = arith.constant 0 : index
    %c0_94 = arith.constant 0 : index
    %60 = vector.load %arg7[%c0_92, %c0_93, %c0_94] : memref<32x24x128xf32, #tpu.memory_space<vmem>>, vector<32x24x128xf32>
    %61 = arith.addf %60, %59 : vector<32x24x128xf32>
    %c0_95 = arith.constant 0 : index
    %c0_96 = arith.constant 0 : index
    %c0_97 = arith.constant 0 : index
    %62 = vector.load %arg7[%c0_95, %c0_96, %c0_97] : memref<32x24x128xf32, #tpu.memory_space<vmem>>, vector<32x24x128xf32>
    tpu.vector_store %arg7[%c0_95, %c0_96, %c0_97], %61 {strides = array<i32>} : memref<32x24x128xf32, #tpu.memory_space<vmem>>, vector<32x24x128xf32>,
    %c0_98 = arith.constant 0 : index
    %c0_99 = arith.constant 0 : index
    %c0_100 = arith.constant 0 : index
    %63 = vector.load %arg5[%c0_98, %c0_99, %c0_100] : memref<32x24x128xf32, #tpu.memory_space<vmem>>, vector<32x16x128xf32>
    %c0_101 = arith.constant 0 : index
    %c1_102 = arith.constant 1 : index
    %c0_103 = arith.constant 0 : index
    %64 = vector.load %arg6[%c0_101, %c1_102, %c0_103] : memref<32x24x128xf32, #tpu.memory_space<vmem>>, vector<32x16x128xf32>
    %65 = arith.addf %63, %64 : vector<32x16x128xf32>
    %c0_104 = arith.constant 0 : index
    %c2_105 = arith.constant 2 : index
    %c0_106 = arith.constant 0 : index
    %66 = vector.load %arg7[%c0_104, %c2_105, %c0_106] : memref<32x24x128xf32, #tpu.memory_space<vmem>>, vector<32x16x128xf32>
    %67 = arith.addf %65, %66 : vector<32x16x128xf32>
    %c0_107 = arith.constant 0 : index
    %c0_108 = arith.constant 0 : index
    %68 = vector.load %arg3[%c0_107, %c0_108] : memref<1x128xf32, #tpu.memory_space<vmem>>, vector<1x128xf32>
    %69 = vector.shape_cast %68 : vector<1x128xf32> to vector<128xf32>
    %70 = vector.shape_cast %69 : vector<128xf32> to vector<1x1x128xf32>
    %71 = vector.broadcast %70 : vector<1x1x128xf32> to vector<32x16x128xf32>
    %72 = arith.addf %67, %71 : vector<32x16x128xf32>
    %cst_109 = arith.constant 0.000000e+00 : f32
    %73 = vector.broadcast %cst_109 : f32 to vector<32x16x128xf32>
    %74 = arith.maximumf %72, %73 : vector<32x16x128xf32>
    %75 = vector.shape_cast %74 : vector<32x16x128xf32> to vector<2x16x16x128xf32>
    %c0_110 = arith.constant 0 : index
    %c0_111 = arith.constant 0 : index
    %c0_112 = arith.constant 0 : index
    %c0_113 = arith.constant 0 : index
    %76 = vector.load %arg4[%c0_110, %c0_111, %c0_112, %c0_113] : memref<2x16x16x128xf32, #tpu.memory_space<vmem>>, vector<2x16x16x128xf32>
    tpu.vector_store %arg4[%c0_110, %c0_111, %c0_112, %c0_113], %75 {strides = array<i32>} : memref<2x16x16x128xf32, #tpu.memory_space<vmem>>, vector<2x16x16x128xf32>,
    return
  }
  func.func @transform_0(%arg0: i32) -> (i32, i32, i32, i32) {
    %c0_i32 = arith.constant 0 : i32
    %c0_i32_0 = arith.constant 0 : i32
    %c0_i32_1 = arith.constant 0 : i32
    %c0_i32_2 = arith.constant 0 : i32
    %c0_i32_3 = arith.constant 0 : i32
    return %c0_i32, %c0_i32_0, %c0_i32_1, %c0_i32_2 : i32, i32, i32, i32
  }
  func.func @transform_1(%arg0: i32) -> (i32, i32, i32, i32) {
    %c0_i32 = arith.constant 0 : i32
    %c0_i32_0 = arith.constant 0 : i32
    %c0_i32_1 = arith.constant 0 : i32
    %c0_i32_2 = arith.constant 0 : i32
    return %c0_i32, %c0_i32_0, %c0_i32_1, %arg0 : i32, i32, i32, i32
  }
  func.func @transform_2(%arg0: i32) -> (i32, i32) {
    %c0_i32 = arith.constant 0 : i32
    %c0_i32_0 = arith.constant 0 : i32
    return %c0_i32, %arg0 : i32, i32
  }
  func.func @transform_3(%arg0: i32) -> (i32, i32, i32, i32) {
    %c0_i32 = arith.constant 0 : i32
    %c0_i32_0 = arith.constant 0 : i32
    %c0_i32_1 = arith.constant 0 : i32
    %c0_i32_2 = arith.constant 0 : i32
    return %c0_i32, %c0_i32_0, %c0_i32_1, %arg0 : i32, i32, i32, i32
  }
}

</mosaic_0001>

<llo_original>
// kernel: tpu_custom_call.1
$region0: #{tpu_custom_call.1}
  #allocation0 [shape = 'u32[]', space=smem, size = 0x4, offset = 0x4, fixed_abs, tag = 'smem constant byte address 0x4 - core index']
  #allocation1 [shape = 'u32[144,128]{1,0:T(1,128)}', space=vmem, size = 0x12000, scoped, tag = 'internal scratch']
  #allocation2 [shape = 'f32[32,24,128]{2,1,0:T(8,128)}', space=vmem, size = 0x60000, scoped, tag = 'scratch operand']
  #allocation3 [shape = 'f32[32,24,128]{2,1,0:T(8,128)}', space=vmem, size = 0x60000, scoped, tag = 'scratch operand']
  #allocation4 [shape = 'f32[32,24,128]{2,1,0:T(8,128)}', space=vmem, size = 0x60000, scoped, tag = 'scratch operand']
  %s0 = inlined_call_operand.hbm [shape: bf16[2,18,24,64], index: 0, kind: input, shape index: {}]
  %s1 = inlined_call_operand.hbm [shape: bf16[3,3,64,128], index: 1, kind: input, shape index: {}]
  %s2 = inlined_call_operand.vmem [shape: f32[1,128], index: 2, kind: input, shape index: {}]
  %s3 = inlined_call_operand.hbm [shape: f32[2,16,16,128], index: 3, kind: output, shape index: {}]
  %s4 = sld [smem:[#allocation0]]
  $region30: #{tpu_custom_call.1} parent=0
    _
  %s6 = ssub.s32 1, %s4
  %s7 = scalar_select 0, %s6, %s4
  $region1: #{tpu_custom_call.1} parent=0
    #allocation5 [shape = 'u8[221184]{0}', space=vmem, size = 0x36000, scoped, tag = 'input window, operand 0, single buffered']
    #allocation6 [shape = 's32[1]{0}', space=sflag, size = 0x4, scoped, tag = 'scoped memory for tpu_custom_call.1']
    #allocation7 [shape = 's32[1]{0}', space=sflag, size = 0x4, scoped, tag = 'scoped memory for tpu_custom_call.1']
    #allocation8 [shape = 'u8[147456]{0}', space=vmem, size = 0x24000, scoped, tag = 'input window, operand 1, single buffered']
    #allocation9 [shape = 's32[1]{0}', space=sflag, size = 0x4, scoped, tag = 'scoped memory for tpu_custom_call.1']
    #allocation10 [shape = 'u8[262144]{0}', space=vmem, size = 0x40000, scoped, tag = 'output window, operand 0, single buffered']
    %8 = vsyncpa [#allocation6], 0
    %9 = vsyncpa [#allocation9], 0
    %10 = vsyncpa [#allocation7], 0
    // Predicated region
    $region2: #{tpu_custom_call.1} parent=1 // pred_check
      _
    $region3: #{tpu_custom_call.1} parent=1 // pred_check_branch
      %12 = sbr.rel (0) target = $region5
    $region4: #{tpu_custom_call.1} parent=1 // pred_region
      %s14 = ssub.s32 6912, 6912
      %15 = vsyncadd [#allocation6], %s14
      %s16 = sshll.u32 [#allocation5], 4
      %s17 = int_to_ptr.vmem [resolvable:$true] %s16
      %22 = dma.hbm_to_vmem [thread:$0]  %s0, 6912, %s17, [#allocation6], 64, 64, 4
    $region5: #{tpu_custom_call.1} parent=1 // pred_fallthru
      _
    // Predicated region
    $region6: #{tpu_custom_call.1} parent=1 // pred_check
      _
    $region7: #{tpu_custom_call.1} parent=1 // pred_check_branch
      %24 = sbr.rel (0) target = $region9
    $region8: #{tpu_custom_call.1} parent=1 // pred_region
      %s26 = ssub.s32 4608, 4608
      %27 = vsyncadd [#allocation9], %s26
      %s28 = sshll.u32 [#allocation8], 4
      %s29 = int_to_ptr.vmem [resolvable:$true] %s28
      %34 = dma.hbm_to_vmem [thread:$0]  %s1, 4608, %s29, [#allocation9], 64, 64, 4
    $region9: #{tpu_custom_call.1} parent=1 // pred_fallthru
      _
    // Predicated region
    $region10: #{tpu_custom_call.1} parent=1 // pred_check
      _
    $region11: #{tpu_custom_call.1} parent=1 // pred_check_branch
      %36 = sbr.rel (0) target = $region13
    $region12: #{tpu_custom_call.1} parent=1 // pred_region
      _
    $region13: #{tpu_custom_call.1} parent=1 // pred_fallthru
      _
    // Predicated region
    $region14: #{tpu_custom_call.1} parent=1 // pred_check
      _
    $region15: #{tpu_custom_call.1} parent=1 // pred_check_branch
      %38 = sbr.rel (0) target = $region17
    $region16: #{tpu_custom_call.1} parent=1 // pred_region
      %39 = dma.done [#allocation6], 6912
    $region17: #{tpu_custom_call.1} parent=1 // pred_fallthru
      _
    // Predicated region
    $region18: #{tpu_custom_call.1} parent=1 // pred_check
      _
    $region19: #{tpu_custom_call.1} parent=1 // pred_check_branch
      %41 = sbr.rel (0) target = $region21
    $region20: #{tpu_custom_call.1} parent=1 // pred_region
      %42 = dma.done [#allocation9], 4608
    $region21: #{tpu_custom_call.1} parent=1 // pred_fallthru
      _
    %v44 = vld [vmem:[#allocation5] sm:$0xf]
    %v45 = vld [vmem:[#allocation5 + $0x4] sm:$0xf]
    %v46 = vld [vmem:[#allocation5 + $0x8] sm:$0xf]
    %v47 = vld [vmem:[#allocation5 + $0xc] sm:$0xf]
    %v48 = vld [vmem:[#allocation5 + $0x10] sm:$0xf]
    %v49 = vld [vmem:[#allocation5 + $0x14] sm:$0xf]
    %v50 = vld [vmem:[#allocation5 + $0x18] sm:$0xf]
    %v51 = vld [vmem:[#allocation5 + $0x1c] sm:$0xf]
    %v52 = vld [vmem:[#allocation5 + $0x20] sm:$0xf]
    %v53 = vld [vmem:[#allocation5 + $0x24] sm:$0xf]
    %v54 = vld [vmem:[#allocation5 + $0x28] sm:$0xf]
    %v55 = vld [vmem:[#allocation5 + $0x2c] sm:$0xf]
    %v56 = vld [vmem:[#allocation5 + $0x30] sm:$0xf]
    %v57 = vld [vmem:[#allocation5 + $0x34] sm:$0xf]
    %v58 = vld [vmem:[#allocation5 + $0x38] sm:$0xf]
    %v59 = vld [vmem:[#allocation5 + $0x3c] sm:$0xf]
    %v60 = vld [vmem:[#allocation5 + $0x40] sm:$0xf]
    %v61 = vld [vmem:[#allocation5 + $0x44] sm:$0xf]
    %v62 = vld [vmem:[#allocation5 + $0x48] sm:$0xf]
    %v63 = vld [vmem:[#allocation5 + $0x4c] sm:$0xf]
    %v64 = vld [vmem:[#allocation5 + $0x50] sm:$0xf]
    %v65 = vld [vmem:[#allocation5 + $0x54] sm:$0xf]
    %v66 = vld [vmem:[#allocation5 + $0x58] sm:$0xf]
    %v67 = vld [vmem:[#allocation5 + $0x5c] sm:$0xf]
    %v68 = vld [vmem:[#allocation5 + $0x60] sm:$0xf]
    %v69 = vld [vmem:[#allocation5 + $0x64] sm:$0xf]
    %v70 = vld [vmem:[#allocation5 + $0x68] sm:$0xf]
    %v71 = vld [vmem:[#allocation5 + $0x6c] sm:$0xf]
    %v72 = vld [vmem:[#allocation5 + $0x70] sm:$0xf]
    %v73 = vld [vmem:[#allocation5 + $0x74] sm:$0xf]
    %v74 = vld [vmem:[#allocation5 + $0x78] sm:$0xf]
    %v75 = vld [vmem:[#allocation5 + $0x7c] sm:$0xf]
    %v76 = vld [vmem:[#allocation5 + $0x80] sm:$0xf]
    %v77 = vld [vmem:[#allocation5 + $0x84] sm:$0xf]
    %v78 = vld [vmem:[#allocation5 + $0x88] sm:$0xf]
    %v79 = vld [vmem:[#allocation5 + $0x8c] sm:$0xf]
    %v80 = vld [vmem:[#allocation5 + $0x90] sm:$0xf]
    %v81 = vld [vmem:[#allocation5 + $0x94] sm:$0xf]
    %v82 = vld [vmem:[#allocation5 + $0x98] sm:$0xf]
    %v83 = vld [vmem:[#allocation5 + $0x9c] sm:$0xf]
    %v84 = vld [vmem:[#allocation5 + $0xa0] sm:$0xf]
    %v85 = vld [vmem:[#allocation5 + $0xa4] sm:$0xf]
    %v86 = vld [vmem:[#allocation5 + $0xa8] sm:$0xf]
    %v87 = vld [vmem:[#allocation5 + $0xac] sm:$0xf]
    %v88 = vld [vmem:[#allocation5 + $0xb0] sm:$0xf]
    %v89 = vld [vmem:[#allocation5 + $0xb4] sm:$0xf]
    %v90 = vld [vmem:[#allocation5 + $0xb8] sm:$0xf]
    %v91 = vld [vmem:[#allocation5 + $0xbc] sm:$0xf]
    %v92 = vld [vmem:[#allocation5 + $0xd8] sm:$0xf]
    %v93 = vld [vmem:[#allocation5 + $0xdc] sm:$0xf]
    %v94 = vld [vmem:[#allocation5 + $0xe0] sm:$0xf]
    %v95 = vld [vmem:[#allocation5 + $0xe4] sm:$0xf]
    %v96 = vld [vmem:[#allocation5 + $0xe8] sm:$0xf]
    %v97 = vld [vmem:[#allocation5 + $0xec] sm:$0xf]
    %v98 = vld [vmem:[#allocation5 + $0xf0] sm:$0xf]
    %v99 = vld [vmem:[#allocation5 + $0xf4] sm:$0xf]
    %v100 = vld [vmem:[#allocation5 + $0xf8] sm:$0xf]
    %v101 = vld [vmem:[#allocation5 + $0xfc] sm:$0xf]
    %v102 = vld [vmem:[#allocation5 + $0x100] sm:$0xf]
    %v103 = vld [vmem:[#allocation5 + $0x104] sm:$0xf]
    %v104 = vld [vmem:[#allocation5 + $0x108] sm:$0xf]
    %v105 = vld [vmem:[#allocation5 + $0x10c] sm:$0xf]
    %v106 = vld [vmem:[#allocation5 + $0x110] sm:$0xf]
    %v107 = vld [vmem:[#allocation5 + $0x114] sm:$0xf]
    %v108 = vld [vmem:[#allocation5 + $0x118] sm:$0xf]
    %v109 = vld [vmem:[#allocation5 + $0x11c] sm:$0xf]
    %v110 = vld [vmem:[#allocation5 + $0x120] sm:$0xf]
    %v111 = vld [vmem:[#allocation5 + $0x124] sm:$0xf]
    %v112 = vld [vmem:[#allocation5 + $0x128] sm:$0xf]
    %v113 = vld [vmem:[#allocation5 + $0x12c] sm:$0xf]
    %v114 = vld [vmem:[#allocation5 + $0x130] sm:$0xf]
    %v115 = vld [vmem:[#allocation5 + $0x134] sm:$0xf]
    %v116 = vld [vmem:[#allocation5 + $0x138] sm:$0xf]
    %v117 = vld [vmem:[#allocation5 + $0x13c] sm:$0xf]
    %v118 = vld [vmem:[#allocation5 + $0x140] sm:$0xf]
    %v119 = vld [vmem:[#allocation5 + $0x144] sm:$0xf]
    %v120 = vld [vmem:[#allocation5 + $0x148] sm:$0xf]
    %v121 = vld [vmem:[#allocation5 + $0x14c] sm:$0xf]
    %v122 = vld [vmem:[#allocation5 + $0x150] sm:$0xf]
    %v123 = vld [vmem:[#allocation5 + $0x154] sm:$0xf]
    %v124 = vld [vmem:[#allocation5 + $0x158] sm:$0xf]
    %v125 = vld [vmem:[#allocation5 + $0x15c] sm:$0xf]
    %v126 = vld [vmem:[#allocation5 + $0x160] sm:$0xf]
    %v127 = vld [vmem:[#allocation5 + $0x164] sm:$0xf]
    %v128 = vld [vmem:[#allocation5 + $0x168] sm:$0xf]
    %v129 = vld [vmem:[#allocation5 + $0x16c] sm:$0xf]
    %v130 = vld [vmem:[#allocation5 + $0x170] sm:$0xf]
    %v131 = vld [vmem:[#allocation5 + $0x174] sm:$0xf]
    %v132 = vld [vmem:[#allocation5 + $0x178] sm:$0xf]
    %v133 = vld [vmem:[#allocation5 + $0x17c] sm:$0xf]
    %v134 = vld [vmem:[#allocation5 + $0x180] sm:$0xf]
    %v135 = vld [vmem:[#allocation5 + $0x184] sm:$0xf]
    %v136 = vld [vmem:[#allocation5 + $0x188] sm:$0xf]
    %v137 = vld [vmem:[#allocation5 + $0x18c] sm:$0xf]
    %v138 = vld [vmem:[#allocation5 + $0x190] sm:$0xf]
    %v139 = vld [vmem:[#allocation5 + $0x194] sm:$0xf]
    %v140 = vld [vmem:[#allocation8] sm:$0xf]
    %v141 = vld [vmem:[#allocation8 + $0x4] sm:$0xf]
    %v142 = vld [vmem:[#allocation8 + $0x8] sm:$0xf]
    %v143 = vld [vmem:[#allocation8 + $0xc] sm:$0xf]
    %v144 = vld [vmem:[#allocation8 + $0x10] sm:$0xf]
    %v145 = vld [vmem:[#allocation8 + $0x14] sm:$0xf]
    %v146 = vld [vmem:[#allocation8 + $0x18] sm:$0xf]
    %v147 = vld [vmem:[#allocation8 + $0x1c] sm:$0xf]
    %v244 = vunpack.c.l.b16 %v44
    %v245 = vunpack.c.l.b16 %v45
    %v246 = vunpack.c.l.b16 %v46
    %v247 = vunpack.c.l.b16 %v47
    %v248 = vunpack.c.l.b16 %v48
    %v249 = vunpack.c.l.b16 %v49
    %v250 = vunpack.c.l.b16 %v50
    %v251 = vunpack.c.l.b16 %v51
    %v252 = vunpack.c.l.b16 %v52
    %v253 = vunpack.c.l.b16 %v53
    %v254 = vunpack.c.l.b16 %v54
    %v255 = vunpack.c.l.b16 %v55
    %v256 = vunpack.c.l.b16 %v56
    %v257 = vunpack.c.l.b16 %v57
    %v258 = vunpack.c.l.b16 %v58
    %v259 = vunpack.c.l.b16 %v59
    %v260 = vunpack.c.l.b16 %v60
    %v261 = vunpack.c.l.b16 %v61
    %v262 = vunpack.c.l.b16 %v62
    %v263 = vunpack.c.l.b16 %v63
    %v264 = vunpack.c.l.b16 %v64
    %v265 = vunpack.c.l.b16 %v65
    %v266 = vunpack.c.l.b16 %v66
    %v267 = vunpack.c.l.b16 %v67
    %v268 = vunpack.c.l.b16 %v68
    %v269 = vunpack.c.l.b16 %v69
    %v270 = vunpack.c.l.b16 %v70
    %v271 = vunpack.c.l.b16 %v71
    %v272 = vunpack.c.l.b16 %v72
    %v273 = vunpack.c.l.b16 %v73
    %v274 = vunpack.c.l.b16 %v74
    %v275 = vunpack.c.l.b16 %v75
    %v276 = vunpack.c.l.b16 %v76
    %v277 = vunpack.c.l.b16 %v77
    %v278 = vunpack.c.l.b16 %v78
    %v279 = vunpack.c.l.b16 %v79
    %v280 = vunpack.c.l.b16 %v80
    %v281 = vunpack.c.l.b16 %v81
    %v282 = vunpack.c.l.b16 %v82
    %v283 = vunpack.c.l.b16 %v83
    %v284 = vunpack.c.l.b16 %v84
    %v285 = vunpack.c.l.b16 %v85
    %v286 = vunpack.c.l.b16 %v86
    %v287 = vunpack.c.l.b16 %v87
    %v288 = vunpack.c.l.b16 %v88
    %v289 = vunpack.c.l.b16 %v89
    %v290 = vunpack.c.l.b16 %v90
    %v291 = vunpack.c.l.b16 %v91
    %v292 = vunpack.c.l.b16 %v92
    %v293 = vunpack.c.l.b16 %v93
    %v294 = vunpack.c.l.b16 %v94
    %v295 = vunpack.c.l.b16 %v95
    %v296 = vunpack.c.l.b16 %v96
    %v297 = vunpack.c.l.b16 %v97
    %v298 = vunpack.c.l.b16 %v98
    %v299 = vunpack.c.l.b16 %v99
    %v300 = vunpack.c.l.b16 %v100
    %v301 = vunpack.c.l.b16 %v101
    %v302 = vunpack.c.l.b16 %v102
    %v303 = vunpack.c.l.b16 %v103
    %v304 = vunpack.c.l.b16 %v104
    %v305 = vunpack.c.l.b16 %v105
    %v306 = vunpack.c.l.b16 %v106
    %v307 = vunpack.c.l.b16 %v107
    %v308 = vunpack.c.l.b16 %v108
    %v309 = vunpack.c.l.b16 %v109
    %v310 = vunpack.c.l.b16 %v110
    %v311 = vunpack.c.l.b16 %v111
    %v312 = vunpack.c.l.b16 %v112
    %v313 = vunpack.c.l.b16 %v113
    %v314 = vunpack.c.l.b16 %v114
    %v315 = vunpack.c.l.b16 %v115
    %v316 = vunpack.c.l.b16 %v116
    %v317 = vunpack.c.l.b16 %v117
    %v318 = vunpack.c.l.b16 %v118
    %v319 = vunpack.c.l.b16 %v119
    %v320 = vunpack.c.l.b16 %v120
    %v321 = vunpack.c.l.b16 %v121
    %v322 = vunpack.c.l.b16 %v122
    %v323 = vunpack.c.l.b16 %v123
    %v324 = vunpack.c.l.b16 %v124
    %v325 = vunpack.c.l.b16 %v125
    %v326 = vunpack.c.l.b16 %v126
    %v327 = vunpack.c.l.b16 %v127
    %v328 = vunpack.c.l.b16 %v128
    %v329 = vunpack.c.l.b16 %v129
    %v330 = vunpack.c.l.b16 %v130
    %v331 = vunpack.c.l.b16 %v131
    %v332 = vunpack.c.l.b16 %v132
    %v333 = vunpack.c.l.b16 %v133
    %v334 = vunpack.c.l.b16 %v134
    %v335 = vunpack.c.l.b16 %v135
    %v336 = vunpack.c.l.b16 %v136
    %v337 = vunpack.c.l.b16 %v137
    %v338 = vunpack.c.l.b16 %v138
    %v339 = vunpack.c.l.b16 %v139
    %v340 = vpack.c.b16 %v245, %v244
    %v341 = vpack.c.b16 %v247, %v246
    %v342 = vpack.c.b16 %v249, %v248
    %v343 = vpack.c.b16 %v251, %v250
    %v344 = vpack.c.b16 %v253, %v252
    %v345 = vpack.c.b16 %v255, %v254
    %v346 = vpack.c.b16 %v257, %v256
    %v347 = vpack.c.b16 %v259, %v258
    %v348 = vpack.c.b16 %v261, %v260
    %v349 = vpack.c.b16 %v263, %v262
    %v350 = vpack.c.b16 %v265, %v264
    %v351 = vpack.c.b16 %v267, %v266
    %v352 = vpack.c.b16 %v269, %v268
    %v353 = vpack.c.b16 %v271, %v270
    %v354 = vpack.c.b16 %v273, %v272
    %v355 = vpack.c.b16 %v275, %v274
    %v356 = vpack.c.b16 %v277, %v276
    %v357 = vpack.c.b16 %v279, %v278
    %v358 = vpack.c.b16 %v281, %v280
    %v359 = vpack.c.b16 %v283, %v282
    %v360 = vpack.c.b16 %v285, %v284
    %v361 = vpack.c.b16 %v287, %v286
    %v362 = vpack.c.b16 %v289, %v288
    %v363 = vpack.c.b16 %v291, %v290
    %v364 = vpack.c.b16 %v293, %v292
    %v365 = vpack.c.b16 %v295, %v294
    %v366 = vpack.c.b16 %v297, %v296
    %v367 = vpack.c.b16 %v299, %v298
    %v368 = vpack.c.b16 %v301, %v300
    %v369 = vpack.c.b16 %v303, %v302
    %v370 = vpack.c.b16 %v305, %v304
    %v371 = vpack.c.b16 %v307, %v306
    %v372 = vpack.c.b16 %v309, %v308
    %v373 = vpack.c.b16 %v311, %v310
    %v374 = vpack.c.b16 %v313, %v312
    %v375 = vpack.c.b16 %v315, %v314
    %v376 = vpack.c.b16 %v317, %v316
    %v377 = vpack.c.b16 %v319, %v318
    %v378 = vpack.c.b16 %v321, %v320
    %v379 = vpack.c.b16 %v323, %v322
    %v380 = vpack.c.b16 %v325, %v324
    %v381 = vpack.c.b16 %v327, %v326
    %v382 = vpack.c.b16 %v329, %v328
    %v383 = vpack.c.b16 %v331, %v330
    %v384 = vpack.c.b16 %v333, %v332
    %v385 = vpack.c.b16 %v335, %v334
    %v386 = vpack.c.b16 %v337, %v336
    %v387 = vpack.c.b16 %v339, %v338
    %v396 = vunpack.c.l.b16 %v140
    %v397 = vunpack.c.l.b16 %v141
    %v398 = vunpack.c.l.b16 %v142
    %v399 = vunpack.c.l.b16 %v143
    %v400 = vunpack.c.l.b16 %v144
    %v401 = vunpack.c.l.b16 %v145
    %v402 = vunpack.c.l.b16 %v146
    %v403 = vunpack.c.l.b16 %v147
    %v404 = vpack.c.b16 %v397, %v396
    %v405 = vpack.c.b16 %v399, %v398
    %v406 = vpack.c.b16 %v401, %v400
    %v407 = vpack.c.b16 %v403, %v402
    %vm412 = vcmask 523264
    %v414 = vsel %vm412, %v340, 0
    %v417 = vsel %vm412, %v341, 0
    %v420 = vsel %vm412, %v342, 0
    %v423 = vsel %vm412, %v343, 0
    %v426 = vsel %vm412, %v344, 0
    %v429 = vsel %vm412, %v345, 0
    %v432 = vsel %vm412, %v346, 0
    %v435 = vsel %vm412, %v347, 0
    %v438 = vsel %vm412, %v348, 0
    %v441 = vsel %vm412, %v349, 0
    %v444 = vsel %vm412, %v350, 0
    %v447 = vsel %vm412, %v351, 0
    %v450 = vsel %vm412, %v352, 0
    %v453 = vsel %vm412, %v353, 0
    %v456 = vsel %vm412, %v354, 0
    %v459 = vsel %vm412, %v355, 0
    %v462 = vsel %vm412, %v356, 0
    %v465 = vsel %vm412, %v357, 0
    %v468 = vsel %vm412, %v358, 0
    %v471 = vsel %vm412, %v359, 0
    %v474 = vsel %vm412, %v360, 0
    %v477 = vsel %vm412, %v361, 0
    %v480 = vsel %vm412, %v362, 0
    %v483 = vsel %vm412, %v363, 0
    %v486 = vsel %vm412, %v364, 0
    %v489 = vsel %vm412, %v365, 0
    %v492 = vsel %vm412, %v366, 0
    %v495 = vsel %vm412, %v367, 0
    %v498 = vsel %vm412, %v368, 0
    %v501 = vsel %vm412, %v369, 0
    %v504 = vsel %vm412, %v370, 0
    %v507 = vsel %vm412, %v371, 0
    %v510 = vsel %vm412, %v372, 0
    %v513 = vsel %vm412, %v373, 0
    %v516 = vsel %vm412, %v374, 0
    %v519 = vsel %vm412, %v375, 0
    %v522 = vsel %vm412, %v376, 0
    %v525 = vsel %vm412, %v377, 0
    %v528 = vsel %vm412, %v378, 0
    %v531 = vsel %vm412, %v379, 0
    %v534 = vsel %vm412, %v380, 0
    %v537 = vsel %vm412, %v381, 0
    %v540 = vsel %vm412, %v382, 0
    %v543 = vsel %vm412, %v383, 0
    %v546 = vsel %vm412, %v384, 0
    %v549 = vsel %vm412, %v385, 0
    %v552 = vsel %vm412, %v386, 0
    %v555 = vsel %vm412, %v387, 0
    %557 = vmatprep.subr.bf16.mxu0 0
    %558 = vmatpush1.bf16.msra.mxu0 %v404
    %559 = vmatprep.subr.bf16.mxu0 0
    %560 = vmatpush1.bf16.msra.mxu0 %v405
    %561 = vmatprep.subr.bf16.mxu0 0
    %562 = vmatpush1.bf16.msra.mxu0 %v406
    %563 = vmatprep.subr.bf16.mxu0 0
    %564 = vmatpush1.bf16.msra.mxu0 %v407
    %565 = vmatprep.subr.bf16.mxu0 0
    %566 = vmatpush1.bf16.msra.mxu0 0
    %567 = vmatprep.subr.bf16.mxu0 0
    %568 = vmatpush1.bf16.msra.mxu0 0
    %569 = vmatprep.subr.bf16.mxu0 0
    %570 = vmatpush1.bf16.msra.mxu0 0
    %571 = vmatprep.subr.bf16.mxu0 0
    %572 = vmatpush1.bf16.msra.mxu0 0
    %573 = vmatprep.subr.bf16.mxu0 0
    %574 = vmatpush1.bf16.msra.mxu0 0
    %575 = vmatprep.subr.bf16.mxu0 0
    %576 = vmatpush1.bf16.msra.mxu0 0
    %577 = vmatprep.subr.bf16.mxu0 0
    %578 = vmatpush1.bf16.msra.mxu0 0
    %579 = vmatprep.subr.bf16.mxu0 0
    %580 = vmatpush1.bf16.msra.mxu0 0
    %581 = vmatprep.subr.bf16.mxu0 0
    %582 = vmatpush1.bf16.msra.mxu0 0
    %583 = vmatprep.subr.bf16.mxu0 0
    %584 = vmatpush1.bf16.msra.mxu0 0
    %585 = vmatprep.subr.bf16.mxu0 0
    %586 = vmatpush1.bf16.msra.mxu0 0
    %587 = vmatprep.subr.bf16.mxu0 0
    %588 = vmatpush1.bf16.msra.mxu0 0
    %589 = vmatprep.mubr.bf16.mxu0 0
    %590 = vmatmul.mubr.bf16.gmra.mrb[0].mxu0 %v414
    %v591 = vpop.f32.mrb[0].mxu0
    %v592 = vadd.f32 0.0, %v591
    %v593 = vpop.f32.mrb[0].mxu0
    %v594 = vpop.f32.mrb[0].mxu0
    %v595 = vadd.f32 0.0, %v594
    %v596 = vpop.f32.mrb[0].mxu0
    %597 = vmatprep.mubr.bf16.mxu0 0
    %598 = vmatmul.mubr.bf16.gmra.mrb[0].mxu0 %v417
    %v599 = vpop.f32.mrb[0].mxu0
    %v600 = vadd.f32 0.0, %v599
    %v601 = vpop.f32.mrb[0].mxu0
    %v602 = vpop.f32.mrb[0].mxu0
    %v603 = vadd.f32 0.0, %v602
    %v604 = vpop.f32.mrb[0].mxu0
    %605 = vmatprep.mubr.bf16.mxu0 0
    %606 = vmatmul.mubr.bf16.gmra.mrb[0].mxu0 %v420
    %v607 = vpop.f32.mrb[0].mxu0
    %v608 = vadd.f32 0.0, %v607
    %v609 = vpop.f32.mrb[0].mxu0
    %v610 = vpop.f32.mrb[0].mxu0
    %v611 = vadd.f32 0.0, %v610
    %v612 = vpop.f32.mrb[0].mxu0
    %613 = vmatprep.mubr.bf16.mxu0 0
    %614 = vmatmul.mubr.bf16.gmra.mrb[0].mxu0 %v423
    %v615 = vpop.f32.mrb[0].mxu0
    %v616 = vadd.f32 0.0, %v615
    %v617 = vpop.f32.mrb[0].mxu0
    %v618 = vpop.f32.mrb[0].mxu0
    %v619 = vadd.f32 0.0, %v618
    %v620 = vpop.f32.mrb[0].mxu0
    %621 = vmatprep.mubr.bf16.mxu0 0
    %622 = vmatmul.mubr.bf16.gmra.mrb[0].mxu0 %v426
    %v623 = vpop.f32.mrb[0].mxu0
    %v624 = vadd.f32 0.0, %v623
    %v625 = vpop.f32.mrb[0].mxu0
    %v626 = vpop.f32.mrb[0].mxu0
    %v627 = vadd.f32 0.0, %v626
    %v628 = vpop.f32.mrb[0].mxu0
    %629 = vmatprep.mubr.bf16.mxu0 0
    %630 = vmatmul.mubr.bf16.gmra.mrb[0].mxu0 %v429
    %v631 = vpop.f32.mrb[0].mxu0
    %v632 = vadd.f32 0.0, %v631
    %v633 = vpop.f32.mrb[0].mxu0
    %v634 = vpop.f32.mrb[0].mxu0
    %v635 = vadd.f32 0.0, %v634
    %v636 = vpop.f32.mrb[0].mxu0
    %637 = vmatprep.mubr.bf16.mxu0 0
    %638 = vmatmul.mubr.bf16.gmra.mrb[0].mxu0 %v432
    %v639 = vpop.f32.mrb[0].mxu0
    %v640 = vadd.f32 0.0, %v639
    %v641 = vpop.f32.mrb[0].mxu0
    %v642 = vpop.f32.mrb[0].mxu0
    %v643 = vadd.f32 0.0, %v642
    %v644 = vpop.f32.mrb[0].mxu0
    %645 = vmatprep.mubr.bf16.mxu0 0
    %646 = vmatmul.mubr.bf16.gmra.mrb[0].mxu0 %v435
    %v647 = vpop.f32.mrb[0].mxu0
    %v648 = vadd.f32 0.0, %v647
    %v649 = vpop.f32.mrb[0].mxu0
    %v650 = vpop.f32.mrb[0].mxu0
    %v651 = vadd.f32 0.0, %v650
    %v652 = vpop.f32.mrb[0].mxu0
    %653 = vmatprep.mubr.bf16.mxu0 0
    %654 = vmatmul.mubr.bf16.gmra.mrb[0].mxu0 %v438
    %v655 = vpop.f32.mrb[0].mxu0
    %v656 = vadd.f32 0.0, %v655
    %v657 = vpop.f32.mrb[0].mxu0
    %v658 = vpop.f32.mrb[0].mxu0
    %v659 = vadd.f32 0.0, %v658
    %v660 = vpop.f32.mrb[0].mxu0
    %661 = vmatprep.mubr.bf16.mxu0 0
    %662 = vmatmul.mubr.bf16.gmra.mrb[0].mxu0 %v441
    %v663 = vpop.f32.mrb[0].mxu0
    %v664 = vadd.f32 0.0, %v663
    %v665 = vpop.f32.mrb[0].mxu0
    %v666 = vpop.f32.mrb[0].mxu0
    %v667 = vadd.f32 0.0, %v666
    %v668 = vpop.f32.mrb[0].mxu0
    %669 = vmatprep.mubr.bf16.mxu0 0
    %670 = vmatmul.mubr.bf16.gmra.mrb[0].mxu0 %v444
    %v671 = vpop.f32.mrb[0].mxu0
    %v672 = vadd.f32 0.0, %v671
    %v673 = vpop.f32.mrb[0].mxu0
    %v674 = vpop.f32.mrb[0].mxu0
    %v675 = vadd.f32 0.0, %v674
    %v676 = vpop.f32.mrb[0].mxu0
    %677 = vmatprep.mubr.bf16.mxu0 0
    %678 = vmatmul.mubr.bf16.gmra.mrb[0].mxu0 %v447
    %v679 = vpop.f32.mrb[0].mxu0
    %v680 = vadd.f32 0.0, %v679
    %v681 = vpop.f32.mrb[0].mxu0
    %v682 = vpop.f32.mrb[0].mxu0
    %v683 = vadd.f32 0.0, %v682
    %v684 = vpop.f32.mrb[0].mxu0
    %685 = vmatprep.mubr.bf16.mxu0 0
    %686 = vmatmul.mubr.bf16.gmra.mrb[0].mxu0 %v450
    %v687 = vpop.f32.mrb[0].mxu0
    %v688 = vadd.f32 0.0, %v687
    %v689 = vpop.f32.mrb[0].mxu0
    %v690 = vpop.f32.mrb[0].mxu0
    %v691 = vadd.f32 0.0, %v690
    %v692 = vpop.f32.mrb[0].mxu0
    %693 = vmatprep.mubr.bf16.mxu0 0
    %694 = vmatmul.mubr.bf16.gmra.mrb[0].mxu0 %v453
    %v695 = vpop.f32.mrb[0].mxu0
    %v696 = vadd.f32 0.0, %v695
    %v697 = vpop.f32.mrb[0].mxu0
    %v698 = vpop.f32.mrb[0].mxu0
    %v699 = vadd.f32 0.0, %v698
    %v700 = vpop.f32.mrb[0].mxu0
    %701 = vmatprep.mubr.bf16.mxu0 0
    %702 = vmatmul.mubr.bf16.gmra.mrb[0].mxu0 %v456
    %v703 = vpop.f32.mrb[0].mxu0
    %v704 = vadd.f32 0.0, %v703
    %v705 = vpop.f32.mrb[0].mxu0
    %v706 = vpop.f32.mrb[0].mxu0
    %v707 = vadd.f32 0.0, %v706
    %v708 = vpop.f32.mrb[0].mxu0
    %709 = vmatprep.mubr.bf16.mxu0 0
    %710 = vmatmul.mubr.bf16.gmra.mrb[0].mxu0 %v459
    %v711 = vpop.f32.mrb[0].mxu0
    %v712 = vadd.f32 0.0, %v711
    %v713 = vpop.f32.mrb[0].mxu0
    %v714 = vpop.f32.mrb[0].mxu0
    %v715 = vadd.f32 0.0, %v714
    %v716 = vpop.f32.mrb[0].mxu0
    %717 = vmatprep.mubr.bf16.mxu0 0
    %718 = vmatmul.mubr.bf16.gmra.mrb[0].mxu0 %v462
    %v719 = vpop.f32.mrb[0].mxu0
    %v720 = vadd.f32 0.0, %v719
    %v721 = vpop.f32.mrb[0].mxu0
    %v722 = vpop.f32.mrb[0].mxu0
    %v723 = vadd.f32 0.0, %v722
    %v724 = vpop.f32.mrb[0].mxu0
    %725 = vmatprep.mubr.bf16.mxu0 0
    %726 = vmatmul.mubr.bf16.gmra.mrb[0].mxu0 %v465
    %v727 = vpop.f32.mrb[0].mxu0
    %v728 = vadd.f32 0.0, %v727
    %v729 = vpop.f32.mrb[0].mxu0
    %v730 = vpop.f32.mrb[0].mxu0
    %v731 = vadd.f32 0.0, %v730
    %v732 = vpop.f32.mrb[0].mxu0
    %733 = vmatprep.mubr.bf16.mxu0 0
    %734 = vmatmul.mubr.bf16.gmra.mrb[0].mxu0 %v468
    %v735 = vpop.f32.mrb[0].mxu0
    %v736 = vadd.f32 0.0, %v735
    %v737 = vpop.f32.mrb[0].mxu0
    %v738 = vpop.f32.mrb[0].mxu0
    %v739 = vadd.f32 0.0, %v738
    %v740 = vpop.f32.mrb[0].mxu0
    %741 = vmatprep.mubr.bf16.mxu0 0
    %742 = vmatmul.mubr.bf16.gmra.mrb[0].mxu0 %v471
    %v743 = vpop.f32.mrb[0].mxu0
    %v744 = vadd.f32 0.0, %v743
    %v745 = vpop.f32.mrb[0].mxu0
    %v746 = vpop.f32.mrb[0].mxu0
    %v747 = vadd.f32 0.0, %v746
    %v748 = vpop.f32.mrb[0].mxu0
    %749 = vmatprep.mubr.bf16.mxu0 0
    %750 = vmatmul.mubr.bf16.gmra.mrb[0].mxu0 %v474
    %v751 = vpop.f32.mrb[0].mxu0
    %v752 = vadd.f32 0.0, %v751
    %v753 = vpop.f32.mrb[0].mxu0
    %v754 = vpop.f32.mrb[0].mxu0
    %v755 = vadd.f32 0.0, %v754
    %v756 = vpop.f32.mrb[0].mxu0
    %757 = vmatprep.mubr.bf16.mxu0 0
    %758 = vmatmul.mubr.bf16.gmra.mrb[0].mxu0 %v477
    %v759 = vpop.f32.mrb[0].mxu0
    %v760 = vadd.f32 0.0, %v759
    %v761 = vpop.f32.mrb[0].mxu0
    %v762 = vpop.f32.mrb[0].mxu0
    %v763 = vadd.f32 0.0, %v762
    %v764 = vpop.f32.mrb[0].mxu0
    %765 = vmatprep.mubr.bf16.mxu0 0
    %766 = vmatmul.mubr.bf16.gmra.mrb[0].mxu0 %v480
    %v767 = vpop.f32.mrb[0].mxu0
    %v768 = vadd.f32 0.0, %v767
    %v769 = vpop.f32.mrb[0].mxu0
    %v770 = vpop.f32.mrb[0].mxu0
    %v771 = vadd.f32 0.0, %v770
    %v772 = vpop.f32.mrb[0].mxu0
    %773 = vmatprep.mubr.bf16.mxu0 0
    %774 = vmatmul.mubr.bf16.gmra.mrb[0].mxu0 %v483
    %v775 = vpop.f32.mrb[0].mxu0
    %v776 = vadd.f32 0.0, %v775
    %v777 = vpop.f32.mrb[0].mxu0
    %v778 = vpop.f32.mrb[0].mxu0
    %v779 = vadd.f32 0.0, %v778
    %v780 = vpop.f32.mrb[0].mxu0
    %781 = vmatprep.mubr.bf16.mxu0 0
    %782 = vmatmul.mubr.bf16.gmra.mrb[0].mxu0 %v486
    %v783 = vpop.f32.mrb[0].mxu0
    %v784 = vadd.f32 0.0, %v783
    %v785 = vpop.f32.mrb[0].mxu0
    %v786 = vpop.f32.mrb[0].mxu0
    %v787 = vadd.f32 0.0, %v786
    %v788 = vpop.f32.mrb[0].mxu0
    %789 = vmatprep.mubr.bf16.mxu0 0
    %790 = vmatmul.mubr.bf16.gmra.mrb[0].mxu0 %v489
    %v791 = vpop.f32.mrb[0].mxu0
    %v792 = vadd.f32 0.0, %v791
    %v793 = vpop.f32.mrb[0].mxu0
    %v794 = vpop.f32.mrb[0].mxu0
    %v795 = vadd.f32 0.0, %v794
    %v796 = vpop.f32.mrb[0].mxu0
    %797 = vmatprep.mubr.bf16.mxu0 0
    %798 = vmatmul.mubr.bf16.gmra.mrb[0].mxu0 %v492
    %v799 = vpop.f32.mrb[0].mxu0
    %v800 = vadd.f32 0.0, %v799
    %v801 = vpop.f32.mrb[0].mxu0
    %v802 = vpop.f32.mrb[0].mxu0
    %v803 = vadd.f32 0.0, %v802
    %v804 = vpop.f32.mrb[0].mxu0
    %805 = vmatprep.mubr.bf16.mxu0 0
    %806 = vmatmul.mubr.bf16.gmra.mrb[0].mxu0 %v495
    %v807 = vpop.f32.mrb[0].mxu0
    %v808 = vadd.f32 0.0, %v807
    %v809 = vpop.f32.mrb[0].mxu0
    %v810 = vpop.f32.mrb[0].mxu0
    %v811 = vadd.f32 0.0, %v810
    %v812 = vpop.f32.mrb[0].mxu0
    %813 = vmatprep.mubr.bf16.mxu0 0
    %814 = vmatmul.mubr.bf16.gmra.mrb[0].mxu0 %v498
    %v815 = vpop.f32.mrb[0].mxu0
    %v816 = vadd.f32 0.0, %v815
    %v817 = vpop.f32.mrb[0].mxu0
    %v818 = vpop.f32.mrb[0].mxu0
    %v819 = vadd.f32 0.0, %v818
    %v820 = vpop.f32.mrb[0].mxu0
    %821 = vmatprep.mubr.bf16.mxu0 0
    %822 = vmatmul.mubr.bf16.gmra.mrb[0].mxu0 %v501
    %v823 = vpop.f32.mrb[0].mxu0
    %v824 = vadd.f32 0.0, %v823
    %v825 = vpop.f32.mrb[0].mxu0
    %v826 = vpop.f32.mrb[0].mxu0
    %v827 = vadd.f32 0.0, %v826
    %v828 = vpop.f32.mrb[0].mxu0
    %829 = vmatprep.mubr.bf16.mxu0 0
    %830 = vmatmul.mubr.bf16.gmra.mrb[0].mxu0 %v504
    %v831 = vpop.f32.mrb[0].mxu0
    %v832 = vadd.f32 0.0, %v831
    %v833 = vpop.f32.mrb[0].mxu0
    %v834 = vpop.f32.mrb[0].mxu0
    %v835 = vadd.f32 0.0, %v834
    %v836 = vpop.f32.mrb[0].mxu0
    %837 = vmatprep.mubr.bf16.mxu0 0
    %838 = vmatmul.mubr.bf16.gmra.mrb[0].mxu0 %v507
    %v839 = vpop.f32.mrb[0].mxu0
    %v840 = vadd.f32 0.0, %v839
    %v841 = vpop.f32.mrb[0].mxu0
    %v842 = vpop.f32.mrb[0].mxu0
    %v843 = vadd.f32 0.0, %v842
    %v844 = vpop.f32.mrb[0].mxu0
    %845 = vmatprep.mubr.bf16.mxu0 0
    %846 = vmatmul.mubr.bf16.gmra.mrb[0].mxu0 %v510
    %v847 = vpop.f32.mrb[0].mxu0
    %v848 = vadd.f32 0.0, %v847
    %v849 = vpop.f32.mrb[0].mxu0
    %v850 = vpop.f32.mrb[0].mxu0
    %v851 = vadd.f32 0.0, %v850
    %v852 = vpop.f32.mrb[0].mxu0
    %853 = vmatprep.mubr.bf16.mxu0 0
    %854 = vmatmul.mubr.bf16.gmra.mrb[0].mxu0 %v513
    %v855 = vpop.f32.mrb[0].mxu0
    %v856 = vadd.f32 0.0, %v855
    %v857 = vpop.f32.mrb[0].mxu0
    %v858 = vpop.f32.mrb[0].mxu0
    %v859 = vadd.f32 0.0, %v858
    %v860 = vpop.f32.mrb[0].mxu0
    %861 = vmatprep.mubr.bf16.mxu0 0
    %862 = vmatmul.mubr.bf16.gmra.mrb[0].mxu0 %v516
    %v863 = vpop.f32.mrb[0].mxu0
    %v864 = vadd.f32 0.0, %v863
    %v865 = vpop.f32.mrb[0].mxu0
    %v866 = vpop.f32.mrb[0].mxu0
    %v867 = vadd.f32 0.0, %v866
    %v868 = vpop.f32.mrb[0].mxu0
    %869 = vmatprep.mubr.bf16.mxu0 0
    %870 = vmatmul.mubr.bf16.gmra.mrb[0].mxu0 %v519
    %v871 = vpop.f32.mrb[0].mxu0
    %v872 = vadd.f32 0.0, %v871
    %v873 = vpop.f32.mrb[0].mxu0
    %v874 = vpop.f32.mrb[0].mxu0
    %v875 = vadd.f32 0.0, %v874
    %v876 = vpop.f32.mrb[0].mxu0
    %877 = vmatprep.mubr.bf16.mxu0 0
    %878 = vmatmul.mubr.bf16.gmra.mrb[0].mxu0 %v522
    %v879 = vpop.f32.mrb[0].mxu0
    %v880 = vadd.f32 0.0, %v879
    %v881 = vpop.f32.mrb[0].mxu0
    %v882 = vpop.f32.mrb[0].mxu0
    %v883 = vadd.f32 0.0, %v882
    %v884 = vpop.f32.mrb[0].mxu0
    %885 = vmatprep.mubr.bf16.mxu0 0
    %886 = vmatmul.mubr.bf16.gmra.mrb[0].mxu0 %v525
    %v887 = vpop.f32.mrb[0].mxu0
    %v888 = vadd.f32 0.0, %v887
    %v889 = vpop.f32.mrb[0].mxu0
    %v890 = vpop.f32.mrb[0].mxu0
    %v891 = vadd.f32 0.0, %v890
    %v892 = vpop.f32.mrb[0].mxu0
    %893 = vmatprep.mubr.bf16.mxu0 0
    %894 = vmatmul.mubr.bf16.gmra.mrb[0].mxu0 %v528
    %v895 = vpop.f32.mrb[0].mxu0
    %v896 = vadd.f32 0.0, %v895
    %v897 = vpop.f32.mrb[0].mxu0
    %v898 = vpop.f32.mrb[0].mxu0
    %v899 = vadd.f32 0.0, %v898
    %v900 = vpop.f32.mrb[0].mxu0
    %901 = vmatprep.mubr.bf16.mxu0 0
    %902 = vmatmul.mubr.bf16.gmra.mrb[0].mxu0 %v531
    %v903 = vpop.f32.mrb[0].mxu0
    %v904 = vadd.f32 0.0, %v903
    %v905 = vpop.f32.mrb[0].mxu0
    %v906 = vpop.f32.mrb[0].mxu0
    %v907 = vadd.f32 0.0, %v906
    %v908 = vpop.f32.mrb[0].mxu0
    %909 = vmatprep.mubr.bf16.mxu0 0
    %910 = vmatmul.mubr.bf16.gmra.mrb[0].mxu0 %v534
    %v911 = vpop.f32.mrb[0].mxu0
    %v912 = vadd.f32 0.0, %v911
    %v913 = vpop.f32.mrb[0].mxu0
    %v914 = vpop.f32.mrb[0].mxu0
    %v915 = vadd.f32 0.0, %v914
    %v916 = vpop.f32.mrb[0].mxu0
    %917 = vmatprep.mubr.bf16.mxu0 0
    %918 = vmatmul.mubr.bf16.gmra.mrb[0].mxu0 %v537
    %v919 = vpop.f32.mrb[0].mxu0
    %v920 = vadd.f32 0.0, %v919
    %v921 = vpop.f32.mrb[0].mxu0
    %v922 = vpop.f32.mrb[0].mxu0
    %v923 = vadd.f32 0.0, %v922
    %v924 = vpop.f32.mrb[0].mxu0
    %925 = vmatprep.mubr.bf16.mxu0 0
    %926 = vmatmul.mubr.bf16.gmra.mrb[0].mxu0 %v540
    %v927 = vpop.f32.mrb[0].mxu0
    %v928 = vadd.f32 0.0, %v927
    %v929 = vpop.f32.mrb[0].mxu0
    %v930 = vpop.f32.mrb[0].mxu0
    %v931 = vadd.f32 0.0, %v930
    %v932 = vpop.f32.mrb[0].mxu0
    %933 = vmatprep.mubr.bf16.mxu0 0
    %934 = vmatmul.mubr.bf16.gmra.mrb[0].mxu0 %v543
    %v935 = vpop.f32.mrb[0].mxu0
    %v936 = vadd.f32 0.0, %v935
    %v937 = vpop.f32.mrb[0].mxu0
    %v938 = vpop.f32.mrb[0].mxu0
    %v939 = vadd.f32 0.0, %v938
    %v940 = vpop.f32.mrb[0].mxu0
    %941 = vmatprep.mubr.bf16.mxu0 0
    %942 = vmatmul.mubr.bf16.gmra.mrb[0].mxu0 %v546
    %v943 = vpop.f32.mrb[0].mxu0
    %v944 = vadd.f32 0.0, %v943
    %v945 = vpop.f32.mrb[0].mxu0
    %v946 = vpop.f32.mrb[0].mxu0
    %v947 = vadd.f32 0.0, %v946
    %v948 = vpop.f32.mrb[0].mxu0
    %949 = vmatprep.mubr.bf16.mxu0 0
    %950 = vmatmul.mubr.bf16.gmra.mrb[0].mxu0 %v549
    %v951 = vpop.f32.mrb[0].mxu0
    %v952 = vadd.f32 0.0, %v951
    %v953 = vpop.f32.mrb[0].mxu0
    %v954 = vpop.f32.mrb[0].mxu0
    %v955 = vadd.f32 0.0, %v954
    %v956 = vpop.f32.mrb[0].mxu0
    %957 = vmatprep.mubr.bf16.mxu0 0
    %958 = vmatmul.mubr.bf16.gmra.mrb[0].mxu0 %v552
    %v959 = vpop.f32.mrb[0].mxu0
    %v960 = vadd.f32 0.0, %v959
    %v961 = vpop.f32.mrb[0].mxu0
    %v962 = vpop.f32.mrb[0].mxu0
    %v963 = vadd.f32 0.0, %v962
    %v964 = vpop.f32.mrb[0].mxu0
    %965 = vmatprep.mubr.bf16.mxu0 0
    %966 = vmatmul.mubr.bf16.gmra.mrb[0].mxu0 %v555
    %v967 = vpop.f32.mrb[0].mxu0
    %v968 = vadd.f32 0.0, %v967
    %v969 = vpop.f32.mrb[0].mxu0
    %v970 = vpop.f32.mrb[0].mxu0
    %v971 = vadd.f32 0.0, %v970
    %v972 = vpop.f32.mrb[0].mxu0
    %973 = vdwg.mxu0
    %974 = vst [vmem:[#allocation2] sm:$0xff] %v592
    %975 = vst [vmem:[#allocation2 + $0x8] sm:$0xff] %v595
    %976 = vst [vmem:[#allocation2 + $0x10] sm:$0xff] %v600
    %977 = vst [vmem:[#allocation2 + $0x18] sm:$0xff] %v603
    %978 = vst [vmem:[#allocation2 + $0x20] sm:$0xff] %v608
    %979 = vst [vmem:[#allocation2 + $0x28] sm:$0xff] %v611
    %980 = vst [vmem:[#allocation2 + $0x30] sm:$0xff] %v616
    %981 = vst [vmem:[#allocation2 + $0x38] sm:$0xff] %v619
    %982 = vst [vmem:[#allocation2 + $0x40] sm:$0xff] %v624
    %983 = vst [vmem:[#allocation2 + $0x48] sm:$0xff] %v627
    %984 = vst [vmem:[#allocation2 + $0x50] sm:$0xff] %v632
    %985 = vst [vmem:[#allocation2 + $0x58] sm:$0xff] %v635
    %986 = vst [vmem:[#allocation2 + $0x60] sm:$0xff] %v640
    %987 = vst [vmem:[#allocation2 + $0x68] sm:$0xff] %v643
    %988 = vst [vmem:[#allocation2 + $0x70] sm:$0xff] %v648
    %989 = vst [vmem:[#allocation2 + $0x78] sm:$0xff] %v651
    %990 = vst [vmem:[#allocation2 + $0x80] sm:$0xff] %v656
    %991 = vst [vmem:[#allocation2 + $0x88] sm:$0xff] %v659
    %992 = vst [vmem:[#allocation2 + $0x90] sm:$0xff] %v664
    %993 = vst [vmem:[#allocation2 + $0x98] sm:$0xff] %v667
    %994 = vst [vmem:[#allocation2 + $0xa0] sm:$0xff] %v672
    %995 = vst [vmem:[#allocation2 + $0xa8] sm:$0xff] %v675
    %996 = vst [vmem:[#allocation2 + $0xb0] sm:$0xff] %v680
    %997 = vst [vmem:[#allocation2 + $0xb8] sm:$0xff] %v683
    %998 = vst [vmem:[#allocation2 + $0xc0] sm:$0xff] %v688
    %999 = vst [vmem:[#allocation2 + $0xc8] sm:$0xff] %v691
    %1000 = vst [vmem:[#allocation2 + $0xd0] sm:$0xff] %v696
    %1001 = vst [vmem:[#allocation2 + $0xd8] sm:$0xff] %v699
    %1002 = vst [vmem:[#allocation2 + $0xe0] sm:$0xff] %v704
    %1003 = vst [vmem:[#allocation2 + $0xe8] sm:$0xff] %v707
    %1004 = vst [vmem:[#allocation2 + $0xf0] sm:$0xff] %v712
    %1005 = vst [vmem:[#allocation2 + $0xf8] sm:$0xff] %v715
    %1006 = vst [vmem:[#allocation2 + $0x100] sm:$0xff] %v720
    %1007 = vst [vmem:[#allocation2 + $0x108] sm:$0xff] %v723
    %1008 = vst [vmem:[#allocation2 + $0x110] sm:$0xff] %v728
    %1009 = vst [vmem:[#allocation2 + $0x118] sm:$0xff] %v731
    %1010 = vst [vmem:[#allocation2 + $0x120] sm:$0xff] %v736
    %1011 = vst [vmem:[#allocation2 + $0x128] sm:$0xff] %v739
    %1012 = vst [vmem:[#allocation2 + $0x130] sm:$0xff] %v744
    %1013 = vst [vmem:[#allocation2 + $0x138] sm:$0xff] %v747
    %1014 = vst [vmem:[#allocation2 + $0x140] sm:$0xff] %v752
    %1015 = vst [vmem:[#allocation2 + $0x148] sm:$0xff] %v755
    %1016 = vst [vmem:[#allocation2 + $0x150] sm:$0xff] %v760
    %1017 = vst [vmem:[#allocation2 + $0x158] sm:$0xff] %v763
    %1018 = vst [vmem:[#allocation2 + $0x160] sm:$0xff] %v768
    %1019 = vst [vmem:[#allocation2 + $0x168] sm:$0xff] %v771
    %1020 = vst [vmem:[#allocation2 + $0x170] sm:$0xff] %v776
    %1021 = vst [vmem:[#allocation2 + $0x178] sm:$0xff] %v779
    %1022 = vst [vmem:[#allocation2 + $0x180] sm:$0xff] %v784
    %1023 = vst [vmem:[#allocation2 + $0x188] sm:$0xff] %v787
    %1024 = vst [vmem:[#allocation2 + $0x190] sm:$0xff] %v792
    %1025 = vst [vmem:[#allocation2 + $0x198] sm:$0xff] %v795
    %1026 = vst [vmem:[#allocation2 + $0x1a0] sm:$0xff] %v800
    %1027 = vst [vmem:[#allocation2 + $0x1a8] sm:$0xff] %v803
    %1028 = vst [vmem:[#allocation2 + $0x1b0] sm:$0xff] %v808
    %1029 = vst [vmem:[#allocation2 + $0x1b8] sm:$0xff] %v811
    %1030 = vst [vmem:[#allocation2 + $0x1c0] sm:$0xff] %v816
    %1031 = vst [vmem:[#allocation2 + $0x1c8] sm:$0xff] %v819
    %1032 = vst [vmem:[#allocation2 + $0x1d0] sm:$0xff] %v824
    %1033 = vst [vmem:[#allocation2 + $0x1d8] sm:$0xff] %v827
    %1034 = vst [vmem:[#allocation2 + $0x1e0] sm:$0xff] %v832
    %1035 = vst [vmem:[#allocation2 + $0x1e8] sm:$0xff] %v835
    %1036 = vst [vmem:[#allocation2 + $0x1f0] sm:$0xff] %v840
    %1037 = vst [vmem:[#allocation2 + $0x1f8] sm:$0xff] %v843
    %1038 = vst [vmem:[#allocation2 + $0x200] sm:$0xff] %v848
    %1039 = vst [vmem:[#allocation2 + $0x208] sm:$0xff] %v851
    %1040 = vst [vmem:[#allocation2 + $0x210] sm:$0xff] %v856
    %1041 = vst [vmem:[#allocation2 + $0x218] sm:$0xff] %v859
    %1042 = vst [vmem:[#allocation2 + $0x220] sm:$0xff] %v864
    %1043 = vst [vmem:[#allocation2 + $0x228] sm:$0xff] %v867
    %1044 = vst [vmem:[#allocation2 + $0x230] sm:$0xff] %v872
    %1045 = vst [vmem:[#allocation2 + $0x238] sm:$0xff] %v875
    %1046 = vst [vmem:[#allocation2 + $0x240] sm:$0xff] %v880
    %1047 = vst [vmem:[#allocation2 + $0x248] sm:$0xff] %v883
    %1048 = vst [vmem:[#allocation2 + $0x250] sm:$0xff] %v888
    %1049 = vst [vmem:[#allocation2 + $0x258] sm:$0xff] %v891
    %1050 = vst [vmem:[#allocation2 + $0x260] sm:$0xff] %v896
    %1051 = vst [vmem:[#allocation2 + $0x268] sm:$0xff] %v899
    %1052 = vst [vmem:[#allocation2 + $0x270] sm:$0xff] %v904
    %1053 = vst [vmem:[#allocation2 + $0x278] sm:$0xff] %v907
    %1054 = vst [vmem:[#allocation2 + $0x280] sm:$0xff] %v912
    %1055 = vst [vmem:[#allocation2 + $0x288] sm:$0xff] %v915
    %1056 = vst [vmem:[#allocation2 + $0x290] sm:$0xff] %v920
    %1057 = vst [vmem:[#allocation2 + $0x298] sm:$0xff] %v923
    %1058 = vst [vmem:[#allocation2 + $0x2a0] sm:$0xff] %v928
    %1059 = vst [vmem:[#allocation2 + $0x2a8] sm:$0xff] %v931
    %1060 = vst [vmem:[#allocation2 + $0x2b0] sm:$0xff] %v936
    %1061 = vst [vmem:[#allocation2 + $0x2b8] sm:$0xff] %v939
    %1062 = vst [vmem:[#allocation2 + $0x2c0] sm:$0xff] %v944
    %1063 = vst [vmem:[#allocation2 + $0x2c8] sm:$0xff] %v947
    %1064 = vst [vmem:[#allocation2 + $0x2d0] sm:$0xff] %v952
    %1065 = vst [vmem:[#allocation2 + $0x2d8] sm:$0xff] %v955
    %1066 = vst [vmem:[#allocation2 + $0x2e0] sm:$0xff] %v960
    %1067 = vst [vmem:[#allocation2 + $0x2e8] sm:$0xff] %v963
    %1068 = vst [vmem:[#allocation2 + $0x2f0] sm:$0xff] %v968
    %1069 = vst [vmem:[#allocation2 + $0x2f8] sm:$0xff] %v971
    %s1070 = scalar_lea.vmem [#allocation8], 32
    %v1071 = vld [vmem:[%s1070] sm:$0xf]
    %v1072 = vld [vmem:[%s1070 + $0x4] sm:$0xf]
    %v1073 = vld [vmem:[%s1070 + $0x8] sm:$0xf]
    %v1074 = vld [vmem:[%s1070 + $0xc] sm:$0xf]
    %v1075 = vld [vmem:[%s1070 + $0x10] sm:$0xf]
    %v1076 = vld [vmem:[%s1070 + $0x14] sm:$0xf]
    %v1077 = vld [vmem:[%s1070 + $0x18] sm:$0xf]
    %v1078 = vld [vmem:[%s1070 + $0x1c] sm:$0xf]
    %v1087 = vunpack.c.l.b16 %v1071
    %v1088 = vunpack.c.l.b16 %v1072
    %v1089 = vunpack.c.l.b16 %v1073
    %v1090 = vunpack.c.l.b16 %v1074
    %v1091 = vunpack.c.l.b16 %v1075
    %v1092 = vunpack.c.l.b16 %v1076
    %v1093 = vunpack.c.l.b16 %v1077
    %v1094 = vunpack.c.l.b16 %v1078
    %v1095 = vpack.c.b16 %v1088, %v1087
    %v1096 = vpack.c.b16 %v1090, %v1089
    %v1097 = vpack.c.b16 %v1092, %v1091
    %v1098 = vpack.c.b16 %v1094, %v1093
    %1103 = vmatprep.subr.bf16.mxu0 0
    %1104 = vmatpush1.bf16.msra.mxu0 %v1095
    %1105 = vmatprep.subr.bf16.mxu0 0
    %1106 = vmatpush1.bf16.msra.mxu0 %v1096
    %1107 = vmatprep.subr.bf16.mxu0 0
    %1108 = vmatpush1.bf16.msra.mxu0 %v1097
    %1109 = vmatprep.subr.bf16.mxu0 0
    %1110 = vmatpush1.bf16.msra.mxu0 %v1098
    %1111 = vmatprep.subr.bf16.mxu0 0
    %1112 = vmatpush1.bf16.msra.mxu0 0
    %1113 = vmatprep.subr.bf16.mxu0 0
    %1114 = vmatpush1.bf16.msra.mxu0 0
    %1115 = vmatprep.subr.bf16.mxu0 0
    %1116 = vmatpush1.bf16.msra.mxu0 0
    %1117 = vmatprep.subr.bf16.mxu0 0
    %1118 = vmatpush1.bf16.msra.mxu0 0
    %1119 = vmatprep.subr.bf16.mxu0 0
    %1120 = vmatpush1.bf16.msra.mxu0 0
    %1121 = vmatprep.subr.bf16.mxu0 0
    %1122 = vmatpush1.bf16.msra.mxu0 0
    %1123 = vmatprep.subr.bf16.mxu0 0
    %1124 = vmatpush1.bf16.msra.mxu0 0
    %1125 = vmatprep.subr.bf16.mxu0 0
    %1126 = vmatpush1.bf16.msra.mxu0 0
    %1127 = vmatprep.subr.bf16.mxu0 0
    %1128 = vmatpush1.bf16.msra.mxu0 0
    %1129 = vmatprep.subr.bf16.mxu0 0
    %1130 = vmatpush1.bf16.msra.mxu0 0
    %1131 = vmatprep.subr.bf16.mxu0 0
    %1132 = vmatpush1.bf16.msra.mxu0 0
    %1133 = vmatprep.subr.bf16.mxu0 0
    %1134 = vmatpush1.bf16.msra.mxu0 0
    %1135 = vmatprep.mubr.bf16.mxu0 0
    %1136 = vmatmul.mubr.bf16.gmra.mrb[0].mxu0 %v414
    %v1137 = vpop.f32.mrb[0].mxu0
    %v1138 = vadd.f32 0.0, %v1137
    %v1139 = vpop.f32.mrb[0].mxu0
    %v1140 = vpop.f32.mrb[0].mxu0
    %v1141 = vadd.f32 0.0, %v1140
    %v1142 = vpop.f32.mrb[0].mxu0
    %1143 = vmatprep.mubr.bf16.mxu0 0
    %1144 = vmatmul.mubr.bf16.gmra.mrb[0].mxu0 %v417
    %v1145 = vpop.f32.mrb[0].mxu0
    %v1146 = vadd.f32 0.0, %v1145
    %v1147 = vpop.f32.mrb[0].mxu0
    %v1148 = vpop.f32.mrb[0].mxu0
    %v1149 = vadd.f32 0.0, %v1148
    %v1150 = vpop.f32.mrb[0].mxu0
    %1151 = vmatprep.mubr.bf16.mxu0 0
    %1152 = vmatmul.mubr.bf16.gmra.mrb[0].mxu0 %v420
    %v1153 = vpop.f32.mrb[0].mxu0
    %v1154 = vadd.f32 0.0, %v1153
    %v1155 = vpop.f32.mrb[0].mxu0
    %v1156 = vpop.f32.mrb[0].mxu0
    %v1157 = vadd.f32 0.0, %v1156
    %v1158 = vpop.f32.mrb[0].mxu0
    %1159 = vmatprep.mubr.bf16.mxu0 0
    %1160 = vmatmul.mubr.bf16.gmra.mrb[0].mxu0 %v423
    %v1161 = vpop.f32.mrb[0].mxu0
    %v1162 = vadd.f32 0.0, %v1161
    %v1163 = vpop.f32.mrb[0].mxu0
    %v1164 = vpop.f32.mrb[0].mxu0
    %v1165 = vadd.f32 0.0, %v1164
    %v1166 = vpop.f32.mrb[0].mxu0
    %1167 = vmatprep.mubr.bf16.mxu0 0
    %1168 = vmatmul.mubr.bf16.gmra.mrb[0].mxu0 %v426
    %v1169 = vpop.f32.mrb[0].mxu0
    %v1170 = vadd.f32 0.0, %v1169
    %v1171 = vpop.f32.mrb[0].mxu0
    %v1172 = vpop.f32.mrb[0].mxu0
    %v1173 = vadd.f32 0.0, %v1172
    %v1174 = vpop.f32.mrb[0].mxu0
    %1175 = vmatprep.mubr.bf16.mxu0 0
    %1176 = vmatmul.mubr.bf16.gmra.mrb[0].mxu0 %v429
    %v1177 = vpop.f32.mrb[0].mxu0
    %v1178 = vadd.f32 0.0, %v1177
    %v1179 = vpop.f32.mrb[0].mxu0
    %v1180 = vpop.f32.mrb[0].mxu0
    %v1181 = vadd.f32 0.0, %v1180
    %v1182 = vpop.f32.mrb[0].mxu0
    %1183 = vmatprep.mubr.bf16.mxu0 0
    %1184 = vmatmul.mubr.bf16.gmra.mrb[0].mxu0 %v432
    %v1185 = vpop.f32.mrb[0].mxu0
    %v1186 = vadd.f32 0.0, %v1185
    %v1187 = vpop.f32.mrb[0].mxu0
    %v1188 = vpop.f32.mrb[0].mxu0
    %v1189 = vadd.f32 0.0, %v1188
    %v1190 = vpop.f32.mrb[0].mxu0
    %1191 = vmatprep.mubr.bf16.mxu0 0
    %1192 = vmatmul.mubr.bf16.gmra.mrb[0].mxu0 %v435
    %v1193 = vpop.f32.mrb[0].mxu0
    %v1194 = vadd.f32 0.0, %v1193
    %v1195 = vpop.f32.mrb[0].mxu0
    %v1196 = vpop.f32.mrb[0].mxu0
    %v1197 = vadd.f32 0.0, %v1196
    %v1198 = vpop.f32.mrb[0].mxu0
    %1199 = vmatprep.mubr.bf16.mxu0 0
    %1200 = vmatmul.mubr.bf16.gmra.mrb[0].mxu0 %v438
    %v1201 = vpop.f32.mrb[0].mxu0
    %v1202 = vadd.f32 0.0, %v1201
    %v1203 = vpop.f32.mrb[0].mxu0
    %v1204 = vpop.f32.mrb[0].mxu0
    %v1205 = vadd.f32 0.0, %v1204
    %v1206 = vpop.f32.mrb[0].mxu0
    %1207 = vmatprep.mubr.bf16.mxu0 0
    %1208 = vmatmul.mubr.bf16.gmra.mrb[0].mxu0 %v441
    %v1209 = vpop.f32.mrb[0].mxu0
    %v1210 = vadd.f32 0.0, %v1209
    %v1211 = vpop.f32.mrb[0].mxu0
    %v1212 = vpop.f32.mrb[0].mxu0
    %v1213 = vadd.f32 0.0, %v1212
    %v1214 = vpop.f32.mrb[0].mxu0
    %1215 = vmatprep.mubr.bf16.mxu0 0
    %1216 = vmatmul.mubr.bf16.gmra.mrb[0].mxu0 %v444
    %v1217 = vpop.f32.mrb[0].mxu0
    %v1218 = vadd.f32 0.0, %v1217
    %v1219 = vpop.f32.mrb[0].mxu0
    %v1220 = vpop.f32.mrb[0].mxu0
    %v1221 = vadd.f32 0.0, %v1220
    %v1222 = vpop.f32.mrb[0].mxu0
    %1223 = vmatprep.mubr.bf16.mxu0 0
    %1224 = vmatmul.mubr.bf16.gmra.mrb[0].mxu0 %v447
    %v1225 = vpop.f32.mrb[0].mxu0
    %v1226 = vadd.f32 0.0, %v1225
    %v1227 = vpop.f32.mrb[0].mxu0
    %v1228 = vpop.f32.mrb[0].mxu0
    %v1229 = vadd.f32 0.0, %v1228
    %v1230 = vpop.f32.mrb[0].mxu0
    %1231 = vmatprep.mubr.bf16.mxu0 0
    %1232 = vmatmul.mubr.bf16.gmra.mrb[0].mxu0 %v450
    %v1233 = vpop.f32.mrb[0].mxu0
    %v1234 = vadd.f32 0.0, %v1233
    %v1235 = vpop.f32.mrb[0].mxu0
    %v1236 = vpop.f32.mrb[0].mxu0
    %v1237 = vadd.f32 0.0, %v1236
    %v1238 = vpop.f32.mrb[0].mxu0
    %1239 = vmatprep.mubr.bf16.mxu0 0
    %1240 = vmatmul.mubr.bf16.gmra.mrb[0].mxu0 %v453
    %v1241 = vpop.f32.mrb[0].mxu0
    %v1242 = vadd.f32 0.0, %v1241
    %v1243 = vpop.f32.mrb[0].mxu0
    %v1244 = vpop.f32.mrb[0].mxu0
    %v1245 = vadd.f32 0.0, %v1244
    %v1246 = vpop.f32.mrb[0].mxu0
    %1247 = vmatprep.mubr.bf16.mxu0 0
    %1248 = vmatmul.mubr.bf16.gmra.mrb[0].mxu0 %v456
    %v1249 = vpop.f32.mrb[0].mxu0
    %v1250 = vadd.f32 0.0, %v1249
    %v1251 = vpop.f32.mrb[0].mxu0
    %v1252 = vpop.f32.mrb[0].mxu0
    %v1253 = vadd.f32 0.0, %v1252
    %v1254 = vpop.f32.mrb[0].mxu0
    %1255 = vmatprep.mubr.bf16.mxu0 0
    %1256 = vmatmul.mubr.bf16.gmra.mrb[0].mxu0 %v459
    %v1257 = vpop.f32.mrb[0].mxu0
    %v1258 = vadd.f32 0.0, %v1257
    %v1259 = vpop.f32.mrb[0].mxu0
    %v1260 = vpop.f32.mrb[0].mxu0
    %v1261 = vadd.f32 0.0, %v1260
    %v1262 = vpop.f32.mrb[0].mxu0
    %1263 = vmatprep.mubr.bf16.mxu0 0
    %1264 = vmatmul.mubr.bf16.gmra.mrb[0].mxu0 %v462
    %v1265 = vpop.f32.mrb[0].mxu0
    %v1266 = vadd.f32 0.0, %v1265
    %v1267 = vpop.f32.mrb[0].mxu0
    %v1268 = vpop.f32.mrb[0].mxu0
    %v1269 = vadd.f32 0.0, %v1268
    %v1270 = vpop.f32.mrb[0].mxu0
    %1271 = vmatprep.mubr.bf16.mxu0 0
    %1272 = vmatmul.mubr.bf16.gmra.mrb[0].mxu0 %v465
    %v1273 = vpop.f32.mrb[0].mxu0
    %v1274 = vadd.f32 0.0, %v1273
    %v1275 = vpop.f32.mrb[0].mxu0
    %v1276 = vpop.f32.mrb[0].mxu0
    %v1277 = vadd.f32 0.0, %v1276
    %v1278 = vpop.f32.mrb[0].mxu0
    %1279 = vmatprep.mubr.bf16.mxu0 0
    %1280 = vmatmul.mubr.bf16.gmra.mrb[0].mxu0 %v468
    %v1281 = vpop.f32.mrb[0].mxu0
    %v1282 = vadd.f32 0.0, %v1281
    %v1283 = vpop.f32.mrb[0].mxu0
    %v1284 = vpop.f32.mrb[0].mxu0
    %v1285 = vadd.f32 0.0, %v1284
    %v1286 = vpop.f32.mrb[0].mxu0
    %1287 = vmatprep.mubr.bf16.mxu0 0
    %1288 = vmatmul.mubr.bf16.gmra.mrb[0].mxu0 %v471
    %v1289 = vpop.f32.mrb[0].mxu0
    %v1290 = vadd.f32 0.0, %v1289
    %v1291 = vpop.f32.mrb[0].mxu0
    %v1292 = vpop.f32.mrb[0].mxu0
    %v1293 = vadd.f32 0.0, %v1292
    %v1294 = vpop.f32.mrb[0].mxu0
    %1295 = vmatprep.mubr.bf16.mxu0 0
    %1296 = vmatmul.mubr.bf16.gmra.mrb[0].mxu0 %v474
    %v1297 = vpop.f32.mrb[0].mxu0
    %v1298 = vadd.f32 0.0, %v1297
    %v1299 = vpop.f32.mrb[0].mxu0
    %v1300 = vpop.f32.mrb[0].mxu0
    %v1301 = vadd.f32 0.0, %v1300
    %v1302 = vpop.f32.mrb[0].mxu0
    %1303 = vmatprep.mubr.bf16.mxu0 0
    %1304 = vmatmul.mubr.bf16.gmra.mrb[0].mxu0 %v477
    %v1305 = vpop.f32.mrb[0].mxu0
    %v1306 = vadd.f32 0.0, %v1305
    %v1307 = vpop.f32.mrb[0].mxu0
    %v1308 = vpop.f32.mrb[0].mxu0
    %v1309 = vadd.f32 0.0, %v1308
    %v1310 = vpop.f32.mrb[0].mxu0
    %1311 = vmatprep.mubr.bf16.mxu0 0
    %1312 = vmatmul.mubr.bf16.gmra.mrb[0].mxu0 %v480
    %v1313 = vpop.f32.mrb[0].mxu0
    %v1314 = vadd.f32 0.0, %v1313
    %v1315 = vpop.f32.mrb[0].mxu0
    %v1316 = vpop.f32.mrb[0].mxu0
    %v1317 = vadd.f32 0.0, %v1316
    %v1318 = vpop.f32.mrb[0].mxu0
    %1319 = vmatprep.mubr.bf16.mxu0 0
    %1320 = vmatmul.mubr.bf16.gmra.mrb[0].mxu0 %v483
    %v1321 = vpop.f32.mrb[0].mxu0
    %v1322 = vadd.f32 0.0, %v1321
    %v1323 = vpop.f32.mrb[0].mxu0
    %v1324 = vpop.f32.mrb[0].mxu0
    %v1325 = vadd.f32 0.0, %v1324
    %v1326 = vpop.f32.mrb[0].mxu0
    %1327 = vmatprep.mubr.bf16.mxu0 0
    %1328 = vmatmul.mubr.bf16.gmra.mrb[0].mxu0 %v486
    %v1329 = vpop.f32.mrb[0].mxu0
    %v1330 = vadd.f32 0.0, %v1329
    %v1331 = vpop.f32.mrb[0].mxu0
    %v1332 = vpop.f32.mrb[0].mxu0
    %v1333 = vadd.f32 0.0, %v1332
    %v1334 = vpop.f32.mrb[0].mxu0
    %1335 = vmatprep.mubr.bf16.mxu0 0
    %1336 = vmatmul.mubr.bf16.gmra.mrb[0].mxu0 %v489
    %v1337 = vpop.f32.mrb[0].mxu0
    %v1338 = vadd.f32 0.0, %v1337
    %v1339 = vpop.f32.mrb[0].mxu0
    %v1340 = vpop.f32.mrb[0].mxu0
    %v1341 = vadd.f32 0.0, %v1340
    %v1342 = vpop.f32.mrb[0].mxu0
    %1343 = vmatprep.mubr.bf16.mxu0 0
    %1344 = vmatmul.mubr.bf16.gmra.mrb[0].mxu0 %v492
    %v1345 = vpop.f32.mrb[0].mxu0
    %v1346 = vadd.f32 0.0, %v1345
    %v1347 = vpop.f32.mrb[0].mxu0
    %v1348 = vpop.f32.mrb[0].mxu0
    %v1349 = vadd.f32 0.0, %v1348
    %v1350 = vpop.f32.mrb[0].mxu0
    %1351 = vmatprep.mubr.bf16.mxu0 0
    %1352 = vmatmul.mubr.bf16.gmra.mrb[0].mxu0 %v495
    %v1353 = vpop.f32.mrb[0].mxu0
    %v1354 = vadd.f32 0.0, %v1353
    %v1355 = vpop.f32.mrb[0].mxu0
    %v1356 = vpop.f32.mrb[0].mxu0
    %v1357 = vadd.f32 0.0, %v1356
    %v1358 = vpop.f32.mrb[0].mxu0
    %1359 = vmatprep.mubr.bf16.mxu0 0
    %1360 = vmatmul.mubr.bf16.gmra.mrb[0].mxu0 %v498
    %v1361 = vpop.f32.mrb[0].mxu0
    %v1362 = vadd.f32 0.0, %v1361
    %v1363 = vpop.f32.mrb[0].mxu0
    %v1364 = vpop.f32.mrb[0].mxu0
    %v1365 = vadd.f32 0.0, %v1364
    %v1366 = vpop.f32.mrb[0].mxu0
    %1367 = vmatprep.mubr.bf16.mxu0 0
    %1368 = vmatmul.mubr.bf16.gmra.mrb[0].mxu0 %v501
    %v1369 = vpop.f32.mrb[0].mxu0
    %v1370 = vadd.f32 0.0, %v1369
    %v1371 = vpop.f32.mrb[0].mxu0
    %v1372 = vpop.f32.mrb[0].mxu0
    %v1373 = vadd.f32 0.0, %v1372
    %v1374 = vpop.f32.mrb[0].mxu0
    %1375 = vmatprep.mubr.bf16.mxu0 0
    %1376 = vmatmul.mubr.bf16.gmra.mrb[0].mxu0 %v504
    %v1377 = vpop.f32.mrb[0].mxu0
    %v1378 = vadd.f32 0.0, %v1377
    %v1379 = vpop.f32.mrb[0].mxu0
    %v1380 = vpop.f32.mrb[0].mxu0
    %v1381 = vadd.f32 0.0, %v1380
    %v1382 = vpop.f32.mrb[0].mxu0
    %1383 = vmatprep.mubr.bf16.mxu0 0
    %1384 = vmatmul.mubr.bf16.gmra.mrb[0].mxu0 %v507
    %v1385 = vpop.f32.mrb[0].mxu0
    %v1386 = vadd.f32 0.0, %v1385
    %v1387 = vpop.f32.mrb[0].mxu0
    %v1388 = vpop.f32.mrb[0].mxu0
    %v1389 = vadd.f32 0.0, %v1388
    %v1390 = vpop.f32.mrb[0].mxu0
    %1391 = vmatprep.mubr.bf16.mxu0 0
    %1392 = vmatmul.mubr.bf16.gmra.mrb[0].mxu0 %v510
    %v1393 = vpop.f32.mrb[0].mxu0
    %v1394 = vadd.f32 0.0, %v1393
    %v1395 = vpop.f32.mrb[0].mxu0
    %v1396 = vpop.f32.mrb[0].mxu0
    %v1397 = vadd.f32 0.0, %v1396
    %v1398 = vpop.f32.mrb[0].mxu0
    %1399 = vmatprep.mubr.bf16.mxu0 0
    %1400 = vmatmul.mubr.bf16.gmra.mrb[0].mxu0 %v513
    %v1401 = vpop.f32.mrb[0].mxu0
    %v1402 = vadd.f32 0.0, %v1401
    %v1403 = vpop.f32.mrb[0].mxu0
    %v1404 = vpop.f32.mrb[0].mxu0
    %v1405 = vadd.f32 0.0, %v1404
    %v1406 = vpop.f32.mrb[0].mxu0
    %1407 = vmatprep.mubr.bf16.mxu0 0
    %1408 = vmatmul.mubr.bf16.gmra.mrb[0].mxu0 %v516
    %v1409 = vpop.f32.mrb[0].mxu0
    %v1410 = vadd.f32 0.0, %v1409
    %v1411 = vpop.f32.mrb[0].mxu0
    %v1412 = vpop.f32.mrb[0].mxu0
    %v1413 = vadd.f32 0.0, %v1412
    %v1414 = vpop.f32.mrb[0].mxu0
    %1415 = vmatprep.mubr.bf16.mxu0 0
    %1416 = vmatmul.mubr.bf16.gmra.mrb[0].mxu0 %v519
    %v1417 = vpop.f32.mrb[0].mxu0
    %v1418 = vadd.f32 0.0, %v1417
    %v1419 = vpop.f32.mrb[0].mxu0
    %v1420 = vpop.f32.mrb[0].mxu0
    %v1421 = vadd.f32 0.0, %v1420
    %v1422 = vpop.f32.mrb[0].mxu0
    %1423 = vmatprep.mubr.bf16.mxu0 0
    %1424 = vmatmul.mubr.bf16.gmra.mrb[0].mxu0 %v522
    %v1425 = vpop.f32.mrb[0].mxu0
    %v1426 = vadd.f32 0.0, %v1425
    %v1427 = vpop.f32.mrb[0].mxu0
    %v1428 = vpop.f32.mrb[0].mxu0
    %v1429 = vadd.f32 0.0, %v1428
    %v1430 = vpop.f32.mrb[0].mxu0
    %1431 = vmatprep.mubr.bf16.mxu0 0
    %1432 = vmatmul.mubr.bf16.gmra.mrb[0].mxu0 %v525
    %v1433 = vpop.f32.mrb[0].mxu0
    %v1434 = vadd.f32 0.0, %v1433
    %v1435 = vpop.f32.mrb[0].mxu0
    %v1436 = vpop.f32.mrb[0].mxu0
    %v1437 = vadd.f32 0.0, %v1436
    %v1438 = vpop.f32.mrb[0].mxu0
    %1439 = vmatprep.mubr.bf16.mxu0 0
    %1440 = vmatmul.mubr.bf16.gmra.mrb[0].mxu0 %v528
    %v1441 = vpop.f32.mrb[0].mxu0
    %v1442 = vadd.f32 0.0, %v1441
    %v1443 = vpop.f32.mrb[0].mxu0
    %v1444 = vpop.f32.mrb[0].mxu0
    %v1445 = vadd.f32 0.0, %v1444
    %v1446 = vpop.f32.mrb[0].mxu0
    %1447 = vmatprep.mubr.bf16.mxu0 0
    %1448 = vmatmul.mubr.bf16.gmra.mrb[0].mxu0 %v531
    %v1449 = vpop.f32.mrb[0].mxu0
    %v1450 = vadd.f32 0.0, %v1449
    %v1451 = vpop.f32.mrb[0].mxu0
    %v1452 = vpop.f32.mrb[0].mxu0
    %v1453 = vadd.f32 0.0, %v1452
    %v1454 = vpop.f32.mrb[0].mxu0
    %1455 = vmatprep.mubr.bf16.mxu0 0
    %1456 = vmatmul.mubr.bf16.gmra.mrb[0].mxu0 %v534
    %v1457 = vpop.f32.mrb[0].mxu0
    %v1458 = vadd.f32 0.0, %v1457
    %v1459 = vpop.f32.mrb[0].mxu0
    %v1460 = vpop.f32.mrb[0].mxu0
    %v1461 = vadd.f32 0.0, %v1460
    %v1462 = vpop.f32.mrb[0].mxu0
    %1463 = vmatprep.mubr.bf16.mxu0 0
    %1464 = vmatmul.mubr.bf16.gmra.mrb[0].mxu0 %v537
    %v1465 = vpop.f32.mrb[0].mxu0
    %v1466 = vadd.f32 0.0, %v1465
    %v1467 = vpop.f32.mrb[0].mxu0
    %v1468 = vpop.f32.mrb[0].mxu0
    %v1469 = vadd.f32 0.0, %v1468
    %v1470 = vpop.f32.mrb[0].mxu0
    %1471 = vmatprep.mubr.bf16.mxu0 0
    %1472 = vmatmul.mubr.bf16.gmra.mrb[0].mxu0 %v540
    %v1473 = vpop.f32.mrb[0].mxu0
    %v1474 = vadd.f32 0.0, %v1473
    %v1475 = vpop.f32.mrb[0].mxu0
    %v1476 = vpop.f32.mrb[0].mxu0
    %v1477 = vadd.f32 0.0, %v1476
    %v1478 = vpop.f32.mrb[0].mxu0
    %1479 = vmatprep.mubr.bf16.mxu0 0
    %1480 = vmatmul.mubr.bf16.gmra.mrb[0].mxu0 %v543
    %v1481 = vpop.f32.mrb[0].mxu0
    %v1482 = vadd.f32 0.0, %v1481
    %v1483 = vpop.f32.mrb[0].mxu0
    %v1484 = vpop.f32.mrb[0].mxu0
    %v1485 = vadd.f32 0.0, %v1484
    %v1486 = vpop.f32.mrb[0].mxu0
    %1487 = vmatprep.mubr.bf16.mxu0 0
    %1488 = vmatmul.mubr.bf16.gmra.mrb[0].mxu0 %v546
    %v1489 = vpop.f32.mrb[0].mxu0
    %v1490 = vadd.f32 0.0, %v1489
    %v1491 = vpop.f32.mrb[0].mxu0
    %v1492 = vpop.f32.mrb[0].mxu0
    %v1493 = vadd.f32 0.0, %v1492
    %v1494 = vpop.f32.mrb[0].mxu0
    %1495 = vmatprep.mubr.bf16.mxu0 0
    %1496 = vmatmul.mubr.bf16.gmra.mrb[0].mxu0 %v549
    %v1497 = vpop.f32.mrb[0].mxu0
    %v1498 = vadd.f32 0.0, %v1497
    %v1499 = vpop.f32.mrb[0].mxu0
    %v1500 = vpop.f32.mrb[0].mxu0
    %v1501 = vadd.f32 0.0, %v1500
    %v1502 = vpop.f32.mrb[0].mxu0
    %1503 = vmatprep.mubr.bf16.mxu0 0
    %1504 = vmatmul.mubr.bf16.gmra.mrb[0].mxu0 %v552
    %v1505 = vpop.f32.mrb[0].mxu0
    %v1506 = vadd.f32 0.0, %v1505
    %v1507 = vpop.f32.mrb[0].mxu0
    %v1508 = vpop.f32.mrb[0].mxu0
    %v1509 = vadd.f32 0.0, %v1508
    %v1510 = vpop.f32.mrb[0].mxu0
    %1511 = vmatprep.mubr.bf16.mxu0 0
    %1512 = vmatmul.mubr.bf16.gmra.mrb[0].mxu0 %v555
    %v1513 = vpop.f32.mrb[0].mxu0
    %v1514 = vadd.f32 0.0, %v1513
    %v1515 = vpop.f32.mrb[0].mxu0
    %v1516 = vpop.f32.mrb[0].mxu0
    %v1517 = vadd.f32 0.0, %v1516
    %v1518 = vpop.f32.mrb[0].mxu0
    %1519 = vdwg.mxu0
    %1520 = vst [vmem:[#allocation3] sm:$0xff] %v1138
    %1521 = vst [vmem:[#allocation3 + $0x8] sm:$0xff] %v1141
    %1522 = vst [vmem:[#allocation3 + $0x10] sm:$0xff] %v1146
    %1523 = vst [vmem:[#allocation3 + $0x18] sm:$0xff] %v1149
    %1524 = vst [vmem:[#allocation3 + $0x20] sm:$0xff] %v1154
    %1525 = vst [vmem:[#allocation3 + $0x28] sm:$0xff] %v1157
    %1526 = vst [vmem:[#allocation3 + $0x30] sm:$0xff] %v1162
    %1527 = vst [vmem:[#allocation3 + $0x38] sm:$0xff] %v1165
    %1528 = vst [vmem:[#allocation3 + $0x40] sm:$0xff] %v1170
    %1529 = vst [vmem:[#allocation3 + $0x48] sm:$0xff] %v1173
    %1530 = vst [vmem:[#allocation3 + $0x50] sm:$0xff] %v1178
    %1531 = vst [vmem:[#allocation3 + $0x58] sm:$0xff] %v1181
    %1532 = vst [vmem:[#allocation3 + $0x60] sm:$0xff] %v1186
    %1533 = vst [vmem:[#allocation3 + $0x68] sm:$0xff] %v1189
    %1534 = vst [vmem:[#allocation3 + $0x70] sm:$0xff] %v1194
    %1535 = vst [vmem:[#allocation3 + $0x78] sm:$0xff] %v1197
    %1536 = vst [vmem:[#allocation3 + $0x80] sm:$0xff] %v1202
    %1537 = vst [vmem:[#allocation3 + $0x88] sm:$0xff] %v1205
    %1538 = vst [vmem:[#allocation3 + $0x90] sm:$0xff] %v1210
    %1539 = vst [vmem:[#allocation3 + $0x98] sm:$0xff] %v1213
    %1540 = vst [vmem:[#allocation3 + $0xa0] sm:$0xff] %v1218
    %1541 = vst [vmem:[#allocation3 + $0xa8] sm:$0xff] %v1221
    %1542 = vst [vmem:[#allocation3 + $0xb0] sm:$0xff] %v1226
    %1543 = vst [vmem:[#allocation3 + $0xb8] sm:$0xff] %v1229
    %1544 = vst [vmem:[#allocation3 + $0xc0] sm:$0xff] %v1234
    %1545 = vst [vmem:[#allocation3 + $0xc8] sm:$0xff] %v1237
    %1546 = vst [vmem:[#allocation3 + $0xd0] sm:$0xff] %v1242
    %1547 = vst [vmem:[#allocation3 + $0xd8] sm:$0xff] %v1245
    %1548 = vst [vmem:[#allocation3 + $0xe0] sm:$0xff] %v1250
    %1549 = vst [vmem:[#allocation3 + $0xe8] sm:$0xff] %v1253
    %1550 = vst [vmem:[#allocation3 + $0xf0] sm:$0xff] %v1258
    %1551 = vst [vmem:[#allocation3 + $0xf8] sm:$0xff] %v1261
    %1552 = vst [vmem:[#allocation3 + $0x100] sm:$0xff] %v1266
    %1553 = vst [vmem:[#allocation3 + $0x108] sm:$0xff] %v1269
    %1554 = vst [vmem:[#allocation3 + $0x110] sm:$0xff] %v1274
    %1555 = vst [vmem:[#allocation3 + $0x118] sm:$0xff] %v1277
    %1556 = vst [vmem:[#allocation3 + $0x120] sm:$0xff] %v1282
    %1557 = vst [vmem:[#allocation3 + $0x128] sm:$0xff] %v1285
    %1558 = vst [vmem:[#allocation3 + $0x130] sm:$0xff] %v1290
    %1559 = vst [vmem:[#allocation3 + $0x138] sm:$0xff] %v1293
    %1560 = vst [vmem:[#allocation3 + $0x140] sm:$0xff] %v1298
    %1561 = vst [vmem:[#allocation3 + $0x148] sm:$0xff] %v1301
    %1562 = vst [vmem:[#allocation3 + $0x150] sm:$0xff] %v1306
    %1563 = vst [vmem:[#allocation3 + $0x158] sm:$0xff] %v1309
    %1564 = vst [vmem:[#allocation3 + $0x160] sm:$0xff] %v1314
    %1565 = vst [vmem:[#allocation3 + $0x168] sm:$0xff] %v1317
    %1566 = vst [vmem:[#allocation3 + $0x170] sm:$0xff] %v1322
    %1567 = vst [vmem:[#allocation3 + $0x178] sm:$0xff] %v1325
    %1568 = vst [vmem:[#allocation3 + $0x180] sm:$0xff] %v1330
    %1569 = vst [vmem:[#allocation3 + $0x188] sm:$0xff] %v1333
    %1570 = vst [vmem:[#allocation3 + $0x190] sm:$0xff] %v1338
    %1571 = vst [vmem:[#allocation3 + $0x198] sm:$0xff] %v1341
    %1572 = vst [vmem:[#allocation3 + $0x1a0] sm:$0xff] %v1346
    %1573 = vst [vmem:[#allocation3 + $0x1a8] sm:$0xff] %v1349
    %1574 = vst [vmem:[#allocation3 + $0x1b0] sm:$0xff] %v1354
    %1575 = vst [vmem:[#allocation3 + $0x1b8] sm:$0xff] %v1357
    %1576 = vst [vmem:[#allocation3 + $0x1c0] sm:$0xff] %v1362
    %1577 = vst [vmem:[#allocation3 + $0x1c8] sm:$0xff] %v1365
    %1578 = vst [vmem:[#allocation3 + $0x1d0] sm:$0xff] %v1370
    %1579 = vst [vmem:[#allocation3 + $0x1d8] sm:$0xff] %v1373
    %1580 = vst [vmem:[#allocation3 + $0x1e0] sm:$0xff] %v1378
    %1581 = vst [vmem:[#allocation3 + $0x1e8] sm:$0xff] %v1381
    %1582 = vst [vmem:[#allocation3 + $0x1f0] sm:$0xff] %v1386
    %1583 = vst [vmem:[#allocation3 + $0x1f8] sm:$0xff] %v1389
    %1584 = vst [vmem:[#allocation3 + $0x200] sm:$0xff] %v1394
    %1585 = vst [vmem:[#allocation3 + $0x208] sm:$0xff] %v1397
    %1586 = vst [vmem:[#allocation3 + $0x210] sm:$0xff] %v1402
    %1587 = vst [vmem:[#allocation3 + $0x218] sm:$0xff] %v1405
    %1588 = vst [vmem:[#allocation3 + $0x220] sm:$0xff] %v1410
    %1589 = vst [vmem:[#allocation3 + $0x228] sm:$0xff] %v1413
    %1590 = vst [vmem:[#allocation3 + $0x230] sm:$0xff] %v1418
    %1591 = vst [vmem:[#allocation3 + $0x238] sm:$0xff] %v1421
    %1592 = vst [vmem:[#allocation3 + $0x240] sm:$0xff] %v1426
    %1593 = vst [vmem:[#allocation3 + $0x248] sm:$0xff] %v1429
    %1594 = vst [vmem:[#allocation3 + $0x250] sm:$0xff] %v1434
    %1595 = vst [vmem:[#allocation3 + $0x258] sm:$0xff] %v1437
    %1596 = vst [vmem:[#allocation3 + $0x260] sm:$0xff] %v1442
    %1597 = vst [vmem:[#allocation3 + $0x268] sm:$0xff] %v1445
    %1598 = vst [vmem:[#allocation3 + $0x270] sm:$0xff] %v1450
    %1599 = vst [vmem:[#allocation3 + $0x278] sm:$0xff] %v1453
    %1600 = vst [vmem:[#allocation3 + $0x280] sm:$0xff] %v1458
    %1601 = vst [vmem:[#allocation3 + $0x288] sm:$0xff] %v1461
    %1602 = vst [vmem:[#allocation3 + $0x290] sm:$0xff] %v1466
    %1603 = vst [vmem:[#allocation3 + $0x298] sm:$0xff] %v1469
    %1604 = vst [vmem:[#allocation3 + $0x2a0] sm:$0xff] %v1474
    %1605 = vst [vmem:[#allocation3 + $0x2a8] sm:$0xff] %v1477
    %1606 = vst [vmem:[#allocation3 + $0x2b0] sm:$0xff] %v1482
    %1607 = vst [vmem:[#allocation3 + $0x2b8] sm:$0xff] %v1485
    %1608 = vst [vmem:[#allocation3 + $0x2c0] sm:$0xff] %v1490
    %1609 = vst [vmem:[#allocation3 + $0x2c8] sm:$0xff] %v1493
    %1610 = vst [vmem:[#allocation3 + $0x2d0] sm:$0xff] %v1498
    %1611 = vst [vmem:[#allocation3 + $0x2d8] sm:$0xff] %v1501
    %1612 = vst [vmem:[#allocation3 + $0x2e0] sm:$0xff] %v1506
    %1613 = vst [vmem:[#allocation3 + $0x2e8] sm:$0xff] %v1509
    %1614 = vst [vmem:[#allocation3 + $0x2f0] sm:$0xff] %v1514
    %1615 = vst [vmem:[#allocation3 + $0x2f8] sm:$0xff] %v1517
    %s1616 = scalar_lea.vmem [#allocation8], 64
    %v1617 = vld [vmem:[%s1616] sm:$0xf]
    %v1618 = vld [vmem:[%s1616 + $0x4] sm:$0xf]
    %v1619 = vld [vmem:[%s1616 + $0x8] sm:$0xf]
    %v1620 = vld [vmem:[%s1616 + $0xc] sm:$0xf]
    %v1621 = vld [vmem:[%s1616 + $0x10] sm:$0xf]
    %v1622 = vld [vmem:[%s1616 + $0x14] sm:$0xf]
    %v1623 = vld [vmem:[%s1616 + $0x18] sm:$0xf]
    %v1624 = vld [vmem:[%s1616 + $0x1c] sm:$0xf]
    %v1633 = vunpack.c.l.b16 %v1617
    %v1634 = vunpack.c.l.b16 %v1618
    %v1635 = vunpack.c.l.b16 %v1619
    %v1636 = vunpack.c.l.b16 %v1620
    %v1637 = vunpack.c.l.b16 %v1621
    %v1638 = vunpack.c.l.b16 %v1622
    %v1639 = vunpack.c.l.b16 %v1623
    %v1640 = vunpack.c.l.b16 %v1624
    %v1641 = vpack.c.b16 %v1634, %v1633
    %v1642 = vpack.c.b16 %v1636, %v1635
    %v1643 = vpack.c.b16 %v1638, %v1637
    %v1644 = vpack.c.b16 %v1640, %v1639
    %1649 = vmatprep.subr.bf16.mxu0 0
    %1650 = vmatpush1.bf16.msra.mxu0 %v1641
    %1651 = vmatprep.subr.bf16.mxu0 0
    %1652 = vmatpush1.bf16.msra.mxu0 %v1642
    %1653 = vmatprep.subr.bf16.mxu0 0
    %1654 = vmatpush1.bf16.msra.mxu0 %v1643
    %1655 = vmatprep.subr.bf16.mxu0 0
    %1656 = vmatpush1.bf16.msra.mxu0 %v1644
    %1657 = vmatprep.subr.bf16.mxu0 0
    %1658 = vmatpush1.bf16.msra.mxu0 0
    %1659 = vmatprep.subr.bf16.mxu0 0
    %1660 = vmatpush1.bf16.msra.mxu0 0
    %1661 = vmatprep.subr.bf16.mxu0 0
    %1662 = vmatpush1.bf16.msra.mxu0 0
    %1663 = vmatprep.subr.bf16.mxu0 0
    %1664 = vmatpush1.bf16.msra.mxu0 0
    %1665 = vmatprep.subr.bf16.mxu0 0
    %1666 = vmatpush1.bf16.msra.mxu0 0
    %1667 = vmatprep.subr.bf16.mxu0 0
    %1668 = vmatpush1.bf16.msra.mxu0 0
    %1669 = vmatprep.subr.bf16.mxu0 0
    %1670 = vmatpush1.bf16.msra.mxu0 0
    %1671 = vmatprep.subr.bf16.mxu0 0
    %1672 = vmatpush1.bf16.msra.mxu0 0
    %1673 = vmatprep.subr.bf16.mxu0 0
    %1674 = vmatpush1.bf16.msra.mxu0 0
    %1675 = vmatprep.subr.bf16.mxu0 0
    %1676 = vmatpush1.bf16.msra.mxu0 0
    %1677 = vmatprep.subr.bf16.mxu0 0
    %1678 = vmatpush1.bf16.msra.mxu0 0
    %1679 = vmatprep.subr.bf16.mxu0 0
    %1680 = vmatpush1.bf16.msra.mxu0 0
    %1681 = vmatprep.mubr.bf16.mxu0 0
    %1682 = vmatmul.mubr.bf16.gmra.mrb[0].mxu0 %v414
    %v1683 = vpop.f32.mrb[0].mxu0
    %v1684 = vadd.f32 0.0, %v1683
    %v1685 = vpop.f32.mrb[0].mxu0
    %v1686 = vpop.f32.mrb[0].mxu0
    %v1687 = vadd.f32 0.0, %v1686
    %v1688 = vpop.f32.mrb[0].mxu0
    %1689 = vmatprep.mubr.bf16.mxu0 0
    %1690 = vmatmul.mubr.bf16.gmra.mrb[0].mxu0 %v417
    %v1691 = vpop.f32.mrb[0].mxu0
    %v1692 = vadd.f32 0.0, %v1691
    %v1693 = vpop.f32.mrb[0].mxu0
    %v1694 = vpop.f32.mrb[0].mxu0
    %v1695 = vadd.f32 0.0, %v1694
    %v1696 = vpop.f32.mrb[0].mxu0
    %1697 = vmatprep.mubr.bf16.mxu0 0
    %1698 = vmatmul.mubr.bf16.gmra.mrb[0].mxu0 %v420
    %v1699 = vpop.f32.mrb[0].mxu0
    %v1700 = vadd.f32 0.0, %v1699
    %v1701 = vpop.f32.mrb[0].mxu0
    %v1702 = vpop.f32.mrb[0].mxu0
    %v1703 = vadd.f32 0.0, %v1702
    %v1704 = vpop.f32.mrb[0].mxu0
    %1705 = vmatprep.mubr.bf16.mxu0 0
    %1706 = vmatmul.mubr.bf16.gmra.mrb[0].mxu0 %v423
    %v1707 = vpop.f32.mrb[0].mxu0
    %v1708 = vadd.f32 0.0, %v1707
    %v1709 = vpop.f32.mrb[0].mxu0
    %v1710 = vpop.f32.mrb[0].mxu0
    %v1711 = vadd.f32 0.0, %v1710
    %v1712 = vpop.f32.mrb[0].mxu0
    %1713 = vmatprep.mubr.bf16.mxu0 0
    %1714 = vmatmul.mubr.bf16.gmra.mrb[0].mxu0 %v426
    %v1715 = vpop.f32.mrb[0].mxu0
    %v1716 = vadd.f32 0.0, %v1715
    %v1717 = vpop.f32.mrb[0].mxu0
    %v1718 = vpop.f32.mrb[0].mxu0
    %v1719 = vadd.f32 0.0, %v1718
    %v1720 = vpop.f32.mrb[0].mxu0
    %1721 = vmatprep.mubr.bf16.mxu0 0
    %1722 = vmatmul.mubr.bf16.gmra.mrb[0].mxu0 %v429
    %v1723 = vpop.f32.mrb[0].mxu0
    %v1724 = vadd.f32 0.0, %v1723
    %v1725 = vpop.f32.mrb[0].mxu0
    %v1726 = vpop.f32.mrb[0].mxu0
    %v1727 = vadd.f32 0.0, %v1726
    %v1728 = vpop.f32.mrb[0].mxu0
    %1729 = vmatprep.mubr.bf16.mxu0 0
    %1730 = vmatmul.mubr.bf16.gmra.mrb[0].mxu0 %v432
    %v1731 = vpop.f32.mrb[0].mxu0
    %v1732 = vadd.f32 0.0, %v1731
    %v1733 = vpop.f32.mrb[0].mxu0
    %v1734 = vpop.f32.mrb[0].mxu0
    %v1735 = vadd.f32 0.0, %v1734
    %v1736 = vpop.f32.mrb[0].mxu0
    %1737 = vmatprep.mubr.bf16.mxu0 0
    %1738 = vmatmul.mubr.bf16.gmra.mrb[0].mxu0 %v435
    %v1739 = vpop.f32.mrb[0].mxu0
    %v1740 = vadd.f32 0.0, %v1739
    %v1741 = vpop.f32.mrb[0].mxu0
    %v1742 = vpop.f32.mrb[0].mxu0
    %v1743 = vadd.f32 0.0, %v1742
    %v1744 = vpop.f32.mrb[0].mxu0
    %1745 = vmatprep.mubr.bf16.mxu0 0
    %1746 = vmatmul.mubr.bf16.gmra.mrb[0].mxu0 %v438
    %v1747 = vpop.f32.mrb[0].mxu0
    %v1748 = vadd.f32 0.0, %v1747
    %v1749 = vpop.f32.mrb[0].mxu0
    %v1750 = vpop.f32.mrb[0].mxu0
    %v1751 = vadd.f32 0.0, %v1750
    %v1752 = vpop.f32.mrb[0].mxu0
    %1753 = vmatprep.mubr.bf16.mxu0 0
    %1754 = vmatmul.mubr.bf16.gmra.mrb[0].mxu0 %v441
    %v1755 = vpop.f32.mrb[0].mxu0
    %v1756 = vadd.f32 0.0, %v1755
    %v1757 = vpop.f32.mrb[0].mxu0
    %v1758 = vpop.f32.mrb[0].mxu0
    %v1759 = vadd.f32 0.0, %v1758
    %v1760 = vpop.f32.mrb[0].mxu0
    %1761 = vmatprep.mubr.bf16.mxu0 0
    %1762 = vmatmul.mubr.bf16.gmra.mrb[0].mxu0 %v444
    %v1763 = vpop.f32.mrb[0].mxu0
    %v1764 = vadd.f32 0.0, %v1763
    %v1765 = vpop.f32.mrb[0].mxu0
    %v1766 = vpop.f32.mrb[0].mxu0
    %v1767 = vadd.f32 0.0, %v1766
    %v1768 = vpop.f32.mrb[0].mxu0
    %1769 = vmatprep.mubr.bf16.mxu0 0
    %1770 = vmatmul.mubr.bf16.gmra.mrb[0].mxu0 %v447
    %v1771 = vpop.f32.mrb[0].mxu0
    %v1772 = vadd.f32 0.0, %v1771
    %v1773 = vpop.f32.mrb[0].mxu0
    %v1774 = vpop.f32.mrb[0].mxu0
    %v1775 = vadd.f32 0.0, %v1774
    %v1776 = vpop.f32.mrb[0].mxu0
    %1777 = vmatprep.mubr.bf16.mxu0 0
    %1778 = vmatmul.mubr.bf16.gmra.mrb[0].mxu0 %v450
    %v1779 = vpop.f32.mrb[0].mxu0
    %v1780 = vadd.f32 0.0, %v1779
    %v1781 = vpop.f32.mrb[0].mxu0
    %v1782 = vpop.f32.mrb[0].mxu0
    %v1783 = vadd.f32 0.0, %v1782
    %v1784 = vpop.f32.mrb[0].mxu0
    %1785 = vmatprep.mubr.bf16.mxu0 0
    %1786 = vmatmul.mubr.bf16.gmra.mrb[0].mxu0 %v453
    %v1787 = vpop.f32.mrb[0].mxu0
    %v1788 = vadd.f32 0.0, %v1787
    %v1789 = vpop.f32.mrb[0].mxu0
    %v1790 = vpop.f32.mrb[0].mxu0
    %v1791 = vadd.f32 0.0, %v1790
    %v1792 = vpop.f32.mrb[0].mxu0
    %1793 = vmatprep.mubr.bf16.mxu0 0
    %1794 = vmatmul.mubr.bf16.gmra.mrb[0].mxu0 %v456
    %v1795 = vpop.f32.mrb[0].mxu0
    %v1796 = vadd.f32 0.0, %v1795
    %v1797 = vpop.f32.mrb[0].mxu0
    %v1798 = vpop.f32.mrb[0].mxu0
    %v1799 = vadd.f32 0.0, %v1798
    %v1800 = vpop.f32.mrb[0].mxu0
    %1801 = vmatprep.mubr.bf16.mxu0 0
    %1802 = vmatmul.mubr.bf16.gmra.mrb[0].mxu0 %v459
    %v1803 = vpop.f32.mrb[0].mxu0
    %v1804 = vadd.f32 0.0, %v1803
    %v1805 = vpop.f32.mrb[0].mxu0
    %v1806 = vpop.f32.mrb[0].mxu0
    %v1807 = vadd.f32 0.0, %v1806
    %v1808 = vpop.f32.mrb[0].mxu0
    %1809 = vmatprep.mubr.bf16.mxu0 0
    %1810 = vmatmul.mubr.bf16.gmra.mrb[0].mxu0 %v462
    %v1811 = vpop.f32.mrb[0].mxu0
    %v1812 = vadd.f32 0.0, %v1811
    %v1813 = vpop.f32.mrb[0].mxu0
    %v1814 = vpop.f32.mrb[0].mxu0
    %v1815 = vadd.f32 0.0, %v1814
    %v1816 = vpop.f32.mrb[0].mxu0
    %1817 = vmatprep.mubr.bf16.mxu0 0
    %1818 = vmatmul.mubr.bf16.gmra.mrb[0].mxu0 %v465
    %v1819 = vpop.f32.mrb[0].mxu0
    %v1820 = vadd.f32 0.0, %v1819
    %v1821 = vpop.f32.mrb[0].mxu0
    %v1822 = vpop.f32.mrb[0].mxu0
    %v1823 = vadd.f32 0.0, %v1822
    %v1824 = vpop.f32.mrb[0].mxu0
    %1825 = vmatprep.mubr.bf16.mxu0 0
    %1826 = vmatmul.mubr.bf16.gmra.mrb[0].mxu0 %v468
    %v1827 = vpop.f32.mrb[0].mxu0
    %v1828 = vadd.f32 0.0, %v1827
    %v1829 = vpop.f32.mrb[0].mxu0
    %v1830 = vpop.f32.mrb[0].mxu0
    %v1831 = vadd.f32 0.0, %v1830
    %v1832 = vpop.f32.mrb[0].mxu0
    %1833 = vmatprep.mubr.bf16.mxu0 0
    %1834 = vmatmul.mubr.bf16.gmra.mrb[0].mxu0 %v471
    %v1835 = vpop.f32.mrb[0].mxu0
    %v1836 = vadd.f32 0.0, %v1835
    %v1837 = vpop.f32.mrb[0].mxu0
    %v1838 = vpop.f32.mrb[0].mxu0
    %v1839 = vadd.f32 0.0, %v1838
    %v1840 = vpop.f32.mrb[0].mxu0
    %1841 = vmatprep.mubr.bf16.mxu0 0
    %1842 = vmatmul.mubr.bf16.gmra.mrb[0].mxu0 %v474
    %v1843 = vpop.f32.mrb[0].mxu0
    %v1844 = vadd.f32 0.0, %v1843
    %v1845 = vpop.f32.mrb[0].mxu0
    %v1846 = vpop.f32.mrb[0].mxu0
    %v1847 = vadd.f32 0.0, %v1846
    %v1848 = vpop.f32.mrb[0].mxu0
    %1849 = vmatprep.mubr.bf16.mxu0 0
    %1850 = vmatmul.mubr.bf16.gmra.mrb[0].mxu0 %v477
    %v1851 = vpop.f32.mrb[0].mxu0
    %v1852 = vadd.f32 0.0, %v1851
    %v1853 = vpop.f32.mrb[0].mxu0
    %v1854 = vpop.f32.mrb[0].mxu0
    %v1855 = vadd.f32 0.0, %v1854
    %v1856 = vpop.f32.mrb[0].mxu0
    %1857 = vmatprep.mubr.bf16.mxu0 0
    %1858 = vmatmul.mubr.bf16.gmra.mrb[0].mxu0 %v480
    %v1859 = vpop.f32.mrb[0].mxu0
    %v1860 = vadd.f32 0.0, %v1859
    %v1861 = vpop.f32.mrb[0].mxu0
    %v1862 = vpop.f32.mrb[0].mxu0
    %v1863 = vadd.f32 0.0, %v1862
    %v1864 = vpop.f32.mrb[0].mxu0
    %1865 = vmatprep.mubr.bf16.mxu0 0
    %1866 = vmatmul.mubr.bf16.gmra.mrb[0].mxu0 %v483
    %v1867 = vpop.f32.mrb[0].mxu0
    %v1868 = vadd.f32 0.0, %v1867
    %v1869 = vpop.f32.mrb[0].mxu0
    %v1870 = vpop.f32.mrb[0].mxu0
    %v1871 = vadd.f32 0.0, %v1870
    %v1872 = vpop.f32.mrb[0].mxu0
    %1873 = vmatprep.mubr.bf16.mxu0 0
    %1874 = vmatmul.mubr.bf16.gmra.mrb[0].mxu0 %v486
    %v1875 = vpop.f32.mrb[0].mxu0
    %v1876 = vadd.f32 0.0, %v1875
    %v1877 = vpop.f32.mrb[0].mxu0
    %v1878 = vpop.f32.mrb[0].mxu0
    %v1879 = vadd.f32 0.0, %v1878
    %v1880 = vpop.f32.mrb[0].mxu0
    %1881 = vmatprep.mubr.bf16.mxu0 0
    %1882 = vmatmul.mubr.bf16.gmra.mrb[0].mxu0 %v489
    %v1883 = vpop.f32.mrb[0].mxu0
    %v1884 = vadd.f32 0.0, %v1883
    %v1885 = vpop.f32.mrb[0].mxu0
    %v1886 = vpop.f32.mrb[0].mxu0
    %v1887 = vadd.f32 0.0, %v1886
    %v1888 = vpop.f32.mrb[0].mxu0
    %1889 = vmatprep.mubr.bf16.mxu0 0
    %1890 = vmatmul.mubr.bf16.gmra.mrb[0].mxu0 %v492
    %v1891 = vpop.f32.mrb[0].mxu0
    %v1892 = vadd.f32 0.0, %v1891
    %v1893 = vpop.f32.mrb[0].mxu0
    %v1894 = vpop.f32.mrb[0].mxu0
    %v1895 = vadd.f32 0.0, %v1894
    %v1896 = vpop.f32.mrb[0].mxu0
    %1897 = vmatprep.mubr.bf16.mxu0 0
    %1898 = vmatmul.mubr.bf16.gmra.mrb[0].mxu0 %v495
    %v1899 = vpop.f32.mrb[0].mxu0
    %v1900 = vadd.f32 0.0, %v1899
    %v1901 = vpop.f32.mrb[0].mxu0
    %v1902 = vpop.f32.mrb[0].mxu0
    %v1903 = vadd.f32 0.0, %v1902
    %v1904 = vpop.f32.mrb[0].mxu0
    %1905 = vmatprep.mubr.bf16.mxu0 0
    %1906 = vmatmul.mubr.bf16.gmra.mrb[0].mxu0 %v498
    %v1907 = vpop.f32.mrb[0].mxu0
    %v1908 = vadd.f32 0.0, %v1907
    %v1909 = vpop.f32.mrb[0].mxu0
    %v1910 = vpop.f32.mrb[0].mxu0
    %v1911 = vadd.f32 0.0, %v1910
    %v1912 = vpop.f32.mrb[0].mxu0
    %1913 = vmatprep.mubr.bf16.mxu0 0
    %1914 = vmatmul.mubr.bf16.gmra.mrb[0].mxu0 %v501
    %v1915 = vpop.f32.mrb[0].mxu0
    %v1916 = vadd.f32 0.0, %v1915
    %v1917 = vpop.f32.mrb[0].mxu0
    %v1918 = vpop.f32.mrb[0].mxu0
    %v1919 = vadd.f32 0.0, %v1918
    %v1920 = vpop.f32.mrb[0].mxu0
    %1921 = vmatprep.mubr.bf16.mxu0 0
    %1922 = vmatmul.mubr.bf16.gmra.mrb[0].mxu0 %v504
    %v1923 = vpop.f32.mrb[0].mxu0
    %v1924 = vadd.f32 0.0, %v1923
    %v1925 = vpop.f32.mrb[0].mxu0
    %v1926 = vpop.f32.mrb[0].mxu0
    %v1927 = vadd.f32 0.0, %v1926
    %v1928 = vpop.f32.mrb[0].mxu0
    %1929 = vmatprep.mubr.bf16.mxu0 0
    %1930 = vmatmul.mubr.bf16.gmra.mrb[0].mxu0 %v507
    %v1931 = vpop.f32.mrb[0].mxu0
    %v1932 = vadd.f32 0.0, %v1931
    %v1933 = vpop.f32.mrb[0].mxu0
    %v1934 = vpop.f32.mrb[0].mxu0
    %v1935 = vadd.f32 0.0, %v1934
    %v1936 = vpop.f32.mrb[0].mxu0
    %1937 = vmatprep.mubr.bf16.mxu0 0
    %1938 = vmatmul.mubr.bf16.gmra.mrb[0].mxu0 %v510
    %v1939 = vpop.f32.mrb[0].mxu0
    %v1940 = vadd.f32 0.0, %v1939
    %v1941 = vpop.f32.mrb[0].mxu0
    %v1942 = vpop.f32.mrb[0].mxu0
    %v1943 = vadd.f32 0.0, %v1942
    %v1944 = vpop.f32.mrb[0].mxu0
    %1945 = vmatprep.mubr.bf16.mxu0 0
    %1946 = vmatmul.mubr.bf16.gmra.mrb[0].mxu0 %v513
    %v1947 = vpop.f32.mrb[0].mxu0
    %v1948 = vadd.f32 0.0, %v1947
    %v1949 = vpop.f32.mrb[0].mxu0
    %v1950 = vpop.f32.mrb[0].mxu0
    %v1951 = vadd.f32 0.0, %v1950
    %v1952 = vpop.f32.mrb[0].mxu0
    %1953 = vmatprep.mubr.bf16.mxu0 0
    %1954 = vmatmul.mubr.bf16.gmra.mrb[0].mxu0 %v516
    %v1955 = vpop.f32.mrb[0].mxu0
    %v1956 = vadd.f32 0.0, %v1955
    %v1957 = vpop.f32.mrb[0].mxu0
    %v1958 = vpop.f32.mrb[0].mxu0
    %v1959 = vadd.f32 0.0, %v1958
    %v1960 = vpop.f32.mrb[0].mxu0
    %1961 = vmatprep.mubr.bf16.mxu0 0
    %1962 = vmatmul.mubr.bf16.gmra.mrb[0].mxu0 %v519
    %v1963 = vpop.f32.mrb[0].mxu0
    %v1964 = vadd.f32 0.0, %v1963
    %v1965 = vpop.f32.mrb[0].mxu0
    %v1966 = vpop.f32.mrb[0].mxu0
    %v1967 = vadd.f32 0.0, %v1966
    %v1968 = vpop.f32.mrb[0].mxu0
    %1969 = vmatprep.mubr.bf16.mxu0 0
    %1970 = vmatmul.mubr.bf16.gmra.mrb[0].mxu0 %v522
    %v1971 = vpop.f32.mrb[0].mxu0
    %v1972 = vadd.f32 0.0, %v1971
    %v1973 = vpop.f32.mrb[0].mxu0
    %v1974 = vpop.f32.mrb[0].mxu0
    %v1975 = vadd.f32 0.0, %v1974
    %v1976 = vpop.f32.mrb[0].mxu0
    %1977 = vmatprep.mubr.bf16.mxu0 0
    %1978 = vmatmul.mubr.bf16.gmra.mrb[0].mxu0 %v525
    %v1979 = vpop.f32.mrb[0].mxu0
    %v1980 = vadd.f32 0.0, %v1979
    %v1981 = vpop.f32.mrb[0].mxu0
    %v1982 = vpop.f32.mrb[0].mxu0
    %v1983 = vadd.f32 0.0, %v1982
    %v1984 = vpop.f32.mrb[0].mxu0
    %1985 = vmatprep.mubr.bf16.mxu0 0
    %1986 = vmatmul.mubr.bf16.gmra.mrb[0].mxu0 %v528
    %v1987 = vpop.f32.mrb[0].mxu0
    %v1988 = vadd.f32 0.0, %v1987
    %v1989 = vpop.f32.mrb[0].mxu0
    %v1990 = vpop.f32.mrb[0].mxu0
    %v1991 = vadd.f32 0.0, %v1990
    %v1992 = vpop.f32.mrb[0].mxu0
    %1993 = vmatprep.mubr.bf16.mxu0 0
    %1994 = vmatmul.mubr.bf16.gmra.mrb[0].mxu0 %v531
    %v1995 = vpop.f32.mrb[0].mxu0
    %v1996 = vadd.f32 0.0, %v1995
    %v1997 = vpop.f32.mrb[0].mxu0
    %v1998 = vpop.f32.mrb[0].mxu0
    %v1999 = vadd.f32 0.0, %v1998
    %v2000 = vpop.f32.mrb[0].mxu0
    %2001 = vmatprep.mubr.bf16.mxu0 0
    %2002 = vmatmul.mubr.bf16.gmra.mrb[0].mxu0 %v534
    %v2003 = vpop.f32.mrb[0].mxu0
    %v2004 = vadd.f32 0.0, %v2003
    %v2005 = vpop.f32.mrb[0].mxu0
    %v2006 = vpop.f32.mrb[0].mxu0
    %v2007 = vadd.f32 0.0, %v2006
    %v2008 = vpop.f32.mrb[0].mxu0
    %2009 = vmatprep.mubr.bf16.mxu0 0
    %2010 = vmatmul.mubr.bf16.gmra.mrb[0].mxu0 %v537
    %v2011 = vpop.f32.mrb[0].mxu0
    %v2012 = vadd.f32 0.0, %v2011
    %v2013 = vpop.f32.mrb[0].mxu0
    %v2014 = vpop.f32.mrb[0].mxu0
    %v2015 = vadd.f32 0.0, %v2014
    %v2016 = vpop.f32.mrb[0].mxu0
    %2017 = vmatprep.mubr.bf16.mxu0 0
    %2018 = vmatmul.mubr.bf16.gmra.mrb[0].mxu0 %v540
    %v2019 = vpop.f32.mrb[0].mxu0
    %v2020 = vadd.f32 0.0, %v2019
    %v2021 = vpop.f32.mrb[0].mxu0
    %v2022 = vpop.f32.mrb[0].mxu0
    %v2023 = vadd.f32 0.0, %v2022
    %v2024 = vpop.f32.mrb[0].mxu0
    %2025 = vmatprep.mubr.bf16.mxu0 0
    %2026 = vmatmul.mubr.bf16.gmra.mrb[0].mxu0 %v543
    %v2027 = vpop.f32.mrb[0].mxu0
    %v2028 = vadd.f32 0.0, %v2027
    %v2029 = vpop.f32.mrb[0].mxu0
    %v2030 = vpop.f32.mrb[0].mxu0
    %v2031 = vadd.f32 0.0, %v2030
    %v2032 = vpop.f32.mrb[0].mxu0
    %2033 = vmatprep.mubr.bf16.mxu0 0
    %2034 = vmatmul.mubr.bf16.gmra.mrb[0].mxu0 %v546
    %v2035 = vpop.f32.mrb[0].mxu0
    %v2036 = vadd.f32 0.0, %v2035
    %v2037 = vpop.f32.mrb[0].mxu0
    %v2038 = vpop.f32.mrb[0].mxu0
    %v2039 = vadd.f32 0.0, %v2038
    %v2040 = vpop.f32.mrb[0].mxu0
    %2041 = vmatprep.mubr.bf16.mxu0 0
    %2042 = vmatmul.mubr.bf16.gmra.mrb[0].mxu0 %v549
    %v2043 = vpop.f32.mrb[0].mxu0
    %v2044 = vadd.f32 0.0, %v2043
    %v2045 = vpop.f32.mrb[0].mxu0
    %v2046 = vpop.f32.mrb[0].mxu0
    %v2047 = vadd.f32 0.0, %v2046
    %v2048 = vpop.f32.mrb[0].mxu0
    %2049 = vmatprep.mubr.bf16.mxu0 0
    %2050 = vmatmul.mubr.bf16.gmra.mrb[0].mxu0 %v552
    %v2051 = vpop.f32.mrb[0].mxu0
    %v2052 = vadd.f32 0.0, %v2051
    %v2053 = vpop.f32.mrb[0].mxu0
    %v2054 = vpop.f32.mrb[0].mxu0
    %v2055 = vadd.f32 0.0, %v2054
    %v2056 = vpop.f32.mrb[0].mxu0
    %2057 = vmatprep.mubr.bf16.mxu0 0
    %2058 = vmatmul.mubr.bf16.gmra.mrb[0].mxu0 %v555
    %v2059 = vpop.f32.mrb[0].mxu0
    %v2060 = vadd.f32 0.0, %v2059
    %v2061 = vpop.f32.mrb[0].mxu0
    %v2062 = vpop.f32.mrb[0].mxu0
    %v2063 = vadd.f32 0.0, %v2062
    %v2064 = vpop.f32.mrb[0].mxu0
    %2065 = vdwg.mxu0
    %2066 = vst [vmem:[#allocation4] sm:$0xff] %v1684
    %2067 = vst [vmem:[#allocation4 + $0x8] sm:$0xff] %v1687
    %2068 = vst [vmem:[#allocation4 + $0x10] sm:$0xff] %v1692
    %2069 = vst [vmem:[#allocation4 + $0x18] sm:$0xff] %v1695
    %2070 = vst [vmem:[#allocation4 + $0x20] sm:$0xff] %v1700
    %2071 = vst [vmem:[#allocation4 + $0x28] sm:$0xff] %v1703
    %2072 = vst [vmem:[#allocation4 + $0x30] sm:$0xff] %v1708
    %2073 = vst [vmem:[#allocation4 + $0x38] sm:$0xff] %v1711
    %2074 = vst [vmem:[#allocation4 + $0x40] sm:$0xff] %v1716
    %2075 = vst [vmem:[#allocation4 + $0x48] sm:$0xff] %v1719
    %2076 = vst [vmem:[#allocation4 + $0x50] sm:$0xff] %v1724
    %2077 = vst [vmem:[#allocation4 + $0x58] sm:$0xff] %v1727
    %2078 = vst [vmem:[#allocation4 + $0x60] sm:$0xff] %v1732
    %2079 = vst [vmem:[#allocation4 + $0x68] sm:$0xff] %v1735
    %2080 = vst [vmem:[#allocation4 + $0x70] sm:$0xff] %v1740
    %2081 = vst [vmem:[#allocation4 + $0x78] sm:$0xff] %v1743
    %2082 = vst [vmem:[#allocation4 + $0x80] sm:$0xff] %v1748
    %2083 = vst [vmem:[#allocation4 + $0x88] sm:$0xff] %v1751
    %2084 = vst [vmem:[#allocation4 + $0x90] sm:$0xff] %v1756
    %2085 = vst [vmem:[#allocation4 + $0x98] sm:$0xff] %v1759
    %2086 = vst [vmem:[#allocation4 + $0xa0] sm:$0xff] %v1764
    %2087 = vst [vmem:[#allocation4 + $0xa8] sm:$0xff] %v1767
    %2088 = vst [vmem:[#allocation4 + $0xb0] sm:$0xff] %v1772
    %2089 = vst [vmem:[#allocation4 + $0xb8] sm:$0xff] %v1775
    %2090 = vst [vmem:[#allocation4 + $0xc0] sm:$0xff] %v1780
    %2091 = vst [vmem:[#allocation4 + $0xc8] sm:$0xff] %v1783
    %2092 = vst [vmem:[#allocation4 + $0xd0] sm:$0xff] %v1788
    %2093 = vst [vmem:[#allocation4 + $0xd8] sm:$0xff] %v1791
    %2094 = vst [vmem:[#allocation4 + $0xe0] sm:$0xff] %v1796
    %2095 = vst [vmem:[#allocation4 + $0xe8] sm:$0xff] %v1799
    %2096 = vst [vmem:[#allocation4 + $0xf0] sm:$0xff] %v1804
    %2097 = vst [vmem:[#allocation4 + $0xf8] sm:$0xff] %v1807
    %2098 = vst [vmem:[#allocation4 + $0x100] sm:$0xff] %v1812
    %2099 = vst [vmem:[#allocation4 + $0x108] sm:$0xff] %v1815
    %2100 = vst [vmem:[#allocation4 + $0x110] sm:$0xff] %v1820
    %2101 = vst [vmem:[#allocation4 + $0x118] sm:$0xff] %v1823
    %2102 = vst [vmem:[#allocation4 + $0x120] sm:$0xff] %v1828
    %2103 = vst [vmem:[#allocation4 + $0x128] sm:$0xff] %v1831
    %2104 = vst [vmem:[#allocation4 + $0x130] sm:$0xff] %v1836
    %2105 = vst [vmem:[#allocation4 + $0x138] sm:$0xff] %v1839
    %2106 = vst [vmem:[#allocation4 + $0x140] sm:$0xff] %v1844
    %2107 = vst [vmem:[#allocation4 + $0x148] sm:$0xff] %v1847
    %2108 = vst [vmem:[#allocation4 + $0x150] sm:$0xff] %v1852
    %2109 = vst [vmem:[#allocation4 + $0x158] sm:$0xff] %v1855
    %2110 = vst [vmem:[#allocation4 + $0x160] sm:$0xff] %v1860
    %2111 = vst [vmem:[#allocation4 + $0x168] sm:$0xff] %v1863
    %2112 = vst [vmem:[#allocation4 + $0x170] sm:$0xff] %v1868
    %2113 = vst [vmem:[#allocation4 + $0x178] sm:$0xff] %v1871
    %2114 = vst [vmem:[#allocation4 + $0x180] sm:$0xff] %v1876
    %2115 = vst [vmem:[#allocation4 + $0x188] sm:$0xff] %v1879
    %2116 = vst [vmem:[#allocation4 + $0x190] sm:$0xff] %v1884
    %2117 = vst [vmem:[#allocation4 + $0x198] sm:$0xff] %v1887
    %2118 = vst [vmem:[#allocation4 + $0x1a0] sm:$0xff] %v1892
    %2119 = vst [vmem:[#allocation4 + $0x1a8] sm:$0xff] %v1895
    %2120 = vst [vmem:[#allocation4 + $0x1b0] sm:$0xff] %v1900
    %2121 = vst [vmem:[#allocation4 + $0x1b8] sm:$0xff] %v1903
    %2122 = vst [vmem:[#allocation4 + $0x1c0] sm:$0xff] %v1908
    %2123 = vst [vmem:[#allocation4 + $0x1c8] sm:$0xff] %v1911
    %2124 = vst [vmem:[#allocation4 + $0x1d0] sm:$0xff] %v1916
    %2125 = vst [vmem:[#allocation4 + $0x1d8] sm:$0xff] %v1919
    %2126 = vst [vmem:[#allocation4 + $0x1e0] sm:$0xff] %v1924
    %2127 = vst [vmem:[#allocation4 + $0x1e8] sm:$0xff] %v1927
    %2128 = vst [vmem:[#allocation4 + $0x1f0] sm:$0xff] %v1932
    %2129 = vst [vmem:[#allocation4 + $0x1f8] sm:$0xff] %v1935
    %2130 = vst [vmem:[#allocation4 + $0x200] sm:$0xff] %v1940
    %2131 = vst [vmem:[#allocation4 + $0x208] sm:$0xff] %v1943
    %2132 = vst [vmem:[#allocation4 + $0x210] sm:$0xff] %v1948
    %2133 = vst [vmem:[#allocation4 + $0x218] sm:$0xff] %v1951
    %2134 = vst [vmem:[#allocation4 + $0x220] sm:$0xff] %v1956
    %2135 = vst [vmem:[#allocation4 + $0x228] sm:$0xff] %v1959
    %2136 = vst [vmem:[#allocation4 + $0x230] sm:$0xff] %v1964
    %2137 = vst [vmem:[#allocation4 + $0x238] sm:$0xff] %v1967
    %2138 = vst [vmem:[#allocation4 + $0x240] sm:$0xff] %v1972
    %2139 = vst [vmem:[#allocation4 + $0x248] sm:$0xff] %v1975
    %2140 = vst [vmem:[#allocation4 + $0x250] sm:$0xff] %v1980
    %2141 = vst [vmem:[#allocation4 + $0x258] sm:$0xff] %v1983
    %2142 = vst [vmem:[#allocation4 + $0x260] sm:$0xff] %v1988
    %2143 = vst [vmem:[#allocation4 + $0x268] sm:$0xff] %v1991
    %2144 = vst [vmem:[#allocation4 + $0x270] sm:$0xff] %v1996
    %2145 = vst [vmem:[#allocation4 + $0x278] sm:$0xff] %v1999
    %2146 = vst [vmem:[#allocation4 + $0x280] sm:$0xff] %v2004
    %2147 = vst [vmem:[#allocation4 + $0x288] sm:$0xff] %v2007
    %2148 = vst [vmem:[#allocation4 + $0x290] sm:$0xff] %v2012
    %2149 = vst [vmem:[#allocation4 + $0x298] sm:$0xff] %v2015
    %2150 = vst [vmem:[#allocation4 + $0x2a0] sm:$0xff] %v2020
    %2151 = vst [vmem:[#allocation4 + $0x2a8] sm:$0xff] %v2023
    %2152 = vst [vmem:[#allocation4 + $0x2b0] sm:$0xff] %v2028
    %2153 = vst [vmem:[#allocation4 + $0x2b8] sm:$0xff] %v2031
    %2154 = vst [vmem:[#allocation4 + $0x2c0] sm:$0xff] %v2036
    %2155 = vst [vmem:[#allocation4 + $0x2c8] sm:$0xff] %v2039
    %2156 = vst [vmem:[#allocation4 + $0x2d0] sm:$0xff] %v2044
    %2157 = vst [vmem:[#allocation4 + $0x2d8] sm:$0xff] %v2047
    %2158 = vst [vmem:[#allocation4 + $0x2e0] sm:$0xff] %v2052
    %2159 = vst [vmem:[#allocation4 + $0x2e8] sm:$0xff] %v2055
    %2160 = vst [vmem:[#allocation4 + $0x2f0] sm:$0xff] %v2060
    %2161 = vst [vmem:[#allocation4 + $0x2f8] sm:$0xff] %v2063
    %s2162 = scalar_lea.vmem [#allocation5], 12
    %v2163 = vld [vmem:[%s2162] sm:$0xf]
    %v2164 = vld [vmem:[%s2162 + $0x4] sm:$0xf]
    %v2165 = vld [vmem:[%s2162 + $0x8] sm:$0xf]
    %v2166 = vld [vmem:[%s2162 + $0xc] sm:$0xf]
    %v2167 = vld [vmem:[%s2162 + $0x10] sm:$0xf]
    %v2168 = vld [vmem:[%s2162 + $0x14] sm:$0xf]
    %v2169 = vld [vmem:[%s2162 + $0x18] sm:$0xf]
    %v2170 = vld [vmem:[%s2162 + $0x1c] sm:$0xf]
    %v2171 = vld [vmem:[%s2162 + $0x20] sm:$0xf]
    %v2172 = vld [vmem:[%s2162 + $0x24] sm:$0xf]
    %v2173 = vld [vmem:[%s2162 + $0x28] sm:$0xf]
    %v2174 = vld [vmem:[%s2162 + $0x2c] sm:$0xf]
    %v2175 = vld [vmem:[%s2162 + $0x30] sm:$0xf]
    %v2176 = vld [vmem:[%s2162 + $0x34] sm:$0xf]
    %v2177 = vld [vmem:[%s2162 + $0x38] sm:$0xf]
    %v2178 = vld [vmem:[%s2162 + $0x3c] sm:$0xf]
    %v2179 = vld [vmem:[%s2162 + $0x40] sm:$0xf]
    %v2180 = vld [vmem:[%s2162 + $0x44] sm:$0xf]
    %v2181 = vld [vmem:[%s2162 + $0x48] sm:$0xf]
    %v2182 = vld [vmem:[%s2162 + $0x4c] sm:$0xf]
    %v2183 = vld [vmem:[%s2162 + $0x50] sm:$0xf]
    %v2184 = vld [vmem:[%s2162 + $0x54] sm:$0xf]
    %v2185 = vld [vmem:[%s2162 + $0x58] sm:$0xf]
    %v2186 = vld [vmem:[%s2162 + $0x5c] sm:$0xf]
    %v2187 = vld [vmem:[%s2162 + $0x60] sm:$0xf]
    %v2188 = vld [vmem:[%s2162 + $0x64] sm:$0xf]
    %v2189 = vld [vmem:[%s2162 + $0x68] sm:$0xf]
    %v2190 = vld [vmem:[%s2162 + $0x6c] sm:$0xf]
    %v2191 = vld [vmem:[%s2162 + $0x70] sm:$0xf]
    %v2192 = vld [vmem:[%s2162 + $0x74] sm:$0xf]
    %v2193 = vld [vmem:[%s2162 + $0x78] sm:$0xf]
    %v2194 = vld [vmem:[%s2162 + $0x7c] sm:$0xf]
    %v2195 = vld [vmem:[%s2162 + $0x80] sm:$0xf]
    %v2196 = vld [vmem:[%s2162 + $0x84] sm:$0xf]
    %v2197 = vld [vmem:[%s2162 + $0x88] sm:$0xf]
    %v2198 = vld [vmem:[%s2162 + $0x8c] sm:$0xf]
    %v2199 = vld [vmem:[%s2162 + $0x90] sm:$0xf]
    %v2200 = vld [vmem:[%s2162 + $0x94] sm:$0xf]
    %v2201 = vld [vmem:[%s2162 + $0x98] sm:$0xf]
    %v2202 = vld [vmem:[%s2162 + $0x9c] sm:$0xf]
    %v2203 = vld [vmem:[%s2162 + $0xa0] sm:$0xf]
    %v2204 = vld [vmem:[%s2162 + $0xa4] sm:$0xf]
    %v2205 = vld [vmem:[%s2162 + $0xa8] sm:$0xf]
    %v2206 = vld [vmem:[%s2162 + $0xac] sm:$0xf]
    %v2207 = vld [vmem:[%s2162 + $0xb0] sm:$0xf]
    %v2208 = vld [vmem:[%s2162 + $0xb4] sm:$0xf]
    %v2209 = vld [vmem:[%s2162 + $0xb8] sm:$0xf]
    %v2210 = vld [vmem:[%s2162 + $0xbc] sm:$0xf]
    %v2211 = vld [vmem:[%s2162 + $0xd8] sm:$0xf]
    %v2212 = vld [vmem:[%s2162 + $0xdc] sm:$0xf]
    %v2213 = vld [vmem:[%s2162 + $0xe0] sm:$0xf]
    %v2214 = vld [vmem:[%s2162 + $0xe4] sm:$0xf]
    %v2215 = vld [vmem:[%s2162 + $0xe8] sm:$0xf]
    %v2216 = vld [vmem:[%s2162 + $0xec] sm:$0xf]
    %v2217 = vld [vmem:[%s2162 + $0xf0] sm:$0xf]
    %v2218 = vld [vmem:[%s2162 + $0xf4] sm:$0xf]
    %v2219 = vld [vmem:[%s2162 + $0xf8] sm:$0xf]
    %v2220 = vld [vmem:[%s2162 + $0xfc] sm:$0xf]
    %v2221 = vld [vmem:[%s2162 + $0x100] sm:$0xf]
    %v2222 = vld [vmem:[%s2162 + $0x104] sm:$0xf]
    %v2223 = vld [vmem:[%s2162 + $0x108] sm:$0xf]
    %v2224 = vld [vmem:[%s2162 + $0x10c] sm:$0xf]
    %v2225 = vld [vmem:[%s2162 + $0x110] sm:$0xf]
    %v2226 = vld [vmem:[%s2162 + $0x114] sm:$0xf]
    %v2227 = vld [vmem:[%s2162 + $0x118] sm:$0xf]
    %v2228 = vld [vmem:[%s2162 + $0x11c] sm:$0xf]
    %v2229 = vld [vmem:[%s2162 + $0x120] sm:$0xf]
    %v2230 = vld [vmem:[%s2162 + $0x124] sm:$0xf]
    %v2231 = vld [vmem:[%s2162 + $0x128] sm:$0xf]
    %v2232 = vld [vmem:[%s2162 + $0x12c] sm:$0xf]
    %v2233 = vld [vmem:[%s2162 + $0x130] sm:$0xf]
    %v2234 = vld [vmem:[%s2162 + $0x134] sm:$0xf]
    %v2235 = vld [vmem:[%s2162 + $0x138] sm:$0xf]
    %v2236 = vld [vmem:[%s2162 + $0x13c] sm:$0xf]
    %v2237 = vld [vmem:[%s2162 + $0x140] sm:$0xf]
    %v2238 = vld [vmem:[%s2162 + $0x144] sm:$0xf]
    %v2239 = vld [vmem:[%s2162 + $0x148] sm:$0xf]
    %v2240 = vld [vmem:[%s2162 + $0x14c] sm:$0xf]
    %v2241 = vld [vmem:[%s2162 + $0x150] sm:$0xf]
    %v2242 = vld [vmem:[%s2162 + $0x154] sm:$0xf]
    %v2243 = vld [vmem:[%s2162 + $0x158] sm:$0xf]
    %v2244 = vld [vmem:[%s2162 + $0x15c] sm:$0xf]
    %v2245 = vld [vmem:[%s2162 + $0x160] sm:$0xf]
    %v2246 = vld [vmem:[%s2162 + $0x164] sm:$0xf]
    %v2247 = vld [vmem:[%s2162 + $0x168] sm:$0xf]
    %v2248 = vld [vmem:[%s2162 + $0x16c] sm:$0xf]
    %v2249 = vld [vmem:[%s2162 + $0x170] sm:$0xf]
    %v2250 = vld [vmem:[%s2162 + $0x174] sm:$0xf]
    %v2251 = vld [vmem:[%s2162 + $0x178] sm:$0xf]
    %v2252 = vld [vmem:[%s2162 + $0x17c] sm:$0xf]
    %v2253 = vld [vmem:[%s2162 + $0x180] sm:$0xf]
    %v2254 = vld [vmem:[%s2162 + $0x184] sm:$0xf]
    %v2255 = vld [vmem:[%s2162 + $0x188] sm:$0xf]
    %v2256 = vld [vmem:[%s2162 + $0x18c] sm:$0xf]
    %v2257 = vld [vmem:[%s2162 + $0x190] sm:$0xf]
    %v2258 = vld [vmem:[%s2162 + $0x194] sm:$0xf]
    %s2259 = scalar_lea.vmem [#allocation8], 96
    %v2260 = vld [vmem:[%s2259] sm:$0xf]
    %v2261 = vld [vmem:[%s2259 + $0x4] sm:$0xf]
    %v2262 = vld [vmem:[%s2259 + $0x8] sm:$0xf]
    %v2263 = vld [vmem:[%s2259 + $0xc] sm:$0xf]
    %v2264 = vld [vmem:[%s2259 + $0x10] sm:$0xf]
    %v2265 = vld [vmem:[%s2259 + $0x14] sm:$0xf]
    %v2266 = vld [vmem:[%s2259 + $0x18] sm:$0xf]
    %v2267 = vld [vmem:[%s2259 + $0x1c] sm:$0xf]
    %v2364 = vunpack.c.l.b16 %v2163
    %v2365 = vunpack.c.l.b16 %v2164
    %v2366 = vunpack.c.l.b16 %v2165
    %v2367 = vunpack.c.l.b16 %v2166
    %v2368 = vunpack.c.l.b16 %v2167
    %v2369 = vunpack.c.l.b16 %v2168
    %v2370 = vunpack.c.l.b16 %v2169
    %v2371 = vunpack.c.l.b16 %v2170
    %v2372 = vunpack.c.l.b16 %v2171
    %v2373 = vunpack.c.l.b16 %v2172
    %v2374 = vunpack.c.l.b16 %v2173
    %v2375 = vunpack.c.l.b16 %v2174
    %v2376 = vunpack.c.l.b16 %v2175
    %v2377 = vunpack.c.l.b16 %v2176
    %v2378 = vunpack.c.l.b16 %v2177
    %v2379 = vunpack.c.l.b16 %v2178
    %v2380 = vunpack.c.l.b16 %v2179
    %v2381 = vunpack.c.l.b16 %v2180
    %v2382 = vunpack.c.l.b16 %v2181
    %v2383 = vunpack.c.l.b16 %v2182
    %v2384 = vunpack.c.l.b16 %v2183
    %v2385 = vunpack.c.l.b16 %v2184
    %v2386 = vunpack.c.l.b16 %v2185
    %v2387 = vunpack.c.l.b16 %v2186
    %v2388 = vunpack.c.l.b16 %v2187
    %v2389 = vunpack.c.l.b16 %v2188
    %v2390 = vunpack.c.l.b16 %v2189
    %v2391 = vunpack.c.l.b16 %v2190
    %v2392 = vunpack.c.l.b16 %v2191
    %v2393 = vunpack.c.l.b16 %v2192
    %v2394 = vunpack.c.l.b16 %v2193
    %v2395 = vunpack.c.l.b16 %v2194
    %v2396 = vunpack.c.l.b16 %v2195
    %v2397 = vunpack.c.l.b16 %v2196
    %v2398 = vunpack.c.l.b16 %v2197
    %v2399 = vunpack.c.l.b16 %v2198
    %v2400 = vunpack.c.l.b16 %v2199
    %v2401 = vunpack.c.l.b16 %v2200
    %v2402 = vunpack.c.l.b16 %v2201
    %v2403 = vunpack.c.l.b16 %v2202
    %v2404 = vunpack.c.l.b16 %v2203
    %v2405 = vunpack.c.l.b16 %v2204
    %v2406 = vunpack.c.l.b16 %v2205
    %v2407 = vunpack.c.l.b16 %v2206
    %v2408 = vunpack.c.l.b16 %v2207
    %v2409 = vunpack.c.l.b16 %v2208
    %v2410 = vunpack.c.l.b16 %v2209
    %v2411 = vunpack.c.l.b16 %v2210
    %v2412 = vunpack.c.l.b16 %v2211
    %v2413 = vunpack.c.l.b16 %v2212
    %v2414 = vunpack.c.l.b16 %v2213
    %v2415 = vunpack.c.l.b16 %v2214
    %v2416 = vunpack.c.l.b16 %v2215
    %v2417 = vunpack.c.l.b16 %v2216
    %v2418 = vunpack.c.l.b16 %v2217
    %v2419 = vunpack.c.l.b16 %v2218
    %v2420 = vunpack.c.l.b16 %v2219
    %v2421 = vunpack.c.l.b16 %v2220
    %v2422 = vunpack.c.l.b16 %v2221
    %v2423 = vunpack.c.l.b16 %v2222
    %v2424 = vunpack.c.l.b16 %v2223
    %v2425 = vunpack.c.l.b16 %v2224
    %v2426 = vunpack.c.l.b16 %v2225
    %v2427 = vunpack.c.l.b16 %v2226
    %v2428 = vunpack.c.l.b16 %v2227
    %v2429 = vunpack.c.l.b16 %v2228
    %v2430 = vunpack.c.l.b16 %v2229
    %v2431 = vunpack.c.l.b16 %v2230
    %v2432 = vunpack.c.l.b16 %v2231
    %v2433 = vunpack.c.l.b16 %v2232
    %v2434 = vunpack.c.l.b16 %v2233
    %v2435 = vunpack.c.l.b16 %v2234
    %v2436 = vunpack.c.l.b16 %v2235
    %v2437 = vunpack.c.l.b16 %v2236
    %v2438 = vunpack.c.l.b16 %v2237
    %v2439 = vunpack.c.l.b16 %v2238
    %v2440 = vunpack.c.l.b16 %v2239
    %v2441 = vunpack.c.l.b16 %v2240
    %v2442 = vunpack.c.l.b16 %v2241
    %v2443 = vunpack.c.l.b16 %v2242
    %v2444 = vunpack.c.l.b16 %v2243
    %v2445 = vunpack.c.l.b16 %v2244
    %v2446 = vunpack.c.l.b16 %v2245
    %v2447 = vunpack.c.l.b16 %v2246
    %v2448 = vunpack.c.l.b16 %v2247
    %v2449 = vunpack.c.l.b16 %v2248
    %v2450 = vunpack.c.l.b16 %v2249
    %v2451 = vunpack.c.l.b16 %v2250
    %v2452 = vunpack.c.l.b16 %v2251
    %v2453 = vunpack.c.l.b16 %v2252
    %v2454 = vunpack.c.l.b16 %v2253
    %v2455 = vunpack.c.l.b16 %v2254
    %v2456 = vunpack.c.l.b16 %v2255
    %v2457 = vunpack.c.l.b16 %v2256
    %v2458 = vunpack.c.l.b16 %v2257
    %v2459 = vunpack.c.l.b16 %v2258
    %v2460 = vpack.c.b16 %v2365, %v2364
    %v2461 = vpack.c.b16 %v2367, %v2366
    %v2462 = vpack.c.b16 %v2369, %v2368
    %v2463 = vpack.c.b16 %v2371, %v2370
    %v2464 = vpack.c.b16 %v2373, %v2372
    %v2465 = vpack.c.b16 %v2375, %v2374
    %v2466 = vpack.c.b16 %v2377, %v2376
    %v2467 = vpack.c.b16 %v2379, %v2378
    %v2468 = vpack.c.b16 %v2381, %v2380
    %v2469 = vpack.c.b16 %v2383, %v2382
    %v2470 = vpack.c.b16 %v2385, %v2384
    %v2471 = vpack.c.b16 %v2387, %v2386
    %v2472 = vpack.c.b16 %v2389, %v2388
    %v2473 = vpack.c.b16 %v2391, %v2390
    %v2474 = vpack.c.b16 %v2393, %v2392
    %v2475 = vpack.c.b16 %v2395, %v2394
    %v2476 = vpack.c.b16 %v2397, %v2396
    %v2477 = vpack.c.b16 %v2399, %v2398
    %v2478 = vpack.c.b16 %v2401, %v2400
    %v2479 = vpack.c.b16 %v2403, %v2402
    %v2480 = vpack.c.b16 %v2405, %v2404
    %v2481 = vpack.c.b16 %v2407, %v2406
    %v2482 = vpack.c.b16 %v2409, %v2408
    %v2483 = vpack.c.b16 %v2411, %v2410
    %v2484 = vpack.c.b16 %v2413, %v2412
    %v2485 = vpack.c.b16 %v2415, %v2414
    %v2486 = vpack.c.b16 %v2417, %v2416
    %v2487 = vpack.c.b16 %v2419, %v2418
    %v2488 = vpack.c.b16 %v2421, %v2420
    %v2489 = vpack.c.b16 %v2423, %v2422
    %v2490 = vpack.c.b16 %v2425, %v2424
    %v2491 = vpack.c.b16 %v2427, %v2426
    %v2492 = vpack.c.b16 %v2429, %v2428
    %v2493 = vpack.c.b16 %v2431, %v2430
    %v2494 = vpack.c.b16 %v2433, %v2432
    %v2495 = vpack.c.b16 %v2435, %v2434
    %v2496 = vpack.c.b16 %v2437, %v2436
    %v2497 = vpack.c.b16 %v2439, %v2438
    %v2498 = vpack.c.b16 %v2441, %v2440
    %v2499 = vpack.c.b16 %v2443, %v2442
    %v2500 = vpack.c.b16 %v2445, %v2444
    %v2501 = vpack.c.b16 %v2447, %v2446
    %v2502 = vpack.c.b16 %v2449, %v2448
    %v2503 = vpack.c.b16 %v2451, %v2450
    %v2504 = vpack.c.b16 %v2453, %v2452
    %v2505 = vpack.c.b16 %v2455, %v2454
    %v2506 = vpack.c.b16 %v2457, %v2456
    %v2507 = vpack.c.b16 %v2459, %v2458
    %v2516 = vunpack.c.l.b16 %v2260
    %v2517 = vunpack.c.l.b16 %v2261
    %v2518 = vunpack.c.l.b16 %v2262
    %v2519 = vunpack.c.l.b16 %v2263
    %v2520 = vunpack.c.l.b16 %v2264
    %v2521 = vunpack.c.l.b16 %v2265
    %v2522 = vunpack.c.l.b16 %v2266
    %v2523 = vunpack.c.l.b16 %v2267
    %v2524 = vpack.c.b16 %v2517, %v2516
    %v2525 = vpack.c.b16 %v2519, %v2518
    %v2526 = vpack.c.b16 %v2521, %v2520
    %v2527 = vpack.c.b16 %v2523, %v2522
    %v2533 = vsel %vm412, %v2460, 0
    %v2536 = vsel %vm412, %v2461, 0
    %v2539 = vsel %vm412, %v2462, 0
    %v2542 = vsel %vm412, %v2463, 0
    %v2545 = vsel %vm412, %v2464, 0
    %v2548 = vsel %vm412, %v2465, 0
    %v2551 = vsel %vm412, %v2466, 0
    %v2554 = vsel %vm412, %v2467, 0
    %v2557 = vsel %vm412, %v2468, 0
    %v2560 = vsel %vm412, %v2469, 0
    %v2563 = vsel %vm412, %v2470, 0
    %v2566 = vsel %vm412, %v2471, 0
    %v2569 = vsel %vm412, %v2472, 0
    %v2572 = vsel %vm412, %v2473, 0
    %v2575 = vsel %vm412, %v2474, 0
    %v2578 = vsel %vm412, %v2475, 0
    %v2581 = vsel %vm412, %v2476, 0
    %v2584 = vsel %vm412, %v2477, 0
    %v2587 = vsel %vm412, %v2478, 0
    %v2590 = vsel %vm412, %v2479, 0
    %v2593 = vsel %vm412, %v2480, 0
    %v2596 = vsel %vm412, %v2481, 0
    %v2599 = vsel %vm412, %v2482, 0
    %v2602 = vsel %vm412, %v2483, 0
    %v2605 = vsel %vm412, %v2484, 0
    %v2608 = vsel %vm412, %v2485, 0
    %v2611 = vsel %vm412, %v2486, 0
    %v2614 = vsel %vm412, %v2487, 0
    %v2617 = vsel %vm412, %v2488, 0
    %v2620 = vsel %vm412, %v2489, 0
    %v2623 = vsel %vm412, %v2490, 0
    %v2626 = vsel %vm412, %v2491, 0
    %v2629 = vsel %vm412, %v2492, 0
    %v2632 = vsel %vm412, %v2493, 0
    %v2635 = vsel %vm412, %v2494, 0
    %v2638 = vsel %vm412, %v2495, 0
    %v2641 = vsel %vm412, %v2496, 0
    %v2644 = vsel %vm412, %v2497, 0
    %v2647 = vsel %vm412, %v2498, 0
    %v2650 = vsel %vm412, %v2499, 0
    %v2653 = vsel %vm412, %v2500, 0
    %v2656 = vsel %vm412, %v2501, 0
    %v2659 = vsel %vm412, %v2502, 0
    %v2662 = vsel %vm412, %v2503, 0
    %v2665 = vsel %vm412, %v2504, 0
    %v2668 = vsel %vm412, %v2505, 0
    %v2671 = vsel %vm412, %v2506, 0
    %v2674 = vsel %vm412, %v2507, 0
    %2676 = vmatprep.subr.bf16.mxu0 0
    %2677 = vmatpush1.bf16.msra.mxu0 %v2524
    %2678 = vmatprep.subr.bf16.mxu0 0
    %2679 = vmatpush1.bf16.msra.mxu0 %v2525
    %2680 = vmatprep.subr.bf16.mxu0 0
    %2681 = vmatpush1.bf16.msra.mxu0 %v2526
    %2682 = vmatprep.subr.bf16.mxu0 0
    %2683 = vmatpush1.bf16.msra.mxu0 %v2527
    %2684 = vmatprep.subr.bf16.mxu0 0
    %2685 = vmatpush1.bf16.msra.mxu0 0
    %2686 = vmatprep.subr.bf16.mxu0 0
    %2687 = vmatpush1.bf16.msra.mxu0 0
    %2688 = vmatprep.subr.bf16.mxu0 0
    %2689 = vmatpush1.bf16.msra.mxu0 0
    %2690 = vmatprep.subr.bf16.mxu0 0
    %2691 = vmatpush1.bf16.msra.mxu0 0
    %2692 = vmatprep.subr.bf16.mxu0 0
    %2693 = vmatpush1.bf16.msra.mxu0 0
    %2694 = vmatprep.subr.bf16.mxu0 0
    %2695 = vmatpush1.bf16.msra.mxu0 0
    %2696 = vmatprep.subr.bf16.mxu0 0
    %2697 = vmatpush1.bf16.msra.mxu0 0
    %2698 = vmatprep.subr.bf16.mxu0 0
    %2699 = vmatpush1.bf16.msra.mxu0 0
    %2700 = vmatprep.subr.bf16.mxu0 0
    %2701 = vmatpush1.bf16.msra.mxu0 0
    %2702 = vmatprep.subr.bf16.mxu0 0
    %2703 = vmatpush1.bf16.msra.mxu0 0
    %2704 = vmatprep.subr.bf16.mxu0 0
    %2705 = vmatpush1.bf16.msra.mxu0 0
    %2706 = vmatprep.subr.bf16.mxu0 0
    %2707 = vmatpush1.bf16.msra.mxu0 0
    %2708 = vmatprep.mubr.bf16.mxu0 0
    %2709 = vmatmul.mubr.bf16.gmra.mrb[0].mxu0 %v2533
    %v2710 = vpop.f32.mrb[0].mxu0
    %v2711 = vadd.f32 0.0, %v2710
    %v2712 = vpop.f32.mrb[0].mxu0
    %v2713 = vpop.f32.mrb[0].mxu0
    %v2714 = vadd.f32 0.0, %v2713
    %v2715 = vpop.f32.mrb[0].mxu0
    %2716 = vmatprep.mubr.bf16.mxu0 0
    %2717 = vmatmul.mubr.bf16.gmra.mrb[0].mxu0 %v2536
    %v2718 = vpop.f32.mrb[0].mxu0
    %v2719 = vadd.f32 0.0, %v2718
    %v2720 = vpop.f32.mrb[0].mxu0
    %v2721 = vpop.f32.mrb[0].mxu0
    %v2722 = vadd.f32 0.0, %v2721
    %v2723 = vpop.f32.mrb[0].mxu0
    %2724 = vmatprep.mubr.bf16.mxu0 0
    %2725 = vmatmul.mubr.bf16.gmra.mrb[0].mxu0 %v2539
    %v2726 = vpop.f32.mrb[0].mxu0
    %v2727 = vadd.f32 0.0, %v2726
    %v2728 = vpop.f32.mrb[0].mxu0
    %v2729 = vpop.f32.mrb[0].mxu0
    %v2730 = vadd.f32 0.0, %v2729
    %v2731 = vpop.f32.mrb[0].mxu0
    %2732 = vmatprep.mubr.bf16.mxu0 0
    %2733 = vmatmul.mubr.bf16.gmra.mrb[0].mxu0 %v2542
    %v2734 = vpop.f32.mrb[0].mxu0
    %v2735 = vadd.f32 0.0, %v2734
    %v2736 = vpop.f32.mrb[0].mxu0
    %v2737 = vpop.f32.mrb[0].mxu0
    %v2738 = vadd.f32 0.0, %v2737
    %v2739 = vpop.f32.mrb[0].mxu0
    %2740 = vmatprep.mubr.bf16.mxu0 0
    %2741 = vmatmul.mubr.bf16.gmra.mrb[0].mxu0 %v2545
    %v2742 = vpop.f32.mrb[0].mxu0
    %v2743 = vadd.f32 0.0, %v2742
    %v2744 = vpop.f32.mrb[0].mxu0
    %v2745 = vpop.f32.mrb[0].mxu0
    %v2746 = vadd.f32 0.0, %v2745
    %v2747 = vpop.f32.mrb[0].mxu0
    %2748 = vmatprep.mubr.bf16.mxu0 0
    %2749 = vmatmul.mubr.bf16.gmra.mrb[0].mxu0 %v2548
    %v2750 = vpop.f32.mrb[0].mxu0
    %v2751 = vadd.f32 0.0, %v2750
    %v2752 = vpop.f32.mrb[0].mxu0
    %v2753 = vpop.f32.mrb[0].mxu0
    %v2754 = vadd.f32 0.0, %v2753
    %v2755 = vpop.f32.mrb[0].mxu0
    %2756 = vmatprep.mubr.bf16.mxu0 0
    %2757 = vmatmul.mubr.bf16.gmra.mrb[0].mxu0 %v2551
    %v2758 = vpop.f32.mrb[0].mxu0
    %v2759 = vadd.f32 0.0, %v2758
    %v2760 = vpop.f32.mrb[0].mxu0
    %v2761 = vpop.f32.mrb[0].mxu0
    %v2762 = vadd.f32 0.0, %v2761
    %v2763 = vpop.f32.mrb[0].mxu0
    %2764 = vmatprep.mubr.bf16.mxu0 0
    %2765 = vmatmul.mubr.bf16.gmra.mrb[0].mxu0 %v2554
    %v2766 = vpop.f32.mrb[0].mxu0
    %v2767 = vadd.f32 0.0, %v2766
    %v2768 = vpop.f32.mrb[0].mxu0
    %v2769 = vpop.f32.mrb[0].mxu0
    %v2770 = vadd.f32 0.0, %v2769
    %v2771 = vpop.f32.mrb[0].mxu0
    %2772 = vmatprep.mubr.bf16.mxu0 0
    %2773 = vmatmul.mubr.bf16.gmra.mrb[0].mxu0 %v2557
    %v2774 = vpop.f32.mrb[0].mxu0
    %v2775 = vadd.f32 0.0, %v2774
    %v2776 = vpop.f32.mrb[0].mxu0
    %v2777 = vpop.f32.mrb[0].mxu0
    %v2778 = vadd.f32 0.0, %v2777
    %v2779 = vpop.f32.mrb[0].mxu0
    %2780 = vmatprep.mubr.bf16.mxu0 0
    %2781 = vmatmul.mubr.bf16.gmra.mrb[0].mxu0 %v2560
    %v2782 = vpop.f32.mrb[0].mxu0
    %v2783 = vadd.f32 0.0, %v2782
    %v2784 = vpop.f32.mrb[0].mxu0
    %v2785 = vpop.f32.mrb[0].mxu0
    %v2786 = vadd.f32 0.0, %v2785
    %v2787 = vpop.f32.mrb[0].mxu0
    %2788 = vmatprep.mubr.bf16.mxu0 0
    %2789 = vmatmul.mubr.bf16.gmra.mrb[0].mxu0 %v2563
    %v2790 = vpop.f32.mrb[0].mxu0
    %v2791 = vadd.f32 0.0, %v2790
    %v2792 = vpop.f32.mrb[0].mxu0
    %v2793 = vpop.f32.mrb[0].mxu0
    %v2794 = vadd.f32 0.0, %v2793
    %v2795 = vpop.f32.mrb[0].mxu0
    %2796 = vmatprep.mubr.bf16.mxu0 0
    %2797 = vmatmul.mubr.bf16.gmra.mrb[0].mxu0 %v2566
    %v2798 = vpop.f32.mrb[0].mxu0
    %v2799 = vadd.f32 0.0, %v2798
    %v2800 = vpop.f32.mrb[0].mxu0
    %v2801 = vpop.f32.mrb[0].mxu0
    %v2802 = vadd.f32 0.0, %v2801
    %v2803 = vpop.f32.mrb[0].mxu0
    %2804 = vmatprep.mubr.bf16.mxu0 0
    %2805 = vmatmul.mubr.bf16.gmra.mrb[0].mxu0 %v2569
    %v2806 = vpop.f32.mrb[0].mxu0
    %v2807 = vadd.f32 0.0, %v2806
    %v2808 = vpop.f32.mrb[0].mxu0
    %v2809 = vpop.f32.mrb[0].mxu0
    %v2810 = vadd.f32 0.0, %v2809
    %v2811 = vpop.f32.mrb[0].mxu0
    %2812 = vmatprep.mubr.bf16.mxu0 0
    %2813 = vmatmul.mubr.bf16.gmra.mrb[0].mxu0 %v2572
    %v2814 = vpop.f32.mrb[0].mxu0
    %v2815 = vadd.f32 0.0, %v2814
    %v2816 = vpop.f32.mrb[0].mxu0
    %v2817 = vpop.f32.mrb[0].mxu0
    %v2818 = vadd.f32 0.0, %v2817
    %v2819 = vpop.f32.mrb[0].mxu0
    %2820 = vmatprep.mubr.bf16.mxu0 0
    %2821 = vmatmul.mubr.bf16.gmra.mrb[0].mxu0 %v2575
    %v2822 = vpop.f32.mrb[0].mxu0
    %v2823 = vadd.f32 0.0, %v2822
    %v2824 = vpop.f32.mrb[0].mxu0
    %v2825 = vpop.f32.mrb[0].mxu0
    %v2826 = vadd.f32 0.0, %v2825
    %v2827 = vpop.f32.mrb[0].mxu0
    %2828 = vmatprep.mubr.bf16.mxu0 0
    %2829 = vmatmul.mubr.bf16.gmra.mrb[0].mxu0 %v2578
    %v2830 = vpop.f32.mrb[0].mxu0
    %v2831 = vadd.f32 0.0, %v2830
    %v2832 = vpop.f32.mrb[0].mxu0
    %v2833 = vpop.f32.mrb[0].mxu0
    %v2834 = vadd.f32 0.0, %v2833
    %v2835 = vpop.f32.mrb[0].mxu0
    %2836 = vmatprep.mubr.bf16.mxu0 0
    %2837 = vmatmul.mubr.bf16.gmra.mrb[0].mxu0 %v2581
    %v2838 = vpop.f32.mrb[0].mxu0
    %v2839 = vadd.f32 0.0, %v2838
    %v2840 = vpop.f32.mrb[0].mxu0
    %v2841 = vpop.f32.mrb[0].mxu0
    %v2842 = vadd.f32 0.0, %v2841
    %v2843 = vpop.f32.mrb[0].mxu0
    %2844 = vmatprep.mubr.bf16.mxu0 0
    %2845 = vmatmul.mubr.bf16.gmra.mrb[0].mxu0 %v2584
    %v2846 = vpop.f32.mrb[0].mxu0
    %v2847 = vadd.f32 0.0, %v2846
    %v2848 = vpop.f32.mrb[0].mxu0
    %v2849 = vpop.f32.mrb[0].mxu0
    %v2850 = vadd.f32 0.0, %v2849
    %v2851 = vpop.f32.mrb[0].mxu0
    %2852 = vmatprep.mubr.bf16.mxu0 0
    %2853 = vmatmul.mubr.bf16.gmra.mrb[0].mxu0 %v2587
    %v2854 = vpop.f32.mrb[0].mxu0
    %v2855 = vadd.f32 0.0, %v2854
    %v2856 = vpop.f32.mrb[0].mxu0
    %v2857 = vpop.f32.mrb[0].mxu0
    %v2858 = vadd.f32 0.0, %v2857
    %v2859 = vpop.f32.mrb[0].mxu0
    %2860 = vmatprep.mubr.bf16.mxu0 0
    %2861 = vmatmul.mubr.bf16.gmra.mrb[0].mxu0 %v2590
    %v2862 = vpop.f32.mrb[0].mxu0
    %v2863 = vadd.f32 0.0, %v2862
    %v2864 = vpop.f32.mrb[0].mxu0
    %v2865 = vpop.f32.mrb[0].mxu0
    %v2866 = vadd.f32 0.0, %v2865
    %v2867 = vpop.f32.mrb[0].mxu0
    %2868 = vmatprep.mubr.bf16.mxu0 0
    %2869 = vmatmul.mubr.bf16.gmra.mrb[0].mxu0 %v2593
    %v2870 = vpop.f32.mrb[0].mxu0
    %v2871 = vadd.f32 0.0, %v2870
    %v2872 = vpop.f32.mrb[0].mxu0
    %v2873 = vpop.f32.mrb[0].mxu0
    %v2874 = vadd.f32 0.0, %v2873
    %v2875 = vpop.f32.mrb[0].mxu0
    %2876 = vmatprep.mubr.bf16.mxu0 0
    %2877 = vmatmul.mubr.bf16.gmra.mrb[0].mxu0 %v2596
    %v2878 = vpop.f32.mrb[0].mxu0
    %v2879 = vadd.f32 0.0, %v2878
    %v2880 = vpop.f32.mrb[0].mxu0
    %v2881 = vpop.f32.mrb[0].mxu0
    %v2882 = vadd.f32 0.0, %v2881
    %v2883 = vpop.f32.mrb[0].mxu0
    %2884 = vmatprep.mubr.bf16.mxu0 0
    %2885 = vmatmul.mubr.bf16.gmra.mrb[0].mxu0 %v2599
    %v2886 = vpop.f32.mrb[0].mxu0
    %v2887 = vadd.f32 0.0, %v2886
    %v2888 = vpop.f32.mrb[0].mxu0
    %v2889 = vpop.f32.mrb[0].mxu0
    %v2890 = vadd.f32 0.0, %v2889
    %v2891 = vpop.f32.mrb[0].mxu0
    %2892 = vmatprep.mubr.bf16.mxu0 0
    %2893 = vmatmul.mubr.bf16.gmra.mrb[0].mxu0 %v2602
    %v2894 = vpop.f32.mrb[0].mxu0
    %v2895 = vadd.f32 0.0, %v2894
    %v2896 = vpop.f32.mrb[0].mxu0
    %v2897 = vpop.f32.mrb[0].mxu0
    %v2898 = vadd.f32 0.0, %v2897
    %v2899 = vpop.f32.mrb[0].mxu0
    %2900 = vmatprep.mubr.bf16.mxu0 0
    %2901 = vmatmul.mubr.bf16.gmra.mrb[0].mxu0 %v2605
    %v2902 = vpop.f32.mrb[0].mxu0
    %v2903 = vadd.f32 0.0, %v2902
    %v2904 = vpop.f32.mrb[0].mxu0
    %v2905 = vpop.f32.mrb[0].mxu0
    %v2906 = vadd.f32 0.0, %v2905
    %v2907 = vpop.f32.mrb[0].mxu0
    %2908 = vmatprep.mubr.bf16.mxu0 0
    %2909 = vmatmul.mubr.bf16.gmra.mrb[0].mxu0 %v2608
    %v2910 = vpop.f32.mrb[0].mxu0
    %v2911 = vadd.f32 0.0, %v2910
    %v2912 = vpop.f32.mrb[0].mxu0
    %v2913 = vpop.f32.mrb[0].mxu0
    %v2914 = vadd.f32 0.0, %v2913
    %v2915 = vpop.f32.mrb[0].mxu0
    %2916 = vmatprep.mubr.bf16.mxu0 0
    %2917 = vmatmul.mubr.bf16.gmra.mrb[0].mxu0 %v2611
    %v2918 = vpop.f32.mrb[0].mxu0
    %v2919 = vadd.f32 0.0, %v2918
    %v2920 = vpop.f32.mrb[0].mxu0
    %v2921 = vpop.f32.mrb[0].mxu0
    %v2922 = vadd.f32 0.0, %v2921
    %v2923 = vpop.f32.mrb[0].mxu0
    %2924 = vmatprep.mubr.bf16.mxu0 0
    %2925 = vmatmul.mubr.bf16.gmra.mrb[0].mxu0 %v2614
    %v2926 = vpop.f32.mrb[0].mxu0
    %v2927 = vadd.f32 0.0, %v2926
    %v2928 = vpop.f32.mrb[0].mxu0
    %v2929 = vpop.f32.mrb[0].mxu0
    %v2930 = vadd.f32 0.0, %v2929
    %v2931 = vpop.f32.mrb[0].mxu0
    %2932 = vmatprep.mubr.bf16.mxu0 0
    %2933 = vmatmul.mubr.bf16.gmra.mrb[0].mxu0 %v2617
    %v2934 = vpop.f32.mrb[0].mxu0
    %v2935 = vadd.f32 0.0, %v2934
    %v2936 = vpop.f32.mrb[0].mxu0
    %v2937 = vpop.f32.mrb[0].mxu0
    %v2938 = vadd.f32 0.0, %v2937
    %v2939 = vpop.f32.mrb[0].mxu0
    %2940 = vmatprep.mubr.bf16.mxu0 0
    %2941 = vmatmul.mubr.bf16.gmra.mrb[0].mxu0 %v2620
    %v2942 = vpop.f32.mrb[0].mxu0
    %v2943 = vadd.f32 0.0, %v2942
    %v2944 = vpop.f32.mrb[0].mxu0
    %v2945 = vpop.f32.mrb[0].mxu0
    %v2946 = vadd.f32 0.0, %v2945
    %v2947 = vpop.f32.mrb[0].mxu0
    %2948 = vmatprep.mubr.bf16.mxu0 0
    %2949 = vmatmul.mubr.bf16.gmra.mrb[0].mxu0 %v2623
    %v2950 = vpop.f32.mrb[0].mxu0
    %v2951 = vadd.f32 0.0, %v2950
    %v2952 = vpop.f32.mrb[0].mxu0
    %v2953 = vpop.f32.mrb[0].mxu0
    %v2954 = vadd.f32 0.0, %v2953
    %v2955 = vpop.f32.mrb[0].mxu0
    %2956 = vmatprep.mubr.bf16.mxu0 0
    %2957 = vmatmul.mubr.bf16.gmra.mrb[0].mxu0 %v2626
    %v2958 = vpop.f32.mrb[0].mxu0
    %v2959 = vadd.f32 0.0, %v2958
    %v2960 = vpop.f32.mrb[0].mxu0
    %v2961 = vpop.f32.mrb[0].mxu0
    %v2962 = vadd.f32 0.0, %v2961
    %v2963 = vpop.f32.mrb[0].mxu0
    %2964 = vmatprep.mubr.bf16.mxu0 0
    %2965 = vmatmul.mubr.bf16.gmra.mrb[0].mxu0 %v2629
    %v2966 = vpop.f32.mrb[0].mxu0
    %v2967 = vadd.f32 0.0, %v2966
    %v2968 = vpop.f32.mrb[0].mxu0
    %v2969 = vpop.f32.mrb[0].mxu0
    %v2970 = vadd.f32 0.0, %v2969
    %v2971 = vpop.f32.mrb[0].mxu0
    %2972 = vmatprep.mubr.bf16.mxu0 0
    %2973 = vmatmul.mubr.bf16.gmra.mrb[0].mxu0 %v2632
    %v2974 = vpop.f32.mrb[0].mxu0
    %v2975 = vadd.f32 0.0, %v2974
    %v2976 = vpop.f32.mrb[0].mxu0
    %v2977 = vpop.f32.mrb[0].mxu0
    %v2978 = vadd.f32 0.0, %v2977
    %v2979 = vpop.f32.mrb[0].mxu0
    %2980 = vmatprep.mubr.bf16.mxu0 0
    %2981 = vmatmul.mubr.bf16.gmra.mrb[0].mxu0 %v2635
    %v2982 = vpop.f32.mrb[0].mxu0
    %v2983 = vadd.f32 0.0, %v2982
    %v2984 = vpop.f32.mrb[0].mxu0
    %v2985 = vpop.f32.mrb[0].mxu0
    %v2986 = vadd.f32 0.0, %v2985
    %v2987 = vpop.f32.mrb[0].mxu0
    %2988 = vmatprep.mubr.bf16.mxu0 0
    %2989 = vmatmul.mubr.bf16.gmra.mrb[0].mxu0 %v2638
    %v2990 = vpop.f32.mrb[0].mxu0
    %v2991 = vadd.f32 0.0, %v2990
    %v2992 = vpop.f32.mrb[0].mxu0
    %v2993 = vpop.f32.mrb[0].mxu0
    %v2994 = vadd.f32 0.0, %v2993
    %v2995 = vpop.f32.mrb[0].mxu0
    %2996 = vmatprep.mubr.bf16.mxu0 0
    %2997 = vmatmul.mubr.bf16.gmra.mrb[0].mxu0 %v2641
    %v2998 = vpop.f32.mrb[0].mxu0
    %v2999 = vadd.f32 0.0, %v2998
    %v3000 = vpop.f32.mrb[0].mxu0
    %v3001 = vpop.f32.mrb[0].mxu0
    %v3002 = vadd.f32 0.0, %v3001
    %v3003 = vpop.f32.mrb[0].mxu0
    %3004 = vmatprep.mubr.bf16.mxu0 0
    %3005 = vmatmul.mubr.bf16.gmra.mrb[0].mxu0 %v2644
    %v3006 = vpop.f32.mrb[0].mxu0
    %v3007 = vadd.f32 0.0, %v3006
    %v3008 = vpop.f32.mrb[0].mxu0
    %v3009 = vpop.f32.mrb[0].mxu0
    %v3010 = vadd.f32 0.0, %v3009
    %v3011 = vpop.f32.mrb[0].mxu0
    %3012 = vmatprep.mubr.bf16.mxu0 0
    %3013 = vmatmul.mubr.bf16.gmra.mrb[0].mxu0 %v2647
    %v3014 = vpop.f32.mrb[0].mxu0
    %v3015 = vadd.f32 0.0, %v3014
    %v3016 = vpop.f32.mrb[0].mxu0
    %v3017 = vpop.f32.mrb[0].mxu0
    %v3018 = vadd.f32 0.0, %v3017
    %v3019 = vpop.f32.mrb[0].mxu0
    %3020 = vmatprep.mubr.bf16.mxu0 0
    %3021 = vmatmul.mubr.bf16.gmra.mrb[0].mxu0 %v2650
    %v3022 = vpop.f32.mrb[0].mxu0
    %v3023 = vadd.f32 0.0, %v3022
    %v3024 = vpop.f32.mrb[0].mxu0
    %v3025 = vpop.f32.mrb[0].mxu0
    %v3026 = vadd.f32 0.0, %v3025
    %v3027 = vpop.f32.mrb[0].mxu0
    %3028 = vmatprep.mubr.bf16.mxu0 0
    %3029 = vmatmul.mubr.bf16.gmra.mrb[0].mxu0 %v2653
    %v3030 = vpop.f32.mrb[0].mxu0
    %v3031 = vadd.f32 0.0, %v3030
    %v3032 = vpop.f32.mrb[0].mxu0
    %v3033 = vpop.f32.mrb[0].mxu0
    %v3034 = vadd.f32 0.0, %v3033
    %v3035 = vpop.f32.mrb[0].mxu0
    %3036 = vmatprep.mubr.bf16.mxu0 0
    %3037 = vmatmul.mubr.bf16.gmra.mrb[0].mxu0 %v2656
    %v3038 = vpop.f32.mrb[0].mxu0
    %v3039 = vadd.f32 0.0, %v3038
    %v3040 = vpop.f32.mrb[0].mxu0
    %v3041 = vpop.f32.mrb[0].mxu0
    %v3042 = vadd.f32 0.0, %v3041
    %v3043 = vpop.f32.mrb[0].mxu0
    %3044 = vmatprep.mubr.bf16.mxu0 0
    %3045 = vmatmul.mubr.bf16.gmra.mrb[0].mxu0 %v2659
    %v3046 = vpop.f32.mrb[0].mxu0
    %v3047 = vadd.f32 0.0, %v3046
    %v3048 = vpop.f32.mrb[0].mxu0
    %v3049 = vpop.f32.mrb[0].mxu0
    %v3050 = vadd.f32 0.0, %v3049
    %v3051 = vpop.f32.mrb[0].mxu0
    %3052 = vmatprep.mubr.bf16.mxu0 0
    %3053 = vmatmul.mubr.bf16.gmra.mrb[0].mxu0 %v2662
    %v3054 = vpop.f32.mrb[0].mxu0
    %v3055 = vadd.f32 0.0, %v3054
    %v3056 = vpop.f32.mrb[0].mxu0
    %v3057 = vpop.f32.mrb[0].mxu0
    %v3058 = vadd.f32 0.0, %v3057
    %v3059 = vpop.f32.mrb[0].mxu0
    %3060 = vmatprep.mubr.bf16.mxu0 0
    %3061 = vmatmul.mubr.bf16.gmra.mrb[0].mxu0 %v2665
    %v3062 = vpop.f32.mrb[0].mxu0
    %v3063 = vadd.f32 0.0, %v3062
    %v3064 = vpop.f32.mrb[0].mxu0
    %v3065 = vpop.f32.mrb[0].mxu0
    %v3066 = vadd.f32 0.0, %v3065
    %v3067 = vpop.f32.mrb[0].mxu0
    %3068 = vmatprep.mubr.bf16.mxu0 0
    %3069 = vmatmul.mubr.bf16.gmra.mrb[0].mxu0 %v2668
    %v3070 = vpop.f32.mrb[0].mxu0
    %v3071 = vadd.f32 0.0, %v3070
    %v3072 = vpop.f32.mrb[0].mxu0
    %v3073 = vpop.f32.mrb[0].mxu0
    %v3074 = vadd.f32 0.0, %v3073
    %v3075 = vpop.f32.mrb[0].mxu0
    %3076 = vmatprep.mubr.bf16.mxu0 0
    %3077 = vmatmul.mubr.bf16.gmra.mrb[0].mxu0 %v2671
    %v3078 = vpop.f32.mrb[0].mxu0
    %v3079 = vadd.f32 0.0, %v3078
    %v3080 = vpop.f32.mrb[0].mxu0
    %v3081 = vpop.f32.mrb[0].mxu0
    %v3082 = vadd.f32 0.0, %v3081
    %v3083 = vpop.f32.mrb[0].mxu0
    %3084 = vmatprep.mubr.bf16.mxu0 0
    %3085 = vmatmul.mubr.bf16.gmra.mrb[0].mxu0 %v2674
    %v3086 = vpop.f32.mrb[0].mxu0
    %v3087 = vadd.f32 0.0, %v3086
    %v3088 = vpop.f32.mrb[0].mxu0
    %v3089 = vpop.f32.mrb[0].mxu0
    %v3090 = vadd.f32 0.0, %v3089
    %v3091 = vpop.f32.mrb[0].mxu0
    %3092 = vdwg.mxu0
    %v3093 = vld [vmem:[#allocation2] sm:$0xff]
    %v3094 = vld [vmem:[#allocation2 + $0x8] sm:$0xff]
    %v3095 = vld [vmem:[#allocation2 + $0x10] sm:$0xff]
    %v3096 = vld [vmem:[#allocation2 + $0x18] sm:$0xff]
    %v3097 = vld [vmem:[#allocation2 + $0x20] sm:$0xff]
    %v3098 = vld [vmem:[#allocation2 + $0x28] sm:$0xff]
    %v3099 = vld [vmem:[#allocation2 + $0x30] sm:$0xff]
    %v3100 = vld [vmem:[#allocation2 + $0x38] sm:$0xff]
    %v3101 = vld [vmem:[#allocation2 + $0x40] sm:$0xff]
    %v3102 = vld [vmem:[#allocation2 + $0x48] sm:$0xff]
    %v3103 = vld [vmem:[#allocation2 + $0x50] sm:$0xff]
    %v3104 = vld [vmem:[#allocation2 + $0x58] sm:$0xff]
    %v3105 = vld [vmem:[#allocation2 + $0x60] sm:$0xff]
    %v3106 = vld [vmem:[#allocation2 + $0x68] sm:$0xff]
    %v3107 = vld [vmem:[#allocation2 + $0x70] sm:$0xff]
    %v3108 = vld [vmem:[#allocation2 + $0x78] sm:$0xff]
    %v3109 = vld [vmem:[#allocation2 + $0x80] sm:$0xff]
    %v3110 = vld [vmem:[#allocation2 + $0x88] sm:$0xff]
    %v3111 = vld [vmem:[#allocation2 + $0x90] sm:$0xff]
    %v3112 = vld [vmem:[#allocation2 + $0x98] sm:$0xff]
    %v3113 = vld [vmem:[#allocation2 + $0xa0] sm:$0xff]
    %v3114 = vld [vmem:[#allocation2 + $0xa8] sm:$0xff]
    %v3115 = vld [vmem:[#allocation2 + $0xb0] sm:$0xff]
    %v3116 = vld [vmem:[#allocation2 + $0xb8] sm:$0xff]
    %v3117 = vld [vmem:[#allocation2 + $0xc0] sm:$0xff]
    %v3118 = vld [vmem:[#allocation2 + $0xc8] sm:$0xff]
    %v3119 = vld [vmem:[#allocation2 + $0xd0] sm:$0xff]
    %v3120 = vld [vmem:[#allocation2 + $0xd8] sm:$0xff]
    %v3121 = vld [vmem:[#allocation2 + $0xe0] sm:$0xff]
    %v3122 = vld [vmem:[#allocation2 + $0xe8] sm:$0xff]
    %v3123 = vld [vmem:[#allocation2 + $0xf0] sm:$0xff]
    %v3124 = vld [vmem:[#allocation2 + $0xf8] sm:$0xff]
    %v3125 = vld [vmem:[#allocation2 + $0x100] sm:$0xff]
    %v3126 = vld [vmem:[#allocation2 + $0x108] sm:$0xff]
    %v3127 = vld [vmem:[#allocation2 + $0x110] sm:$0xff]
    %v3128 = vld [vmem:[#allocation2 + $0x118] sm:$0xff]
    %v3129 = vld [vmem:[#allocation2 + $0x120] sm:$0xff]
    %v3130 = vld [vmem:[#allocation2 + $0x128] sm:$0xff]
    %v3131 = vld [vmem:[#allocation2 + $0x130] sm:$0xff]
    %v3132 = vld [vmem:[#allocation2 + $0x138] sm:$0xff]
    %v3133 = vld [vmem:[#allocation2 + $0x140] sm:$0xff]
    %v3134 = vld [vmem:[#allocation2 + $0x148] sm:$0xff]
    %v3135 = vld [vmem:[#allocation2 + $0x150] sm:$0xff]
    %v3136 = vld [vmem:[#allocation2 + $0x158] sm:$0xff]
    %v3137 = vld [vmem:[#allocation2 + $0x160] sm:$0xff]
    %v3138 = vld [vmem:[#allocation2 + $0x168] sm:$0xff]
    %v3139 = vld [vmem:[#allocation2 + $0x170] sm:$0xff]
    %v3140 = vld [vmem:[#allocation2 + $0x178] sm:$0xff]
    %v3141 = vld [vmem:[#allocation2 + $0x180] sm:$0xff]
    %v3142 = vld [vmem:[#allocation2 + $0x188] sm:$0xff]
    %v3143 = vld [vmem:[#allocation2 + $0x190] sm:$0xff]
    %v3144 = vld [vmem:[#allocation2 + $0x198] sm:$0xff]
    %v3145 = vld [vmem:[#allocation2 + $0x1a0] sm:$0xff]
    %v3146 = vld [vmem:[#allocation2 + $0x1a8] sm:$0xff]
    %v3147 = vld [vmem:[#allocation2 + $0x1b0] sm:$0xff]
    %v3148 = vld [vmem:[#allocation2 + $0x1b8] sm:$0xff]
    %v3149 = vld [vmem:[#allocation2 + $0x1c0] sm:$0xff]
    %v3150 = vld [vmem:[#allocation2 + $0x1c8] sm:$0xff]
    %v3151 = vld [vmem:[#allocation2 + $0x1d0] sm:$0xff]
    %v3152 = vld [vmem:[#allocation2 + $0x1d8] sm:$0xff]
    %v3153 = vld [vmem:[#allocation2 + $0x1e0] sm:$0xff]
    %v3154 = vld [vmem:[#allocation2 + $0x1e8] sm:$0xff]
    %v3155 = vld [vmem:[#allocation2 + $0x1f0] sm:$0xff]
    %v3156 = vld [vmem:[#allocation2 + $0x1f8] sm:$0xff]
    %v3157 = vld [vmem:[#allocation2 + $0x200] sm:$0xff]
    %v3158 = vld [vmem:[#allocation2 + $0x208] sm:$0xff]
    %v3159 = vld [vmem:[#allocation2 + $0x210] sm:$0xff]
    %v3160 = vld [vmem:[#allocation2 + $0x218] sm:$0xff]
    %v3161 = vld [vmem:[#allocation2 + $0x220] sm:$0xff]
    %v3162 = vld [vmem:[#allocation2 + $0x228] sm:$0xff]
    %v3163 = vld [vmem:[#allocation2 + $0x230] sm:$0xff]
    %v3164 = vld [vmem:[#allocation2 + $0x238] sm:$0xff]
    %v3165 = vld [vmem:[#allocation2 + $0x240] sm:$0xff]
    %v3166 = vld [vmem:[#allocation2 + $0x248] sm:$0xff]
    %v3167 = vld [vmem:[#allocation2 + $0x250] sm:$0xff]
    %v3168 = vld [vmem:[#allocation2 + $0x258] sm:$0xff]
    %v3169 = vld [vmem:[#allocation2 + $0x260] sm:$0xff]
    %v3170 = vld [vmem:[#allocation2 + $0x268] sm:$0xff]
    %v3171 = vld [vmem:[#allocation2 + $0x270] sm:$0xff]
    %v3172 = vld [vmem:[#allocation2 + $0x278] sm:$0xff]
    %v3173 = vld [vmem:[#allocation2 + $0x280] sm:$0xff]
    %v3174 = vld [vmem:[#allocation2 + $0x288] sm:$0xff]
    %v3175 = vld [vmem:[#allocation2 + $0x290] sm:$0xff]
    %v3176 = vld [vmem:[#allocation2 + $0x298] sm:$0xff]
    %v3177 = vld [vmem:[#allocation2 + $0x2a0] sm:$0xff]
    %v3178 = vld [vmem:[#allocation2 + $0x2a8] sm:$0xff]
    %v3179 = vld [vmem:[#allocation2 + $0x2b0] sm:$0xff]
    %v3180 = vld [vmem:[#allocation2 + $0x2b8] sm:$0xff]
    %v3181 = vld [vmem:[#allocation2 + $0x2c0] sm:$0xff]
    %v3182 = vld [vmem:[#allocation2 + $0x2c8] sm:$0xff]
    %v3183 = vld [vmem:[#allocation2 + $0x2d0] sm:$0xff]
    %v3184 = vld [vmem:[#allocation2 + $0x2d8] sm:$0xff]
    %v3185 = vld [vmem:[#allocation2 + $0x2e0] sm:$0xff]
    %v3186 = vld [vmem:[#allocation2 + $0x2e8] sm:$0xff]
    %v3187 = vld [vmem:[#allocation2 + $0x2f0] sm:$0xff]
    %v3188 = vld [vmem:[#allocation2 + $0x2f8] sm:$0xff]
    %v3189 = vadd.f32 %v3093, %v2711
    %v3190 = vadd.f32 %v3094, %v2714
    %v3191 = vadd.f32 %v3095, %v2719
    %v3192 = vadd.f32 %v3096, %v2722
    %v3193 = vadd.f32 %v3097, %v2727
    %v3194 = vadd.f32 %v3098, %v2730
    %v3195 = vadd.f32 %v3099, %v2735
    %v3196 = vadd.f32 %v3100, %v2738
    %v3197 = vadd.f32 %v3101, %v2743
    %v3198 = vadd.f32 %v3102, %v2746
    %v3199 = vadd.f32 %v3103, %v2751
    %v3200 = vadd.f32 %v3104, %v2754
    %v3201 = vadd.f32 %v3105, %v2759
    %v3202 = vadd.f32 %v3106, %v2762
    %v3203 = vadd.f32 %v3107, %v2767
    %v3204 = vadd.f32 %v3108, %v2770
    %v3205 = vadd.f32 %v3109, %v2775
    %v3206 = vadd.f32 %v3110, %v2778
    %v3207 = vadd.f32 %v3111, %v2783
    %v3208 = vadd.f32 %v3112, %v2786
    %v3209 = vadd.f32 %v3113, %v2791
    %v3210 = vadd.f32 %v3114, %v2794
    %v3211 = vadd.f32 %v3115, %v2799
    %v3212 = vadd.f32 %v3116, %v2802
    %v3213 = vadd.f32 %v3117, %v2807
    %v3214 = vadd.f32 %v3118, %v2810
    %v3215 = vadd.f32 %v3119, %v2815
    %v3216 = vadd.f32 %v3120, %v2818
    %v3217 = vadd.f32 %v3121, %v2823
    %v3218 = vadd.f32 %v3122, %v2826
    %v3219 = vadd.f32 %v3123, %v2831
    %v3220 = vadd.f32 %v3124, %v2834
    %v3221 = vadd.f32 %v3125, %v2839
    %v3222 = vadd.f32 %v3126, %v2842
    %v3223 = vadd.f32 %v3127, %v2847
    %v3224 = vadd.f32 %v3128, %v2850
    %v3225 = vadd.f32 %v3129, %v2855
    %v3226 = vadd.f32 %v3130, %v2858
    %v3227 = vadd.f32 %v3131, %v2863
    %v3228 = vadd.f32 %v3132, %v2866
    %v3229 = vadd.f32 %v3133, %v2871
    %v3230 = vadd.f32 %v3134, %v2874
    %v3231 = vadd.f32 %v3135, %v2879
    %v3232 = vadd.f32 %v3136, %v2882
    %v3233 = vadd.f32 %v3137, %v2887
    %v3234 = vadd.f32 %v3138, %v2890
    %v3235 = vadd.f32 %v3139, %v2895
    %v3236 = vadd.f32 %v3140, %v2898
    %v3237 = vadd.f32 %v3141, %v2903
    %v3238 = vadd.f32 %v3142, %v2906
    %v3239 = vadd.f32 %v3143, %v2911
    %v3240 = vadd.f32 %v3144, %v2914
    %v3241 = vadd.f32 %v3145, %v2919
    %v3242 = vadd.f32 %v3146, %v2922
    %v3243 = vadd.f32 %v3147, %v2927
    %v3244 = vadd.f32 %v3148, %v2930
    %v3245 = vadd.f32 %v3149, %v2935
    %v3246 = vadd.f32 %v3150, %v2938
    %v3247 = vadd.f32 %v3151, %v2943
    %v3248 = vadd.f32 %v3152, %v2946
    %v3249 = vadd.f32 %v3153, %v2951
    %v3250 = vadd.f32 %v3154, %v2954
    %v3251 = vadd.f32 %v3155, %v2959
    %v3252 = vadd.f32 %v3156, %v2962
    %v3253 = vadd.f32 %v3157, %v2967
    %v3254 = vadd.f32 %v3158, %v2970
    %v3255 = vadd.f32 %v3159, %v2975
    %v3256 = vadd.f32 %v3160, %v2978
    %v3257 = vadd.f32 %v3161, %v2983
    %v3258 = vadd.f32 %v3162, %v2986
    %v3259 = vadd.f32 %v3163, %v2991
    %v3260 = vadd.f32 %v3164, %v2994
    %v3261 = vadd.f32 %v3165, %v2999
    %v3262 = vadd.f32 %v3166, %v3002
    %v3263 = vadd.f32 %v3167, %v3007
    %v3264 = vadd.f32 %v3168, %v3010
    %v3265 = vadd.f32 %v3169, %v3015
    %v3266 = vadd.f32 %v3170, %v3018
    %v3267 = vadd.f32 %v3171, %v3023
    %v3268 = vadd.f32 %v3172, %v3026
    %v3269 = vadd.f32 %v3173, %v3031
    %v3270 = vadd.f32 %v3174, %v3034
    %v3271 = vadd.f32 %v3175, %v3039
    %v3272 = vadd.f32 %v3176, %v3042
    %v3273 = vadd.f32 %v3177, %v3047
    %v3274 = vadd.f32 %v3178, %v3050
    %v3275 = vadd.f32 %v3179, %v3055
    %v3276 = vadd.f32 %v3180, %v3058
    %v3277 = vadd.f32 %v3181, %v3063
    %v3278 = vadd.f32 %v3182, %v3066
    %v3279 = vadd.f32 %v3183, %v3071
    %v3280 = vadd.f32 %v3184, %v3074
    %v3281 = vadd.f32 %v3185, %v3079
    %v3282 = vadd.f32 %v3186, %v3082
    %v3283 = vadd.f32 %v3187, %v3087
    %v3284 = vadd.f32 %v3188, %v3090
    %3285 = vst [vmem:[#allocation2] sm:$0xff] %v3189
    %3286 = vst [vmem:[#allocation2 + $0x8] sm:$0xff] %v3190
    %3287 = vst [vmem:[#allocation2 + $0x10] sm:$0xff] %v3191
    %3288 = vst [vmem:[#allocation2 + $0x18] sm:$0xff] %v3192
    %3289 = vst [vmem:[#allocation2 + $0x20] sm:$0xff] %v3193
    %3290 = vst [vmem:[#allocation2 + $0x28] sm:$0xff] %v3194
    %3291 = vst [vmem:[#allocation2 + $0x30] sm:$0xff] %v3195
    %3292 = vst [vmem:[#allocation2 + $0x38] sm:$0xff] %v3196
    %3293 = vst [vmem:[#allocation2 + $0x40] sm:$0xff] %v3197
    %3294 = vst [vmem:[#allocation2 + $0x48] sm:$0xff] %v3198
    %3295 = vst [vmem:[#allocation2 + $0x50] sm:$0xff] %v3199
    %3296 = vst [vmem:[#allocation2 + $0x58] sm:$0xff] %v3200
    %3297 = vst [vmem:[#allocation2 + $0x60] sm:$0xff] %v3201
    %3298 = vst [vmem:[#allocation2 + $0x68] sm:$0xff] %v3202
    %3299 = vst [vmem:[#allocation2 + $0x70] sm:$0xff] %v3203
    %3300 = vst [vmem:[#allocation2 + $0x78] sm:$0xff] %v3204
    %3301 = vst [vmem:[#allocation2 + $0x80] sm:$0xff] %v3205
    %3302 = vst [vmem:[#allocation2 + $0x88] sm:$0xff] %v3206
    %3303 = vst [vmem:[#allocation2 + $0x90] sm:$0xff] %v3207
    %3304 = vst [vmem:[#allocation2 + $0x98] sm:$0xff] %v3208
    %3305 = vst [vmem:[#allocation2 + $0xa0] sm:$0xff] %v3209
    %3306 = vst [vmem:[#allocation2 + $0xa8] sm:$0xff] %v3210
    %3307 = vst [vmem:[#allocation2 + $0xb0] sm:$0xff] %v3211
    %3308 = vst [vmem:[#allocation2 + $0xb8] sm:$0xff] %v3212
    %3309 = vst [vmem:[#allocation2 + $0xc0] sm:$0xff] %v3213
    %3310 = vst [vmem:[#allocation2 + $0xc8] sm:$0xff] %v3214
    %3311 = vst [vmem:[#allocation2 + $0xd0] sm:$0xff] %v3215
    %3312 = vst [vmem:[#allocation2 + $0xd8] sm:$0xff] %v3216
    %3313 = vst [vmem:[#allocation2 + $0xe0] sm:$0xff] %v3217
    %3314 = vst [vmem:[#allocation2 + $0xe8] sm:$0xff] %v3218
    %3315 = vst [vmem:[#allocation2 + $0xf0] sm:$0xff] %v3219
    %3316 = vst [vmem:[#allocation2 + $0xf8] sm:$0xff] %v3220
    %3317 = vst [vmem:[#allocation2 + $0x100] sm:$0xff] %v3221
    %3318 = vst [vmem:[#allocation2 + $0x108] sm:$0xff] %v3222
    %3319 = vst [vmem:[#allocation2 + $0x110] sm:$0xff] %v3223
    %3320 = vst [vmem:[#allocation2 + $0x118] sm:$0xff] %v3224
    %3321 = vst [vmem:[#allocation2 + $0x120] sm:$0xff] %v3225
    %3322 = vst [vmem:[#allocation2 + $0x128] sm:$0xff] %v3226
    %3323 = vst [vmem:[#allocation2 + $0x130] sm:$0xff] %v3227
    %3324 = vst [vmem:[#allocation2 + $0x138] sm:$0xff] %v3228
    %3325 = vst [vmem:[#allocation2 + $0x140] sm:$0xff] %v3229
    %3326 = vst [vmem:[#allocation2 + $0x148] sm:$0xff] %v3230
    %3327 = vst [vmem:[#allocation2 + $0x150] sm:$0xff] %v3231
    %3328 = vst [vmem:[#allocation2 + $0x158] sm:$0xff] %v3232
    %3329 = vst [vmem:[#allocation2 + $0x160] sm:$0xff] %v3233
    %3330 = vst [vmem:[#allocation2 + $0x168] sm:$0xff] %v3234
    %3331 = vst [vmem:[#allocation2 + $0x170] sm:$0xff] %v3235
    %3332 = vst [vmem:[#allocation2 + $0x178] sm:$0xff] %v3236
    %3333 = vst [vmem:[#allocation2 + $0x180] sm:$0xff] %v3237
    %3334 = vst [vmem:[#allocation2 + $0x188] sm:$0xff] %v3238
    %3335 = vst [vmem:[#allocation2 + $0x190] sm:$0xff] %v3239
    %3336 = vst [vmem:[#allocation2 + $0x198] sm:$0xff] %v3240
    %3337 = vst [vmem:[#allocation2 + $0x1a0] sm:$0xff] %v3241
    %3338 = vst [vmem:[#allocation2 + $0x1a8] sm:$0xff] %v3242
    %3339 = vst [vmem:[#allocation2 + $0x1b0] sm:$0xff] %v3243
    %3340 = vst [vmem:[#allocation2 + $0x1b8] sm:$0xff] %v3244
    %3341 = vst [vmem:[#allocation2 + $0x1c0] sm:$0xff] %v3245
    %3342 = vst [vmem:[#allocation2 + $0x1c8] sm:$0xff] %v3246
    %3343 = vst [vmem:[#allocation2 + $0x1d0] sm:$0xff] %v3247
    %3344 = vst [vmem:[#allocation2 + $0x1d8] sm:$0xff] %v3248
    %3345 = vst [vmem:[#allocation2 + $0x1e0] sm:$0xff] %v3249
    %3346 = vst [vmem:[#allocation2 + $0x1e8] sm:$0xff] %v3250
    %3347 = vst [vmem:[#allocation2 + $0x1f0] sm:$0xff] %v3251
    %3348 = vst [vmem:[#allocation2 + $0x1f8] sm:$0xff] %v3252
    %3349 = vst [vmem:[#allocation2 + $0x200] sm:$0xff] %v3253
    %3350 = vst [vmem:[#allocation2 + $0x208] sm:$0xff] %v3254
    %3351 = vst [vmem:[#allocation2 + $0x210] sm:$0xff] %v3255
    %3352 = vst [vmem:[#allocation2 + $0x218] sm:$0xff] %v3256
    %3353 = vst [vmem:[#allocation2 + $0x220] sm:$0xff] %v3257
    %3354 = vst [vmem:[#allocation2 + $0x228] sm:$0xff] %v3258
    %3355 = vst [vmem:[#allocation2 + $0x230] sm:$0xff] %v3259
    %3356 = vst [vmem:[#allocation2 + $0x238] sm:$0xff] %v3260
    %3357 = vst [vmem:[#allocation2 + $0x240] sm:$0xff] %v3261
    %3358 = vst [vmem:[#allocation2 + $0x248] sm:$0xff] %v3262
    %3359 = vst [vmem:[#allocation2 + $0x250] sm:$0xff] %v3263
    %3360 = vst [vmem:[#allocation2 + $0x258] sm:$0xff] %v3264
    %3361 = vst [vmem:[#allocation2 + $0x260] sm:$0xff] %v3265
    %3362 = vst [vmem:[#allocation2 + $0x268] sm:$0xff] %v3266
    %3363 = vst [vmem:[#allocation2 + $0x270] sm:$0xff] %v3267
    %3364 = vst [vmem:[#allocation2 + $0x278] sm:$0xff] %v3268
    %3365 = vst [vmem:[#allocation2 + $0x280] sm:$0xff] %v3269
    %3366 = vst [vmem:[#allocation2 + $0x288] sm:$0xff] %v3270
    %3367 = vst [vmem:[#allocation2 + $0x290] sm:$0xff] %v3271
    %3368 = vst [vmem:[#allocation2 + $0x298] sm:$0xff] %v3272
    %3369 = vst [vmem:[#allocation2 + $0x2a0] sm:$0xff] %v3273
    %3370 = vst [vmem:[#allocation2 + $0x2a8] sm:$0xff] %v3274
    %3371 = vst [vmem:[#allocation2 + $0x2b0] sm:$0xff] %v3275
    %3372 = vst [vmem:[#allocation2 + $0x2b8] sm:$0xff] %v3276
    %3373 = vst [vmem:[#allocation2 + $0x2c0] sm:$0xff] %v3277
    %3374 = vst [vmem:[#allocation2 + $0x2c8] sm:$0xff] %v3278
    %3375 = vst [vmem:[#allocation2 + $0x2d0] sm:$0xff] %v3279
    %3376 = vst [vmem:[#allocation2 + $0x2d8] sm:$0xff] %v3280
    %3377 = vst [vmem:[#allocation2 + $0x2e0] sm:$0xff] %v3281
    %3378 = vst [vmem:[#allocation2 + $0x2e8] sm:$0xff] %v3282
    %3379 = vst [vmem:[#allocation2 + $0x2f0] sm:$0xff] %v3283
    %3380 = vst [vmem:[#allocation2 + $0x2f8] sm:$0xff] %v3284
    %s3381 = scalar_lea.vmem [#allocation8], 128
    %v3382 = vld [vmem:[%s3381] sm:$0xf]
    %v3383 = vld [vmem:[%s3381 + $0x4] sm:$0xf]
    %v3384 = vld [vmem:[%s3381 + $0x8] sm:$0xf]
    %v3385 = vld [vmem:[%s3381 + $0xc] sm:$0xf]
    %v3386 = vld [vmem:[%s3381 + $0x10] sm:$0xf]
    %v3387 = vld [vmem:[%s3381 + $0x14] sm:$0xf]
    %v3388 = vld [vmem:[%s3381 + $0x18] sm:$0xf]
    %v3389 = vld [vmem:[%s3381 + $0x1c] sm:$0xf]
    %v3398 = vunpack.c.l.b16 %v3382
    %v3399 = vunpack.c.l.b16 %v3383
    %v3400 = vunpack.c.l.b16 %v3384
    %v3401 = vunpack.c.l.b16 %v3385
    %v3402 = vunpack.c.l.b16 %v3386
    %v3403 = vunpack.c.l.b16 %v3387
    %v3404 = vunpack.c.l.b16 %v3388
    %v3405 = vunpack.c.l.b16 %v3389
    %v3406 = vpack.c.b16 %v3399, %v3398
    %v3407 = vpack.c.b16 %v3401, %v3400
    %v3408 = vpack.c.b16 %v3403, %v3402
    %v3409 = vpack.c.b16 %v3405, %v3404
    %3414 = vmatprep.subr.bf16.mxu0 0
    %3415 = vmatpush1.bf16.msra.mxu0 %v3406
    %3416 = vmatprep.subr.bf16.mxu0 0
    %3417 = vmatpush1.bf16.msra.mxu0 %v3407
    %3418 = vmatprep.subr.bf16.mxu0 0
    %3419 = vmatpush1.bf16.msra.mxu0 %v3408
    %3420 = vmatprep.subr.bf16.mxu0 0
    %3421 = vmatpush1.bf16.msra.mxu0 %v3409
    %3422 = vmatprep.subr.bf16.mxu0 0
    %3423 = vmatpush1.bf16.msra.mxu0 0
    %3424 = vmatprep.subr.bf16.mxu0 0
    %3425 = vmatpush1.bf16.msra.mxu0 0
    %3426 = vmatprep.subr.bf16.mxu0 0
    %3427 = vmatpush1.bf16.msra.mxu0 0
    %3428 = vmatprep.subr.bf16.mxu0 0
    %3429 = vmatpush1.bf16.msra.mxu0 0
    %3430 = vmatprep.subr.bf16.mxu0 0
    %3431 = vmatpush1.bf16.msra.mxu0 0
    %3432 = vmatprep.subr.bf16.mxu0 0
    %3433 = vmatpush1.bf16.msra.mxu0 0
    %3434 = vmatprep.subr.bf16.mxu0 0
    %3435 = vmatpush1.bf16.msra.mxu0 0
    %3436 = vmatprep.subr.bf16.mxu0 0
    %3437 = vmatpush1.bf16.msra.mxu0 0
    %3438 = vmatprep.subr.bf16.mxu0 0
    %3439 = vmatpush1.bf16.msra.mxu0 0
    %3440 = vmatprep.subr.bf16.mxu0 0
    %3441 = vmatpush1.bf16.msra.mxu0 0
    %3442 = vmatprep.subr.bf16.mxu0 0
    %3443 = vmatpush1.bf16.msra.mxu0 0
    %3444 = vmatprep.subr.bf16.mxu0 0
    %3445 = vmatpush1.bf16.msra.mxu0 0
    %3446 = vmatprep.mubr.bf16.mxu0 0
    %3447 = vmatmul.mubr.bf16.gmra.mrb[0].mxu0 %v2533
    %v3448 = vpop.f32.mrb[0].mxu0
    %v3449 = vadd.f32 0.0, %v3448
    %v3450 = vpop.f32.mrb[0].mxu0
    %v3451 = vpop.f32.mrb[0].mxu0
    %v3452 = vadd.f32 0.0, %v3451
    %v3453 = vpop.f32.mrb[0].mxu0
    %3454 = vmatprep.mubr.bf16.mxu0 0
    %3455 = vmatmul.mubr.bf16.gmra.mrb[0].mxu0 %v2536
    %v3456 = vpop.f32.mrb[0].mxu0
    %v3457 = vadd.f32 0.0, %v3456
    %v3458 = vpop.f32.mrb[0].mxu0
    %v3459 = vpop.f32.mrb[0].mxu0
    %v3460 = vadd.f32 0.0, %v3459
    %v3461 = vpop.f32.mrb[0].mxu0
    %3462 = vmatprep.mubr.bf16.mxu0 0
    %3463 = vmatmul.mubr.bf16.gmra.mrb[0].mxu0 %v2539
    %v3464 = vpop.f32.mrb[0].mxu0
    %v3465 = vadd.f32 0.0, %v3464
    %v3466 = vpop.f32.mrb[0].mxu0
    %v3467 = vpop.f32.mrb[0].mxu0
    %v3468 = vadd.f32 0.0, %v3467
    %v3469 = vpop.f32.mrb[0].mxu0
    %3470 = vmatprep.mubr.bf16.mxu0 0
    %3471 = vmatmul.mubr.bf16.gmra.mrb[0].mxu0 %v2542
    %v3472 = vpop.f32.mrb[0].mxu0
    %v3473 = vadd.f32 0.0, %v3472
    %v3474 = vpop.f32.mrb[0].mxu0
    %v3475 = vpop.f32.mrb[0].mxu0
    %v3476 = vadd.f32 0.0, %v3475
    %v3477 = vpop.f32.mrb[0].mxu0
    %3478 = vmatprep.mubr.bf16.mxu0 0
    %3479 = vmatmul.mubr.bf16.gmra.mrb[0].mxu0 %v2545
    %v3480 = vpop.f32.mrb[0].mxu0
    %v3481 = vadd.f32 0.0, %v3480
    %v3482 = vpop.f32.mrb[0].mxu0
    %v3483 = vpop.f32.mrb[0].mxu0
    %v3484 = vadd.f32 0.0, %v3483
    %v3485 = vpop.f32.mrb[0].mxu0
    %3486 = vmatprep.mubr.bf16.mxu0 0
    %3487 = vmatmul.mubr.bf16.gmra.mrb[0].mxu0 %v2548
    %v3488 = vpop.f32.mrb[0].mxu0
    %v3489 = vadd.f32 0.0, %v3488
    %v3490 = vpop.f32.mrb[0].mxu0
    %v3491 = vpop.f32.mrb[0].mxu0
    %v3492 = vadd.f32 0.0, %v3491
    %v3493 = vpop.f32.mrb[0].mxu0
    %3494 = vmatprep.mubr.bf16.mxu0 0
    %3495 = vmatmul.mubr.bf16.gmra.mrb[0].mxu0 %v2551
    %v3496 = vpop.f32.mrb[0].mxu0
    %v3497 = vadd.f32 0.0, %v3496
    %v3498 = vpop.f32.mrb[0].mxu0
    %v3499 = vpop.f32.mrb[0].mxu0
    %v3500 = vadd.f32 0.0, %v3499
    %v3501 = vpop.f32.mrb[0].mxu0
    %3502 = vmatprep.mubr.bf16.mxu0 0
    %3503 = vmatmul.mubr.bf16.gmra.mrb[0].mxu0 %v2554
    %v3504 = vpop.f32.mrb[0].mxu0
    %v3505 = vadd.f32 0.0, %v3504
    %v3506 = vpop.f32.mrb[0].mxu0
    %v3507 = vpop.f32.mrb[0].mxu0
    %v3508 = vadd.f32 0.0, %v3507
    %v3509 = vpop.f32.mrb[0].mxu0
    %3510 = vmatprep.mubr.bf16.mxu0 0
    %3511 = vmatmul.mubr.bf16.gmra.mrb[0].mxu0 %v2557
    %v3512 = vpop.f32.mrb[0].mxu0
    %v3513 = vadd.f32 0.0, %v3512
    %v3514 = vpop.f32.mrb[0].mxu0
    %v3515 = vpop.f32.mrb[0].mxu0
    %v3516 = vadd.f32 0.0, %v3515
    %v3517 = vpop.f32.mrb[0].mxu0
    %3518 = vmatprep.mubr.bf16.mxu0 0
    %3519 = vmatmul.mubr.bf16.gmra.mrb[0].mxu0 %v2560
    %v3520 = vpop.f32.mrb[0].mxu0
    %v3521 = vadd.f32 0.0, %v3520
    %v3522 = vpop.f32.mrb[0].mxu0
    %v3523 = vpop.f32.mrb[0].mxu0
    %v3524 = vadd.f32 0.0, %v3523
    %v3525 = vpop.f32.mrb[0].mxu0
    %3526 = vmatprep.mubr.bf16.mxu0 0
    %3527 = vmatmul.mubr.bf16.gmra.mrb[0].mxu0 %v2563
    %v3528 = vpop.f32.mrb[0].mxu0
    %v3529 = vadd.f32 0.0, %v3528
    %v3530 = vpop.f32.mrb[0].mxu0
    %v3531 = vpop.f32.mrb[0].mxu0
    %v3532 = vadd.f32 0.0, %v3531
    %v3533 = vpop.f32.mrb[0].mxu0
    %3534 = vmatprep.mubr.bf16.mxu0 0
    %3535 = vmatmul.mubr.bf16.gmra.mrb[0].mxu0 %v2566
    %v3536 = vpop.f32.mrb[0].mxu0
    %v3537 = vadd.f32 0.0, %v3536
    %v3538 = vpop.f32.mrb[0].mxu0
    %v3539 = vpop.f32.mrb[0].mxu0
    %v3540 = vadd.f32 0.0, %v3539
    %v3541 = vpop.f32.mrb[0].mxu0
    %3542 = vmatprep.mubr.bf16.mxu0 0
    %3543 = vmatmul.mubr.bf16.gmra.mrb[0].mxu0 %v2569
    %v3544 = vpop.f32.mrb[0].mxu0
    %v3545 = vadd.f32 0.0, %v3544
    %v3546 = vpop.f32.mrb[0].mxu0
    %v3547 = vpop.f32.mrb[0].mxu0
    %v3548 = vadd.f32 0.0, %v3547
    %v3549 = vpop.f32.mrb[0].mxu0
    %3550 = vmatprep.mubr.bf16.mxu0 0
    %3551 = vmatmul.mubr.bf16.gmra.mrb[0].mxu0 %v2572
    %v3552 = vpop.f32.mrb[0].mxu0
    %v3553 = vadd.f32 0.0, %v3552
    %v3554 = vpop.f32.mrb[0].mxu0
    %v3555 = vpop.f32.mrb[0].mxu0
    %v3556 = vadd.f32 0.0, %v3555
    %v3557 = vpop.f32.mrb[0].mxu0
    %3558 = vmatprep.mubr.bf16.mxu0 0
    %3559 = vmatmul.mubr.bf16.gmra.mrb[0].mxu0 %v2575
    %v3560 = vpop.f32.mrb[0].mxu0
    %v3561 = vadd.f32 0.0, %v3560
    %v3562 = vpop.f32.mrb[0].mxu0
    %v3563 = vpop.f32.mrb[0].mxu0
    %v3564 = vadd.f32 0.0, %v3563
    %v3565 = vpop.f32.mrb[0].mxu0
    %3566 = vmatprep.mubr.bf16.mxu0 0
    %3567 = vmatmul.mubr.bf16.gmra.mrb[0].mxu0 %v2578
    %v3568 = vpop.f32.mrb[0].mxu0
    %v3569 = vadd.f32 0.0, %v3568
    %v3570 = vpop.f32.mrb[0].mxu0
    %v3571 = vpop.f32.mrb[0].mxu0
    %v3572 = vadd.f32 0.0, %v3571
    %v3573 = vpop.f32.mrb[0].mxu0
    %3574 = vmatprep.mubr.bf16.mxu0 0
    %3575 = vmatmul.mubr.bf16.gmra.mrb[0].mxu0 %v2581
    %v3576 = vpop.f32.mrb[0].mxu0
    %v3577 = vadd.f32 0.0, %v3576
    %v3578 = vpop.f32.mrb[0].mxu0
    %v3579 = vpop.f32.mrb[0].mxu0
    %v3580 = vadd.f32 0.0, %v3579
    %v3581 = vpop.f32.mrb[0].mxu0
    %3582 = vmatprep.mubr.bf16.mxu0 0
    %3583 = vmatmul.mubr.bf16.gmra.mrb[0].mxu0 %v2584
    %v3584 = vpop.f32.mrb[0].mxu0
    %v3585 = vadd.f32 0.0, %v3584
    %v3586 = vpop.f32.mrb[0].mxu0
    %v3587 = vpop.f32.mrb[0].mxu0
    %v3588 = vadd.f32 0.0, %v3587
    %v3589 = vpop.f32.mrb[0].mxu0
    %3590 = vmatprep.mubr.bf16.mxu0 0
    %3591 = vmatmul.mubr.bf16.gmra.mrb[0].mxu0 %v2587
    %v3592 = vpop.f32.mrb[0].mxu0
    %v3593 = vadd.f32 0.0, %v3592
    %v3594 = vpop.f32.mrb[0].mxu0
    %v3595 = vpop.f32.mrb[0].mxu0
    %v3596 = vadd.f32 0.0, %v3595
    %v3597 = vpop.f32.mrb[0].mxu0
    %3598 = vmatprep.mubr.bf16.mxu0 0
    %3599 = vmatmul.mubr.bf16.gmra.mrb[0].mxu0 %v2590
    %v3600 = vpop.f32.mrb[0].mxu0
    %v3601 = vadd.f32 0.0, %v3600
    %v3602 = vpop.f32.mrb[0].mxu0
    %v3603 = vpop.f32.mrb[0].mxu0
    %v3604 = vadd.f32 0.0, %v3603
    %v3605 = vpop.f32.mrb[0].mxu0
    %3606 = vmatprep.mubr.bf16.mxu0 0
    %3607 = vmatmul.mubr.bf16.gmra.mrb[0].mxu0 %v2593
    %v3608 = vpop.f32.mrb[0].mxu0
    %v3609 = vadd.f32 0.0, %v3608
    %v3610 = vpop.f32.mrb[0].mxu0
    %v3611 = vpop.f32.mrb[0].mxu0
    %v3612 = vadd.f32 0.0, %v3611
    %v3613 = vpop.f32.mrb[0].mxu0
    %3614 = vmatprep.mubr.bf16.mxu0 0
    %3615 = vmatmul.mubr.bf16.gmra.mrb[0].mxu0 %v2596
    %v3616 = vpop.f32.mrb[0].mxu0
    %v3617 = vadd.f32 0.0, %v3616
    %v3618 = vpop.f32.mrb[0].mxu0
    %v3619 = vpop.f32.mrb[0].mxu0
    %v3620 = vadd.f32 0.0, %v3619
    %v3621 = vpop.f32.mrb[0].mxu0
    %3622 = vmatprep.mubr.bf16.mxu0 0
    %3623 = vmatmul.mubr.bf16.gmra.mrb[0].mxu0 %v2599
    %v3624 = vpop.f32.mrb[0].mxu0
    %v3625 = vadd.f32 0.0, %v3624
    %v3626 = vpop.f32.mrb[0].mxu0
    %v3627 = vpop.f32.mrb[0].mxu0
    %v3628 = vadd.f32 0.0, %v3627
    %v3629 = vpop.f32.mrb[0].mxu0
    %3630 = vmatprep.mubr.bf16.mxu0 0
    %3631 = vmatmul.mubr.bf16.gmra.mrb[0].mxu0 %v2602
    %v3632 = vpop.f32.mrb[0].mxu0
    %v3633 = vadd.f32 0.0, %v3632
    %v3634 = vpop.f32.mrb[0].mxu0
    %v3635 = vpop.f32.mrb[0].mxu0
    %v3636 = vadd.f32 0.0, %v3635
    %v3637 = vpop.f32.mrb[0].mxu0
    %3638 = vmatprep.mubr.bf16.mxu0 0
    %3639 = vmatmul.mubr.bf16.gmra.mrb[0].mxu0 %v2605
    %v3640 = vpop.f32.mrb[0].mxu0
    %v3641 = vadd.f32 0.0, %v3640
    %v3642 = vpop.f32.mrb[0].mxu0
    %v3643 = vpop.f32.mrb[0].mxu0
    %v3644 = vadd.f32 0.0, %v3643
    %v3645 = vpop.f32.mrb[0].mxu0
    %3646 = vmatprep.mubr.bf16.mxu0 0
    %3647 = vmatmul.mubr.bf16.gmra.mrb[0].mxu0 %v2608
    %v3648 = vpop.f32.mrb[0].mxu0
    %v3649 = vadd.f32 0.0, %v3648
    %v3650 = vpop.f32.mrb[0].mxu0
    %v3651 = vpop.f32.mrb[0].mxu0
    %v3652 = vadd.f32 0.0, %v3651
    %v3653 = vpop.f32.mrb[0].mxu0
    %3654 = vmatprep.mubr.bf16.mxu0 0
    %3655 = vmatmul.mubr.bf16.gmra.mrb[0].mxu0 %v2611
    %v3656 = vpop.f32.mrb[0].mxu0
    %v3657 = vadd.f32 0.0, %v3656
    %v3658 = vpop.f32.mrb[0].mxu0
    %v3659 = vpop.f32.mrb[0].mxu0
    %v3660 = vadd.f32 0.0, %v3659
    %v3661 = vpop.f32.mrb[0].mxu0
    %3662 = vmatprep.mubr.bf16.mxu0 0
    %3663 = vmatmul.mubr.bf16.gmra.mrb[0].mxu0 %v2614
    %v3664 = vpop.f32.mrb[0].mxu0
    %v3665 = vadd.f32 0.0, %v3664
    %v3666 = vpop.f32.mrb[0].mxu0
    %v3667 = vpop.f32.mrb[0].mxu0
    %v3668 = vadd.f32 0.0, %v3667
    %v3669 = vpop.f32.mrb[0].mxu0
    %3670 = vmatprep.mubr.bf16.mxu0 0
    %3671 = vmatmul.mubr.bf16.gmra.mrb[0].mxu0 %v2617
    %v3672 = vpop.f32.mrb[0].mxu0
    %v3673 = vadd.f32 0.0, %v3672
    %v3674 = vpop.f32.mrb[0].mxu0
    %v3675 = vpop.f32.mrb[0].mxu0
    %v3676 = vadd.f32 0.0, %v3675
    %v3677 = vpop.f32.mrb[0].mxu0
    %3678 = vmatprep.mubr.bf16.mxu0 0
    %3679 = vmatmul.mubr.bf16.gmra.mrb[0].mxu0 %v2620
    %v3680 = vpop.f32.mrb[0].mxu0
    %v3681 = vadd.f32 0.0, %v3680
    %v3682 = vpop.f32.mrb[0].mxu0
    %v3683 = vpop.f32.mrb[0].mxu0
    %v3684 = vadd.f32 0.0, %v3683
    %v3685 = vpop.f32.mrb[0].mxu0
    %3686 = vmatprep.mubr.bf16.mxu0 0
    %3687 = vmatmul.mubr.bf16.gmra.mrb[0].mxu0 %v2623
    %v3688 = vpop.f32.mrb[0].mxu0
    %v3689 = vadd.f32 0.0, %v3688
    %v3690 = vpop.f32.mrb[0].mxu0
    %v3691 = vpop.f32.mrb[0].mxu0
    %v3692 = vadd.f32 0.0, %v3691
    %v3693 = vpop.f32.mrb[0].mxu0
    %3694 = vmatprep.mubr.bf16.mxu0 0
    %3695 = vmatmul.mubr.bf16.gmra.mrb[0].mxu0 %v2626
    %v3696 = vpop.f32.mrb[0].mxu0
    %v3697 = vadd.f32 0.0, %v3696
    %v3698 = vpop.f32.mrb[0].mxu0
    %v3699 = vpop.f32.mrb[0].mxu0
    %v3700 = vadd.f32 0.0, %v3699
    %v3701 = vpop.f32.mrb[0].mxu0
    %3702 = vmatprep.mubr.bf16.mxu0 0
    %3703 = vmatmul.mubr.bf16.gmra.mrb[0].mxu0 %v2629
    %v3704 = vpop.f32.mrb[0].mxu0
    %v3705 = vadd.f32 0.0, %v3704
    %v3706 = vpop.f32.mrb[0].mxu0
    %v3707 = vpop.f32.mrb[0].mxu0
    %v3708 = vadd.f32 0.0, %v3707
    %v3709 = vpop.f32.mrb[0].mxu0
    %3710 = vmatprep.mubr.bf16.mxu0 0
    %3711 = vmatmul.mubr.bf16.gmra.mrb[0].mxu0 %v2632
    %v3712 = vpop.f32.mrb[0].mxu0
    %v3713 = vadd.f32 0.0, %v3712
    %v3714 = vpop.f32.mrb[0].mxu0
    %v3715 = vpop.f32.mrb[0].mxu0
    %v3716 = vadd.f32 0.0, %v3715
    %v3717 = vpop.f32.mrb[0].mxu0
    %3718 = vmatprep.mubr.bf16.mxu0 0
    %3719 = vmatmul.mubr.bf16.gmra.mrb[0].mxu0 %v2635
    %v3720 = vpop.f32.mrb[0].mxu0
    %v3721 = vadd.f32 0.0, %v3720
    %v3722 = vpop.f32.mrb[0].mxu0
    %v3723 = vpop.f32.mrb[0].mxu0
    %v3724 = vadd.f32 0.0, %v3723
    %v3725 = vpop.f32.mrb[0].mxu0
    %3726 = vmatprep.mubr.bf16.mxu0 0
    %3727 = vmatmul.mubr.bf16.gmra.mrb[0].mxu0 %v2638
    %v3728 = vpop.f32.mrb[0].mxu0
    %v3729 = vadd.f32 0.0, %v3728
    %v3730 = vpop.f32.mrb[0].mxu0
    %v3731 = vpop.f32.mrb[0].mxu0
    %v3732 = vadd.f32 0.0, %v3731
    %v3733 = vpop.f32.mrb[0].mxu0
    %3734 = vmatprep.mubr.bf16.mxu0 0
    %3735 = vmatmul.mubr.bf16.gmra.mrb[0].mxu0 %v2641
    %v3736 = vpop.f32.mrb[0].mxu0
    %v3737 = vadd.f32 0.0, %v3736
    %v3738 = vpop.f32.mrb[0].mxu0
    %v3739 = vpop.f32.mrb[0].mxu0
    %v3740 = vadd.f32 0.0, %v3739
    %v3741 = vpop.f32.mrb[0].mxu0
    %3742 = vmatprep.mubr.bf16.mxu0 0
    %3743 = vmatmul.mubr.bf16.gmra.mrb[0].mxu0 %v2644
    %v3744 = vpop.f32.mrb[0].mxu0
    %v3745 = vadd.f32 0.0, %v3744
    %v3746 = vpop.f32.mrb[0].mxu0
    %v3747 = vpop.f32.mrb[0].mxu0
    %v3748 = vadd.f32 0.0, %v3747
    %v3749 = vpop.f32.mrb[0].mxu0
    %3750 = vmatprep.mubr.bf16.mxu0 0
    %3751 = vmatmul.mubr.bf16.gmra.mrb[0].mxu0 %v2647
    %v3752 = vpop.f32.mrb[0].mxu0
    %v3753 = vadd.f32 0.0, %v3752
    %v3754 = vpop.f32.mrb[0].mxu0
    %v3755 = vpop.f32.mrb[0].mxu0
    %v3756 = vadd.f32 0.0, %v3755
    %v3757 = vpop.f32.mrb[0].mxu0
    %3758 = vmatprep.mubr.bf16.mxu0 0
    %3759 = vmatmul.mubr.bf16.gmra.mrb[0].mxu0 %v2650
    %v3760 = vpop.f32.mrb[0].mxu0
    %v3761 = vadd.f32 0.0, %v3760
    %v3762 = vpop.f32.mrb[0].mxu0
    %v3763 = vpop.f32.mrb[0].mxu0
    %v3764 = vadd.f32 0.0, %v3763
    %v3765 = vpop.f32.mrb[0].mxu0
    %3766 = vmatprep.mubr.bf16.mxu0 0
    %3767 = vmatmul.mubr.bf16.gmra.mrb[0].mxu0 %v2653
    %v3768 = vpop.f32.mrb[0].mxu0
    %v3769 = vadd.f32 0.0, %v3768
    %v3770 = vpop.f32.mrb[0].mxu0
    %v3771 = vpop.f32.mrb[0].mxu0
    %v3772 = vadd.f32 0.0, %v3771
    %v3773 = vpop.f32.mrb[0].mxu0
    %3774 = vmatprep.mubr.bf16.mxu0 0
    %3775 = vmatmul.mubr.bf16.gmra.mrb[0].mxu0 %v2656
    %v3776 = vpop.f32.mrb[0].mxu0
    %v3777 = vadd.f32 0.0, %v3776
    %v3778 = vpop.f32.mrb[0].mxu0
    %v3779 = vpop.f32.mrb[0].mxu0
    %v3780 = vadd.f32 0.0, %v3779
    %v3781 = vpop.f32.mrb[0].mxu0
    %3782 = vmatprep.mubr.bf16.mxu0 0
    %3783 = vmatmul.mubr.bf16.gmra.mrb[0].mxu0 %v2659
    %v3784 = vpop.f32.mrb[0].mxu0
    %v3785 = vadd.f32 0.0, %v3784
    %v3786 = vpop.f32.mrb[0].mxu0
    %v3787 = vpop.f32.mrb[0].mxu0
    %v3788 = vadd.f32 0.0, %v3787
    %v3789 = vpop.f32.mrb[0].mxu0
    %3790 = vmatprep.mubr.bf16.mxu0 0
    %3791 = vmatmul.mubr.bf16.gmra.mrb[0].mxu0 %v2662
    %v3792 = vpop.f32.mrb[0].mxu0
    %v3793 = vadd.f32 0.0, %v3792
    %v3794 = vpop.f32.mrb[0].mxu0
    %v3795 = vpop.f32.mrb[0].mxu0
    %v3796 = vadd.f32 0.0, %v3795
    %v3797 = vpop.f32.mrb[0].mxu0
    %3798 = vmatprep.mubr.bf16.mxu0 0
    %3799 = vmatmul.mubr.bf16.gmra.mrb[0].mxu0 %v2665
    %v3800 = vpop.f32.mrb[0].mxu0
    %v3801 = vadd.f32 0.0, %v3800
    %v3802 = vpop.f32.mrb[0].mxu0
    %v3803 = vpop.f32.mrb[0].mxu0
    %v3804 = vadd.f32 0.0, %v3803
    %v3805 = vpop.f32.mrb[0].mxu0
    %3806 = vmatprep.mubr.bf16.mxu0 0
    %3807 = vmatmul.mubr.bf16.gmra.mrb[0].mxu0 %v2668
    %v3808 = vpop.f32.mrb[0].mxu0
    %v3809 = vadd.f32 0.0, %v3808
    %v3810 = vpop.f32.mrb[0].mxu0
    %v3811 = vpop.f32.mrb[0].mxu0
    %v3812 = vadd.f32 0.0, %v3811
    %v3813 = vpop.f32.mrb[0].mxu0
    %3814 = vmatprep.mubr.bf16.mxu0 0
    %3815 = vmatmul.mubr.bf16.gmra.mrb[0].mxu0 %v2671
    %v3816 = vpop.f32.mrb[0].mxu0
    %v3817 = vadd.f32 0.0, %v3816
    %v3818 = vpop.f32.mrb[0].mxu0
    %v3819 = vpop.f32.mrb[0].mxu0
    %v3820 = vadd.f32 0.0, %v3819
    %v3821 = vpop.f32.mrb[0].mxu0
    %3822 = vmatprep.mubr.bf16.mxu0 0
    %3823 = vmatmul.mubr.bf16.gmra.mrb[0].mxu0 %v2674
    %v3824 = vpop.f32.mrb[0].mxu0
    %v3825 = vadd.f32 0.0, %v3824
    %v3826 = vpop.f32.mrb[0].mxu0
    %v3827 = vpop.f32.mrb[0].mxu0
    %v3828 = vadd.f32 0.0, %v3827
    %v3829 = vpop.f32.mrb[0].mxu0
    %3830 = vdwg.mxu0
    %v3831 = vld [vmem:[#allocation3] sm:$0xff]
    %v3832 = vld [vmem:[#allocation3 + $0x8] sm:$0xff]
    %v3833 = vld [vmem:[#allocation3 + $0x10] sm:$0xff]
    %v3834 = vld [vmem:[#allocation3 + $0x18] sm:$0xff]
    %v3835 = vld [vmem:[#allocation3 + $0x20] sm:$0xff]
    %v3836 = vld [vmem:[#allocation3 + $0x28] sm:$0xff]
    %v3837 = vld [vmem:[#allocation3 + $0x30] sm:$0xff]
    %v3838 = vld [vmem:[#allocation3 + $0x38] sm:$0xff]
    %v3839 = vld [vmem:[#allocation3 + $0x40] sm:$0xff]
    %v3840 = vld [vmem:[#allocation3 + $0x48] sm:$0xff]
    %v3841 = vld [vmem:[#allocation3 + $0x50] sm:$0xff]
    %v3842 = vld [vmem:[#allocation3 + $0x58] sm:$0xff]
    %v3843 = vld [vmem:[#allocation3 + $0x60] sm:$0xff]
    %v3844 = vld [vmem:[#allocation3 + $0x68] sm:$0xff]
    %v3845 = vld [vmem:[#allocation3 + $0x70] sm:$0xff]
    %v3846 = vld [vmem:[#allocation3 + $0x78] sm:$0xff]
    %v3847 = vld [vmem:[#allocation3 + $0x80] sm:$0xff]
    %v3848 = vld [vmem:[#allocation3 + $0x88] sm:$0xff]
    %v3849 = vld [vmem:[#allocation3 + $0x90] sm:$0xff]
    %v3850 = vld [vmem:[#allocation3 + $0x98] sm:$0xff]
    %v3851 = vld [vmem:[#allocation3 + $0xa0] sm:$0xff]
    %v3852 = vld [vmem:[#allocation3 + $0xa8] sm:$0xff]
    %v3853 = vld [vmem:[#allocation3 + $0xb0] sm:$0xff]
    %v3854 = vld [vmem:[#allocation3 + $0xb8] sm:$0xff]
    %v3855 = vld [vmem:[#allocation3 + $0xc0] sm:$0xff]
    %v3856 = vld [vmem:[#allocation3 + $0xc8] sm:$0xff]
    %v3857 = vld [vmem:[#allocation3 + $0xd0] sm:$0xff]
    %v3858 = vld [vmem:[#allocation3 + $0xd8] sm:$0xff]
    %v3859 = vld [vmem:[#allocation3 + $0xe0] sm:$0xff]
    %v3860 = vld [vmem:[#allocation3 + $0xe8] sm:$0xff]
    %v3861 = vld [vmem:[#allocation3 + $0xf0] sm:$0xff]
    %v3862 = vld [vmem:[#allocation3 + $0xf8] sm:$0xff]
    %v3863 = vld [vmem:[#allocation3 + $0x100] sm:$0xff]
    %v3864 = vld [vmem:[#allocation3 + $0x108] sm:$0xff]
    %v3865 = vld [vmem:[#allocation3 + $0x110] sm:$0xff]
    %v3866 = vld [vmem:[#allocation3 + $0x118] sm:$0xff]
    %v3867 = vld [vmem:[#allocation3 + $0x120] sm:$0xff]
    %v3868 = vld [vmem:[#allocation3 + $0x128] sm:$0xff]
    %v3869 = vld [vmem:[#allocation3 + $0x130] sm:$0xff]
    %v3870 = vld [vmem:[#allocation3 + $0x138] sm:$0xff]
    %v3871 = vld [vmem:[#allocation3 + $0x140] sm:$0xff]
    %v3872 = vld [vmem:[#allocation3 + $0x148] sm:$0xff]
    %v3873 = vld [vmem:[#allocation3 + $0x150] sm:$0xff]
    %v3874 = vld [vmem:[#allocation3 + $0x158] sm:$0xff]
    %v3875 = vld [vmem:[#allocation3 + $0x160] sm:$0xff]
    %v3876 = vld [vmem:[#allocation3 + $0x168] sm:$0xff]
    %v3877 = vld [vmem:[#allocation3 + $0x170] sm:$0xff]
    %v3878 = vld [vmem:[#allocation3 + $0x178] sm:$0xff]
    %v3879 = vld [vmem:[#allocation3 + $0x180] sm:$0xff]
    %v3880 = vld [vmem:[#allocation3 + $0x188] sm:$0xff]
    %v3881 = vld [vmem:[#allocation3 + $0x190] sm:$0xff]
    %v3882 = vld [vmem:[#allocation3 + $0x198] sm:$0xff]
    %v3883 = vld [vmem:[#allocation3 + $0x1a0] sm:$0xff]
    %v3884 = vld [vmem:[#allocation3 + $0x1a8] sm:$0xff]
    %v3885 = vld [vmem:[#allocation3 + $0x1b0] sm:$0xff]
    %v3886 = vld [vmem:[#allocation3 + $0x1b8] sm:$0xff]
    %v3887 = vld [vmem:[#allocation3 + $0x1c0] sm:$0xff]
    %v3888 = vld [vmem:[#allocation3 + $0x1c8] sm:$0xff]
    %v3889 = vld [vmem:[#allocation3 + $0x1d0] sm:$0xff]
    %v3890 = vld [vmem:[#allocation3 + $0x1d8] sm:$0xff]
    %v3891 = vld [vmem:[#allocation3 + $0x1e0] sm:$0xff]
    %v3892 = vld [vmem:[#allocation3 + $0x1e8] sm:$0xff]
    %v3893 = vld [vmem:[#allocation3 + $0x1f0] sm:$0xff]
    %v3894 = vld [vmem:[#allocation3 + $0x1f8] sm:$0xff]
    %v3895 = vld [vmem:[#allocation3 + $0x200] sm:$0xff]
    %v3896 = vld [vmem:[#allocation3 + $0x208] sm:$0xff]
    %v3897 = vld [vmem:[#allocation3 + $0x210] sm:$0xff]
    %v3898 = vld [vmem:[#allocation3 + $0x218] sm:$0xff]
    %v3899 = vld [vmem:[#allocation3 + $0x220] sm:$0xff]
    %v3900 = vld [vmem:[#allocation3 + $0x228] sm:$0xff]
    %v3901 = vld [vmem:[#allocation3 + $0x230] sm:$0xff]
    %v3902 = vld [vmem:[#allocation3 + $0x238] sm:$0xff]
    %v3903 = vld [vmem:[#allocation3 + $0x240] sm:$0xff]
    %v3904 = vld [vmem:[#allocation3 + $0x248] sm:$0xff]
    %v3905 = vld [vmem:[#allocation3 + $0x250] sm:$0xff]
    %v3906 = vld [vmem:[#allocation3 + $0x258] sm:$0xff]
    %v3907 = vld [vmem:[#allocation3 + $0x260] sm:$0xff]
    %v3908 = vld [vmem:[#allocation3 + $0x268] sm:$0xff]
    %v3909 = vld [vmem:[#allocation3 + $0x270] sm:$0xff]
    %v3910 = vld [vmem:[#allocation3 + $0x278] sm:$0xff]
    %v3911 = vld [vmem:[#allocation3 + $0x280] sm:$0xff]
    %v3912 = vld [vmem:[#allocation3 + $0x288] sm:$0xff]
    %v3913 = vld [vmem:[#allocation3 + $0x290] sm:$0xff]
    %v3914 = vld [vmem:[#allocation3 + $0x298] sm:$0xff]
    %v3915 = vld [vmem:[#allocation3 + $0x2a0] sm:$0xff]
    %v3916 = vld [vmem:[#allocation3 + $0x2a8] sm:$0xff]
    %v3917 = vld [vmem:[#allocation3 + $0x2b0] sm:$0xff]
    %v3918 = vld [vmem:[#allocation3 + $0x2b8] sm:$0xff]
    %v3919 = vld [vmem:[#allocation3 + $0x2c0] sm:$0xff]
    %v3920 = vld [vmem:[#allocation3 + $0x2c8] sm:$0xff]
    %v3921 = vld [vmem:[#allocation3 + $0x2d0] sm:$0xff]
    %v3922 = vld [vmem:[#allocation3 + $0x2d8] sm:$0xff]
    %v3923 = vld [vmem:[#allocation3 + $0x2e0] sm:$0xff]
    %v3924 = vld [vmem:[#allocation3 + $0x2e8] sm:$0xff]
    %v3925 = vld [vmem:[#allocation3 + $0x2f0] sm:$0xff]
    %v3926 = vld [vmem:[#allocation3 + $0x2f8] sm:$0xff]
    %v3927 = vadd.f32 %v3831, %v3449
    %v3928 = vadd.f32 %v3832, %v3452
    %v3929 = vadd.f32 %v3833, %v3457
    %v3930 = vadd.f32 %v3834, %v3460
    %v3931 = vadd.f32 %v3835, %v3465
    %v3932 = vadd.f32 %v3836, %v3468
    %v3933 = vadd.f32 %v3837, %v3473
    %v3934 = vadd.f32 %v3838, %v3476
    %v3935 = vadd.f32 %v3839, %v3481
    %v3936 = vadd.f32 %v3840, %v3484
    %v3937 = vadd.f32 %v3841, %v3489
    %v3938 = vadd.f32 %v3842, %v3492
    %v3939 = vadd.f32 %v3843, %v3497
    %v3940 = vadd.f32 %v3844, %v3500
    %v3941 = vadd.f32 %v3845, %v3505
    %v3942 = vadd.f32 %v3846, %v3508
    %v3943 = vadd.f32 %v3847, %v3513
    %v3944 = vadd.f32 %v3848, %v3516
    %v3945 = vadd.f32 %v3849, %v3521
    %v3946 = vadd.f32 %v3850, %v3524
    %v3947 = vadd.f32 %v3851, %v3529
    %v3948 = vadd.f32 %v3852, %v3532
    %v3949 = vadd.f32 %v3853, %v3537
    %v3950 = vadd.f32 %v3854, %v3540
    %v3951 = vadd.f32 %v3855, %v3545
    %v3952 = vadd.f32 %v3856, %v3548
    %v3953 = vadd.f32 %v3857, %v3553
    %v3954 = vadd.f32 %v3858, %v3556
    %v3955 = vadd.f32 %v3859, %v3561
    %v3956 = vadd.f32 %v3860, %v3564
    %v3957 = vadd.f32 %v3861, %v3569
    %v3958 = vadd.f32 %v3862, %v3572
    %v3959 = vadd.f32 %v3863, %v3577
    %v3960 = vadd.f32 %v3864, %v3580
    %v3961 = vadd.f32 %v3865, %v3585
    %v3962 = vadd.f32 %v3866, %v3588
    %v3963 = vadd.f32 %v3867, %v3593
    %v3964 = vadd.f32 %v3868, %v3596
    %v3965 = vadd.f32 %v3869, %v3601
    %v3966 = vadd.f32 %v3870, %v3604
    %v3967 = vadd.f32 %v3871, %v3609
    %v3968 = vadd.f32 %v3872, %v3612
    %v3969 = vadd.f32 %v3873, %v3617
    %v3970 = vadd.f32 %v3874, %v3620
    %v3971 = vadd.f32 %v3875, %v3625
    %v3972 = vadd.f32 %v3876, %v3628
    %v3973 = vadd.f32 %v3877, %v3633
    %v3974 = vadd.f32 %v3878, %v3636
    %v3975 = vadd.f32 %v3879, %v3641
    %v3976 = vadd.f32 %v3880, %v3644
    %v3977 = vadd.f32 %v3881, %v3649
    %v3978 = vadd.f32 %v3882, %v3652
    %v3979 = vadd.f32 %v3883, %v3657
    %v3980 = vadd.f32 %v3884, %v3660
    %v3981 = vadd.f32 %v3885, %v3665
    %v3982 = vadd.f32 %v3886, %v3668
    %v3983 = vadd.f32 %v3887, %v3673
    %v3984 = vadd.f32 %v3888, %v3676
    %v3985 = vadd.f32 %v3889, %v3681
    %v3986 = vadd.f32 %v3890, %v3684
    %v3987 = vadd.f32 %v3891, %v3689
    %v3988 = vadd.f32 %v3892, %v3692
    %v3989 = vadd.f32 %v3893, %v3697
    %v3990 = vadd.f32 %v3894, %v3700
    %v3991 = vadd.f32 %v3895, %v3705
    %v3992 = vadd.f32 %v3896, %v3708
    %v3993 = vadd.f32 %v3897, %v3713
    %v3994 = vadd.f32 %v3898, %v3716
    %v3995 = vadd.f32 %v3899, %v3721
    %v3996 = vadd.f32 %v3900, %v3724
    %v3997 = vadd.f32 %v3901, %v3729
    %v3998 = vadd.f32 %v3902, %v3732
    %v3999 = vadd.f32 %v3903, %v3737
    %v4000 = vadd.f32 %v3904, %v3740
    %v4001 = vadd.f32 %v3905, %v3745
    %v4002 = vadd.f32 %v3906, %v3748
    %v4003 = vadd.f32 %v3907, %v3753
    %v4004 = vadd.f32 %v3908, %v3756
    %v4005 = vadd.f32 %v3909, %v3761
    %v4006 = vadd.f32 %v3910, %v3764
    %v4007 = vadd.f32 %v3911, %v3769
    %v4008 = vadd.f32 %v3912, %v3772
    %v4009 = vadd.f32 %v3913, %v3777
    %v4010 = vadd.f32 %v3914, %v3780
    %v4011 = vadd.f32 %v3915, %v3785
    %v4012 = vadd.f32 %v3916, %v3788
    %v4013 = vadd.f32 %v3917, %v3793
    %v4014 = vadd.f32 %v3918, %v3796
    %v4015 = vadd.f32 %v3919, %v3801
    %v4016 = vadd.f32 %v3920, %v3804
    %v4017 = vadd.f32 %v3921, %v3809
    %v4018 = vadd.f32 %v3922, %v3812
    %v4019 = vadd.f32 %v3923, %v3817
    %v4020 = vadd.f32 %v3924, %v3820
    %v4021 = vadd.f32 %v3925, %v3825
    %v4022 = vadd.f32 %v3926, %v3828
    %4023 = vst [vmem:[#allocation3] sm:$0xff] %v3927
    %4024 = vst [vmem:[#allocation3 + $0x8] sm:$0xff] %v3928
    %4025 = vst [vmem:[#allocation3 + $0x10] sm:$0xff] %v3929
    %4026 = vst [vmem:[#allocation3 + $0x18] sm:$0xff] %v3930
    %4027 = vst [vmem:[#allocation3 + $0x20] sm:$0xff] %v3931
    %4028 = vst [vmem:[#allocation3 + $0x28] sm:$0xff] %v3932
    %4029 = vst [vmem:[#allocation3 + $0x30] sm:$0xff] %v3933
    %4030 = vst [vmem:[#allocation3 + $0x38] sm:$0xff] %v3934
    %4031 = vst [vmem:[#allocation3 + $0x40] sm:$0xff] %v3935
    %4032 = vst [vmem:[#allocation3 + $0x48] sm:$0xff] %v3936
    %4033 = vst [vmem:[#allocation3 + $0x50] sm:$0xff] %v3937
    %4034 = vst [vmem:[#allocation3 + $0x58] sm:$0xff] %v3938
    %4035 = vst [vmem:[#allocation3 + $0x60] sm:$0xff] %v3939
    %4036 = vst [vmem:[#allocation3 + $0x68] sm:$0xff] %v3940
    %4037 = vst [vmem:[#allocation3 + $0x70] sm:$0xff] %v3941
    %4038 = vst [vmem:[#allocation3 + $0x78] sm:$0xff] %v3942
    %4039 = vst [vmem:[#allocation3 + $0x80] sm:$0xff] %v3943
    %4040 = vst [vmem:[#allocation3 + $0x88] sm:$0xff] %v3944
    %4041 = vst [vmem:[#allocation3 + $0x90] sm:$0xff] %v3945
    %4042 = vst [vmem:[#allocation3 + $0x98] sm:$0xff] %v3946
    %4043 = vst [vmem:[#allocation3 + $0xa0] sm:$0xff] %v3947
    %4044 = vst [vmem:[#allocation3 + $0xa8] sm:$0xff] %v3948
    %4045 = vst [vmem:[#allocation3 + $0xb0] sm:$0xff] %v3949
    %4046 = vst [vmem:[#allocation3 + $0xb8] sm:$0xff] %v3950
    %4047 = vst [vmem:[#allocation3 + $0xc0] sm:$0xff] %v3951
    %4048 = vst [vmem:[#allocation3 + $0xc8] sm:$0xff] %v3952
    %4049 = vst [vmem:[#allocation3 + $0xd0] sm:$0xff] %v3953
    %4050 = vst [vmem:[#allocation3 + $0xd8] sm:$0xff] %v3954
    %4051 = vst [vmem:[#allocation3 + $0xe0] sm:$0xff] %v3955
    %4052 = vst [vmem:[#allocation3 + $0xe8] sm:$0xff] %v3956
    %4053 = vst [vmem:[#allocation3 + $0xf0] sm:$0xff] %v3957
    %4054 = vst [vmem:[#allocation3 + $0xf8] sm:$0xff] %v3958
    %4055 = vst [vmem:[#allocation3 + $0x100] sm:$0xff] %v3959
    %4056 = vst [vmem:[#allocation3 + $0x108] sm:$0xff] %v3960
    %4057 = vst [vmem:[#allocation3 + $0x110] sm:$0xff] %v3961
    %4058 = vst [vmem:[#allocation3 + $0x118] sm:$0xff] %v3962
    %4059 = vst [vmem:[#allocation3 + $0x120] sm:$0xff] %v3963
    %4060 = vst [vmem:[#allocation3 + $0x128] sm:$0xff] %v3964
    %4061 = vst [vmem:[#allocation3 + $0x130] sm:$0xff] %v3965
    %4062 = vst [vmem:[#allocation3 + $0x138] sm:$0xff] %v3966
    %4063 = vst [vmem:[#allocation3 + $0x140] sm:$0xff] %v3967
    %4064 = vst [vmem:[#allocation3 + $0x148] sm:$0xff] %v3968
    %4065 = vst [vmem:[#allocation3 + $0x150] sm:$0xff] %v3969
    %4066 = vst [vmem:[#allocation3 + $0x158] sm:$0xff] %v3970
    %4067 = vst [vmem:[#allocation3 + $0x160] sm:$0xff] %v3971
    %4068 = vst [vmem:[#allocation3 + $0x168] sm:$0xff] %v3972
    %4069 = vst [vmem:[#allocation3 + $0x170] sm:$0xff] %v3973
    %4070 = vst [vmem:[#allocation3 + $0x178] sm:$0xff] %v3974
    %4071 = vst [vmem:[#allocation3 + $0x180] sm:$0xff] %v3975
    %4072 = vst [vmem:[#allocation3 + $0x188] sm:$0xff] %v3976
    %4073 = vst [vmem:[#allocation3 + $0x190] sm:$0xff] %v3977
    %4074 = vst [vmem:[#allocation3 + $0x198] sm:$0xff] %v3978
    %4075 = vst [vmem:[#allocation3 + $0x1a0] sm:$0xff] %v3979
    %4076 = vst [vmem:[#allocation3 + $0x1a8] sm:$0xff] %v3980
    %4077 = vst [vmem:[#allocation3 + $0x1b0] sm:$0xff] %v3981
    %4078 = vst [vmem:[#allocation3 + $0x1b8] sm:$0xff] %v3982
    %4079 = vst [vmem:[#allocation3 + $0x1c0] sm:$0xff] %v3983
    %4080 = vst [vmem:[#allocation3 + $0x1c8] sm:$0xff] %v3984
    %4081 = vst [vmem:[#allocation3 + $0x1d0] sm:$0xff] %v3985
    %4082 = vst [vmem:[#allocation3 + $0x1d8] sm:$0xff] %v3986
    %4083 = vst [vmem:[#allocation3 + $0x1e0] sm:$0xff] %v3987
    %4084 = vst [vmem:[#allocation3 + $0x1e8] sm:$0xff] %v3988
    %4085 = vst [vmem:[#allocation3 + $0x1f0] sm:$0xff] %v3989
    %4086 = vst [vmem:[#allocation3 + $0x1f8] sm:$0xff] %v3990
    %4087 = vst [vmem:[#allocation3 + $0x200] sm:$0xff] %v3991
    %4088 = vst [vmem:[#allocation3 + $0x208] sm:$0xff] %v3992
    %4089 = vst [vmem:[#allocation3 + $0x210] sm:$0xff] %v3993
    %4090 = vst [vmem:[#allocation3 + $0x218] sm:$0xff] %v3994
    %4091 = vst [vmem:[#allocation3 + $0x220] sm:$0xff] %v3995
    %4092 = vst [vmem:[#allocation3 + $0x228] sm:$0xff] %v3996
    %4093 = vst [vmem:[#allocation3 + $0x230] sm:$0xff] %v3997
    %4094 = vst [vmem:[#allocation3 + $0x238] sm:$0xff] %v3998
    %4095 = vst [vmem:[#allocation3 + $0x240] sm:$0xff] %v3999
    %4096 = vst [vmem:[#allocation3 + $0x248] sm:$0xff] %v4000
    %4097 = vst [vmem:[#allocation3 + $0x250] sm:$0xff] %v4001
    %4098 = vst [vmem:[#allocation3 + $0x258] sm:$0xff] %v4002
    %4099 = vst [vmem:[#allocation3 + $0x260] sm:$0xff] %v4003
    %4100 = vst [vmem:[#allocation3 + $0x268] sm:$0xff] %v4004
    %4101 = vst [vmem:[#allocation3 + $0x270] sm:$0xff] %v4005
    %4102 = vst [vmem:[#allocation3 + $0x278] sm:$0xff] %v4006
    %4103 = vst [vmem:[#allocation3 + $0x280] sm:$0xff] %v4007
    %4104 = vst [vmem:[#allocation3 + $0x288] sm:$0xff] %v4008
    %4105 = vst [vmem:[#allocation3 + $0x290] sm:$0xff] %v4009
    %4106 = vst [vmem:[#allocation3 + $0x298] sm:$0xff] %v4010
    %4107 = vst [vmem:[#allocation3 + $0x2a0] sm:$0xff] %v4011
    %4108 = vst [vmem:[#allocation3 + $0x2a8] sm:$0xff] %v4012
    %4109 = vst [vmem:[#allocation3 + $0x2b0] sm:$0xff] %v4013
    %4110 = vst [vmem:[#allocation3 + $0x2b8] sm:$0xff] %v4014
    %4111 = vst [vmem:[#allocation3 + $0x2c0] sm:$0xff] %v4015
    %4112 = vst [vmem:[#allocation3 + $0x2c8] sm:$0xff] %v4016
    %4113 = vst [vmem:[#allocation3 + $0x2d0] sm:$0xff] %v4017
    %4114 = vst [vmem:[#allocation3 + $0x2d8] sm:$0xff] %v4018
    %4115 = vst [vmem:[#allocation3 + $0x2e0] sm:$0xff] %v4019
    %4116 = vst [vmem:[#allocation3 + $0x2e8] sm:$0xff] %v4020
    %4117 = vst [vmem:[#allocation3 + $0x2f0] sm:$0xff] %v4021
    %4118 = vst [vmem:[#allocation3 + $0x2f8] sm:$0xff] %v4022
    %s4119 = scalar_lea.vmem [#allocation8], 160
    %v4120 = vld [vmem:[%s4119] sm:$0xf]
    %v4121 = vld [vmem:[%s4119 + $0x4] sm:$0xf]
    %v4122 = vld [vmem:[%s4119 + $0x8] sm:$0xf]
    %v4123 = vld [vmem:[%s4119 + $0xc] sm:$0xf]
    %v4124 = vld [vmem:[%s4119 + $0x10] sm:$0xf]
    %v4125 = vld [vmem:[%s4119 + $0x14] sm:$0xf]
    %v4126 = vld [vmem:[%s4119 + $0x18] sm:$0xf]
    %v4127 = vld [vmem:[%s4119 + $0x1c] sm:$0xf]
    %v4136 = vunpack.c.l.b16 %v4120
    %v4137 = vunpack.c.l.b16 %v4121
    %v4138 = vunpack.c.l.b16 %v4122
    %v4139 = vunpack.c.l.b16 %v4123
    %v4140 = vunpack.c.l.b16 %v4124
    %v4141 = vunpack.c.l.b16 %v4125
    %v4142 = vunpack.c.l.b16 %v4126
    %v4143 = vunpack.c.l.b16 %v4127
    %v4144 = vpack.c.b16 %v4137, %v4136
    %v4145 = vpack.c.b16 %v4139, %v4138
    %v4146 = vpack.c.b16 %v4141, %v4140
    %v4147 = vpack.c.b16 %v4143, %v4142
    %4152 = vmatprep.subr.bf16.mxu0 0
    %4153 = vmatpush1.bf16.msra.mxu0 %v4144
    %4154 = vmatprep.subr.bf16.mxu0 0
    %4155 = vmatpush1.bf16.msra.mxu0 %v4145
    %4156 = vmatprep.subr.bf16.mxu0 0
    %4157 = vmatpush1.bf16.msra.mxu0 %v4146
    %4158 = vmatprep.subr.bf16.mxu0 0
    %4159 = vmatpush1.bf16.msra.mxu0 %v4147
    %4160 = vmatprep.subr.bf16.mxu0 0
    %4161 = vmatpush1.bf16.msra.mxu0 0
    %4162 = vmatprep.subr.bf16.mxu0 0
    %4163 = vmatpush1.bf16.msra.mxu0 0
    %4164 = vmatprep.subr.bf16.mxu0 0
    %4165 = vmatpush1.bf16.msra.mxu0 0
    %4166 = vmatprep.subr.bf16.mxu0 0
    %4167 = vmatpush1.bf16.msra.mxu0 0
    %4168 = vmatprep.subr.bf16.mxu0 0
    %4169 = vmatpush1.bf16.msra.mxu0 0
    %4170 = vmatprep.subr.bf16.mxu0 0
    %4171 = vmatpush1.bf16.msra.mxu0 0
    %4172 = vmatprep.subr.bf16.mxu0 0
    %4173 = vmatpush1.bf16.msra.mxu0 0
    %4174 = vmatprep.subr.bf16.mxu0 0
    %4175 = vmatpush1.bf16.msra.mxu0 0
    %4176 = vmatprep.subr.bf16.mxu0 0
    %4177 = vmatpush1.bf16.msra.mxu0 0
    %4178 = vmatprep.subr.bf16.mxu0 0
    %4179 = vmatpush1.bf16.msra.mxu0 0
    %4180 = vmatprep.subr.bf16.mxu0 0
    %4181 = vmatpush1.bf16.msra.mxu0 0
    %4182 = vmatprep.subr.bf16.mxu0 0
    %4183 = vmatpush1.bf16.msra.mxu0 0
    %4184 = vmatprep.mubr.bf16.mxu0 0
    %4185 = vmatmul.mubr.bf16.gmra.mrb[0].mxu0 %v2533
    %v4186 = vpop.f32.mrb[0].mxu0
    %v4187 = vadd.f32 0.0, %v4186
    %v4188 = vpop.f32.mrb[0].mxu0
    %v4189 = vpop.f32.mrb[0].mxu0
    %v4190 = vadd.f32 0.0, %v4189
    %v4191 = vpop.f32.mrb[0].mxu0
    %4192 = vmatprep.mubr.bf16.mxu0 0
    %4193 = vmatmul.mubr.bf16.gmra.mrb[0].mxu0 %v2536
    %v4194 = vpop.f32.mrb[0].mxu0
    %v4195 = vadd.f32 0.0, %v4194
    %v4196 = vpop.f32.mrb[0].mxu0
    %v4197 = vpop.f32.mrb[0].mxu0
    %v4198 = vadd.f32 0.0, %v4197
    %v4199 = vpop.f32.mrb[0].mxu0
    %4200 = vmatprep.mubr.bf16.mxu0 0
    %4201 = vmatmul.mubr.bf16.gmra.mrb[0].mxu0 %v2539
    %v4202 = vpop.f32.mrb[0].mxu0
    %v4203 = vadd.f32 0.0, %v4202
    %v4204 = vpop.f32.mrb[0].mxu0
    %v4205 = vpop.f32.mrb[0].mxu0
    %v4206 = vadd.f32 0.0, %v4205
    %v4207 = vpop.f32.mrb[0].mxu0
    %4208 = vmatprep.mubr.bf16.mxu0 0
    %4209 = vmatmul.mubr.bf16.gmra.mrb[0].mxu0 %v2542
    %v4210 = vpop.f32.mrb[0].mxu0
    %v4211 = vadd.f32 0.0, %v4210
    %v4212 = vpop.f32.mrb[0].mxu0
    %v4213 = vpop.f32.mrb[0].mxu0
    %v4214 = vadd.f32 0.0, %v4213
    %v4215 = vpop.f32.mrb[0].mxu0
    %4216 = vmatprep.mubr.bf16.mxu0 0
    %4217 = vmatmul.mubr.bf16.gmra.mrb[0].mxu0 %v2545
    %v4218 = vpop.f32.mrb[0].mxu0
    %v4219 = vadd.f32 0.0, %v4218
    %v4220 = vpop.f32.mrb[0].mxu0
    %v4221 = vpop.f32.mrb[0].mxu0
    %v4222 = vadd.f32 0.0, %v4221
    %v4223 = vpop.f32.mrb[0].mxu0
    %4224 = vmatprep.mubr.bf16.mxu0 0
    %4225 = vmatmul.mubr.bf16.gmra.mrb[0].mxu0 %v2548
    %v4226 = vpop.f32.mrb[0].mxu0
    %v4227 = vadd.f32 0.0, %v4226
    %v4228 = vpop.f32.mrb[0].mxu0
    %v4229 = vpop.f32.mrb[0].mxu0
    %v4230 = vadd.f32 0.0, %v4229
    %v4231 = vpop.f32.mrb[0].mxu0
    %4232 = vmatprep.mubr.bf16.mxu0 0
    %4233 = vmatmul.mubr.bf16.gmra.mrb[0].mxu0 %v2551
    %v4234 = vpop.f32.mrb[0].mxu0
    %v4235 = vadd.f32 0.0, %v4234
    %v4236 = vpop.f32.mrb[0].mxu0
    %v4237 = vpop.f32.mrb[0].mxu0
    %v4238 = vadd.f32 0.0, %v4237
    %v4239 = vpop.f32.mrb[0].mxu0
    %4240 = vmatprep.mubr.bf16.mxu0 0
    %4241 = vmatmul.mubr.bf16.gmra.mrb[0].mxu0 %v2554
    %v4242 = vpop.f32.mrb[0].mxu0
    %v4243 = vadd.f32 0.0, %v4242
    %v4244 = vpop.f32.mrb[0].mxu0
    %v4245 = vpop.f32.mrb[0].mxu0
    %v4246 = vadd.f32 0.0, %v4245
    %v4247 = vpop.f32.mrb[0].mxu0
    %4248 = vmatprep.mubr.bf16.mxu0 0
    %4249 = vmatmul.mubr.bf16.gmra.mrb[0].mxu0 %v2557
    %v4250 = vpop.f32.mrb[0].mxu0
    %v4251 = vadd.f32 0.0, %v4250
    %v4252 = vpop.f32.mrb[0].mxu0
    %v4253 = vpop.f32.mrb[0].mxu0
    %v4254 = vadd.f32 0.0, %v4253
    %v4255 = vpop.f32.mrb[0].mxu0
    %4256 = vmatprep.mubr.bf16.mxu0 0
    %4257 = vmatmul.mubr.bf16.gmra.mrb[0].mxu0 %v2560
    %v4258 = vpop.f32.mrb[0].mxu0
    %v4259 = vadd.f32 0.0, %v4258
    %v4260 = vpop.f32.mrb[0].mxu0
    %v4261 = vpop.f32.mrb[0].mxu0
    %v4262 = vadd.f32 0.0, %v4261
    %v4263 = vpop.f32.mrb[0].mxu0
    %4264 = vmatprep.mubr.bf16.mxu0 0
    %4265 = vmatmul.mubr.bf16.gmra.mrb[0].mxu0 %v2563
    %v4266 = vpop.f32.mrb[0].mxu0
    %v4267 = vadd.f32 0.0, %v4266
    %v4268 = vpop.f32.mrb[0].mxu0
    %v4269 = vpop.f32.mrb[0].mxu0
    %v4270 = vadd.f32 0.0, %v4269
    %v4271 = vpop.f32.mrb[0].mxu0
    %4272 = vmatprep.mubr.bf16.mxu0 0
    %4273 = vmatmul.mubr.bf16.gmra.mrb[0].mxu0 %v2566
    %v4274 = vpop.f32.mrb[0].mxu0
    %v4275 = vadd.f32 0.0, %v4274
    %v4276 = vpop.f32.mrb[0].mxu0
    %v4277 = vpop.f32.mrb[0].mxu0
    %v4278 = vadd.f32 0.0, %v4277
    %v4279 = vpop.f32.mrb[0].mxu0
    %4280 = vmatprep.mubr.bf16.mxu0 0
    %4281 = vmatmul.mubr.bf16.gmra.mrb[0].mxu0 %v2569
    %v4282 = vpop.f32.mrb[0].mxu0
    %v4283 = vadd.f32 0.0, %v4282
    %v4284 = vpop.f32.mrb[0].mxu0
    %v4285 = vpop.f32.mrb[0].mxu0
    %v4286 = vadd.f32 0.0, %v4285
    %v4287 = vpop.f32.mrb[0].mxu0
    %4288 = vmatprep.mubr.bf16.mxu0 0
    %4289 = vmatmul.mubr.bf16.gmra.mrb[0].mxu0 %v2572
    %v4290 = vpop.f32.mrb[0].mxu0
    %v4291 = vadd.f32 0.0, %v4290
    %v4292 = vpop.f32.mrb[0].mxu0
    %v4293 = vpop.f32.mrb[0].mxu0
    %v4294 = vadd.f32 0.0, %v4293
    %v4295 = vpop.f32.mrb[0].mxu0
    %4296 = vmatprep.mubr.bf16.mxu0 0
    %4297 = vmatmul.mubr.bf16.gmra.mrb[0].mxu0 %v2575
    %v4298 = vpop.f32.mrb[0].mxu0
    %v4299 = vadd.f32 0.0, %v4298
    %v4300 = vpop.f32.mrb[0].mxu0
    %v4301 = vpop.f32.mrb[0].mxu0
    %v4302 = vadd.f32 0.0, %v4301
    %v4303 = vpop.f32.mrb[0].mxu0
    %4304 = vmatprep.mubr.bf16.mxu0 0
    %4305 = vmatmul.mubr.bf16.gmra.mrb[0].mxu0 %v2578
    %v4306 = vpop.f32.mrb[0].mxu0
    %v4307 = vadd.f32 0.0, %v4306
    %v4308 = vpop.f32.mrb[0].mxu0
    %v4309 = vpop.f32.mrb[0].mxu0
    %v4310 = vadd.f32 0.0, %v4309
    %v4311 = vpop.f32.mrb[0].mxu0
    %4312 = vmatprep.mubr.bf16.mxu0 0
    %4313 = vmatmul.mubr.bf16.gmra.mrb[0].mxu0 %v2581
    %v4314 = vpop.f32.mrb[0].mxu0
    %v4315 = vadd.f32 0.0, %v4314
    %v4316 = vpop.f32.mrb[0].mxu0
    %v4317 = vpop.f32.mrb[0].mxu0
    %v4318 = vadd.f32 0.0, %v4317
    %v4319 = vpop.f32.mrb[0].mxu0
    %4320 = vmatprep.mubr.bf16.mxu0 0
    %4321 = vmatmul.mubr.bf16.gmra.mrb[0].mxu0 %v2584
    %v4322 = vpop.f32.mrb[0].mxu0
    %v4323 = vadd.f32 0.0, %v4322
    %v4324 = vpop.f32.mrb[0].mxu0
    %v4325 = vpop.f32.mrb[0].mxu0
    %v4326 = vadd.f32 0.0, %v4325
    %v4327 = vpop.f32.mrb[0].mxu0
    %4328 = vmatprep.mubr.bf16.mxu0 0
    %4329 = vmatmul.mubr.bf16.gmra.mrb[0].mxu0 %v2587
    %v4330 = vpop.f32.mrb[0].mxu0
    %v4331 = vadd.f32 0.0, %v4330
    %v4332 = vpop.f32.mrb[0].mxu0
    %v4333 = vpop.f32.mrb[0].mxu0
    %v4334 = vadd.f32 0.0, %v4333
    %v4335 = vpop.f32.mrb[0].mxu0
    %4336 = vmatprep.mubr.bf16.mxu0 0
    %4337 = vmatmul.mubr.bf16.gmra.mrb[0].mxu0 %v2590
    %v4338 = vpop.f32.mrb[0].mxu0
    %v4339 = vadd.f32 0.0, %v4338
    %v4340 = vpop.f32.mrb[0].mxu0
    %v4341 = vpop.f32.mrb[0].mxu0
    %v4342 = vadd.f32 0.0, %v4341
    %v4343 = vpop.f32.mrb[0].mxu0
    %4344 = vmatprep.mubr.bf16.mxu0 0
    %4345 = vmatmul.mubr.bf16.gmra.mrb[0].mxu0 %v2593
    %v4346 = vpop.f32.mrb[0].mxu0
    %v4347 = vadd.f32 0.0, %v4346
    %v4348 = vpop.f32.mrb[0].mxu0
    %v4349 = vpop.f32.mrb[0].mxu0
    %v4350 = vadd.f32 0.0, %v4349
    %v4351 = vpop.f32.mrb[0].mxu0
    %4352 = vmatprep.mubr.bf16.mxu0 0
    %4353 = vmatmul.mubr.bf16.gmra.mrb[0].mxu0 %v2596
    %v4354 = vpop.f32.mrb[0].mxu0
    %v4355 = vadd.f32 0.0, %v4354
    %v4356 = vpop.f32.mrb[0].mxu0
    %v4357 = vpop.f32.mrb[0].mxu0
    %v4358 = vadd.f32 0.0, %v4357
    %v4359 = vpop.f32.mrb[0].mxu0
    %4360 = vmatprep.mubr.bf16.mxu0 0
    %4361 = vmatmul.mubr.bf16.gmra.mrb[0].mxu0 %v2599
    %v4362 = vpop.f32.mrb[0].mxu0
    %v4363 = vadd.f32 0.0, %v4362
    %v4364 = vpop.f32.mrb[0].mxu0
    %v4365 = vpop.f32.mrb[0].mxu0
    %v4366 = vadd.f32 0.0, %v4365
    %v4367 = vpop.f32.mrb[0].mxu0
    %4368 = vmatprep.mubr.bf16.mxu0 0
    %4369 = vmatmul.mubr.bf16.gmra.mrb[0].mxu0 %v2602
    %v4370 = vpop.f32.mrb[0].mxu0
    %v4371 = vadd.f32 0.0, %v4370
    %v4372 = vpop.f32.mrb[0].mxu0
    %v4373 = vpop.f32.mrb[0].mxu0
    %v4374 = vadd.f32 0.0, %v4373
    %v4375 = vpop.f32.mrb[0].mxu0
    %4376 = vmatprep.mubr.bf16.mxu0 0
    %4377 = vmatmul.mubr.bf16.gmra.mrb[0].mxu0 %v2605
    %v4378 = vpop.f32.mrb[0].mxu0
    %v4379 = vadd.f32 0.0, %v4378
    %v4380 = vpop.f32.mrb[0].mxu0
    %v4381 = vpop.f32.mrb[0].mxu0
    %v4382 = vadd.f32 0.0, %v4381
    %v4383 = vpop.f32.mrb[0].mxu0
    %4384 = vmatprep.mubr.bf16.mxu0 0
    %4385 = vmatmul.mubr.bf16.gmra.mrb[0].mxu0 %v2608
    %v4386 = vpop.f32.mrb[0].mxu0
    %v4387 = vadd.f32 0.0, %v4386
    %v4388 = vpop.f32.mrb[0].mxu0
    %v4389 = vpop.f32.mrb[0].mxu0
    %v4390 = vadd.f32 0.0, %v4389
    %v4391 = vpop.f32.mrb[0].mxu0
    %4392 = vmatprep.mubr.bf16.mxu0 0
    %4393 = vmatmul.mubr.bf16.gmra.mrb[0].mxu0 %v2611
    %v4394 = vpop.f32.mrb[0].mxu0
    %v4395 = vadd.f32 0.0, %v4394
    %v4396 = vpop.f32.mrb[0].mxu0
    %v4397 = vpop.f32.mrb[0].mxu0
    %v4398 = vadd.f32 0.0, %v4397
    %v4399 = vpop.f32.mrb[0].mxu0
    %4400 = vmatprep.mubr.bf16.mxu0 0
    %4401 = vmatmul.mubr.bf16.gmra.mrb[0].mxu0 %v2614
    %v4402 = vpop.f32.mrb[0].mxu0
    %v4403 = vadd.f32 0.0, %v4402
    %v4404 = vpop.f32.mrb[0].mxu0
    %v4405 = vpop.f32.mrb[0].mxu0
    %v4406 = vadd.f32 0.0, %v4405
    %v4407 = vpop.f32.mrb[0].mxu0
    %4408 = vmatprep.mubr.bf16.mxu0 0
    %4409 = vmatmul.mubr.bf16.gmra.mrb[0].mxu0 %v2617
    %v4410 = vpop.f32.mrb[0].mxu0
    %v4411 = vadd.f32 0.0, %v4410
    %v4412 = vpop.f32.mrb[0].mxu0
    %v4413 = vpop.f32.mrb[0].mxu0
    %v4414 = vadd.f32 0.0, %v4413
    %v4415 = vpop.f32.mrb[0].mxu0
    %4416 = vmatprep.mubr.bf16.mxu0 0
    %4417 = vmatmul.mubr.bf16.gmra.mrb[0].mxu0 %v2620
    %v4418 = vpop.f32.mrb[0].mxu0
    %v4419 = vadd.f32 0.0, %v4418
    %v4420 = vpop.f32.mrb[0].mxu0
    %v4421 = vpop.f32.mrb[0].mxu0
    %v4422 = vadd.f32 0.0, %v4421
    %v4423 = vpop.f32.mrb[0].mxu0
    %4424 = vmatprep.mubr.bf16.mxu0 0
    %4425 = vmatmul.mubr.bf16.gmra.mrb[0].mxu0 %v2623
    %v4426 = vpop.f32.mrb[0].mxu0
    %v4427 = vadd.f32 0.0, %v4426
    %v4428 = vpop.f32.mrb[0].mxu0
    %v4429 = vpop.f32.mrb[0].mxu0
    %v4430 = vadd.f32 0.0, %v4429
    %v4431 = vpop.f32.mrb[0].mxu0
    %4432 = vmatprep.mubr.bf16.mxu0 0
    %4433 = vmatmul.mubr.bf16.gmra.mrb[0].mxu0 %v2626
    %v4434 = vpop.f32.mrb[0].mxu0
    %v4435 = vadd.f32 0.0, %v4434
    %v4436 = vpop.f32.mrb[0].mxu0
    %v4437 = vpop.f32.mrb[0].mxu0
    %v4438 = vadd.f32 0.0, %v4437
    %v4439 = vpop.f32.mrb[0].mxu0
    %4440 = vmatprep.mubr.bf16.mxu0 0
    %4441 = vmatmul.mubr.bf16.gmra.mrb[0].mxu0 %v2629
    %v4442 = vpop.f32.mrb[0].mxu0
    %v4443 = vadd.f32 0.0, %v4442
    %v4444 = vpop.f32.mrb[0].mxu0
    %v4445 = vpop.f32.mrb[0].mxu0
    %v4446 = vadd.f32 0.0, %v4445
    %v4447 = vpop.f32.mrb[0].mxu0
    %4448 = vmatprep.mubr.bf16.mxu0 0
    %4449 = vmatmul.mubr.bf16.gmra.mrb[0].mxu0 %v2632
    %v4450 = vpop.f32.mrb[0].mxu0
    %v4451 = vadd.f32 0.0, %v4450
    %v4452 = vpop.f32.mrb[0].mxu0
    %v4453 = vpop.f32.mrb[0].mxu0
    %v4454 = vadd.f32 0.0, %v4453
    %v4455 = vpop.f32.mrb[0].mxu0
    %4456 = vmatprep.mubr.bf16.mxu0 0
    %4457 = vmatmul.mubr.bf16.gmra.mrb[0].mxu0 %v2635
    %v4458 = vpop.f32.mrb[0].mxu0
    %v4459 = vadd.f32 0.0, %v4458
    %v4460 = vpop.f32.mrb[0].mxu0
    %v4461 = vpop.f32.mrb[0].mxu0
    %v4462 = vadd.f32 0.0, %v4461
    %v4463 = vpop.f32.mrb[0].mxu0
    %4464 = vmatprep.mubr.bf16.mxu0 0
    %4465 = vmatmul.mubr.bf16.gmra.mrb[0].mxu0 %v2638
    %v4466 = vpop.f32.mrb[0].mxu0
    %v4467 = vadd.f32 0.0, %v4466
    %v4468 = vpop.f32.mrb[0].mxu0
    %v4469 = vpop.f32.mrb[0].mxu0
    %v4470 = vadd.f32 0.0, %v4469
    %v4471 = vpop.f32.mrb[0].mxu0
    %4472 = vmatprep.mubr.bf16.mxu0 0
    %4473 = vmatmul.mubr.bf16.gmra.mrb[0].mxu0 %v2641
    %v4474 = vpop.f32.mrb[0].mxu0
    %v4475 = vadd.f32 0.0, %v4474
    %v4476 = vpop.f32.mrb[0].mxu0
    %v4477 = vpop.f32.mrb[0].mxu0
    %v4478 = vadd.f32 0.0, %v4477
    %v4479 = vpop.f32.mrb[0].mxu0
    %4480 = vmatprep.mubr.bf16.mxu0 0
    %4481 = vmatmul.mubr.bf16.gmra.mrb[0].mxu0 %v2644
    %v4482 = vpop.f32.mrb[0].mxu0
    %v4483 = vadd.f32 0.0, %v4482
    %v4484 = vpop.f32.mrb[0].mxu0
    %v4485 = vpop.f32.mrb[0].mxu0
    %v4486 = vadd.f32 0.0, %v4485
    %v4487 = vpop.f32.mrb[0].mxu0
    %4488 = vmatprep.mubr.bf16.mxu0 0
    %4489 = vmatmul.mubr.bf16.gmra.mrb[0].mxu0 %v2647
    %v4490 = vpop.f32.mrb[0].mxu0
    %v4491 = vadd.f32 0.0, %v4490
    %v4492 = vpop.f32.mrb[0].mxu0
    %v4493 = vpop.f32.mrb[0].mxu0
    %v4494 = vadd.f32 0.0, %v4493
    %v4495 = vpop.f32.mrb[0].mxu0
    %4496 = vmatprep.mubr.bf16.mxu0 0
    %4497 = vmatmul.mubr.bf16.gmra.mrb[0].mxu0 %v2650
    %v4498 = vpop.f32.mrb[0].mxu0
    %v4499 = vadd.f32 0.0, %v4498
    %v4500 = vpop.f32.mrb[0].mxu0
    %v4501 = vpop.f32.mrb[0].mxu0
    %v4502 = vadd.f32 0.0, %v4501
    %v4503 = vpop.f32.mrb[0].mxu0
    %4504 = vmatprep.mubr.bf16.mxu0 0
    %4505 = vmatmul.mubr.bf16.gmra.mrb[0].mxu0 %v2653
    %v4506 = vpop.f32.mrb[0].mxu0
    %v4507 = vadd.f32 0.0, %v4506
    %v4508 = vpop.f32.mrb[0].mxu0
    %v4509 = vpop.f32.mrb[0].mxu0
    %v4510 = vadd.f32 0.0, %v4509
    %v4511 = vpop.f32.mrb[0].mxu0
    %4512 = vmatprep.mubr.bf16.mxu0 0
    %4513 = vmatmul.mubr.bf16.gmra.mrb[0].mxu0 %v2656
    %v4514 = vpop.f32.mrb[0].mxu0
    %v4515 = vadd.f32 0.0, %v4514
    %v4516 = vpop.f32.mrb[0].mxu0
    %v4517 = vpop.f32.mrb[0].mxu0
    %v4518 = vadd.f32 0.0, %v4517
    %v4519 = vpop.f32.mrb[0].mxu0
    %4520 = vmatprep.mubr.bf16.mxu0 0
    %4521 = vmatmul.mubr.bf16.gmra.mrb[0].mxu0 %v2659
    %v4522 = vpop.f32.mrb[0].mxu0
    %v4523 = vadd.f32 0.0, %v4522
    %v4524 = vpop.f32.mrb[0].mxu0
    %v4525 = vpop.f32.mrb[0].mxu0
    %v4526 = vadd.f32 0.0, %v4525
    %v4527 = vpop.f32.mrb[0].mxu0
    %4528 = vmatprep.mubr.bf16.mxu0 0
    %4529 = vmatmul.mubr.bf16.gmra.mrb[0].mxu0 %v2662
    %v4530 = vpop.f32.mrb[0].mxu0
    %v4531 = vadd.f32 0.0, %v4530
    %v4532 = vpop.f32.mrb[0].mxu0
    %v4533 = vpop.f32.mrb[0].mxu0
    %v4534 = vadd.f32 0.0, %v4533
    %v4535 = vpop.f32.mrb[0].mxu0
    %4536 = vmatprep.mubr.bf16.mxu0 0
    %4537 = vmatmul.mubr.bf16.gmra.mrb[0].mxu0 %v2665
    %v4538 = vpop.f32.mrb[0].mxu0
    %v4539 = vadd.f32 0.0, %v4538
    %v4540 = vpop.f32.mrb[0].mxu0
    %v4541 = vpop.f32.mrb[0].mxu0
    %v4542 = vadd.f32 0.0, %v4541
    %v4543 = vpop.f32.mrb[0].mxu0
    %4544 = vmatprep.mubr.bf16.mxu0 0
    %4545 = vmatmul.mubr.bf16.gmra.mrb[0].mxu0 %v2668
    %v4546 = vpop.f32.mrb[0].mxu0
    %v4547 = vadd.f32 0.0, %v4546
    %v4548 = vpop.f32.mrb[0].mxu0
    %v4549 = vpop.f32.mrb[0].mxu0
    %v4550 = vadd.f32 0.0, %v4549
    %v4551 = vpop.f32.mrb[0].mxu0
    %4552 = vmatprep.mubr.bf16.mxu0 0
    %4553 = vmatmul.mubr.bf16.gmra.mrb[0].mxu0 %v2671
    %v4554 = vpop.f32.mrb[0].mxu0
    %v4555 = vadd.f32 0.0, %v4554
    %v4556 = vpop.f32.mrb[0].mxu0
    %v4557 = vpop.f32.mrb[0].mxu0
    %v4558 = vadd.f32 0.0, %v4557
    %v4559 = vpop.f32.mrb[0].mxu0
    %4560 = vmatprep.mubr.bf16.mxu0 0
    %4561 = vmatmul.mubr.bf16.gmra.mrb[0].mxu0 %v2674
    %v4562 = vpop.f32.mrb[0].mxu0
    %v4563 = vadd.f32 0.0, %v4562
    %v4564 = vpop.f32.mrb[0].mxu0
    %v4565 = vpop.f32.mrb[0].mxu0
    %v4566 = vadd.f32 0.0, %v4565
    %v4567 = vpop.f32.mrb[0].mxu0
    %4568 = vdwg.mxu0
    %v4569 = vld [vmem:[#allocation4] sm:$0xff]
    %v4570 = vld [vmem:[#allocation4 + $0x8] sm:$0xff]
    %v4571 = vld [vmem:[#allocation4 + $0x10] sm:$0xff]
    %v4572 = vld [vmem:[#allocation4 + $0x18] sm:$0xff]
    %v4573 = vld [vmem:[#allocation4 + $0x20] sm:$0xff]
    %v4574 = vld [vmem:[#allocation4 + $0x28] sm:$0xff]
    %v4575 = vld [vmem:[#allocation4 + $0x30] sm:$0xff]
    %v4576 = vld [vmem:[#allocation4 + $0x38] sm:$0xff]
    %v4577 = vld [vmem:[#allocation4 + $0x40] sm:$0xff]
    %v4578 = vld [vmem:[#allocation4 + $0x48] sm:$0xff]
    %v4579 = vld [vmem:[#allocation4 + $0x50] sm:$0xff]
    %v4580 = vld [vmem:[#allocation4 + $0x58] sm:$0xff]
    %v4581 = vld [vmem:[#allocation4 + $0x60] sm:$0xff]
    %v4582 = vld [vmem:[#allocation4 + $0x68] sm:$0xff]
    %v4583 = vld [vmem:[#allocation4 + $0x70] sm:$0xff]
    %v4584 = vld [vmem:[#allocation4 + $0x78] sm:$0xff]
    %v4585 = vld [vmem:[#allocation4 + $0x80] sm:$0xff]
    %v4586 = vld [vmem:[#allocation4 + $0x88] sm:$0xff]
    %v4587 = vld [vmem:[#allocation4 + $0x90] sm:$0xff]
    %v4588 = vld [vmem:[#allocation4 + $0x98] sm:$0xff]
    %v4589 = vld [vmem:[#allocation4 + $0xa0] sm:$0xff]
    %v4590 = vld [vmem:[#allocation4 + $0xa8] sm:$0xff]
    %v4591 = vld [vmem:[#allocation4 + $0xb0] sm:$0xff]
    %v4592 = vld [vmem:[#allocation4 + $0xb8] sm:$0xff]
    %v4593 = vld [vmem:[#allocation4 + $0xc0] sm:$0xff]
    %v4594 = vld [vmem:[#allocation4 + $0xc8] sm:$0xff]
    %v4595 = vld [vmem:[#allocation4 + $0xd0] sm:$0xff]
    %v4596 = vld [vmem:[#allocation4 + $0xd8] sm:$0xff]
    %v4597 = vld [vmem:[#allocation4 + $0xe0] sm:$0xff]
    %v4598 = vld [vmem:[#allocation4 + $0xe8] sm:$0xff]
    %v4599 = vld [vmem:[#allocation4 + $0xf0] sm:$0xff]
    %v4600 = vld [vmem:[#allocation4 + $0xf8] sm:$0xff]
    %v4601 = vld [vmem:[#allocation4 + $0x100] sm:$0xff]
    %v4602 = vld [vmem:[#allocation4 + $0x108] sm:$0xff]
    %v4603 = vld [vmem:[#allocation4 + $0x110] sm:$0xff]
    %v4604 = vld [vmem:[#allocation4 + $0x118] sm:$0xff]
    %v4605 = vld [vmem:[#allocation4 + $0x120] sm:$0xff]
    %v4606 = vld [vmem:[#allocation4 + $0x128] sm:$0xff]
    %v4607 = vld [vmem:[#allocation4 + $0x130] sm:$0xff]
    %v4608 = vld [vmem:[#allocation4 + $0x138] sm:$0xff]
    %v4609 = vld [vmem:[#allocation4 + $0x140] sm:$0xff]
    %v4610 = vld [vmem:[#allocation4 + $0x148] sm:$0xff]
    %v4611 = vld [vmem:[#allocation4 + $0x150] sm:$0xff]
    %v4612 = vld [vmem:[#allocation4 + $0x158] sm:$0xff]
    %v4613 = vld [vmem:[#allocation4 + $0x160] sm:$0xff]
    %v4614 = vld [vmem:[#allocation4 + $0x168] sm:$0xff]
    %v4615 = vld [vmem:[#allocation4 + $0x170] sm:$0xff]
    %v4616 = vld [vmem:[#allocation4 + $0x178] sm:$0xff]
    %v4617 = vld [vmem:[#allocation4 + $0x180] sm:$0xff]
    %v4618 = vld [vmem:[#allocation4 + $0x188] sm:$0xff]
    %v4619 = vld [vmem:[#allocation4 + $0x190] sm:$0xff]
    %v4620 = vld [vmem:[#allocation4 + $0x198] sm:$0xff]
    %v4621 = vld [vmem:[#allocation4 + $0x1a0] sm:$0xff]
    %v4622 = vld [vmem:[#allocation4 + $0x1a8] sm:$0xff]
    %v4623 = vld [vmem:[#allocation4 + $0x1b0] sm:$0xff]
    %v4624 = vld [vmem:[#allocation4 + $0x1b8] sm:$0xff]
    %v4625 = vld [vmem:[#allocation4 + $0x1c0] sm:$0xff]
    %v4626 = vld [vmem:[#allocation4 + $0x1c8] sm:$0xff]
    %v4627 = vld [vmem:[#allocation4 + $0x1d0] sm:$0xff]
    %v4628 = vld [vmem:[#allocation4 + $0x1d8] sm:$0xff]
    %v4629 = vld [vmem:[#allocation4 + $0x1e0] sm:$0xff]
    %v4630 = vld [vmem:[#allocation4 + $0x1e8] sm:$0xff]
    %v4631 = vld [vmem:[#allocation4 + $0x1f0] sm:$0xff]
    %v4632 = vld [vmem:[#allocation4 + $0x1f8] sm:$0xff]
    %v4633 = vld [vmem:[#allocation4 + $0x200] sm:$0xff]
    %v4634 = vld [vmem:[#allocation4 + $0x208] sm:$0xff]
    %v4635 = vld [vmem:[#allocation4 + $0x210] sm:$0xff]
    %v4636 = vld [vmem:[#allocation4 + $0x218] sm:$0xff]
    %v4637 = vld [vmem:[#allocation4 + $0x220] sm:$0xff]
    %v4638 = vld [vmem:[#allocation4 + $0x228] sm:$0xff]
    %v4639 = vld [vmem:[#allocation4 + $0x230] sm:$0xff]
    %v4640 = vld [vmem:[#allocation4 + $0x238] sm:$0xff]
    %v4641 = vld [vmem:[#allocation4 + $0x240] sm:$0xff]
    %v4642 = vld [vmem:[#allocation4 + $0x248] sm:$0xff]
    %v4643 = vld [vmem:[#allocation4 + $0x250] sm:$0xff]
    %v4644 = vld [vmem:[#allocation4 + $0x258] sm:$0xff]
    %v4645 = vld [vmem:[#allocation4 + $0x260] sm:$0xff]
    %v4646 = vld [vmem:[#allocation4 + $0x268] sm:$0xff]
    %v4647 = vld [vmem:[#allocation4 + $0x270] sm:$0xff]
    %v4648 = vld [vmem:[#allocation4 + $0x278] sm:$0xff]
    %v4649 = vld [vmem:[#allocation4 + $0x280] sm:$0xff]
    %v4650 = vld [vmem:[#allocation4 + $0x288] sm:$0xff]
    %v4651 = vld [vmem:[#allocation4 + $0x290] sm:$0xff]
    %v4652 = vld [vmem:[#allocation4 + $0x298] sm:$0xff]
    %v4653 = vld [vmem:[#allocation4 + $0x2a0] sm:$0xff]
    %v4654 = vld [vmem:[#allocation4 + $0x2a8] sm:$0xff]
    %v4655 = vld [vmem:[#allocation4 + $0x2b0] sm:$0xff]
    %v4656 = vld [vmem:[#allocation4 + $0x2b8] sm:$0xff]
    %v4657 = vld [vmem:[#allocation4 + $0x2c0] sm:$0xff]
    %v4658 = vld [vmem:[#allocation4 + $0x2c8] sm:$0xff]
    %v4659 = vld [vmem:[#allocation4 + $0x2d0] sm:$0xff]
    %v4660 = vld [vmem:[#allocation4 + $0x2d8] sm:$0xff]
    %v4661 = vld [vmem:[#allocation4 + $0x2e0] sm:$0xff]
    %v4662 = vld [vmem:[#allocation4 + $0x2e8] sm:$0xff]
    %v4663 = vld [vmem:[#allocation4 + $0x2f0] sm:$0xff]
    %v4664 = vld [vmem:[#allocation4 + $0x2f8] sm:$0xff]
    %v4665 = vadd.f32 %v4569, %v4187
    %v4666 = vadd.f32 %v4570, %v4190
    %v4667 = vadd.f32 %v4571, %v4195
    %v4668 = vadd.f32 %v4572, %v4198
    %v4669 = vadd.f32 %v4573, %v4203
    %v4670 = vadd.f32 %v4574, %v4206
    %v4671 = vadd.f32 %v4575, %v4211
    %v4672 = vadd.f32 %v4576, %v4214
    %v4673 = vadd.f32 %v4577, %v4219
    %v4674 = vadd.f32 %v4578, %v4222
    %v4675 = vadd.f32 %v4579, %v4227
    %v4676 = vadd.f32 %v4580, %v4230
    %v4677 = vadd.f32 %v4581, %v4235
    %v4678 = vadd.f32 %v4582, %v4238
    %v4679 = vadd.f32 %v4583, %v4243
    %v4680 = vadd.f32 %v4584, %v4246
    %v4681 = vadd.f32 %v4585, %v4251
    %v4682 = vadd.f32 %v4586, %v4254
    %v4683 = vadd.f32 %v4587, %v4259
    %v4684 = vadd.f32 %v4588, %v4262
    %v4685 = vadd.f32 %v4589, %v4267
    %v4686 = vadd.f32 %v4590, %v4270
    %v4687 = vadd.f32 %v4591, %v4275
    %v4688 = vadd.f32 %v4592, %v4278
    %v4689 = vadd.f32 %v4593, %v4283
    %v4690 = vadd.f32 %v4594, %v4286
    %v4691 = vadd.f32 %v4595, %v4291
    %v4692 = vadd.f32 %v4596, %v4294
    %v4693 = vadd.f32 %v4597, %v4299
    %v4694 = vadd.f32 %v4598, %v4302
    %v4695 = vadd.f32 %v4599, %v4307
    %v4696 = vadd.f32 %v4600, %v4310
    %v4697 = vadd.f32 %v4601, %v4315
    %v4698 = vadd.f32 %v4602, %v4318
    %v4699 = vadd.f32 %v4603, %v4323
    %v4700 = vadd.f32 %v4604, %v4326
    %v4701 = vadd.f32 %v4605, %v4331
    %v4702 = vadd.f32 %v4606, %v4334
    %v4703 = vadd.f32 %v4607, %v4339
    %v4704 = vadd.f32 %v4608, %v4342
    %v4705 = vadd.f32 %v4609, %v4347
    %v4706 = vadd.f32 %v4610, %v4350
    %v4707 = vadd.f32 %v4611, %v4355
    %v4708 = vadd.f32 %v4612, %v4358
    %v4709 = vadd.f32 %v4613, %v4363
    %v4710 = vadd.f32 %v4614, %v4366
    %v4711 = vadd.f32 %v4615, %v4371
    %v4712 = vadd.f32 %v4616, %v4374
    %v4713 = vadd.f32 %v4617, %v4379
    %v4714 = vadd.f32 %v4618, %v4382
    %v4715 = vadd.f32 %v4619, %v4387
    %v4716 = vadd.f32 %v4620, %v4390
    %v4717 = vadd.f32 %v4621, %v4395
    %v4718 = vadd.f32 %v4622, %v4398
    %v4719 = vadd.f32 %v4623, %v4403
    %v4720 = vadd.f32 %v4624, %v4406
    %v4721 = vadd.f32 %v4625, %v4411
    %v4722 = vadd.f32 %v4626, %v4414
    %v4723 = vadd.f32 %v4627, %v4419
    %v4724 = vadd.f32 %v4628, %v4422
    %v4725 = vadd.f32 %v4629, %v4427
    %v4726 = vadd.f32 %v4630, %v4430
    %v4727 = vadd.f32 %v4631, %v4435
    %v4728 = vadd.f32 %v4632, %v4438
    %v4729 = vadd.f32 %v4633, %v4443
    %v4730 = vadd.f32 %v4634, %v4446
    %v4731 = vadd.f32 %v4635, %v4451
    %v4732 = vadd.f32 %v4636, %v4454
    %v4733 = vadd.f32 %v4637, %v4459
    %v4734 = vadd.f32 %v4638, %v4462
    %v4735 = vadd.f32 %v4639, %v4467
    %v4736 = vadd.f32 %v4640, %v4470
    %v4737 = vadd.f32 %v4641, %v4475
    %v4738 = vadd.f32 %v4642, %v4478
    %v4739 = vadd.f32 %v4643, %v4483
    %v4740 = vadd.f32 %v4644, %v4486
    %v4741 = vadd.f32 %v4645, %v4491
    %v4742 = vadd.f32 %v4646, %v4494
    %v4743 = vadd.f32 %v4647, %v4499
    %v4744 = vadd.f32 %v4648, %v4502
    %v4745 = vadd.f32 %v4649, %v4507
    %v4746 = vadd.f32 %v4650, %v4510
    %v4747 = vadd.f32 %v4651, %v4515
    %v4748 = vadd.f32 %v4652, %v4518
    %v4749 = vadd.f32 %v4653, %v4523
    %v4750 = vadd.f32 %v4654, %v4526
    %v4751 = vadd.f32 %v4655, %v4531
    %v4752 = vadd.f32 %v4656, %v4534
    %v4753 = vadd.f32 %v4657, %v4539
    %v4754 = vadd.f32 %v4658, %v4542
    %v4755 = vadd.f32 %v4659, %v4547
    %v4756 = vadd.f32 %v4660, %v4550
    %v4757 = vadd.f32 %v4661, %v4555
    %v4758 = vadd.f32 %v4662, %v4558
    %v4759 = vadd.f32 %v4663, %v4563
    %v4760 = vadd.f32 %v4664, %v4566
    %4761 = vst [vmem:[#allocation4] sm:$0xff] %v4665
    %4762 = vst [vmem:[#allocation4 + $0x8] sm:$0xff] %v4666
    %4763 = vst [vmem:[#allocation4 + $0x10] sm:$0xff] %v4667
    %4764 = vst [vmem:[#allocation4 + $0x18] sm:$0xff] %v4668
    %4765 = vst [vmem:[#allocation4 + $0x20] sm:$0xff] %v4669
    %4766 = vst [vmem:[#allocation4 + $0x28] sm:$0xff] %v4670
    %4767 = vst [vmem:[#allocation4 + $0x30] sm:$0xff] %v4671
    %4768 = vst [vmem:[#allocation4 + $0x38] sm:$0xff] %v4672
    %4769 = vst [vmem:[#allocation4 + $0x40] sm:$0xff] %v4673
    %4770 = vst [vmem:[#allocation4 + $0x48] sm:$0xff] %v4674
    %4771 = vst [vmem:[#allocation4 + $0x50] sm:$0xff] %v4675
    %4772 = vst [vmem:[#allocation4 + $0x58] sm:$0xff] %v4676
    %4773 = vst [vmem:[#allocation4 + $0x60] sm:$0xff] %v4677
    %4774 = vst [vmem:[#allocation4 + $0x68] sm:$0xff] %v4678
    %4775 = vst [vmem:[#allocation4 + $0x70] sm:$0xff] %v4679
    %4776 = vst [vmem:[#allocation4 + $0x78] sm:$0xff] %v4680
    %4777 = vst [vmem:[#allocation4 + $0x80] sm:$0xff] %v4681
    %4778 = vst [vmem:[#allocation4 + $0x88] sm:$0xff] %v4682
    %4779 = vst [vmem:[#allocation4 + $0x90] sm:$0xff] %v4683
    %4780 = vst [vmem:[#allocation4 + $0x98] sm:$0xff] %v4684
    %4781 = vst [vmem:[#allocation4 + $0xa0] sm:$0xff] %v4685
    %4782 = vst [vmem:[#allocation4 + $0xa8] sm:$0xff] %v4686
    %4783 = vst [vmem:[#allocation4 + $0xb0] sm:$0xff] %v4687
    %4784 = vst [vmem:[#allocation4 + $0xb8] sm:$0xff] %v4688
    %4785 = vst [vmem:[#allocation4 + $0xc0] sm:$0xff] %v4689
    %4786 = vst [vmem:[#allocation4 + $0xc8] sm:$0xff] %v4690
    %4787 = vst [vmem:[#allocation4 + $0xd0] sm:$0xff] %v4691
    %4788 = vst [vmem:[#allocation4 + $0xd8] sm:$0xff] %v4692
    %4789 = vst [vmem:[#allocation4 + $0xe0] sm:$0xff] %v4693
    %4790 = vst [vmem:[#allocation4 + $0xe8] sm:$0xff] %v4694
    %4791 = vst [vmem:[#allocation4 + $0xf0] sm:$0xff] %v4695
    %4792 = vst [vmem:[#allocation4 + $0xf8] sm:$0xff] %v4696
    %4793 = vst [vmem:[#allocation4 + $0x100] sm:$0xff] %v4697
    %4794 = vst [vmem:[#allocation4 + $0x108] sm:$0xff] %v4698
    %4795 = vst [vmem:[#allocation4 + $0x110] sm:$0xff] %v4699
    %4796 = vst [vmem:[#allocation4 + $0x118] sm:$0xff] %v4700
    %4797 = vst [vmem:[#allocation4 + $0x120] sm:$0xff] %v4701
    %4798 = vst [vmem:[#allocation4 + $0x128] sm:$0xff] %v4702
    %4799 = vst [vmem:[#allocation4 + $0x130] sm:$0xff] %v4703
    %4800 = vst [vmem:[#allocation4 + $0x138] sm:$0xff] %v4704
    %4801 = vst [vmem:[#allocation4 + $0x140] sm:$0xff] %v4705
    %4802 = vst [vmem:[#allocation4 + $0x148] sm:$0xff] %v4706
    %4803 = vst [vmem:[#allocation4 + $0x150] sm:$0xff] %v4707
    %4804 = vst [vmem:[#allocation4 + $0x158] sm:$0xff] %v4708
    %4805 = vst [vmem:[#allocation4 + $0x160] sm:$0xff] %v4709
    %4806 = vst [vmem:[#allocation4 + $0x168] sm:$0xff] %v4710
    %4807 = vst [vmem:[#allocation4 + $0x170] sm:$0xff] %v4711
    %4808 = vst [vmem:[#allocation4 + $0x178] sm:$0xff] %v4712
    %4809 = vst [vmem:[#allocation4 + $0x180] sm:$0xff] %v4713
    %4810 = vst [vmem:[#allocation4 + $0x188] sm:$0xff] %v4714
    %4811 = vst [vmem:[#allocation4 + $0x190] sm:$0xff] %v4715
    %4812 = vst [vmem:[#allocation4 + $0x198] sm:$0xff] %v4716
    %4813 = vst [vmem:[#allocation4 + $0x1a0] sm:$0xff] %v4717
    %4814 = vst [vmem:[#allocation4 + $0x1a8] sm:$0xff] %v4718
    %4815 = vst [vmem:[#allocation4 + $0x1b0] sm:$0xff] %v4719
    %4816 = vst [vmem:[#allocation4 + $0x1b8] sm:$0xff] %v4720
    %4817 = vst [vmem:[#allocation4 + $0x1c0] sm:$0xff] %v4721
    %4818 = vst [vmem:[#allocation4 + $0x1c8] sm:$0xff] %v4722
    %4819 = vst [vmem:[#allocation4 + $0x1d0] sm:$0xff] %v4723
    %4820 = vst [vmem:[#allocation4 + $0x1d8] sm:$0xff] %v4724
    %4821 = vst [vmem:[#allocation4 + $0x1e0] sm:$0xff] %v4725
    %4822 = vst [vmem:[#allocation4 + $0x1e8] sm:$0xff] %v4726
    %4823 = vst [vmem:[#allocation4 + $0x1f0] sm:$0xff] %v4727
    %4824 = vst [vmem:[#allocation4 + $0x1f8] sm:$0xff] %v4728
    %4825 = vst [vmem:[#allocation4 + $0x200] sm:$0xff] %v4729
    %4826 = vst [vmem:[#allocation4 + $0x208] sm:$0xff] %v4730
    %4827 = vst [vmem:[#allocation4 + $0x210] sm:$0xff] %v4731
    %4828 = vst [vmem:[#allocation4 + $0x218] sm:$0xff] %v4732
    %4829 = vst [vmem:[#allocation4 + $0x220] sm:$0xff] %v4733
    %4830 = vst [vmem:[#allocation4 + $0x228] sm:$0xff] %v4734
    %4831 = vst [vmem:[#allocation4 + $0x230] sm:$0xff] %v4735
    %4832 = vst [vmem:[#allocation4 + $0x238] sm:$0xff] %v4736
    %4833 = vst [vmem:[#allocation4 + $0x240] sm:$0xff] %v4737
    %4834 = vst [vmem:[#allocation4 + $0x248] sm:$0xff] %v4738
    %4835 = vst [vmem:[#allocation4 + $0x250] sm:$0xff] %v4739
    %4836 = vst [vmem:[#allocation4 + $0x258] sm:$0xff] %v4740
    %4837 = vst [vmem:[#allocation4 + $0x260] sm:$0xff] %v4741
    %4838 = vst [vmem:[#allocation4 + $0x268] sm:$0xff] %v4742
    %4839 = vst [vmem:[#allocation4 + $0x270] sm:$0xff] %v4743
    %4840 = vst [vmem:[#allocation4 + $0x278] sm:$0xff] %v4744
    %4841 = vst [vmem:[#allocation4 + $0x280] sm:$0xff] %v4745
    %4842 = vst [vmem:[#allocation4 + $0x288] sm:$0xff] %v4746
    %4843 = vst [vmem:[#allocation4 + $0x290] sm:$0xff] %v4747
    %4844 = vst [vmem:[#allocation4 + $0x298] sm:$0xff] %v4748
    %4845 = vst [vmem:[#allocation4 + $0x2a0] sm:$0xff] %v4749
    %4846 = vst [vmem:[#allocation4 + $0x2a8] sm:$0xff] %v4750
    %4847 = vst [vmem:[#allocation4 + $0x2b0] sm:$0xff] %v4751
    %4848 = vst [vmem:[#allocation4 + $0x2b8] sm:$0xff] %v4752
    %4849 = vst [vmem:[#allocation4 + $0x2c0] sm:$0xff] %v4753
    %4850 = vst [vmem:[#allocation4 + $0x2c8] sm:$0xff] %v4754
    %4851 = vst [vmem:[#allocation4 + $0x2d0] sm:$0xff] %v4755
    %4852 = vst [vmem:[#allocation4 + $0x2d8] sm:$0xff] %v4756
    %4853 = vst [vmem:[#allocation4 + $0x2e0] sm:$0xff] %v4757
    %4854 = vst [vmem:[#allocation4 + $0x2e8] sm:$0xff] %v4758
    %4855 = vst [vmem:[#allocation4 + $0x2f0] sm:$0xff] %v4759
    %4856 = vst [vmem:[#allocation4 + $0x2f8] sm:$0xff] %v4760
    %s4857 = scalar_lea.vmem [#allocation5], 24
    %v4858 = vld [vmem:[%s4857] sm:$0xf]
    %v4859 = vld [vmem:[%s4857 + $0x4] sm:$0xf]
    %v4860 = vld [vmem:[%s4857 + $0x8] sm:$0xf]
    %v4861 = vld [vmem:[%s4857 + $0xc] sm:$0xf]
    %v4862 = vld [vmem:[%s4857 + $0x10] sm:$0xf]
    %v4863 = vld [vmem:[%s4857 + $0x14] sm:$0xf]
    %v4864 = vld [vmem:[%s4857 + $0x18] sm:$0xf]
    %v4865 = vld [vmem:[%s4857 + $0x1c] sm:$0xf]
    %v4866 = vld [vmem:[%s4857 + $0x20] sm:$0xf]
    %v4867 = vld [vmem:[%s4857 + $0x24] sm:$0xf]
    %v4868 = vld [vmem:[%s4857 + $0x28] sm:$0xf]
    %v4869 = vld [vmem:[%s4857 + $0x2c] sm:$0xf]
    %v4870 = vld [vmem:[%s4857 + $0x30] sm:$0xf]
    %v4871 = vld [vmem:[%s4857 + $0x34] sm:$0xf]
    %v4872 = vld [vmem:[%s4857 + $0x38] sm:$0xf]
    %v4873 = vld [vmem:[%s4857 + $0x3c] sm:$0xf]
    %v4874 = vld [vmem:[%s4857 + $0x40] sm:$0xf]
    %v4875 = vld [vmem:[%s4857 + $0x44] sm:$0xf]
    %v4876 = vld [vmem:[%s4857 + $0x48] sm:$0xf]
    %v4877 = vld [vmem:[%s4857 + $0x4c] sm:$0xf]
    %v4878 = vld [vmem:[%s4857 + $0x50] sm:$0xf]
    %v4879 = vld [vmem:[%s4857 + $0x54] sm:$0xf]
    %v4880 = vld [vmem:[%s4857 + $0x58] sm:$0xf]
    %v4881 = vld [vmem:[%s4857 + $0x5c] sm:$0xf]
    %v4882 = vld [vmem:[%s4857 + $0x60] sm:$0xf]
    %v4883 = vld [vmem:[%s4857 + $0x64] sm:$0xf]
    %v4884 = vld [vmem:[%s4857 + $0x68] sm:$0xf]
    %v4885 = vld [vmem:[%s4857 + $0x6c] sm:$0xf]
    %v4886 = vld [vmem:[%s4857 + $0x70] sm:$0xf]
    %v4887 = vld [vmem:[%s4857 + $0x74] sm:$0xf]
    %v4888 = vld [vmem:[%s4857 + $0x78] sm:$0xf]
    %v4889 = vld [vmem:[%s4857 + $0x7c] sm:$0xf]
    %v4890 = vld [vmem:[%s4857 + $0x80] sm:$0xf]
    %v4891 = vld [vmem:[%s4857 + $0x84] sm:$0xf]
    %v4892 = vld [vmem:[%s4857 + $0x88] sm:$0xf]
    %v4893 = vld [vmem:[%s4857 + $0x8c] sm:$0xf]
    %v4894 = vld [vmem:[%s4857 + $0x90] sm:$0xf]
    %v4895 = vld [vmem:[%s4857 + $0x94] sm:$0xf]
    %v4896 = vld [vmem:[%s4857 + $0x98] sm:$0xf]
    %v4897 = vld [vmem:[%s4857 + $0x9c] sm:$0xf]
    %v4898 = vld [vmem:[%s4857 + $0xa0] sm:$0xf]
    %v4899 = vld [vmem:[%s4857 + $0xa4] sm:$0xf]
    %v4900 = vld [vmem:[%s4857 + $0xa8] sm:$0xf]
    %v4901 = vld [vmem:[%s4857 + $0xac] sm:$0xf]
    %v4902 = vld [vmem:[%s4857 + $0xb0] sm:$0xf]
    %v4903 = vld [vmem:[%s4857 + $0xb4] sm:$0xf]
    %v4904 = vld [vmem:[%s4857 + $0xb8] sm:$0xf]
    %v4905 = vld [vmem:[%s4857 + $0xbc] sm:$0xf]
    %v4906 = vld [vmem:[%s4857 + $0xd8] sm:$0xf]
    %v4907 = vld [vmem:[%s4857 + $0xdc] sm:$0xf]
    %v4908 = vld [vmem:[%s4857 + $0xe0] sm:$0xf]
    %v4909 = vld [vmem:[%s4857 + $0xe4] sm:$0xf]
    %v4910 = vld [vmem:[%s4857 + $0xe8] sm:$0xf]
    %v4911 = vld [vmem:[%s4857 + $0xec] sm:$0xf]
    %v4912 = vld [vmem:[%s4857 + $0xf0] sm:$0xf]
    %v4913 = vld [vmem:[%s4857 + $0xf4] sm:$0xf]
    %v4914 = vld [vmem:[%s4857 + $0xf8] sm:$0xf]
    %v4915 = vld [vmem:[%s4857 + $0xfc] sm:$0xf]
    %v4916 = vld [vmem:[%s4857 + $0x100] sm:$0xf]
    %v4917 = vld [vmem:[%s4857 + $0x104] sm:$0xf]
    %v4918 = vld [vmem:[%s4857 + $0x108] sm:$0xf]
    %v4919 = vld [vmem:[%s4857 + $0x10c] sm:$0xf]
    %v4920 = vld [vmem:[%s4857 + $0x110] sm:$0xf]
    %v4921 = vld [vmem:[%s4857 + $0x114] sm:$0xf]
    %v4922 = vld [vmem:[%s4857 + $0x118] sm:$0xf]
    %v4923 = vld [vmem:[%s4857 + $0x11c] sm:$0xf]
    %v4924 = vld [vmem:[%s4857 + $0x120] sm:$0xf]
    %v4925 = vld [vmem:[%s4857 + $0x124] sm:$0xf]
    %v4926 = vld [vmem:[%s4857 + $0x128] sm:$0xf]
    %v4927 = vld [vmem:[%s4857 + $0x12c] sm:$0xf]
    %v4928 = vld [vmem:[%s4857 + $0x130] sm:$0xf]
    %v4929 = vld [vmem:[%s4857 + $0x134] sm:$0xf]
    %v4930 = vld [vmem:[%s4857 + $0x138] sm:$0xf]
    %v4931 = vld [vmem:[%s4857 + $0x13c] sm:$0xf]
    %v4932 = vld [vmem:[%s4857 + $0x140] sm:$0xf]
    %v4933 = vld [vmem:[%s4857 + $0x144] sm:$0xf]
    %v4934 = vld [vmem:[%s4857 + $0x148] sm:$0xf]
    %v4935 = vld [vmem:[%s4857 + $0x14c] sm:$0xf]
    %v4936 = vld [vmem:[%s4857 + $0x150] sm:$0xf]
    %v4937 = vld [vmem:[%s4857 + $0x154] sm:$0xf]
    %v4938 = vld [vmem:[%s4857 + $0x158] sm:$0xf]
    %v4939 = vld [vmem:[%s4857 + $0x15c] sm:$0xf]
    %v4940 = vld [vmem:[%s4857 + $0x160] sm:$0xf]
    %v4941 = vld [vmem:[%s4857 + $0x164] sm:$0xf]
    %v4942 = vld [vmem:[%s4857 + $0x168] sm:$0xf]
    %v4943 = vld [vmem:[%s4857 + $0x16c] sm:$0xf]
    %v4944 = vld [vmem:[%s4857 + $0x170] sm:$0xf]
    %v4945 = vld [vmem:[%s4857 + $0x174] sm:$0xf]
    %v4946 = vld [vmem:[%s4857 + $0x178] sm:$0xf]
    %v4947 = vld [vmem:[%s4857 + $0x17c] sm:$0xf]
    %v4948 = vld [vmem:[%s4857 + $0x180] sm:$0xf]
    %v4949 = vld [vmem:[%s4857 + $0x184] sm:$0xf]
    %v4950 = vld [vmem:[%s4857 + $0x188] sm:$0xf]
    %v4951 = vld [vmem:[%s4857 + $0x18c] sm:$0xf]
    %v4952 = vld [vmem:[%s4857 + $0x190] sm:$0xf]
    %v4953 = vld [vmem:[%s4857 + $0x194] sm:$0xf]
    %s4954 = scalar_lea.vmem [#allocation8], 192
    %v4955 = vld [vmem:[%s4954] sm:$0xf]
    %v4956 = vld [vmem:[%s4954 + $0x4] sm:$0xf]
    %v4957 = vld [vmem:[%s4954 + $0x8] sm:$0xf]
    %v4958 = vld [vmem:[%s4954 + $0xc] sm:$0xf]
    %v4959 = vld [vmem:[%s4954 + $0x10] sm:$0xf]
    %v4960 = vld [vmem:[%s4954 + $0x14] sm:$0xf]
    %v4961 = vld [vmem:[%s4954 + $0x18] sm:$0xf]
    %v4962 = vld [vmem:[%s4954 + $0x1c] sm:$0xf]
    %v5059 = vunpack.c.l.b16 %v4858
    %v5060 = vunpack.c.l.b16 %v4859
    %v5061 = vunpack.c.l.b16 %v4860
    %v5062 = vunpack.c.l.b16 %v4861
    %v5063 = vunpack.c.l.b16 %v4862
    %v5064 = vunpack.c.l.b16 %v4863
    %v5065 = vunpack.c.l.b16 %v4864
    %v5066 = vunpack.c.l.b16 %v4865
    %v5067 = vunpack.c.l.b16 %v4866
    %v5068 = vunpack.c.l.b16 %v4867
    %v5069 = vunpack.c.l.b16 %v4868
    %v5070 = vunpack.c.l.b16 %v4869
    %v5071 = vunpack.c.l.b16 %v4870
    %v5072 = vunpack.c.l.b16 %v4871
    %v5073 = vunpack.c.l.b16 %v4872
    %v5074 = vunpack.c.l.b16 %v4873
    %v5075 = vunpack.c.l.b16 %v4874
    %v5076 = vunpack.c.l.b16 %v4875
    %v5077 = vunpack.c.l.b16 %v4876
    %v5078 = vunpack.c.l.b16 %v4877
    %v5079 = vunpack.c.l.b16 %v4878
    %v5080 = vunpack.c.l.b16 %v4879
    %v5081 = vunpack.c.l.b16 %v4880
    %v5082 = vunpack.c.l.b16 %v4881
    %v5083 = vunpack.c.l.b16 %v4882
    %v5084 = vunpack.c.l.b16 %v4883
    %v5085 = vunpack.c.l.b16 %v4884
    %v5086 = vunpack.c.l.b16 %v4885
    %v5087 = vunpack.c.l.b16 %v4886
    %v5088 = vunpack.c.l.b16 %v4887
    %v5089 = vunpack.c.l.b16 %v4888
    %v5090 = vunpack.c.l.b16 %v4889
    %v5091 = vunpack.c.l.b16 %v4890
    %v5092 = vunpack.c.l.b16 %v4891
    %v5093 = vunpack.c.l.b16 %v4892
    %v5094 = vunpack.c.l.b16 %v4893
    %v5095 = vunpack.c.l.b16 %v4894
    %v5096 = vunpack.c.l.b16 %v4895
    %v5097 = vunpack.c.l.b16 %v4896
    %v5098 = vunpack.c.l.b16 %v4897
    %v5099 = vunpack.c.l.b16 %v4898
    %v5100 = vunpack.c.l.b16 %v4899
    %v5101 = vunpack.c.l.b16 %v4900
    %v5102 = vunpack.c.l.b16 %v4901
    %v5103 = vunpack.c.l.b16 %v4902
    %v5104 = vunpack.c.l.b16 %v4903
    %v5105 = vunpack.c.l.b16 %v4904
    %v5106 = vunpack.c.l.b16 %v4905
    %v5107 = vunpack.c.l.b16 %v4906
    %v5108 = vunpack.c.l.b16 %v4907
    %v5109 = vunpack.c.l.b16 %v4908
    %v5110 = vunpack.c.l.b16 %v4909
    %v5111 = vunpack.c.l.b16 %v4910
    %v5112 = vunpack.c.l.b16 %v4911
    %v5113 = vunpack.c.l.b16 %v4912
    %v5114 = vunpack.c.l.b16 %v4913
    %v5115 = vunpack.c.l.b16 %v4914
    %v5116 = vunpack.c.l.b16 %v4915
    %v5117 = vunpack.c.l.b16 %v4916
    %v5118 = vunpack.c.l.b16 %v4917
    %v5119 = vunpack.c.l.b16 %v4918
    %v5120 = vunpack.c.l.b16 %v4919
    %v5121 = vunpack.c.l.b16 %v4920
    %v5122 = vunpack.c.l.b16 %v4921
    %v5123 = vunpack.c.l.b16 %v4922
    %v5124 = vunpack.c.l.b16 %v4923
    %v5125 = vunpack.c.l.b16 %v4924
    %v5126 = vunpack.c.l.b16 %v4925
    %v5127 = vunpack.c.l.b16 %v4926
    %v5128 = vunpack.c.l.b16 %v4927
    %v5129 = vunpack.c.l.b16 %v4928
    %v5130 = vunpack.c.l.b16 %v4929
    %v5131 = vunpack.c.l.b16 %v4930
    %v5132 = vunpack.c.l.b16 %v4931
    %v5133 = vunpack.c.l.b16 %v4932
    %v5134 = vunpack.c.l.b16 %v4933
    %v5135 = vunpack.c.l.b16 %v4934
    %v5136 = vunpack.c.l.b16 %v4935
    %v5137 = vunpack.c.l.b16 %v4936
    %v5138 = vunpack.c.l.b16 %v4937
    %v5139 = vunpack.c.l.b16 %v4938
    %v5140 = vunpack.c.l.b16 %v4939
    %v5141 = vunpack.c.l.b16 %v4940
    %v5142 = vunpack.c.l.b16 %v4941
    %v5143 = vunpack.c.l.b16 %v4942
    %v5144 = vunpack.c.l.b16 %v4943
    %v5145 = vunpack.c.l.b16 %v4944
    %v5146 = vunpack.c.l.b16 %v4945
    %v5147 = vunpack.c.l.b16 %v4946
    %v5148 = vunpack.c.l.b16 %v4947
    %v5149 = vunpack.c.l.b16 %v4948
    %v5150 = vunpack.c.l.b16 %v4949
    %v5151 = vunpack.c.l.b16 %v4950
    %v5152 = vunpack.c.l.b16 %v4951
    %v5153 = vunpack.c.l.b16 %v4952
    %v5154 = vunpack.c.l.b16 %v4953
    %v5155 = vpack.c.b16 %v5060, %v5059
    %v5156 = vpack.c.b16 %v5062, %v5061
    %v5157 = vpack.c.b16 %v5064, %v5063
    %v5158 = vpack.c.b16 %v5066, %v5065
    %v5159 = vpack.c.b16 %v5068, %v5067
    %v5160 = vpack.c.b16 %v5070, %v5069
    %v5161 = vpack.c.b16 %v5072, %v5071
    %v5162 = vpack.c.b16 %v5074, %v5073
    %v5163 = vpack.c.b16 %v5076, %v5075
    %v5164 = vpack.c.b16 %v5078, %v5077
    %v5165 = vpack.c.b16 %v5080, %v5079
    %v5166 = vpack.c.b16 %v5082, %v5081
    %v5167 = vpack.c.b16 %v5084, %v5083
    %v5168 = vpack.c.b16 %v5086, %v5085
    %v5169 = vpack.c.b16 %v5088, %v5087
    %v5170 = vpack.c.b16 %v5090, %v5089
    %v5171 = vpack.c.b16 %v5092, %v5091
    %v5172 = vpack.c.b16 %v5094, %v5093
    %v5173 = vpack.c.b16 %v5096, %v5095
    %v5174 = vpack.c.b16 %v5098, %v5097
    %v5175 = vpack.c.b16 %v5100, %v5099
    %v5176 = vpack.c.b16 %v5102, %v5101
    %v5177 = vpack.c.b16 %v5104, %v5103
    %v5178 = vpack.c.b16 %v5106, %v5105
    %v5179 = vpack.c.b16 %v5108, %v5107
    %v5180 = vpack.c.b16 %v5110, %v5109
    %v5181 = vpack.c.b16 %v5112, %v5111
    %v5182 = vpack.c.b16 %v5114, %v5113
    %v5183 = vpack.c.b16 %v5116, %v5115
    %v5184 = vpack.c.b16 %v5118, %v5117
    %v5185 = vpack.c.b16 %v5120, %v5119
    %v5186 = vpack.c.b16 %v5122, %v5121
    %v5187 = vpack.c.b16 %v5124, %v5123
    %v5188 = vpack.c.b16 %v5126, %v5125
    %v5189 = vpack.c.b16 %v5128, %v5127
    %v5190 = vpack.c.b16 %v5130, %v5129
    %v5191 = vpack.c.b16 %v5132, %v5131
    %v5192 = vpack.c.b16 %v5134, %v5133
    %v5193 = vpack.c.b16 %v5136, %v5135
    %v5194 = vpack.c.b16 %v5138, %v5137
    %v5195 = vpack.c.b16 %v5140, %v5139
    %v5196 = vpack.c.b16 %v5142, %v5141
    %v5197 = vpack.c.b16 %v5144, %v5143
    %v5198 = vpack.c.b16 %v5146, %v5145
    %v5199 = vpack.c.b16 %v5148, %v5147
    %v5200 = vpack.c.b16 %v5150, %v5149
    %v5201 = vpack.c.b16 %v5152, %v5151
    %v5202 = vpack.c.b16 %v5154, %v5153
    %v5211 = vunpack.c.l.b16 %v4955
    %v5212 = vunpack.c.l.b16 %v4956
    %v5213 = vunpack.c.l.b16 %v4957
    %v5214 = vunpack.c.l.b16 %v4958
    %v5215 = vunpack.c.l.b16 %v4959
    %v5216 = vunpack.c.l.b16 %v4960
    %v5217 = vunpack.c.l.b16 %v4961
    %v5218 = vunpack.c.l.b16 %v4962
    %v5219 = vpack.c.b16 %v5212, %v5211
    %v5220 = vpack.c.b16 %v5214, %v5213
    %v5221 = vpack.c.b16 %v5216, %v5215
    %v5222 = vpack.c.b16 %v5218, %v5217
    %v5228 = vsel %vm412, %v5155, 0
    %v5231 = vsel %vm412, %v5156, 0
    %v5234 = vsel %vm412, %v5157, 0
    %v5237 = vsel %vm412, %v5158, 0
    %v5240 = vsel %vm412, %v5159, 0
    %v5243 = vsel %vm412, %v5160, 0
    %v5246 = vsel %vm412, %v5161, 0
    %v5249 = vsel %vm412, %v5162, 0
    %v5252 = vsel %vm412, %v5163, 0
    %v5255 = vsel %vm412, %v5164, 0
    %v5258 = vsel %vm412, %v5165, 0
    %v5261 = vsel %vm412, %v5166, 0
    %v5264 = vsel %vm412, %v5167, 0
    %v5267 = vsel %vm412, %v5168, 0
    %v5270 = vsel %vm412, %v5169, 0
    %v5273 = vsel %vm412, %v5170, 0
    %v5276 = vsel %vm412, %v5171, 0
    %v5279 = vsel %vm412, %v5172, 0
    %v5282 = vsel %vm412, %v5173, 0
    %v5285 = vsel %vm412, %v5174, 0
    %v5288 = vsel %vm412, %v5175, 0
    %v5291 = vsel %vm412, %v5176, 0
    %v5294 = vsel %vm412, %v5177, 0
    %v5297 = vsel %vm412, %v5178, 0
    %v5300 = vsel %vm412, %v5179, 0
    %v5303 = vsel %vm412, %v5180, 0
    %v5306 = vsel %vm412, %v5181, 0
    %v5309 = vsel %vm412, %v5182, 0
    %v5312 = vsel %vm412, %v5183, 0
    %v5315 = vsel %vm412, %v5184, 0
    %v5318 = vsel %vm412, %v5185, 0
    %v5321 = vsel %vm412, %v5186, 0
    %v5324 = vsel %vm412, %v5187, 0
    %v5327 = vsel %vm412, %v5188, 0
    %v5330 = vsel %vm412, %v5189, 0
    %v5333 = vsel %vm412, %v5190, 0
    %v5336 = vsel %vm412, %v5191, 0
    %v5339 = vsel %vm412, %v5192, 0
    %v5342 = vsel %vm412, %v5193, 0
    %v5345 = vsel %vm412, %v5194, 0
    %v5348 = vsel %vm412, %v5195, 0
    %v5351 = vsel %vm412, %v5196, 0
    %v5354 = vsel %vm412, %v5197, 0
    %v5357 = vsel %vm412, %v5198, 0
    %v5360 = vsel %vm412, %v5199, 0
    %v5363 = vsel %vm412, %v5200, 0
    %v5366 = vsel %vm412, %v5201, 0
    %v5369 = vsel %vm412, %v5202, 0
    %5371 = vmatprep.subr.bf16.mxu0 0
    %5372 = vmatpush1.bf16.msra.mxu0 %v5219
    %5373 = vmatprep.subr.bf16.mxu0 0
    %5374 = vmatpush1.bf16.msra.mxu0 %v5220
    %5375 = vmatprep.subr.bf16.mxu0 0
    %5376 = vmatpush1.bf16.msra.mxu0 %v5221
    %5377 = vmatprep.subr.bf16.mxu0 0
    %5378 = vmatpush1.bf16.msra.mxu0 %v5222
    %5379 = vmatprep.subr.bf16.mxu0 0
    %5380 = vmatpush1.bf16.msra.mxu0 0
    %5381 = vmatprep.subr.bf16.mxu0 0
    %5382 = vmatpush1.bf16.msra.mxu0 0
    %5383 = vmatprep.subr.bf16.mxu0 0
    %5384 = vmatpush1.bf16.msra.mxu0 0
    %5385 = vmatprep.subr.bf16.mxu0 0
    %5386 = vmatpush1.bf16.msra.mxu0 0
    %5387 = vmatprep.subr.bf16.mxu0 0
    %5388 = vmatpush1.bf16.msra.mxu0 0
    %5389 = vmatprep.subr.bf16.mxu0 0
    %5390 = vmatpush1.bf16.msra.mxu0 0
    %5391 = vmatprep.subr.bf16.mxu0 0
    %5392 = vmatpush1.bf16.msra.mxu0 0
    %5393 = vmatprep.subr.bf16.mxu0 0
    %5394 = vmatpush1.bf16.msra.mxu0 0
    %5395 = vmatprep.subr.bf16.mxu0 0
    %5396 = vmatpush1.bf16.msra.mxu0 0
    %5397 = vmatprep.subr.bf16.mxu0 0
    %5398 = vmatpush1.bf16.msra.mxu0 0
    %5399 = vmatprep.subr.bf16.mxu0 0
    %5400 = vmatpush1.bf16.msra.mxu0 0
    %5401 = vmatprep.subr.bf16.mxu0 0
    %5402 = vmatpush1.bf16.msra.mxu0 0
    %5403 = vmatprep.mubr.bf16.mxu0 0
    %5404 = vmatmul.mubr.bf16.gmra.mrb[0].mxu0 %v5228
    %v5405 = vpop.f32.mrb[0].mxu0
    %v5406 = vadd.f32 0.0, %v5405
    %v5407 = vpop.f32.mrb[0].mxu0
    %v5408 = vpop.f32.mrb[0].mxu0
    %v5409 = vadd.f32 0.0, %v5408
    %v5410 = vpop.f32.mrb[0].mxu0
    %5411 = vmatprep.mubr.bf16.mxu0 0
    %5412 = vmatmul.mubr.bf16.gmra.mrb[0].mxu0 %v5231
    %v5413 = vpop.f32.mrb[0].mxu0
    %v5414 = vadd.f32 0.0, %v5413
    %v5415 = vpop.f32.mrb[0].mxu0
    %v5416 = vpop.f32.mrb[0].mxu0
    %v5417 = vadd.f32 0.0, %v5416
    %v5418 = vpop.f32.mrb[0].mxu0
    %5419 = vmatprep.mubr.bf16.mxu0 0
    %5420 = vmatmul.mubr.bf16.gmra.mrb[0].mxu0 %v5234
    %v5421 = vpop.f32.mrb[0].mxu0
    %v5422 = vadd.f32 0.0, %v5421
    %v5423 = vpop.f32.mrb[0].mxu0
    %v5424 = vpop.f32.mrb[0].mxu0
    %v5425 = vadd.f32 0.0, %v5424
    %v5426 = vpop.f32.mrb[0].mxu0
    %5427 = vmatprep.mubr.bf16.mxu0 0
    %5428 = vmatmul.mubr.bf16.gmra.mrb[0].mxu0 %v5237
    %v5429 = vpop.f32.mrb[0].mxu0
    %v5430 = vadd.f32 0.0, %v5429
    %v5431 = vpop.f32.mrb[0].mxu0
    %v5432 = vpop.f32.mrb[0].mxu0
    %v5433 = vadd.f32 0.0, %v5432
    %v5434 = vpop.f32.mrb[0].mxu0
    %5435 = vmatprep.mubr.bf16.mxu0 0
    %5436 = vmatmul.mubr.bf16.gmra.mrb[0].mxu0 %v5240
    %v5437 = vpop.f32.mrb[0].mxu0
    %v5438 = vadd.f32 0.0, %v5437
    %v5439 = vpop.f32.mrb[0].mxu0
    %v5440 = vpop.f32.mrb[0].mxu0
    %v5441 = vadd.f32 0.0, %v5440
    %v5442 = vpop.f32.mrb[0].mxu0
    %5443 = vmatprep.mubr.bf16.mxu0 0
    %5444 = vmatmul.mubr.bf16.gmra.mrb[0].mxu0 %v5243
    %v5445 = vpop.f32.mrb[0].mxu0
    %v5446 = vadd.f32 0.0, %v5445
    %v5447 = vpop.f32.mrb[0].mxu0
    %v5448 = vpop.f32.mrb[0].mxu0
    %v5449 = vadd.f32 0.0, %v5448
    %v5450 = vpop.f32.mrb[0].mxu0
    %5451 = vmatprep.mubr.bf16.mxu0 0
    %5452 = vmatmul.mubr.bf16.gmra.mrb[0].mxu0 %v5246
    %v5453 = vpop.f32.mrb[0].mxu0
    %v5454 = vadd.f32 0.0, %v5453
    %v5455 = vpop.f32.mrb[0].mxu0
    %v5456 = vpop.f32.mrb[0].mxu0
    %v5457 = vadd.f32 0.0, %v5456
    %v5458 = vpop.f32.mrb[0].mxu0
    %5459 = vmatprep.mubr.bf16.mxu0 0
    %5460 = vmatmul.mubr.bf16.gmra.mrb[0].mxu0 %v5249
    %v5461 = vpop.f32.mrb[0].mxu0
    %v5462 = vadd.f32 0.0, %v5461
    %v5463 = vpop.f32.mrb[0].mxu0
    %v5464 = vpop.f32.mrb[0].mxu0
    %v5465 = vadd.f32 0.0, %v5464
    %v5466 = vpop.f32.mrb[0].mxu0
    %5467 = vmatprep.mubr.bf16.mxu0 0
    %5468 = vmatmul.mubr.bf16.gmra.mrb[0].mxu0 %v5252
    %v5469 = vpop.f32.mrb[0].mxu0
    %v5470 = vadd.f32 0.0, %v5469
    %v5471 = vpop.f32.mrb[0].mxu0
    %v5472 = vpop.f32.mrb[0].mxu0
    %v5473 = vadd.f32 0.0, %v5472
    %v5474 = vpop.f32.mrb[0].mxu0
    %5475 = vmatprep.mubr.bf16.mxu0 0
    %5476 = vmatmul.mubr.bf16.gmra.mrb[0].mxu0 %v5255
    %v5477 = vpop.f32.mrb[0].mxu0
    %v5478 = vadd.f32 0.0, %v5477
    %v5479 = vpop.f32.mrb[0].mxu0
    %v5480 = vpop.f32.mrb[0].mxu0
    %v5481 = vadd.f32 0.0, %v5480
    %v5482 = vpop.f32.mrb[0].mxu0
    %5483 = vmatprep.mubr.bf16.mxu0 0
    %5484 = vmatmul.mubr.bf16.gmra.mrb[0].mxu0 %v5258
    %v5485 = vpop.f32.mrb[0].mxu0
    %v5486 = vadd.f32 0.0, %v5485
    %v5487 = vpop.f32.mrb[0].mxu0
    %v5488 = vpop.f32.mrb[0].mxu0
    %v5489 = vadd.f32 0.0, %v5488
    %v5490 = vpop.f32.mrb[0].mxu0
    %5491 = vmatprep.mubr.bf16.mxu0 0
    %5492 = vmatmul.mubr.bf16.gmra.mrb[0].mxu0 %v5261
    %v5493 = vpop.f32.mrb[0].mxu0
    %v5494 = vadd.f32 0.0, %v5493
    %v5495 = vpop.f32.mrb[0].mxu0
    %v5496 = vpop.f32.mrb[0].mxu0
    %v5497 = vadd.f32 0.0, %v5496
    %v5498 = vpop.f32.mrb[0].mxu0
    %5499 = vmatprep.mubr.bf16.mxu0 0
    %5500 = vmatmul.mubr.bf16.gmra.mrb[0].mxu0 %v5264
    %v5501 = vpop.f32.mrb[0].mxu0
    %v5502 = vadd.f32 0.0, %v5501
    %v5503 = vpop.f32.mrb[0].mxu0
    %v5504 = vpop.f32.mrb[0].mxu0
    %v5505 = vadd.f32 0.0, %v5504
    %v5506 = vpop.f32.mrb[0].mxu0
    %5507 = vmatprep.mubr.bf16.mxu0 0
    %5508 = vmatmul.mubr.bf16.gmra.mrb[0].mxu0 %v5267
    %v5509 = vpop.f32.mrb[0].mxu0
    %v5510 = vadd.f32 0.0, %v5509
    %v5511 = vpop.f32.mrb[0].mxu0
    %v5512 = vpop.f32.mrb[0].mxu0
    %v5513 = vadd.f32 0.0, %v5512
    %v5514 = vpop.f32.mrb[0].mxu0
    %5515 = vmatprep.mubr.bf16.mxu0 0
    %5516 = vmatmul.mubr.bf16.gmra.mrb[0].mxu0 %v5270
    %v5517 = vpop.f32.mrb[0].mxu0
    %v5518 = vadd.f32 0.0, %v5517
    %v5519 = vpop.f32.mrb[0].mxu0
    %v5520 = vpop.f32.mrb[0].mxu0
    %v5521 = vadd.f32 0.0, %v5520
    %v5522 = vpop.f32.mrb[0].mxu0
    %5523 = vmatprep.mubr.bf16.mxu0 0
    %5524 = vmatmul.mubr.bf16.gmra.mrb[0].mxu0 %v5273
    %v5525 = vpop.f32.mrb[0].mxu0
    %v5526 = vadd.f32 0.0, %v5525
    %v5527 = vpop.f32.mrb[0].mxu0
    %v5528 = vpop.f32.mrb[0].mxu0
    %v5529 = vadd.f32 0.0, %v5528
    %v5530 = vpop.f32.mrb[0].mxu0
    %5531 = vmatprep.mubr.bf16.mxu0 0
    %5532 = vmatmul.mubr.bf16.gmra.mrb[0].mxu0 %v5276
    %v5533 = vpop.f32.mrb[0].mxu0
    %v5534 = vadd.f32 0.0, %v5533
    %v5535 = vpop.f32.mrb[0].mxu0
    %v5536 = vpop.f32.mrb[0].mxu0
    %v5537 = vadd.f32 0.0, %v5536
    %v5538 = vpop.f32.mrb[0].mxu0
    %5539 = vmatprep.mubr.bf16.mxu0 0
    %5540 = vmatmul.mubr.bf16.gmra.mrb[0].mxu0 %v5279
    %v5541 = vpop.f32.mrb[0].mxu0
    %v5542 = vadd.f32 0.0, %v5541
    %v5543 = vpop.f32.mrb[0].mxu0
    %v5544 = vpop.f32.mrb[0].mxu0
    %v5545 = vadd.f32 0.0, %v5544
    %v5546 = vpop.f32.mrb[0].mxu0
    %5547 = vmatprep.mubr.bf16.mxu0 0
    %5548 = vmatmul.mubr.bf16.gmra.mrb[0].mxu0 %v5282
    %v5549 = vpop.f32.mrb[0].mxu0
    %v5550 = vadd.f32 0.0, %v5549
    %v5551 = vpop.f32.mrb[0].mxu0
    %v5552 = vpop.f32.mrb[0].mxu0
    %v5553 = vadd.f32 0.0, %v5552
    %v5554 = vpop.f32.mrb[0].mxu0
    %5555 = vmatprep.mubr.bf16.mxu0 0
    %5556 = vmatmul.mubr.bf16.gmra.mrb[0].mxu0 %v5285
    %v5557 = vpop.f32.mrb[0].mxu0
    %v5558 = vadd.f32 0.0, %v5557
    %v5559 = vpop.f32.mrb[0].mxu0
    %v5560 = vpop.f32.mrb[0].mxu0
    %v5561 = vadd.f32 0.0, %v5560
    %v5562 = vpop.f32.mrb[0].mxu0
    %5563 = vmatprep.mubr.bf16.mxu0 0
    %5564 = vmatmul.mubr.bf16.gmra.mrb[0].mxu0 %v5288
    %v5565 = vpop.f32.mrb[0].mxu0
    %v5566 = vadd.f32 0.0, %v5565
    %v5567 = vpop.f32.mrb[0].mxu0
    %v5568 = vpop.f32.mrb[0].mxu0
    %v5569 = vadd.f32 0.0, %v5568
    %v5570 = vpop.f32.mrb[0].mxu0
    %5571 = vmatprep.mubr.bf16.mxu0 0
    %5572 = vmatmul.mubr.bf16.gmra.mrb[0].mxu0 %v5291
    %v5573 = vpop.f32.mrb[0].mxu0
    %v5574 = vadd.f32 0.0, %v5573
    %v5575 = vpop.f32.mrb[0].mxu0
    %v5576 = vpop.f32.mrb[0].mxu0
    %v5577 = vadd.f32 0.0, %v5576
    %v5578 = vpop.f32.mrb[0].mxu0
    %5579 = vmatprep.mubr.bf16.mxu0 0
    %5580 = vmatmul.mubr.bf16.gmra.mrb[0].mxu0 %v5294
    %v5581 = vpop.f32.mrb[0].mxu0
    %v5582 = vadd.f32 0.0, %v5581
    %v5583 = vpop.f32.mrb[0].mxu0
    %v5584 = vpop.f32.mrb[0].mxu0
    %v5585 = vadd.f32 0.0, %v5584
    %v5586 = vpop.f32.mrb[0].mxu0
    %5587 = vmatprep.mubr.bf16.mxu0 0
    %5588 = vmatmul.mubr.bf16.gmra.mrb[0].mxu0 %v5297
    %v5589 = vpop.f32.mrb[0].mxu0
    %v5590 = vadd.f32 0.0, %v5589
    %v5591 = vpop.f32.mrb[0].mxu0
    %v5592 = vpop.f32.mrb[0].mxu0
    %v5593 = vadd.f32 0.0, %v5592
    %v5594 = vpop.f32.mrb[0].mxu0
    %5595 = vmatprep.mubr.bf16.mxu0 0
    %5596 = vmatmul.mubr.bf16.gmra.mrb[0].mxu0 %v5300
    %v5597 = vpop.f32.mrb[0].mxu0
    %v5598 = vadd.f32 0.0, %v5597
    %v5599 = vpop.f32.mrb[0].mxu0
    %v5600 = vpop.f32.mrb[0].mxu0
    %v5601 = vadd.f32 0.0, %v5600
    %v5602 = vpop.f32.mrb[0].mxu0
    %5603 = vmatprep.mubr.bf16.mxu0 0
    %5604 = vmatmul.mubr.bf16.gmra.mrb[0].mxu0 %v5303
    %v5605 = vpop.f32.mrb[0].mxu0
    %v5606 = vadd.f32 0.0, %v5605
    %v5607 = vpop.f32.mrb[0].mxu0
    %v5608 = vpop.f32.mrb[0].mxu0
    %v5609 = vadd.f32 0.0, %v5608
    %v5610 = vpop.f32.mrb[0].mxu0
    %5611 = vmatprep.mubr.bf16.mxu0 0
    %5612 = vmatmul.mubr.bf16.gmra.mrb[0].mxu0 %v5306
    %v5613 = vpop.f32.mrb[0].mxu0
    %v5614 = vadd.f32 0.0, %v5613
    %v5615 = vpop.f32.mrb[0].mxu0
    %v5616 = vpop.f32.mrb[0].mxu0
    %v5617 = vadd.f32 0.0, %v5616
    %v5618 = vpop.f32.mrb[0].mxu0
    %5619 = vmatprep.mubr.bf16.mxu0 0
    %5620 = vmatmul.mubr.bf16.gmra.mrb[0].mxu0 %v5309
    %v5621 = vpop.f32.mrb[0].mxu0
    %v5622 = vadd.f32 0.0, %v5621
    %v5623 = vpop.f32.mrb[0].mxu0
    %v5624 = vpop.f32.mrb[0].mxu0
    %v5625 = vadd.f32 0.0, %v5624
    %v5626 = vpop.f32.mrb[0].mxu0
    %5627 = vmatprep.mubr.bf16.mxu0 0
    %5628 = vmatmul.mubr.bf16.gmra.mrb[0].mxu0 %v5312
    %v5629 = vpop.f32.mrb[0].mxu0
    %v5630 = vadd.f32 0.0, %v5629
    %v5631 = vpop.f32.mrb[0].mxu0
    %v5632 = vpop.f32.mrb[0].mxu0
    %v5633 = vadd.f32 0.0, %v5632
    %v5634 = vpop.f32.mrb[0].mxu0
    %5635 = vmatprep.mubr.bf16.mxu0 0
    %5636 = vmatmul.mubr.bf16.gmra.mrb[0].mxu0 %v5315
    %v5637 = vpop.f32.mrb[0].mxu0
    %v5638 = vadd.f32 0.0, %v5637
    %v5639 = vpop.f32.mrb[0].mxu0
    %v5640 = vpop.f32.mrb[0].mxu0
    %v5641 = vadd.f32 0.0, %v5640
    %v5642 = vpop.f32.mrb[0].mxu0
    %5643 = vmatprep.mubr.bf16.mxu0 0
    %5644 = vmatmul.mubr.bf16.gmra.mrb[0].mxu0 %v5318
    %v5645 = vpop.f32.mrb[0].mxu0
    %v5646 = vadd.f32 0.0, %v5645
    %v5647 = vpop.f32.mrb[0].mxu0
    %v5648 = vpop.f32.mrb[0].mxu0
    %v5649 = vadd.f32 0.0, %v5648
    %v5650 = vpop.f32.mrb[0].mxu0
    %5651 = vmatprep.mubr.bf16.mxu0 0
    %5652 = vmatmul.mubr.bf16.gmra.mrb[0].mxu0 %v5321
    %v5653 = vpop.f32.mrb[0].mxu0
    %v5654 = vadd.f32 0.0, %v5653
    %v5655 = vpop.f32.mrb[0].mxu0
    %v5656 = vpop.f32.mrb[0].mxu0
    %v5657 = vadd.f32 0.0, %v5656
    %v5658 = vpop.f32.mrb[0].mxu0
    %5659 = vmatprep.mubr.bf16.mxu0 0
    %5660 = vmatmul.mubr.bf16.gmra.mrb[0].mxu0 %v5324
    %v5661 = vpop.f32.mrb[0].mxu0
    %v5662 = vadd.f32 0.0, %v5661
    %v5663 = vpop.f32.mrb[0].mxu0
    %v5664 = vpop.f32.mrb[0].mxu0
    %v5665 = vadd.f32 0.0, %v5664
    %v5666 = vpop.f32.mrb[0].mxu0
    %5667 = vmatprep.mubr.bf16.mxu0 0
    %5668 = vmatmul.mubr.bf16.gmra.mrb[0].mxu0 %v5327
    %v5669 = vpop.f32.mrb[0].mxu0
    %v5670 = vadd.f32 0.0, %v5669
    %v5671 = vpop.f32.mrb[0].mxu0
    %v5672 = vpop.f32.mrb[0].mxu0
    %v5673 = vadd.f32 0.0, %v5672
    %v5674 = vpop.f32.mrb[0].mxu0
    %5675 = vmatprep.mubr.bf16.mxu0 0
    %5676 = vmatmul.mubr.bf16.gmra.mrb[0].mxu0 %v5330
    %v5677 = vpop.f32.mrb[0].mxu0
    %v5678 = vadd.f32 0.0, %v5677
    %v5679 = vpop.f32.mrb[0].mxu0
    %v5680 = vpop.f32.mrb[0].mxu0
    %v5681 = vadd.f32 0.0, %v5680
    %v5682 = vpop.f32.mrb[0].mxu0
    %5683 = vmatprep.mubr.bf16.mxu0 0
    %5684 = vmatmul.mubr.bf16.gmra.mrb[0].mxu0 %v5333
    %v5685 = vpop.f32.mrb[0].mxu0
    %v5686 = vadd.f32 0.0, %v5685
    %v5687 = vpop.f32.mrb[0].mxu0
    %v5688 = vpop.f32.mrb[0].mxu0
    %v5689 = vadd.f32 0.0, %v5688
    %v5690 = vpop.f32.mrb[0].mxu0
    %5691 = vmatprep.mubr.bf16.mxu0 0
    %5692 = vmatmul.mubr.bf16.gmra.mrb[0].mxu0 %v5336
    %v5693 = vpop.f32.mrb[0].mxu0
    %v5694 = vadd.f32 0.0, %v5693
    %v5695 = vpop.f32.mrb[0].mxu0
    %v5696 = vpop.f32.mrb[0].mxu0
    %v5697 = vadd.f32 0.0, %v5696
    %v5698 = vpop.f32.mrb[0].mxu0
    %5699 = vmatprep.mubr.bf16.mxu0 0
    %5700 = vmatmul.mubr.bf16.gmra.mrb[0].mxu0 %v5339
    %v5701 = vpop.f32.mrb[0].mxu0
    %v5702 = vadd.f32 0.0, %v5701
    %v5703 = vpop.f32.mrb[0].mxu0
    %v5704 = vpop.f32.mrb[0].mxu0
    %v5705 = vadd.f32 0.0, %v5704
    %v5706 = vpop.f32.mrb[0].mxu0
    %5707 = vmatprep.mubr.bf16.mxu0 0
    %5708 = vmatmul.mubr.bf16.gmra.mrb[0].mxu0 %v5342
    %v5709 = vpop.f32.mrb[0].mxu0
    %v5710 = vadd.f32 0.0, %v5709
    %v5711 = vpop.f32.mrb[0].mxu0
    %v5712 = vpop.f32.mrb[0].mxu0
    %v5713 = vadd.f32 0.0, %v5712
    %v5714 = vpop.f32.mrb[0].mxu0
    %5715 = vmatprep.mubr.bf16.mxu0 0
    %5716 = vmatmul.mubr.bf16.gmra.mrb[0].mxu0 %v5345
    %v5717 = vpop.f32.mrb[0].mxu0
    %v5718 = vadd.f32 0.0, %v5717
    %v5719 = vpop.f32.mrb[0].mxu0
    %v5720 = vpop.f32.mrb[0].mxu0
    %v5721 = vadd.f32 0.0, %v5720
    %v5722 = vpop.f32.mrb[0].mxu0
    %5723 = vmatprep.mubr.bf16.mxu0 0
    %5724 = vmatmul.mubr.bf16.gmra.mrb[0].mxu0 %v5348
    %v5725 = vpop.f32.mrb[0].mxu0
    %v5726 = vadd.f32 0.0, %v5725
    %v5727 = vpop.f32.mrb[0].mxu0
    %v5728 = vpop.f32.mrb[0].mxu0
    %v5729 = vadd.f32 0.0, %v5728
    %v5730 = vpop.f32.mrb[0].mxu0
    %5731 = vmatprep.mubr.bf16.mxu0 0
    %5732 = vmatmul.mubr.bf16.gmra.mrb[0].mxu0 %v5351
    %v5733 = vpop.f32.mrb[0].mxu0
    %v5734 = vadd.f32 0.0, %v5733
    %v5735 = vpop.f32.mrb[0].mxu0
    %v5736 = vpop.f32.mrb[0].mxu0
    %v5737 = vadd.f32 0.0, %v5736
    %v5738 = vpop.f32.mrb[0].mxu0
    %5739 = vmatprep.mubr.bf16.mxu0 0
    %5740 = vmatmul.mubr.bf16.gmra.mrb[0].mxu0 %v5354
    %v5741 = vpop.f32.mrb[0].mxu0
    %v5742 = vadd.f32 0.0, %v5741
    %v5743 = vpop.f32.mrb[0].mxu0
    %v5744 = vpop.f32.mrb[0].mxu0
    %v5745 = vadd.f32 0.0, %v5744
    %v5746 = vpop.f32.mrb[0].mxu0
    %5747 = vmatprep.mubr.bf16.mxu0 0
    %5748 = vmatmul.mubr.bf16.gmra.mrb[0].mxu0 %v5357
    %v5749 = vpop.f32.mrb[0].mxu0
    %v5750 = vadd.f32 0.0, %v5749
    %v5751 = vpop.f32.mrb[0].mxu0
    %v5752 = vpop.f32.mrb[0].mxu0
    %v5753 = vadd.f32 0.0, %v5752
    %v5754 = vpop.f32.mrb[0].mxu0
    %5755 = vmatprep.mubr.bf16.mxu0 0
    %5756 = vmatmul.mubr.bf16.gmra.mrb[0].mxu0 %v5360
    %v5757 = vpop.f32.mrb[0].mxu0
    %v5758 = vadd.f32 0.0, %v5757
    %v5759 = vpop.f32.mrb[0].mxu0
    %v5760 = vpop.f32.mrb[0].mxu0
    %v5761 = vadd.f32 0.0, %v5760
    %v5762 = vpop.f32.mrb[0].mxu0
    %5763 = vmatprep.mubr.bf16.mxu0 0
    %5764 = vmatmul.mubr.bf16.gmra.mrb[0].mxu0 %v5363
    %v5765 = vpop.f32.mrb[0].mxu0
    %v5766 = vadd.f32 0.0, %v5765
    %v5767 = vpop.f32.mrb[0].mxu0
    %v5768 = vpop.f32.mrb[0].mxu0
    %v5769 = vadd.f32 0.0, %v5768
    %v5770 = vpop.f32.mrb[0].mxu0
    %5771 = vmatprep.mubr.bf16.mxu0 0
    %5772 = vmatmul.mubr.bf16.gmra.mrb[0].mxu0 %v5366
    %v5773 = vpop.f32.mrb[0].mxu0
    %v5774 = vadd.f32 0.0, %v5773
    %v5775 = vpop.f32.mrb[0].mxu0
    %v5776 = vpop.f32.mrb[0].mxu0
    %v5777 = vadd.f32 0.0, %v5776
    %v5778 = vpop.f32.mrb[0].mxu0
    %5779 = vmatprep.mubr.bf16.mxu0 0
    %5780 = vmatmul.mubr.bf16.gmra.mrb[0].mxu0 %v5369
    %v5781 = vpop.f32.mrb[0].mxu0
    %v5782 = vadd.f32 0.0, %v5781
    %v5783 = vpop.f32.mrb[0].mxu0
    %v5784 = vpop.f32.mrb[0].mxu0
    %v5785 = vadd.f32 0.0, %v5784
    %v5786 = vpop.f32.mrb[0].mxu0
    %5787 = vdwg.mxu0
    %v5788 = vld [vmem:[#allocation2] sm:$0xff]
    %v5789 = vld [vmem:[#allocation2 + $0x8] sm:$0xff]
    %v5790 = vld [vmem:[#allocation2 + $0x10] sm:$0xff]
    %v5791 = vld [vmem:[#allocation2 + $0x18] sm:$0xff]
    %v5792 = vld [vmem:[#allocation2 + $0x20] sm:$0xff]
    %v5793 = vld [vmem:[#allocation2 + $0x28] sm:$0xff]
    %v5794 = vld [vmem:[#allocation2 + $0x30] sm:$0xff]
    %v5795 = vld [vmem:[#allocation2 + $0x38] sm:$0xff]
    %v5796 = vld [vmem:[#allocation2 + $0x40] sm:$0xff]
    %v5797 = vld [vmem:[#allocation2 + $0x48] sm:$0xff]
    %v5798 = vld [vmem:[#allocation2 + $0x50] sm:$0xff]
    %v5799 = vld [vmem:[#allocation2 + $0x58] sm:$0xff]
    %v5800 = vld [vmem:[#allocation2 + $0x60] sm:$0xff]
    %v5801 = vld [vmem:[#allocation2 + $0x68] sm:$0xff]
    %v5802 = vld [vmem:[#allocation2 + $0x70] sm:$0xff]
    %v5803 = vld [vmem:[#allocation2 + $0x78] sm:$0xff]
    %v5804 = vld [vmem:[#allocation2 + $0x80] sm:$0xff]
    %v5805 = vld [vmem:[#allocation2 + $0x88] sm:$0xff]
    %v5806 = vld [vmem:[#allocation2 + $0x90] sm:$0xff]
    %v5807 = vld [vmem:[#allocation2 + $0x98] sm:$0xff]
    %v5808 = vld [vmem:[#allocation2 + $0xa0] sm:$0xff]
    %v5809 = vld [vmem:[#allocation2 + $0xa8] sm:$0xff]
    %v5810 = vld [vmem:[#allocation2 + $0xb0] sm:$0xff]
    %v5811 = vld [vmem:[#allocation2 + $0xb8] sm:$0xff]
    %v5812 = vld [vmem:[#allocation2 + $0xc0] sm:$0xff]
    %v5813 = vld [vmem:[#allocation2 + $0xc8] sm:$0xff]
    %v5814 = vld [vmem:[#allocation2 + $0xd0] sm:$0xff]
    %v5815 = vld [vmem:[#allocation2 + $0xd8] sm:$0xff]
    %v5816 = vld [vmem:[#allocation2 + $0xe0] sm:$0xff]
    %v5817 = vld [vmem:[#allocation2 + $0xe8] sm:$0xff]
    %v5818 = vld [vmem:[#allocation2 + $0xf0] sm:$0xff]
    %v5819 = vld [vmem:[#allocation2 + $0xf8] sm:$0xff]
    %v5820 = vld [vmem:[#allocation2 + $0x100] sm:$0xff]
    %v5821 = vld [vmem:[#allocation2 + $0x108] sm:$0xff]
    %v5822 = vld [vmem:[#allocation2 + $0x110] sm:$0xff]
    %v5823 = vld [vmem:[#allocation2 + $0x118] sm:$0xff]
    %v5824 = vld [vmem:[#allocation2 + $0x120] sm:$0xff]
    %v5825 = vld [vmem:[#allocation2 + $0x128] sm:$0xff]
    %v5826 = vld [vmem:[#allocation2 + $0x130] sm:$0xff]
    %v5827 = vld [vmem:[#allocation2 + $0x138] sm:$0xff]
    %v5828 = vld [vmem:[#allocation2 + $0x140] sm:$0xff]
    %v5829 = vld [vmem:[#allocation2 + $0x148] sm:$0xff]
    %v5830 = vld [vmem:[#allocation2 + $0x150] sm:$0xff]
    %v5831 = vld [vmem:[#allocation2 + $0x158] sm:$0xff]
    %v5832 = vld [vmem:[#allocation2 + $0x160] sm:$0xff]
    %v5833 = vld [vmem:[#allocation2 + $0x168] sm:$0xff]
    %v5834 = vld [vmem:[#allocation2 + $0x170] sm:$0xff]
    %v5835 = vld [vmem:[#allocation2 + $0x178] sm:$0xff]
    %v5836 = vld [vmem:[#allocation2 + $0x180] sm:$0xff]
    %v5837 = vld [vmem:[#allocation2 + $0x188] sm:$0xff]
    %v5838 = vld [vmem:[#allocation2 + $0x190] sm:$0xff]
    %v5839 = vld [vmem:[#allocation2 + $0x198] sm:$0xff]
    %v5840 = vld [vmem:[#allocation2 + $0x1a0] sm:$0xff]
    %v5841 = vld [vmem:[#allocation2 + $0x1a8] sm:$0xff]
    %v5842 = vld [vmem:[#allocation2 + $0x1b0] sm:$0xff]
    %v5843 = vld [vmem:[#allocation2 + $0x1b8] sm:$0xff]
    %v5844 = vld [vmem:[#allocation2 + $0x1c0] sm:$0xff]
    %v5845 = vld [vmem:[#allocation2 + $0x1c8] sm:$0xff]
    %v5846 = vld [vmem:[#allocation2 + $0x1d0] sm:$0xff]
    %v5847 = vld [vmem:[#allocation2 + $0x1d8] sm:$0xff]
    %v5848 = vld [vmem:[#allocation2 + $0x1e0] sm:$0xff]
    %v5849 = vld [vmem:[#allocation2 + $0x1e8] sm:$0xff]
    %v5850 = vld [vmem:[#allocation2 + $0x1f0] sm:$0xff]
    %v5851 = vld [vmem:[#allocation2 + $0x1f8] sm:$0xff]
    %v5852 = vld [vmem:[#allocation2 + $0x200] sm:$0xff]
    %v5853 = vld [vmem:[#allocation2 + $0x208] sm:$0xff]
    %v5854 = vld [vmem:[#allocation2 + $0x210] sm:$0xff]
    %v5855 = vld [vmem:[#allocation2 + $0x218] sm:$0xff]
    %v5856 = vld [vmem:[#allocation2 + $0x220] sm:$0xff]
    %v5857 = vld [vmem:[#allocation2 + $0x228] sm:$0xff]
    %v5858 = vld [vmem:[#allocation2 + $0x230] sm:$0xff]
    %v5859 = vld [vmem:[#allocation2 + $0x238] sm:$0xff]
    %v5860 = vld [vmem:[#allocation2 + $0x240] sm:$0xff]
    %v5861 = vld [vmem:[#allocation2 + $0x248] sm:$0xff]
    %v5862 = vld [vmem:[#allocation2 + $0x250] sm:$0xff]
    %v5863 = vld [vmem:[#allocation2 + $0x258] sm:$0xff]
    %v5864 = vld [vmem:[#allocation2 + $0x260] sm:$0xff]
    %v5865 = vld [vmem:[#allocation2 + $0x268] sm:$0xff]
    %v5866 = vld [vmem:[#allocation2 + $0x270] sm:$0xff]
    %v5867 = vld [vmem:[#allocation2 + $0x278] sm:$0xff]
    %v5868 = vld [vmem:[#allocation2 + $0x280] sm:$0xff]
    %v5869 = vld [vmem:[#allocation2 + $0x288] sm:$0xff]
    %v5870 = vld [vmem:[#allocation2 + $0x290] sm:$0xff]
    %v5871 = vld [vmem:[#allocation2 + $0x298] sm:$0xff]
    %v5872 = vld [vmem:[#allocation2 + $0x2a0] sm:$0xff]
    %v5873 = vld [vmem:[#allocation2 + $0x2a8] sm:$0xff]
    %v5874 = vld [vmem:[#allocation2 + $0x2b0] sm:$0xff]
    %v5875 = vld [vmem:[#allocation2 + $0x2b8] sm:$0xff]
    %v5876 = vld [vmem:[#allocation2 + $0x2c0] sm:$0xff]
    %v5877 = vld [vmem:[#allocation2 + $0x2c8] sm:$0xff]
    %v5878 = vld [vmem:[#allocation2 + $0x2d0] sm:$0xff]
    %v5879 = vld [vmem:[#allocation2 + $0x2d8] sm:$0xff]
    %v5880 = vld [vmem:[#allocation2 + $0x2e0] sm:$0xff]
    %v5881 = vld [vmem:[#allocation2 + $0x2e8] sm:$0xff]
    %v5882 = vld [vmem:[#allocation2 + $0x2f0] sm:$0xff]
    %v5883 = vld [vmem:[#allocation2 + $0x2f8] sm:$0xff]
    %v5884 = vadd.f32 %v5788, %v5406
    %v5885 = vadd.f32 %v5789, %v5409
    %v5886 = vadd.f32 %v5790, %v5414
    %v5887 = vadd.f32 %v5791, %v5417
    %v5888 = vadd.f32 %v5792, %v5422
    %v5889 = vadd.f32 %v5793, %v5425
    %v5890 = vadd.f32 %v5794, %v5430
    %v5891 = vadd.f32 %v5795, %v5433
    %v5892 = vadd.f32 %v5796, %v5438
    %v5893 = vadd.f32 %v5797, %v5441
    %v5894 = vadd.f32 %v5798, %v5446
    %v5895 = vadd.f32 %v5799, %v5449
    %v5896 = vadd.f32 %v5800, %v5454
    %v5897 = vadd.f32 %v5801, %v5457
    %v5898 = vadd.f32 %v5802, %v5462
    %v5899 = vadd.f32 %v5803, %v5465
    %v5900 = vadd.f32 %v5804, %v5470
    %v5901 = vadd.f32 %v5805, %v5473
    %v5902 = vadd.f32 %v5806, %v5478
    %v5903 = vadd.f32 %v5807, %v5481
    %v5904 = vadd.f32 %v5808, %v5486
    %v5905 = vadd.f32 %v5809, %v5489
    %v5906 = vadd.f32 %v5810, %v5494
    %v5907 = vadd.f32 %v5811, %v5497
    %v5908 = vadd.f32 %v5812, %v5502
    %v5909 = vadd.f32 %v5813, %v5505
    %v5910 = vadd.f32 %v5814, %v5510
    %v5911 = vadd.f32 %v5815, %v5513
    %v5912 = vadd.f32 %v5816, %v5518
    %v5913 = vadd.f32 %v5817, %v5521
    %v5914 = vadd.f32 %v5818, %v5526
    %v5915 = vadd.f32 %v5819, %v5529
    %v5916 = vadd.f32 %v5820, %v5534
    %v5917 = vadd.f32 %v5821, %v5537
    %v5918 = vadd.f32 %v5822, %v5542
    %v5919 = vadd.f32 %v5823, %v5545
    %v5920 = vadd.f32 %v5824, %v5550
    %v5921 = vadd.f32 %v5825, %v5553
    %v5922 = vadd.f32 %v5826, %v5558
    %v5923 = vadd.f32 %v5827, %v5561
    %v5924 = vadd.f32 %v5828, %v5566
    %v5925 = vadd.f32 %v5829, %v5569
    %v5926 = vadd.f32 %v5830, %v5574
    %v5927 = vadd.f32 %v5831, %v5577
    %v5928 = vadd.f32 %v5832, %v5582
    %v5929 = vadd.f32 %v5833, %v5585
    %v5930 = vadd.f32 %v5834, %v5590
    %v5931 = vadd.f32 %v5835, %v5593
    %v5932 = vadd.f32 %v5836, %v5598
    %v5933 = vadd.f32 %v5837, %v5601
    %v5934 = vadd.f32 %v5838, %v5606
    %v5935 = vadd.f32 %v5839, %v5609
    %v5936 = vadd.f32 %v5840, %v5614
    %v5937 = vadd.f32 %v5841, %v5617
    %v5938 = vadd.f32 %v5842, %v5622
    %v5939 = vadd.f32 %v5843, %v5625
    %v5940 = vadd.f32 %v5844, %v5630
    %v5941 = vadd.f32 %v5845, %v5633
    %v5942 = vadd.f32 %v5846, %v5638
    %v5943 = vadd.f32 %v5847, %v5641
    %v5944 = vadd.f32 %v5848, %v5646
    %v5945 = vadd.f32 %v5849, %v5649
    %v5946 = vadd.f32 %v5850, %v5654
    %v5947 = vadd.f32 %v5851, %v5657
    %v5948 = vadd.f32 %v5852, %v5662
    %v5949 = vadd.f32 %v5853, %v5665
    %v5950 = vadd.f32 %v5854, %v5670
    %v5951 = vadd.f32 %v5855, %v5673
    %v5952 = vadd.f32 %v5856, %v5678
    %v5953 = vadd.f32 %v5857, %v5681
    %v5954 = vadd.f32 %v5858, %v5686
    %v5955 = vadd.f32 %v5859, %v5689
    %v5956 = vadd.f32 %v5860, %v5694
    %v5957 = vadd.f32 %v5861, %v5697
    %v5958 = vadd.f32 %v5862, %v5702
    %v5959 = vadd.f32 %v5863, %v5705
    %v5960 = vadd.f32 %v5864, %v5710
    %v5961 = vadd.f32 %v5865, %v5713
    %v5962 = vadd.f32 %v5866, %v5718
    %v5963 = vadd.f32 %v5867, %v5721
    %v5964 = vadd.f32 %v5868, %v5726
    %v5965 = vadd.f32 %v5869, %v5729
    %v5966 = vadd.f32 %v5870, %v5734
    %v5967 = vadd.f32 %v5871, %v5737
    %v5968 = vadd.f32 %v5872, %v5742
    %v5969 = vadd.f32 %v5873, %v5745
    %v5970 = vadd.f32 %v5874, %v5750
    %v5971 = vadd.f32 %v5875, %v5753
    %v5972 = vadd.f32 %v5876, %v5758
    %v5973 = vadd.f32 %v5877, %v5761
    %v5974 = vadd.f32 %v5878, %v5766
    %v5975 = vadd.f32 %v5879, %v5769
    %v5976 = vadd.f32 %v5880, %v5774
    %v5977 = vadd.f32 %v5881, %v5777
    %v5978 = vadd.f32 %v5882, %v5782
    %v5979 = vadd.f32 %v5883, %v5785
    %5980 = vst [vmem:[#allocation2] sm:$0xff] %v5884
    %5981 = vst [vmem:[#allocation2 + $0x8] sm:$0xff] %v5885
    %5982 = vst [vmem:[#allocation2 + $0x10] sm:$0xff] %v5886
    %5983 = vst [vmem:[#allocation2 + $0x18] sm:$0xff] %v5887
    %5984 = vst [vmem:[#allocation2 + $0x20] sm:$0xff] %v5888
    %5985 = vst [vmem:[#allocation2 + $0x28] sm:$0xff] %v5889
    %5986 = vst [vmem:[#allocation2 + $0x30] sm:$0xff] %v5890
    %5987 = vst [vmem:[#allocation2 + $0x38] sm:$0xff] %v5891
    %5988 = vst [vmem:[#allocation2 + $0x40] sm:$0xff] %v5892
    %5989 = vst [vmem:[#allocation2 + $0x48] sm:$0xff] %v5893
    %5990 = vst [vmem:[#allocation2 + $0x50] sm:$0xff] %v5894
    %5991 = vst [vmem:[#allocation2 + $0x58] sm:$0xff] %v5895
    %5992 = vst [vmem:[#allocation2 + $0x60] sm:$0xff] %v5896
    %5993 = vst [vmem:[#allocation2 + $0x68] sm:$0xff] %v5897
    %5994 = vst [vmem:[#allocation2 + $0x70] sm:$0xff] %v5898
    %5995 = vst [vmem:[#allocation2 + $0x78] sm:$0xff] %v5899
    %5996 = vst [vmem:[#allocation2 + $0x80] sm:$0xff] %v5900
    %5997 = vst [vmem:[#allocation2 + $0x88] sm:$0xff] %v5901
    %5998 = vst [vmem:[#allocation2 + $0x90] sm:$0xff] %v5902
    %5999 = vst [vmem:[#allocation2 + $0x98] sm:$0xff] %v5903
    %6000 = vst [vmem:[#allocation2 + $0xa0] sm:$0xff] %v5904
    %6001 = vst [vmem:[#allocation2 + $0xa8] sm:$0xff] %v5905
    %6002 = vst [vmem:[#allocation2 + $0xb0] sm:$0xff] %v5906
    %6003 = vst [vmem:[#allocation2 + $0xb8] sm:$0xff] %v5907
    %6004 = vst [vmem:[#allocation2 + $0xc0] sm:$0xff] %v5908
    %6005 = vst [vmem:[#allocation2 + $0xc8] sm:$0xff] %v5909
    %6006 = vst [vmem:[#allocation2 + $0xd0] sm:$0xff] %v5910
    %6007 = vst [vmem:[#allocation2 + $0xd8] sm:$0xff] %v5911
    %6008 = vst [vmem:[#allocation2 + $0xe0] sm:$0xff] %v5912
    %6009 = vst [vmem:[#allocation2 + $0xe8] sm:$0xff] %v5913
    %6010 = vst [vmem:[#allocation2 + $0xf0] sm:$0xff] %v5914
    %6011 = vst [vmem:[#allocation2 + $0xf8] sm:$0xff] %v5915
    %6012 = vst [vmem:[#allocation2 + $0x100] sm:$0xff] %v5916
    %6013 = vst [vmem:[#allocation2 + $0x108] sm:$0xff] %v5917
    %6014 = vst [vmem:[#allocation2 + $0x110] sm:$0xff] %v5918
    %6015 = vst [vmem:[#allocation2 + $0x118] sm:$0xff] %v5919
    %6016 = vst [vmem:[#allocation2 + $0x120] sm:$0xff] %v5920
    %6017 = vst [vmem:[#allocation2 + $0x128] sm:$0xff] %v5921
    %6018 = vst [vmem:[#allocation2 + $0x130] sm:$0xff] %v5922
    %6019 = vst [vmem:[#allocation2 + $0x138] sm:$0xff] %v5923
    %6020 = vst [vmem:[#allocation2 + $0x140] sm:$0xff] %v5924
    %6021 = vst [vmem:[#allocation2 + $0x148] sm:$0xff] %v5925
    %6022 = vst [vmem:[#allocation2 + $0x150] sm:$0xff] %v5926
    %6023 = vst [vmem:[#allocation2 + $0x158] sm:$0xff] %v5927
    %6024 = vst [vmem:[#allocation2 + $0x160] sm:$0xff] %v5928
    %6025 = vst [vmem:[#allocation2 + $0x168] sm:$0xff] %v5929
    %6026 = vst [vmem:[#allocation2 + $0x170] sm:$0xff] %v5930
    %6027 = vst [vmem:[#allocation2 + $0x178] sm:$0xff] %v5931
    %6028 = vst [vmem:[#allocation2 + $0x180] sm:$0xff] %v5932
    %6029 = vst [vmem:[#allocation2 + $0x188] sm:$0xff] %v5933
    %6030 = vst [vmem:[#allocation2 + $0x190] sm:$0xff] %v5934
    %6031 = vst [vmem:[#allocation2 + $0x198] sm:$0xff] %v5935
    %6032 = vst [vmem:[#allocation2 + $0x1a0] sm:$0xff] %v5936
    %6033 = vst [vmem:[#allocation2 + $0x1a8] sm:$0xff] %v5937
    %6034 = vst [vmem:[#allocation2 + $0x1b0] sm:$0xff] %v5938
    %6035 = vst [vmem:[#allocation2 + $0x1b8] sm:$0xff] %v5939
    %6036 = vst [vmem:[#allocation2 + $0x1c0] sm:$0xff] %v5940
    %6037 = vst [vmem:[#allocation2 + $0x1c8] sm:$0xff] %v5941
    %6038 = vst [vmem:[#allocation2 + $0x1d0] sm:$0xff] %v5942
    %6039 = vst [vmem:[#allocation2 + $0x1d8] sm:$0xff] %v5943
    %6040 = vst [vmem:[#allocation2 + $0x1e0] sm:$0xff] %v5944
    %6041 = vst [vmem:[#allocation2 + $0x1e8] sm:$0xff] %v5945
    %6042 = vst [vmem:[#allocation2 + $0x1f0] sm:$0xff] %v5946
    %6043 = vst [vmem:[#allocation2 + $0x1f8] sm:$0xff] %v5947
    %6044 = vst [vmem:[#allocation2 + $0x200] sm:$0xff] %v5948
    %6045 = vst [vmem:[#allocation2 + $0x208] sm:$0xff] %v5949
    %6046 = vst [vmem:[#allocation2 + $0x210] sm:$0xff] %v5950
    %6047 = vst [vmem:[#allocation2 + $0x218] sm:$0xff] %v5951
    %6048 = vst [vmem:[#allocation2 + $0x220] sm:$0xff] %v5952
    %6049 = vst [vmem:[#allocation2 + $0x228] sm:$0xff] %v5953
    %6050 = vst [vmem:[#allocation2 + $0x230] sm:$0xff] %v5954
    %6051 = vst [vmem:[#allocation2 + $0x238] sm:$0xff] %v5955
    %6052 = vst [vmem:[#allocation2 + $0x240] sm:$0xff] %v5956
    %6053 = vst [vmem:[#allocation2 + $0x248] sm:$0xff] %v5957
    %6054 = vst [vmem:[#allocation2 + $0x250] sm:$0xff] %v5958
    %6055 = vst [vmem:[#allocation2 + $0x258] sm:$0xff] %v5959
    %6056 = vst [vmem:[#allocation2 + $0x260] sm:$0xff] %v5960
    %6057 = vst [vmem:[#allocation2 + $0x268] sm:$0xff] %v5961
    %6058 = vst [vmem:[#allocation2 + $0x270] sm:$0xff] %v5962
    %6059 = vst [vmem:[#allocation2 + $0x278] sm:$0xff] %v5963
    %6060 = vst [vmem:[#allocation2 + $0x280] sm:$0xff] %v5964
    %6061 = vst [vmem:[#allocation2 + $0x288] sm:$0xff] %v5965
    %6062 = vst [vmem:[#allocation2 + $0x290] sm:$0xff] %v5966
    %6063 = vst [vmem:[#allocation2 + $0x298] sm:$0xff] %v5967
    %6064 = vst [vmem:[#allocation2 + $0x2a0] sm:$0xff] %v5968
    %6065 = vst [vmem:[#allocation2 + $0x2a8] sm:$0xff] %v5969
    %6066 = vst [vmem:[#allocation2 + $0x2b0] sm:$0xff] %v5970
    %6067 = vst [vmem:[#allocation2 + $0x2b8] sm:$0xff] %v5971
    %6068 = vst [vmem:[#allocation2 + $0x2c0] sm:$0xff] %v5972
    %6069 = vst [vmem:[#allocation2 + $0x2c8] sm:$0xff] %v5973
    %6070 = vst [vmem:[#allocation2 + $0x2d0] sm:$0xff] %v5974
    %6071 = vst [vmem:[#allocation2 + $0x2d8] sm:$0xff] %v5975
    %6072 = vst [vmem:[#allocation2 + $0x2e0] sm:$0xff] %v5976
    %6073 = vst [vmem:[#allocation2 + $0x2e8] sm:$0xff] %v5977
    %6074 = vst [vmem:[#allocation2 + $0x2f0] sm:$0xff] %v5978
    %6075 = vst [vmem:[#allocation2 + $0x2f8] sm:$0xff] %v5979
    %s6076 = scalar_lea.vmem [#allocation8], 224
    %v6077 = vld [vmem:[%s6076] sm:$0xf]
    %v6078 = vld [vmem:[%s6076 + $0x4] sm:$0xf]
    %v6079 = vld [vmem:[%s6076 + $0x8] sm:$0xf]
    %v6080 = vld [vmem:[%s6076 + $0xc] sm:$0xf]
    %v6081 = vld [vmem:[%s6076 + $0x10] sm:$0xf]
    %v6082 = vld [vmem:[%s6076 + $0x14] sm:$0xf]
    %v6083 = vld [vmem:[%s6076 + $0x18] sm:$0xf]
    %v6084 = vld [vmem:[%s6076 + $0x1c] sm:$0xf]
    %v6093 = vunpack.c.l.b16 %v6077
    %v6094 = vunpack.c.l.b16 %v6078
    %v6095 = vunpack.c.l.b16 %v6079
    %v6096 = vunpack.c.l.b16 %v6080
    %v6097 = vunpack.c.l.b16 %v6081
    %v6098 = vunpack.c.l.b16 %v6082
    %v6099 = vunpack.c.l.b16 %v6083
    %v6100 = vunpack.c.l.b16 %v6084
    %v6101 = vpack.c.b16 %v6094, %v6093
    %v6102 = vpack.c.b16 %v6096, %v6095
    %v6103 = vpack.c.b16 %v6098, %v6097
    %v6104 = vpack.c.b16 %v6100, %v6099
    %6109 = vmatprep.subr.bf16.mxu0 0
    %6110 = vmatpush1.bf16.msra.mxu0 %v6101
    %6111 = vmatprep.subr.bf16.mxu0 0
    %6112 = vmatpush1.bf16.msra.mxu0 %v6102
    %6113 = vmatprep.subr.bf16.mxu0 0
    %6114 = vmatpush1.bf16.msra.mxu0 %v6103
    %6115 = vmatprep.subr.bf16.mxu0 0
    %6116 = vmatpush1.bf16.msra.mxu0 %v6104
    %6117 = vmatprep.subr.bf16.mxu0 0
    %6118 = vmatpush1.bf16.msra.mxu0 0
    %6119 = vmatprep.subr.bf16.mxu0 0
    %6120 = vmatpush1.bf16.msra.mxu0 0
    %6121 = vmatprep.subr.bf16.mxu0 0
    %6122 = vmatpush1.bf16.msra.mxu0 0
    %6123 = vmatprep.subr.bf16.mxu0 0
    %6124 = vmatpush1.bf16.msra.mxu0 0
    %6125 = vmatprep.subr.bf16.mxu0 0
    %6126 = vmatpush1.bf16.msra.mxu0 0
    %6127 = vmatprep.subr.bf16.mxu0 0
    %6128 = vmatpush1.bf16.msra.mxu0 0
    %6129 = vmatprep.subr.bf16.mxu0 0
    %6130 = vmatpush1.bf16.msra.mxu0 0
    %6131 = vmatprep.subr.bf16.mxu0 0
    %6132 = vmatpush1.bf16.msra.mxu0 0
    %6133 = vmatprep.subr.bf16.mxu0 0
    %6134 = vmatpush1.bf16.msra.mxu0 0
    %6135 = vmatprep.subr.bf16.mxu0 0
    %6136 = vmatpush1.bf16.msra.mxu0 0
    %6137 = vmatprep.subr.bf16.mxu0 0
    %6138 = vmatpush1.bf16.msra.mxu0 0
    %6139 = vmatprep.subr.bf16.mxu0 0
    %6140 = vmatpush1.bf16.msra.mxu0 0
    %6141 = vmatprep.mubr.bf16.mxu0 0
    %6142 = vmatmul.mubr.bf16.gmra.mrb[0].mxu0 %v5228
    %v6143 = vpop.f32.mrb[0].mxu0
    %v6144 = vadd.f32 0.0, %v6143
    %v6145 = vpop.f32.mrb[0].mxu0
    %v6146 = vpop.f32.mrb[0].mxu0
    %v6147 = vadd.f32 0.0, %v6146
    %v6148 = vpop.f32.mrb[0].mxu0
    %6149 = vmatprep.mubr.bf16.mxu0 0
    %6150 = vmatmul.mubr.bf16.gmra.mrb[0].mxu0 %v5231
    %v6151 = vpop.f32.mrb[0].mxu0
    %v6152 = vadd.f32 0.0, %v6151
    %v6153 = vpop.f32.mrb[0].mxu0
    %v6154 = vpop.f32.mrb[0].mxu0
    %v6155 = vadd.f32 0.0, %v6154
    %v6156 = vpop.f32.mrb[0].mxu0
    %6157 = vmatprep.mubr.bf16.mxu0 0
    %6158 = vmatmul.mubr.bf16.gmra.mrb[0].mxu0 %v5234
    %v6159 = vpop.f32.mrb[0].mxu0
    %v6160 = vadd.f32 0.0, %v6159
    %v6161 = vpop.f32.mrb[0].mxu0
    %v6162 = vpop.f32.mrb[0].mxu0
    %v6163 = vadd.f32 0.0, %v6162
    %v6164 = vpop.f32.mrb[0].mxu0
    %6165 = vmatprep.mubr.bf16.mxu0 0
    %6166 = vmatmul.mubr.bf16.gmra.mrb[0].mxu0 %v5237
    %v6167 = vpop.f32.mrb[0].mxu0
    %v6168 = vadd.f32 0.0, %v6167
    %v6169 = vpop.f32.mrb[0].mxu0
    %v6170 = vpop.f32.mrb[0].mxu0
    %v6171 = vadd.f32 0.0, %v6170
    %v6172 = vpop.f32.mrb[0].mxu0
    %6173 = vmatprep.mubr.bf16.mxu0 0
    %6174 = vmatmul.mubr.bf16.gmra.mrb[0].mxu0 %v5240
    %v6175 = vpop.f32.mrb[0].mxu0
    %v6176 = vadd.f32 0.0, %v6175
    %v6177 = vpop.f32.mrb[0].mxu0
    %v6178 = vpop.f32.mrb[0].mxu0
    %v6179 = vadd.f32 0.0, %v6178
    %v6180 = vpop.f32.mrb[0].mxu0
    %6181 = vmatprep.mubr.bf16.mxu0 0
    %6182 = vmatmul.mubr.bf16.gmra.mrb[0].mxu0 %v5243
    %v6183 = vpop.f32.mrb[0].mxu0
    %v6184 = vadd.f32 0.0, %v6183
    %v6185 = vpop.f32.mrb[0].mxu0
    %v6186 = vpop.f32.mrb[0].mxu0
    %v6187 = vadd.f32 0.0, %v6186
    %v6188 = vpop.f32.mrb[0].mxu0
    %6189 = vmatprep.mubr.bf16.mxu0 0
    %6190 = vmatmul.mubr.bf16.gmra.mrb[0].mxu0 %v5246
    %v6191 = vpop.f32.mrb[0].mxu0
    %v6192 = vadd.f32 0.0, %v6191
    %v6193 = vpop.f32.mrb[0].mxu0
    %v6194 = vpop.f32.mrb[0].mxu0
    %v6195 = vadd.f32 0.0, %v6194
    %v6196 = vpop.f32.mrb[0].mxu0
    %6197 = vmatprep.mubr.bf16.mxu0 0
    %6198 = vmatmul.mubr.bf16.gmra.mrb[0].mxu0 %v5249
    %v6199 = vpop.f32.mrb[0].mxu0
    %v6200 = vadd.f32 0.0, %v6199
    %v6201 = vpop.f32.mrb[0].mxu0
    %v6202 = vpop.f32.mrb[0].mxu0
    %v6203 = vadd.f32 0.0, %v6202
    %v6204 = vpop.f32.mrb[0].mxu0
    %6205 = vmatprep.mubr.bf16.mxu0 0
    %6206 = vmatmul.mubr.bf16.gmra.mrb[0].mxu0 %v5252
    %v6207 = vpop.f32.mrb[0].mxu0
    %v6208 = vadd.f32 0.0, %v6207
    %v6209 = vpop.f32.mrb[0].mxu0
    %v6210 = vpop.f32.mrb[0].mxu0
    %v6211 = vadd.f32 0.0, %v6210
    %v6212 = vpop.f32.mrb[0].mxu0
    %6213 = vmatprep.mubr.bf16.mxu0 0
    %6214 = vmatmul.mubr.bf16.gmra.mrb[0].mxu0 %v5255
    %v6215 = vpop.f32.mrb[0].mxu0
    %v6216 = vadd.f32 0.0, %v6215
    %v6217 = vpop.f32.mrb[0].mxu0
    %v6218 = vpop.f32.mrb[0].mxu0
    %v6219 = vadd.f32 0.0, %v6218
    %v6220 = vpop.f32.mrb[0].mxu0
    %6221 = vmatprep.mubr.bf16.mxu0 0
    %6222 = vmatmul.mubr.bf16.gmra.mrb[0].mxu0 %v5258
    %v6223 = vpop.f32.mrb[0].mxu0
    %v6224 = vadd.f32 0.0, %v6223
    %v6225 = vpop.f32.mrb[0].mxu0
    %v6226 = vpop.f32.mrb[0].mxu0
    %v6227 = vadd.f32 0.0, %v6226
    %v6228 = vpop.f32.mrb[0].mxu0
    %6229 = vmatprep.mubr.bf16.mxu0 0
    %6230 = vmatmul.mubr.bf16.gmra.mrb[0].mxu0 %v5261
    %v6231 = vpop.f32.mrb[0].mxu0
    %v6232 = vadd.f32 0.0, %v6231
    %v6233 = vpop.f32.mrb[0].mxu0
    %v6234 = vpop.f32.mrb[0].mxu0
    %v6235 = vadd.f32 0.0, %v6234
    %v6236 = vpop.f32.mrb[0].mxu0
    %6237 = vmatprep.mubr.bf16.mxu0 0
    %6238 = vmatmul.mubr.bf16.gmra.mrb[0].mxu0 %v5264
    %v6239 = vpop.f32.mrb[0].mxu0
    %v6240 = vadd.f32 0.0, %v6239
    %v6241 = vpop.f32.mrb[0].mxu0
    %v6242 = vpop.f32.mrb[0].mxu0
    %v6243 = vadd.f32 0.0, %v6242
    %v6244 = vpop.f32.mrb[0].mxu0
    %6245 = vmatprep.mubr.bf16.mxu0 0
    %6246 = vmatmul.mubr.bf16.gmra.mrb[0].mxu0 %v5267
    %v6247 = vpop.f32.mrb[0].mxu0
    %v6248 = vadd.f32 0.0, %v6247
    %v6249 = vpop.f32.mrb[0].mxu0
    %v6250 = vpop.f32.mrb[0].mxu0
    %v6251 = vadd.f32 0.0, %v6250
    %v6252 = vpop.f32.mrb[0].mxu0
    %6253 = vmatprep.mubr.bf16.mxu0 0
    %6254 = vmatmul.mubr.bf16.gmra.mrb[0].mxu0 %v5270
    %v6255 = vpop.f32.mrb[0].mxu0
    %v6256 = vadd.f32 0.0, %v6255
    %v6257 = vpop.f32.mrb[0].mxu0
    %v6258 = vpop.f32.mrb[0].mxu0
    %v6259 = vadd.f32 0.0, %v6258
    %v6260 = vpop.f32.mrb[0].mxu0
    %6261 = vmatprep.mubr.bf16.mxu0 0
    %6262 = vmatmul.mubr.bf16.gmra.mrb[0].mxu0 %v5273
    %v6263 = vpop.f32.mrb[0].mxu0
    %v6264 = vadd.f32 0.0, %v6263
    %v6265 = vpop.f32.mrb[0].mxu0
    %v6266 = vpop.f32.mrb[0].mxu0
    %v6267 = vadd.f32 0.0, %v6266
    %v6268 = vpop.f32.mrb[0].mxu0
    %6269 = vmatprep.mubr.bf16.mxu0 0
    %6270 = vmatmul.mubr.bf16.gmra.mrb[0].mxu0 %v5276
    %v6271 = vpop.f32.mrb[0].mxu0
    %v6272 = vadd.f32 0.0, %v6271
    %v6273 = vpop.f32.mrb[0].mxu0
    %v6274 = vpop.f32.mrb[0].mxu0
    %v6275 = vadd.f32 0.0, %v6274
    %v6276 = vpop.f32.mrb[0].mxu0
    %6277 = vmatprep.mubr.bf16.mxu0 0
    %6278 = vmatmul.mubr.bf16.gmra.mrb[0].mxu0 %v5279
    %v6279 = vpop.f32.mrb[0].mxu0
    %v6280 = vadd.f32 0.0, %v6279
    %v6281 = vpop.f32.mrb[0].mxu0
    %v6282 = vpop.f32.mrb[0].mxu0
    %v6283 = vadd.f32 0.0, %v6282
    %v6284 = vpop.f32.mrb[0].mxu0
    %6285 = vmatprep.mubr.bf16.mxu0 0
    %6286 = vmatmul.mubr.bf16.gmra.mrb[0].mxu0 %v5282
    %v6287 = vpop.f32.mrb[0].mxu0
    %v6288 = vadd.f32 0.0, %v6287
    %v6289 = vpop.f32.mrb[0].mxu0
    %v6290 = vpop.f32.mrb[0].mxu0
    %v6291 = vadd.f32 0.0, %v6290
    %v6292 = vpop.f32.mrb[0].mxu0
    %6293 = vmatprep.mubr.bf16.mxu0 0
    %6294 = vmatmul.mubr.bf16.gmra.mrb[0].mxu0 %v5285
    %v6295 = vpop.f32.mrb[0].mxu0
    %v6296 = vadd.f32 0.0, %v6295
    %v6297 = vpop.f32.mrb[0].mxu0
    %v6298 = vpop.f32.mrb[0].mxu0
    %v6299 = vadd.f32 0.0, %v6298
    %v6300 = vpop.f32.mrb[0].mxu0
    %6301 = vmatprep.mubr.bf16.mxu0 0
    %6302 = vmatmul.mubr.bf16.gmra.mrb[0].mxu0 %v5288
    %v6303 = vpop.f32.mrb[0].mxu0
    %v6304 = vadd.f32 0.0, %v6303
    %v6305 = vpop.f32.mrb[0].mxu0
    %v6306 = vpop.f32.mrb[0].mxu0
    %v6307 = vadd.f32 0.0, %v6306
    %v6308 = vpop.f32.mrb[0].mxu0
    %6309 = vmatprep.mubr.bf16.mxu0 0
    %6310 = vmatmul.mubr.bf16.gmra.mrb[0].mxu0 %v5291
    %v6311 = vpop.f32.mrb[0].mxu0
    %v6312 = vadd.f32 0.0, %v6311
    %v6313 = vpop.f32.mrb[0].mxu0
    %v6314 = vpop.f32.mrb[0].mxu0
    %v6315 = vadd.f32 0.0, %v6314
    %v6316 = vpop.f32.mrb[0].mxu0
    %6317 = vmatprep.mubr.bf16.mxu0 0
    %6318 = vmatmul.mubr.bf16.gmra.mrb[0].mxu0 %v5294
    %v6319 = vpop.f32.mrb[0].mxu0
    %v6320 = vadd.f32 0.0, %v6319
    %v6321 = vpop.f32.mrb[0].mxu0
    %v6322 = vpop.f32.mrb[0].mxu0
    %v6323 = vadd.f32 0.0, %v6322
    %v6324 = vpop.f32.mrb[0].mxu0
    %6325 = vmatprep.mubr.bf16.mxu0 0
    %6326 = vmatmul.mubr.bf16.gmra.mrb[0].mxu0 %v5297
    %v6327 = vpop.f32.mrb[0].mxu0
    %v6328 = vadd.f32 0.0, %v6327
    %v6329 = vpop.f32.mrb[0].mxu0
    %v6330 = vpop.f32.mrb[0].mxu0
    %v6331 = vadd.f32 0.0, %v6330
    %v6332 = vpop.f32.mrb[0].mxu0
    %6333 = vmatprep.mubr.bf16.mxu0 0
    %6334 = vmatmul.mubr.bf16.gmra.mrb[0].mxu0 %v5300
    %v6335 = vpop.f32.mrb[0].mxu0
    %v6336 = vadd.f32 0.0, %v6335
    %v6337 = vpop.f32.mrb[0].mxu0
    %v6338 = vpop.f32.mrb[0].mxu0
    %v6339 = vadd.f32 0.0, %v6338
    %v6340 = vpop.f32.mrb[0].mxu0
    %6341 = vmatprep.mubr.bf16.mxu0 0
    %6342 = vmatmul.mubr.bf16.gmra.mrb[0].mxu0 %v5303
    %v6343 = vpop.f32.mrb[0].mxu0
    %v6344 = vadd.f32 0.0, %v6343
    %v6345 = vpop.f32.mrb[0].mxu0
    %v6346 = vpop.f32.mrb[0].mxu0
    %v6347 = vadd.f32 0.0, %v6346
    %v6348 = vpop.f32.mrb[0].mxu0
    %6349 = vmatprep.mubr.bf16.mxu0 0
    %6350 = vmatmul.mubr.bf16.gmra.mrb[0].mxu0 %v5306
    %v6351 = vpop.f32.mrb[0].mxu0
    %v6352 = vadd.f32 0.0, %v6351
    %v6353 = vpop.f32.mrb[0].mxu0
    %v6354 = vpop.f32.mrb[0].mxu0
    %v6355 = vadd.f32 0.0, %v6354
    %v6356 = vpop.f32.mrb[0].mxu0
    %6357 = vmatprep.mubr.bf16.mxu0 0
    %6358 = vmatmul.mubr.bf16.gmra.mrb[0].mxu0 %v5309
    %v6359 = vpop.f32.mrb[0].mxu0
    %v6360 = vadd.f32 0.0, %v6359
    %v6361 = vpop.f32.mrb[0].mxu0
    %v6362 = vpop.f32.mrb[0].mxu0
    %v6363 = vadd.f32 0.0, %v6362
    %v6364 = vpop.f32.mrb[0].mxu0
    %6365 = vmatprep.mubr.bf16.mxu0 0
    %6366 = vmatmul.mubr.bf16.gmra.mrb[0].mxu0 %v5312
    %v6367 = vpop.f32.mrb[0].mxu0
    %v6368 = vadd.f32 0.0, %v6367
    %v6369 = vpop.f32.mrb[0].mxu0
    %v6370 = vpop.f32.mrb[0].mxu0
    %v6371 = vadd.f32 0.0, %v6370
    %v6372 = vpop.f32.mrb[0].mxu0
    %6373 = vmatprep.mubr.bf16.mxu0 0
    %6374 = vmatmul.mubr.bf16.gmra.mrb[0].mxu0 %v5315
    %v6375 = vpop.f32.mrb[0].mxu0
    %v6376 = vadd.f32 0.0, %v6375
    %v6377 = vpop.f32.mrb[0].mxu0
    %v6378 = vpop.f32.mrb[0].mxu0
    %v6379 = vadd.f32 0.0, %v6378
    %v6380 = vpop.f32.mrb[0].mxu0
    %6381 = vmatprep.mubr.bf16.mxu0 0
    %6382 = vmatmul.mubr.bf16.gmra.mrb[0].mxu0 %v5318
    %v6383 = vpop.f32.mrb[0].mxu0
    %v6384 = vadd.f32 0.0, %v6383
    %v6385 = vpop.f32.mrb[0].mxu0
    %v6386 = vpop.f32.mrb[0].mxu0
    %v6387 = vadd.f32 0.0, %v6386
    %v6388 = vpop.f32.mrb[0].mxu0
    %6389 = vmatprep.mubr.bf16.mxu0 0
    %6390 = vmatmul.mubr.bf16.gmra.mrb[0].mxu0 %v5321
    %v6391 = vpop.f32.mrb[0].mxu0
    %v6392 = vadd.f32 0.0, %v6391
    %v6393 = vpop.f32.mrb[0].mxu0
    %v6394 = vpop.f32.mrb[0].mxu0
    %v6395 = vadd.f32 0.0, %v6394
    %v6396 = vpop.f32.mrb[0].mxu0
    %6397 = vmatprep.mubr.bf16.mxu0 0
    %6398 = vmatmul.mubr.bf16.gmra.mrb[0].mxu0 %v5324
    %v6399 = vpop.f32.mrb[0].mxu0
    %v6400 = vadd.f32 0.0, %v6399
    %v6401 = vpop.f32.mrb[0].mxu0
    %v6402 = vpop.f32.mrb[0].mxu0
    %v6403 = vadd.f32 0.0, %v6402
    %v6404 = vpop.f32.mrb[0].mxu0
    %6405 = vmatprep.mubr.bf16.mxu0 0
    %6406 = vmatmul.mubr.bf16.gmra.mrb[0].mxu0 %v5327
    %v6407 = vpop.f32.mrb[0].mxu0
    %v6408 = vadd.f32 0.0, %v6407
    %v6409 = vpop.f32.mrb[0].mxu0
    %v6410 = vpop.f32.mrb[0].mxu0
    %v6411 = vadd.f32 0.0, %v6410
    %v6412 = vpop.f32.mrb[0].mxu0
    %6413 = vmatprep.mubr.bf16.mxu0 0
    %6414 = vmatmul.mubr.bf16.gmra.mrb[0].mxu0 %v5330
    %v6415 = vpop.f32.mrb[0].mxu0
    %v6416 = vadd.f32 0.0, %v6415
    %v6417 = vpop.f32.mrb[0].mxu0
    %v6418 = vpop.f32.mrb[0].mxu0
    %v6419 = vadd.f32 0.0, %v6418
    %v6420 = vpop.f32.mrb[0].mxu0
    %6421 = vmatprep.mubr.bf16.mxu0 0
    %6422 = vmatmul.mubr.bf16.gmra.mrb[0].mxu0 %v5333
    %v6423 = vpop.f32.mrb[0].mxu0
    %v6424 = vadd.f32 0.0, %v6423
    %v6425 = vpop.f32.mrb[0].mxu0
    %v6426 = vpop.f32.mrb[0].mxu0
    %v6427 = vadd.f32 0.0, %v6426
    %v6428 = vpop.f32.mrb[0].mxu0
    %6429 = vmatprep.mubr.bf16.mxu0 0
    %6430 = vmatmul.mubr.bf16.gmra.mrb[0].mxu0 %v5336
    %v6431 = vpop.f32.mrb[0].mxu0
    %v6432 = vadd.f32 0.0, %v6431
    %v6433 = vpop.f32.mrb[0].mxu0
    %v6434 = vpop.f32.mrb[0].mxu0
    %v6435 = vadd.f32 0.0, %v6434
    %v6436 = vpop.f32.mrb[0].mxu0
    %6437 = vmatprep.mubr.bf16.mxu0 0
    %6438 = vmatmul.mubr.bf16.gmra.mrb[0].mxu0 %v5339
    %v6439 = vpop.f32.mrb[0].mxu0
    %v6440 = vadd.f32 0.0, %v6439
    %v6441 = vpop.f32.mrb[0].mxu0
    %v6442 = vpop.f32.mrb[0].mxu0
    %v6443 = vadd.f32 0.0, %v6442
    %v6444 = vpop.f32.mrb[0].mxu0
    %6445 = vmatprep.mubr.bf16.mxu0 0
    %6446 = vmatmul.mubr.bf16.gmra.mrb[0].mxu0 %v5342
    %v6447 = vpop.f32.mrb[0].mxu0
    %v6448 = vadd.f32 0.0, %v6447
    %v6449 = vpop.f32.mrb[0].mxu0
    %v6450 = vpop.f32.mrb[0].mxu0
    %v6451 = vadd.f32 0.0, %v6450
    %v6452 = vpop.f32.mrb[0].mxu0
    %6453 = vmatprep.mubr.bf16.mxu0 0
    %6454 = vmatmul.mubr.bf16.gmra.mrb[0].mxu0 %v5345
    %v6455 = vpop.f32.mrb[0].mxu0
    %v6456 = vadd.f32 0.0, %v6455
    %v6457 = vpop.f32.mrb[0].mxu0
    %v6458 = vpop.f32.mrb[0].mxu0
    %v6459 = vadd.f32 0.0, %v6458
    %v6460 = vpop.f32.mrb[0].mxu0
    %6461 = vmatprep.mubr.bf16.mxu0 0
    %6462 = vmatmul.mubr.bf16.gmra.mrb[0].mxu0 %v5348
    %v6463 = vpop.f32.mrb[0].mxu0
    %v6464 = vadd.f32 0.0, %v6463
    %v6465 = vpop.f32.mrb[0].mxu0
    %v6466 = vpop.f32.mrb[0].mxu0
    %v6467 = vadd.f32 0.0, %v6466
    %v6468 = vpop.f32.mrb[0].mxu0
    %6469 = vmatprep.mubr.bf16.mxu0 0
    %6470 = vmatmul.mubr.bf16.gmra.mrb[0].mxu0 %v5351
    %v6471 = vpop.f32.mrb[0].mxu0
    %v6472 = vadd.f32 0.0, %v6471
    %v6473 = vpop.f32.mrb[0].mxu0
    %v6474 = vpop.f32.mrb[0].mxu0
    %v6475 = vadd.f32 0.0, %v6474
    %v6476 = vpop.f32.mrb[0].mxu0
    %6477 = vmatprep.mubr.bf16.mxu0 0
    %6478 = vmatmul.mubr.bf16.gmra.mrb[0].mxu0 %v5354
    %v6479 = vpop.f32.mrb[0].mxu0
    %v6480 = vadd.f32 0.0, %v6479
    %v6481 = vpop.f32.mrb[0].mxu0
    %v6482 = vpop.f32.mrb[0].mxu0
    %v6483 = vadd.f32 0.0, %v6482
    %v6484 = vpop.f32.mrb[0].mxu0
    %6485 = vmatprep.mubr.bf16.mxu0 0
    %6486 = vmatmul.mubr.bf16.gmra.mrb[0].mxu0 %v5357
    %v6487 = vpop.f32.mrb[0].mxu0
    %v6488 = vadd.f32 0.0, %v6487
    %v6489 = vpop.f32.mrb[0].mxu0
    %v6490 = vpop.f32.mrb[0].mxu0
    %v6491 = vadd.f32 0.0, %v6490
    %v6492 = vpop.f32.mrb[0].mxu0
    %6493 = vmatprep.mubr.bf16.mxu0 0
    %6494 = vmatmul.mubr.bf16.gmra.mrb[0].mxu0 %v5360
    %v6495 = vpop.f32.mrb[0].mxu0
    %v6496 = vadd.f32 0.0, %v6495
    %v6497 = vpop.f32.mrb[0].mxu0
    %v6498 = vpop.f32.mrb[0].mxu0
    %v6499 = vadd.f32 0.0, %v6498
    %v6500 = vpop.f32.mrb[0].mxu0
    %6501 = vmatprep.mubr.bf16.mxu0 0
    %6502 = vmatmul.mubr.bf16.gmra.mrb[0].mxu0 %v5363
    %v6503 = vpop.f32.mrb[0].mxu0
    %v6504 = vadd.f32 0.0, %v6503
    %v6505 = vpop.f32.mrb[0].mxu0
    %v6506 = vpop.f32.mrb[0].mxu0
    %v6507 = vadd.f32 0.0, %v6506
    %v6508 = vpop.f32.mrb[0].mxu0
    %6509 = vmatprep.mubr.bf16.mxu0 0
    %6510 = vmatmul.mubr.bf16.gmra.mrb[0].mxu0 %v5366
    %v6511 = vpop.f32.mrb[0].mxu0
    %v6512 = vadd.f32 0.0, %v6511
    %v6513 = vpop.f32.mrb[0].mxu0
    %v6514 = vpop.f32.mrb[0].mxu0
    %v6515 = vadd.f32 0.0, %v6514
    %v6516 = vpop.f32.mrb[0].mxu0
    %6517 = vmatprep.mubr.bf16.mxu0 0
    %6518 = vmatmul.mubr.bf16.gmra.mrb[0].mxu0 %v5369
    %v6519 = vpop.f32.mrb[0].mxu0
    %v6520 = vadd.f32 0.0, %v6519
    %v6521 = vpop.f32.mrb[0].mxu0
    %v6522 = vpop.f32.mrb[0].mxu0
    %v6523 = vadd.f32 0.0, %v6522
    %v6524 = vpop.f32.mrb[0].mxu0
    %6525 = vdwg.mxu0
    %v6526 = vld [vmem:[#allocation3] sm:$0xff]
    %v6527 = vld [vmem:[#allocation3 + $0x8] sm:$0xff]
    %v6528 = vld [vmem:[#allocation3 + $0x10] sm:$0xff]
    %v6529 = vld [vmem:[#allocation3 + $0x18] sm:$0xff]
    %v6530 = vld [vmem:[#allocation3 + $0x20] sm:$0xff]
    %v6531 = vld [vmem:[#allocation3 + $0x28] sm:$0xff]
    %v6532 = vld [vmem:[#allocation3 + $0x30] sm:$0xff]
    %v6533 = vld [vmem:[#allocation3 + $0x38] sm:$0xff]
    %v6534 = vld [vmem:[#allocation3 + $0x40] sm:$0xff]
    %v6535 = vld [vmem:[#allocation3 + $0x48] sm:$0xff]
    %v6536 = vld [vmem:[#allocation3 + $0x50] sm:$0xff]
    %v6537 = vld [vmem:[#allocation3 + $0x58] sm:$0xff]
    %v6538 = vld [vmem:[#allocation3 + $0x60] sm:$0xff]
    %v6539 = vld [vmem:[#allocation3 + $0x68] sm:$0xff]
    %v6540 = vld [vmem:[#allocation3 + $0x70] sm:$0xff]
    %v6541 = vld [vmem:[#allocation3 + $0x78] sm:$0xff]
    %v6542 = vld [vmem:[#allocation3 + $0x80] sm:$0xff]
    %v6543 = vld [vmem:[#allocation3 + $0x88] sm:$0xff]
    %v6544 = vld [vmem:[#allocation3 + $0x90] sm:$0xff]
    %v6545 = vld [vmem:[#allocation3 + $0x98] sm:$0xff]
    %v6546 = vld [vmem:[#allocation3 + $0xa0] sm:$0xff]
    %v6547 = vld [vmem:[#allocation3 + $0xa8] sm:$0xff]
    %v6548 = vld [vmem:[#allocation3 + $0xb0] sm:$0xff]
    %v6549 = vld [vmem:[#allocation3 + $0xb8] sm:$0xff]
    %v6550 = vld [vmem:[#allocation3 + $0xc0] sm:$0xff]
    %v6551 = vld [vmem:[#allocation3 + $0xc8] sm:$0xff]
    %v6552 = vld [vmem:[#allocation3 + $0xd0] sm:$0xff]
    %v6553 = vld [vmem:[#allocation3 + $0xd8] sm:$0xff]
    %v6554 = vld [vmem:[#allocation3 + $0xe0] sm:$0xff]
    %v6555 = vld [vmem:[#allocation3 + $0xe8] sm:$0xff]
    %v6556 = vld [vmem:[#allocation3 + $0xf0] sm:$0xff]
    %v6557 = vld [vmem:[#allocation3 + $0xf8] sm:$0xff]
    %v6558 = vld [vmem:[#allocation3 + $0x100] sm:$0xff]
    %v6559 = vld [vmem:[#allocation3 + $0x108] sm:$0xff]
    %v6560 = vld [vmem:[#allocation3 + $0x110] sm:$0xff]
    %v6561 = vld [vmem:[#allocation3 + $0x118] sm:$0xff]
    %v6562 = vld [vmem:[#allocation3 + $0x120] sm:$0xff]
    %v6563 = vld [vmem:[#allocation3 + $0x128] sm:$0xff]
    %v6564 = vld [vmem:[#allocation3 + $0x130] sm:$0xff]
    %v6565 = vld [vmem:[#allocation3 + $0x138] sm:$0xff]
    %v6566 = vld [vmem:[#allocation3 + $0x140] sm:$0xff]
    %v6567 = vld [vmem:[#allocation3 + $0x148] sm:$0xff]
    %v6568 = vld [vmem:[#allocation3 + $0x150] sm:$0xff]
    %v6569 = vld [vmem:[#allocation3 + $0x158] sm:$0xff]
    %v6570 = vld [vmem:[#allocation3 + $0x160] sm:$0xff]
    %v6571 = vld [vmem:[#allocation3 + $0x168] sm:$0xff]
    %v6572 = vld [vmem:[#allocation3 + $0x170] sm:$0xff]
    %v6573 = vld [vmem:[#allocation3 + $0x178] sm:$0xff]
    %v6574 = vld [vmem:[#allocation3 + $0x180] sm:$0xff]
    %v6575 = vld [vmem:[#allocation3 + $0x188] sm:$0xff]
    %v6576 = vld [vmem:[#allocation3 + $0x190] sm:$0xff]
    %v6577 = vld [vmem:[#allocation3 + $0x198] sm:$0xff]
    %v6578 = vld [vmem:[#allocation3 + $0x1a0] sm:$0xff]
    %v6579 = vld [vmem:[#allocation3 + $0x1a8] sm:$0xff]
    %v6580 = vld [vmem:[#allocation3 + $0x1b0] sm:$0xff]
    %v6581 = vld [vmem:[#allocation3 + $0x1b8] sm:$0xff]
    %v6582 = vld [vmem:[#allocation3 + $0x1c0] sm:$0xff]
    %v6583 = vld [vmem:[#allocation3 + $0x1c8] sm:$0xff]
    %v6584 = vld [vmem:[#allocation3 + $0x1d0] sm:$0xff]
    %v6585 = vld [vmem:[#allocation3 + $0x1d8] sm:$0xff]
    %v6586 = vld [vmem:[#allocation3 + $0x1e0] sm:$0xff]
    %v6587 = vld [vmem:[#allocation3 + $0x1e8] sm:$0xff]
    %v6588 = vld [vmem:[#allocation3 + $0x1f0] sm:$0xff]
    %v6589 = vld [vmem:[#allocation3 + $0x1f8] sm:$0xff]
    %v6590 = vld [vmem:[#allocation3 + $0x200] sm:$0xff]
    %v6591 = vld [vmem:[#allocation3 + $0x208] sm:$0xff]
    %v6592 = vld [vmem:[#allocation3 + $0x210] sm:$0xff]
    %v6593 = vld [vmem:[#allocation3 + $0x218] sm:$0xff]
    %v6594 = vld [vmem:[#allocation3 + $0x220] sm:$0xff]
    %v6595 = vld [vmem:[#allocation3 + $0x228] sm:$0xff]
    %v6596 = vld [vmem:[#allocation3 + $0x230] sm:$0xff]
    %v6597 = vld [vmem:[#allocation3 + $0x238] sm:$0xff]
    %v6598 = vld [vmem:[#allocation3 + $0x240] sm:$0xff]
    %v6599 = vld [vmem:[#allocation3 + $0x248] sm:$0xff]
    %v6600 = vld [vmem:[#allocation3 + $0x250] sm:$0xff]
    %v6601 = vld [vmem:[#allocation3 + $0x258] sm:$0xff]
    %v6602 = vld [vmem:[#allocation3 + $0x260] sm:$0xff]
    %v6603 = vld [vmem:[#allocation3 + $0x268] sm:$0xff]
    %v6604 = vld [vmem:[#allocation3 + $0x270] sm:$0xff]
    %v6605 = vld [vmem:[#allocation3 + $0x278] sm:$0xff]
    %v6606 = vld [vmem:[#allocation3 + $0x280] sm:$0xff]
    %v6607 = vld [vmem:[#allocation3 + $0x288] sm:$0xff]
    %v6608 = vld [vmem:[#allocation3 + $0x290] sm:$0xff]
    %v6609 = vld [vmem:[#allocation3 + $0x298] sm:$0xff]
    %v6610 = vld [vmem:[#allocation3 + $0x2a0] sm:$0xff]
    %v6611 = vld [vmem:[#allocation3 + $0x2a8] sm:$0xff]
    %v6612 = vld [vmem:[#allocation3 + $0x2b0] sm:$0xff]
    %v6613 = vld [vmem:[#allocation3 + $0x2b8] sm:$0xff]
    %v6614 = vld [vmem:[#allocation3 + $0x2c0] sm:$0xff]
    %v6615 = vld [vmem:[#allocation3 + $0x2c8] sm:$0xff]
    %v6616 = vld [vmem:[#allocation3 + $0x2d0] sm:$0xff]
    %v6617 = vld [vmem:[#allocation3 + $0x2d8] sm:$0xff]
    %v6618 = vld [vmem:[#allocation3 + $0x2e0] sm:$0xff]
    %v6619 = vld [vmem:[#allocation3 + $0x2e8] sm:$0xff]
    %v6620 = vld [vmem:[#allocation3 + $0x2f0] sm:$0xff]
    %v6621 = vld [vmem:[#allocation3 + $0x2f8] sm:$0xff]
    %v6622 = vadd.f32 %v6526, %v6144
    %v6623 = vadd.f32 %v6527, %v6147
    %v6624 = vadd.f32 %v6528, %v6152
    %v6625 = vadd.f32 %v6529, %v6155
    %v6626 = vadd.f32 %v6530, %v6160
    %v6627 = vadd.f32 %v6531, %v6163
    %v6628 = vadd.f32 %v6532, %v6168
    %v6629 = vadd.f32 %v6533, %v6171
    %v6630 = vadd.f32 %v6534, %v6176
    %v6631 = vadd.f32 %v6535, %v6179
    %v6632 = vadd.f32 %v6536, %v6184
    %v6633 = vadd.f32 %v6537, %v6187
    %v6634 = vadd.f32 %v6538, %v6192
    %v6635 = vadd.f32 %v6539, %v6195
    %v6636 = vadd.f32 %v6540, %v6200
    %v6637 = vadd.f32 %v6541, %v6203
    %v6638 = vadd.f32 %v6542, %v6208
    %v6639 = vadd.f32 %v6543, %v6211
    %v6640 = vadd.f32 %v6544, %v6216
    %v6641 = vadd.f32 %v6545, %v6219
    %v6642 = vadd.f32 %v6546, %v6224
    %v6643 = vadd.f32 %v6547, %v6227
    %v6644 = vadd.f32 %v6548, %v6232
    %v6645 = vadd.f32 %v6549, %v6235
    %v6646 = vadd.f32 %v6550, %v6240
    %v6647 = vadd.f32 %v6551, %v6243
    %v6648 = vadd.f32 %v6552, %v6248
    %v6649 = vadd.f32 %v6553, %v6251
    %v6650 = vadd.f32 %v6554, %v6256
    %v6651 = vadd.f32 %v6555, %v6259
    %v6652 = vadd.f32 %v6556, %v6264
    %v6653 = vadd.f32 %v6557, %v6267
    %v6654 = vadd.f32 %v6558, %v6272
    %v6655 = vadd.f32 %v6559, %v6275
    %v6656 = vadd.f32 %v6560, %v6280
    %v6657 = vadd.f32 %v6561, %v6283
    %v6658 = vadd.f32 %v6562, %v6288
    %v6659 = vadd.f32 %v6563, %v6291
    %v6660 = vadd.f32 %v6564, %v6296
    %v6661 = vadd.f32 %v6565, %v6299
    %v6662 = vadd.f32 %v6566, %v6304
    %v6663 = vadd.f32 %v6567, %v6307
    %v6664 = vadd.f32 %v6568, %v6312
    %v6665 = vadd.f32 %v6569, %v6315
    %v6666 = vadd.f32 %v6570, %v6320
    %v6667 = vadd.f32 %v6571, %v6323
    %v6668 = vadd.f32 %v6572, %v6328
    %v6669 = vadd.f32 %v6573, %v6331
    %v6670 = vadd.f32 %v6574, %v6336
    %v6671 = vadd.f32 %v6575, %v6339
    %v6672 = vadd.f32 %v6576, %v6344
    %v6673 = vadd.f32 %v6577, %v6347
    %v6674 = vadd.f32 %v6578, %v6352
    %v6675 = vadd.f32 %v6579, %v6355
    %v6676 = vadd.f32 %v6580, %v6360
    %v6677 = vadd.f32 %v6581, %v6363
    %v6678 = vadd.f32 %v6582, %v6368
    %v6679 = vadd.f32 %v6583, %v6371
    %v6680 = vadd.f32 %v6584, %v6376
    %v6681 = vadd.f32 %v6585, %v6379
    %v6682 = vadd.f32 %v6586, %v6384
    %v6683 = vadd.f32 %v6587, %v6387
    %v6684 = vadd.f32 %v6588, %v6392
    %v6685 = vadd.f32 %v6589, %v6395
    %v6686 = vadd.f32 %v6590, %v6400
    %v6687 = vadd.f32 %v6591, %v6403
    %v6688 = vadd.f32 %v6592, %v6408
    %v6689 = vadd.f32 %v6593, %v6411
    %v6690 = vadd.f32 %v6594, %v6416
    %v6691 = vadd.f32 %v6595, %v6419
    %v6692 = vadd.f32 %v6596, %v6424
    %v6693 = vadd.f32 %v6597, %v6427
    %v6694 = vadd.f32 %v6598, %v6432
    %v6695 = vadd.f32 %v6599, %v6435
    %v6696 = vadd.f32 %v6600, %v6440
    %v6697 = vadd.f32 %v6601, %v6443
    %v6698 = vadd.f32 %v6602, %v6448
    %v6699 = vadd.f32 %v6603, %v6451
    %v6700 = vadd.f32 %v6604, %v6456
    %v6701 = vadd.f32 %v6605, %v6459
    %v6702 = vadd.f32 %v6606, %v6464
    %v6703 = vadd.f32 %v6607, %v6467
    %v6704 = vadd.f32 %v6608, %v6472
    %v6705 = vadd.f32 %v6609, %v6475
    %v6706 = vadd.f32 %v6610, %v6480
    %v6707 = vadd.f32 %v6611, %v6483
    %v6708 = vadd.f32 %v6612, %v6488
    %v6709 = vadd.f32 %v6613, %v6491
    %v6710 = vadd.f32 %v6614, %v6496
    %v6711 = vadd.f32 %v6615, %v6499
    %v6712 = vadd.f32 %v6616, %v6504
    %v6713 = vadd.f32 %v6617, %v6507
    %v6714 = vadd.f32 %v6618, %v6512
    %v6715 = vadd.f32 %v6619, %v6515
    %v6716 = vadd.f32 %v6620, %v6520
    %v6717 = vadd.f32 %v6621, %v6523
    %6718 = vst [vmem:[#allocation3] sm:$0xff] %v6622
    %6719 = vst [vmem:[#allocation3 + $0x8] sm:$0xff] %v6623
    %6720 = vst [vmem:[#allocation3 + $0x10] sm:$0xff] %v6624
    %6721 = vst [vmem:[#allocation3 + $0x18] sm:$0xff] %v6625
    %6722 = vst [vmem:[#allocation3 + $0x20] sm:$0xff] %v6626
    %6723 = vst [vmem:[#allocation3 + $0x28] sm:$0xff] %v6627
    %6724 = vst [vmem:[#allocation3 + $0x30] sm:$0xff] %v6628
    %6725 = vst [vmem:[#allocation3 + $0x38] sm:$0xff] %v6629
    %6726 = vst [vmem:[#allocation3 + $0x40] sm:$0xff] %v6630
    %6727 = vst [vmem:[#allocation3 + $0x48] sm:$0xff] %v6631
    %6728 = vst [vmem:[#allocation3 + $0x50] sm:$0xff] %v6632
    %6729 = vst [vmem:[#allocation3 + $0x58] sm:$0xff] %v6633
    %6730 = vst [vmem:[#allocation3 + $0x60] sm:$0xff] %v6634
    %6731 = vst [vmem:[#allocation3 + $0x68] sm:$0xff] %v6635
    %6732 = vst [vmem:[#allocation3 + $0x70] sm:$0xff] %v6636
    %6733 = vst [vmem:[#allocation3 + $0x78] sm:$0xff] %v6637
    %6734 = vst [vmem:[#allocation3 + $0x80] sm:$0xff] %v6638
    %6735 = vst [vmem:[#allocation3 + $0x88] sm:$0xff] %v6639
    %6736 = vst [vmem:[#allocation3 + $0x90] sm:$0xff] %v6640
    %6737 = vst [vmem:[#allocation3 + $0x98] sm:$0xff] %v6641
    %6738 = vst [vmem:[#allocation3 + $0xa0] sm:$0xff] %v6642
    %6739 = vst [vmem:[#allocation3 + $0xa8] sm:$0xff] %v6643
    %6740 = vst [vmem:[#allocation3 + $0xb0] sm:$0xff] %v6644
    %6741 = vst [vmem:[#allocation3 + $0xb8] sm:$0xff] %v6645
    %6742 = vst [vmem:[#allocation3 + $0xc0] sm:$0xff] %v6646
    %6743 = vst [vmem:[#allocation3 + $0xc8] sm:$0xff] %v6647
    %6744 = vst [vmem:[#allocation3 + $0xd0] sm:$0xff] %v6648
    %6745 = vst [vmem:[#allocation3 + $0xd8] sm:$0xff] %v6649
    %6746 = vst [vmem:[#allocation3 + $0xe0] sm:$0xff] %v6650
    %6747 = vst [vmem:[#allocation3 + $0xe8] sm:$0xff] %v6651
    %6748 = vst [vmem:[#allocation3 + $0xf0] sm:$0xff] %v6652
    %6749 = vst [vmem:[#allocation3 + $0xf8] sm:$0xff] %v6653
    %6750 = vst [vmem:[#allocation3 + $0x100] sm:$0xff] %v6654
    %6751 = vst [vmem:[#allocation3 + $0x108] sm:$0xff] %v6655
    %6752 = vst [vmem:[#allocation3 + $0x110] sm:$0xff] %v6656
    %6753 = vst [vmem:[#allocation3 + $0x118] sm:$0xff] %v6657
    %6754 = vst [vmem:[#allocation3 + $0x120] sm:$0xff] %v6658
    %6755 = vst [vmem:[#allocation3 + $0x128] sm:$0xff] %v6659
    %6756 = vst [vmem:[#allocation3 + $0x130] sm:$0xff] %v6660
    %6757 = vst [vmem:[#allocation3 + $0x138] sm:$0xff] %v6661
    %6758 = vst [vmem:[#allocation3 + $0x140] sm:$0xff] %v6662
    %6759 = vst [vmem:[#allocation3 + $0x148] sm:$0xff] %v6663
    %6760 = vst [vmem:[#allocation3 + $0x150] sm:$0xff] %v6664
    %6761 = vst [vmem:[#allocation3 + $0x158] sm:$0xff] %v6665
    %6762 = vst [vmem:[#allocation3 + $0x160] sm:$0xff] %v6666
    %6763 = vst [vmem:[#allocation3 + $0x168] sm:$0xff] %v6667
    %6764 = vst [vmem:[#allocation3 + $0x170] sm:$0xff] %v6668
    %6765 = vst [vmem:[#allocation3 + $0x178] sm:$0xff] %v6669
    %6766 = vst [vmem:[#allocation3 + $0x180] sm:$0xff] %v6670
    %6767 = vst [vmem:[#allocation3 + $0x188] sm:$0xff] %v6671
    %6768 = vst [vmem:[#allocation3 + $0x190] sm:$0xff] %v6672
    %6769 = vst [vmem:[#allocation3 + $0x198] sm:$0xff] %v6673
    %6770 = vst [vmem:[#allocation3 + $0x1a0] sm:$0xff] %v6674
    %6771 = vst [vmem:[#allocation3 + $0x1a8] sm:$0xff] %v6675
    %6772 = vst [vmem:[#allocation3 + $0x1b0] sm:$0xff] %v6676
    %6773 = vst [vmem:[#allocation3 + $0x1b8] sm:$0xff] %v6677
    %6774 = vst [vmem:[#allocation3 + $0x1c0] sm:$0xff] %v6678
    %6775 = vst [vmem:[#allocation3 + $0x1c8] sm:$0xff] %v6679
    %6776 = vst [vmem:[#allocation3 + $0x1d0] sm:$0xff] %v6680
    %6777 = vst [vmem:[#allocation3 + $0x1d8] sm:$0xff] %v6681
    %6778 = vst [vmem:[#allocation3 + $0x1e0] sm:$0xff] %v6682
    %6779 = vst [vmem:[#allocation3 + $0x1e8] sm:$0xff] %v6683
    %6780 = vst [vmem:[#allocation3 + $0x1f0] sm:$0xff] %v6684
    %6781 = vst [vmem:[#allocation3 + $0x1f8] sm:$0xff] %v6685
    %6782 = vst [vmem:[#allocation3 + $0x200] sm:$0xff] %v6686
    %6783 = vst [vmem:[#allocation3 + $0x208] sm:$0xff] %v6687
    %6784 = vst [vmem:[#allocation3 + $0x210] sm:$0xff] %v6688
    %6785 = vst [vmem:[#allocation3 + $0x218] sm:$0xff] %v6689
    %6786 = vst [vmem:[#allocation3 + $0x220] sm:$0xff] %v6690
    %6787 = vst [vmem:[#allocation3 + $0x228] sm:$0xff] %v6691
    %6788 = vst [vmem:[#allocation3 + $0x230] sm:$0xff] %v6692
    %6789 = vst [vmem:[#allocation3 + $0x238] sm:$0xff] %v6693
    %6790 = vst [vmem:[#allocation3 + $0x240] sm:$0xff] %v6694
    %6791 = vst [vmem:[#allocation3 + $0x248] sm:$0xff] %v6695
    %6792 = vst [vmem:[#allocation3 + $0x250] sm:$0xff] %v6696
    %6793 = vst [vmem:[#allocation3 + $0x258] sm:$0xff] %v6697
    %6794 = vst [vmem:[#allocation3 + $0x260] sm:$0xff] %v6698
    %6795 = vst [vmem:[#allocation3 + $0x268] sm:$0xff] %v6699
    %6796 = vst [vmem:[#allocation3 + $0x270] sm:$0xff] %v6700
    %6797 = vst [vmem:[#allocation3 + $0x278] sm:$0xff] %v6701
    %6798 = vst [vmem:[#allocation3 + $0x280] sm:$0xff] %v6702
    %6799 = vst [vmem:[#allocation3 + $0x288] sm:$0xff] %v6703
    %6800 = vst [vmem:[#allocation3 + $0x290] sm:$0xff] %v6704
    %6801 = vst [vmem:[#allocation3 + $0x298] sm:$0xff] %v6705
    %6802 = vst [vmem:[#allocation3 + $0x2a0] sm:$0xff] %v6706
    %6803 = vst [vmem:[#allocation3 + $0x2a8] sm:$0xff] %v6707
    %6804 = vst [vmem:[#allocation3 + $0x2b0] sm:$0xff] %v6708
    %6805 = vst [vmem:[#allocation3 + $0x2b8] sm:$0xff] %v6709
    %6806 = vst [vmem:[#allocation3 + $0x2c0] sm:$0xff] %v6710
    %6807 = vst [vmem:[#allocation3 + $0x2c8] sm:$0xff] %v6711
    %6808 = vst [vmem:[#allocation3 + $0x2d0] sm:$0xff] %v6712
    %6809 = vst [vmem:[#allocation3 + $0x2d8] sm:$0xff] %v6713
    %6810 = vst [vmem:[#allocation3 + $0x2e0] sm:$0xff] %v6714
    %6811 = vst [vmem:[#allocation3 + $0x2e8] sm:$0xff] %v6715
    %6812 = vst [vmem:[#allocation3 + $0x2f0] sm:$0xff] %v6716
    %6813 = vst [vmem:[#allocation3 + $0x2f8] sm:$0xff] %v6717
    %s6814 = scalar_lea.vmem [#allocation8], 256
    %v6815 = vld [vmem:[%s6814] sm:$0xf]
    %v6816 = vld [vmem:[%s6814 + $0x4] sm:$0xf]
    %v6817 = vld [vmem:[%s6814 + $0x8] sm:$0xf]
    %v6818 = vld [vmem:[%s6814 + $0xc] sm:$0xf]
    %v6819 = vld [vmem:[%s6814 + $0x10] sm:$0xf]
    %v6820 = vld [vmem:[%s6814 + $0x14] sm:$0xf]
    %v6821 = vld [vmem:[%s6814 + $0x18] sm:$0xf]
    %v6822 = vld [vmem:[%s6814 + $0x1c] sm:$0xf]
    %v6831 = vunpack.c.l.b16 %v6815
    %v6832 = vunpack.c.l.b16 %v6816
    %v6833 = vunpack.c.l.b16 %v6817
    %v6834 = vunpack.c.l.b16 %v6818
    %v6835 = vunpack.c.l.b16 %v6819
    %v6836 = vunpack.c.l.b16 %v6820
    %v6837 = vunpack.c.l.b16 %v6821
    %v6838 = vunpack.c.l.b16 %v6822
    %v6839 = vpack.c.b16 %v6832, %v6831
    %v6840 = vpack.c.b16 %v6834, %v6833
    %v6841 = vpack.c.b16 %v6836, %v6835
    %v6842 = vpack.c.b16 %v6838, %v6837
    %6847 = vmatprep.subr.bf16.mxu0 0
    %6848 = vmatpush1.bf16.msra.mxu0 %v6839
    %6849 = vmatprep.subr.bf16.mxu0 0
    %6850 = vmatpush1.bf16.msra.mxu0 %v6840
    %6851 = vmatprep.subr.bf16.mxu0 0
    %6852 = vmatpush1.bf16.msra.mxu0 %v6841
    %6853 = vmatprep.subr.bf16.mxu0 0
    %6854 = vmatpush1.bf16.msra.mxu0 %v6842
    %6855 = vmatprep.subr.bf16.mxu0 0
    %6856 = vmatpush1.bf16.msra.mxu0 0
    %6857 = vmatprep.subr.bf16.mxu0 0
    %6858 = vmatpush1.bf16.msra.mxu0 0
    %6859 = vmatprep.subr.bf16.mxu0 0
    %6860 = vmatpush1.bf16.msra.mxu0 0
    %6861 = vmatprep.subr.bf16.mxu0 0
    %6862 = vmatpush1.bf16.msra.mxu0 0
    %6863 = vmatprep.subr.bf16.mxu0 0
    %6864 = vmatpush1.bf16.msra.mxu0 0
    %6865 = vmatprep.subr.bf16.mxu0 0
    %6866 = vmatpush1.bf16.msra.mxu0 0
    %6867 = vmatprep.subr.bf16.mxu0 0
    %6868 = vmatpush1.bf16.msra.mxu0 0
    %6869 = vmatprep.subr.bf16.mxu0 0
    %6870 = vmatpush1.bf16.msra.mxu0 0
    %6871 = vmatprep.subr.bf16.mxu0 0
    %6872 = vmatpush1.bf16.msra.mxu0 0
    %6873 = vmatprep.subr.bf16.mxu0 0
    %6874 = vmatpush1.bf16.msra.mxu0 0
    %6875 = vmatprep.subr.bf16.mxu0 0
    %6876 = vmatpush1.bf16.msra.mxu0 0
    %6877 = vmatprep.subr.bf16.mxu0 0
    %6878 = vmatpush1.bf16.msra.mxu0 0
    %6879 = vmatprep.mubr.bf16.mxu0 0
    %6880 = vmatmul.mubr.bf16.gmra.mrb[0].mxu0 %v5228
    %v6881 = vpop.f32.mrb[0].mxu0
    %v6882 = vadd.f32 0.0, %v6881
    %v6883 = vpop.f32.mrb[0].mxu0
    %v6884 = vpop.f32.mrb[0].mxu0
    %v6885 = vadd.f32 0.0, %v6884
    %v6886 = vpop.f32.mrb[0].mxu0
    %6887 = vmatprep.mubr.bf16.mxu0 0
    %6888 = vmatmul.mubr.bf16.gmra.mrb[0].mxu0 %v5231
    %v6889 = vpop.f32.mrb[0].mxu0
    %v6890 = vadd.f32 0.0, %v6889
    %v6891 = vpop.f32.mrb[0].mxu0
    %v6892 = vpop.f32.mrb[0].mxu0
    %v6893 = vadd.f32 0.0, %v6892
    %v6894 = vpop.f32.mrb[0].mxu0
    %6895 = vmatprep.mubr.bf16.mxu0 0
    %6896 = vmatmul.mubr.bf16.gmra.mrb[0].mxu0 %v5234
    %v6897 = vpop.f32.mrb[0].mxu0
    %v6898 = vadd.f32 0.0, %v6897
    %v6899 = vpop.f32.mrb[0].mxu0
    %v6900 = vpop.f32.mrb[0].mxu0
    %v6901 = vadd.f32 0.0, %v6900
    %v6902 = vpop.f32.mrb[0].mxu0
    %6903 = vmatprep.mubr.bf16.mxu0 0
    %6904 = vmatmul.mubr.bf16.gmra.mrb[0].mxu0 %v5237
    %v6905 = vpop.f32.mrb[0].mxu0
    %v6906 = vadd.f32 0.0, %v6905
    %v6907 = vpop.f32.mrb[0].mxu0
    %v6908 = vpop.f32.mrb[0].mxu0
    %v6909 = vadd.f32 0.0, %v6908
    %v6910 = vpop.f32.mrb[0].mxu0
    %6911 = vmatprep.mubr.bf16.mxu0 0
    %6912 = vmatmul.mubr.bf16.gmra.mrb[0].mxu0 %v5240
    %v6913 = vpop.f32.mrb[0].mxu0
    %v6914 = vadd.f32 0.0, %v6913
    %v6915 = vpop.f32.mrb[0].mxu0
    %v6916 = vpop.f32.mrb[0].mxu0
    %v6917 = vadd.f32 0.0, %v6916
    %v6918 = vpop.f32.mrb[0].mxu0
    %6919 = vmatprep.mubr.bf16.mxu0 0
    %6920 = vmatmul.mubr.bf16.gmra.mrb[0].mxu0 %v5243
    %v6921 = vpop.f32.mrb[0].mxu0
    %v6922 = vadd.f32 0.0, %v6921
    %v6923 = vpop.f32.mrb[0].mxu0
    %v6924 = vpop.f32.mrb[0].mxu0
    %v6925 = vadd.f32 0.0, %v6924
    %v6926 = vpop.f32.mrb[0].mxu0
    %6927 = vmatprep.mubr.bf16.mxu0 0
    %6928 = vmatmul.mubr.bf16.gmra.mrb[0].mxu0 %v5246
    %v6929 = vpop.f32.mrb[0].mxu0
    %v6930 = vadd.f32 0.0, %v6929
    %v6931 = vpop.f32.mrb[0].mxu0
    %v6932 = vpop.f32.mrb[0].mxu0
    %v6933 = vadd.f32 0.0, %v6932
    %v6934 = vpop.f32.mrb[0].mxu0
    %6935 = vmatprep.mubr.bf16.mxu0 0
    %6936 = vmatmul.mubr.bf16.gmra.mrb[0].mxu0 %v5249
    %v6937 = vpop.f32.mrb[0].mxu0
    %v6938 = vadd.f32 0.0, %v6937
    %v6939 = vpop.f32.mrb[0].mxu0
    %v6940 = vpop.f32.mrb[0].mxu0
    %v6941 = vadd.f32 0.0, %v6940
    %v6942 = vpop.f32.mrb[0].mxu0
    %6943 = vmatprep.mubr.bf16.mxu0 0
    %6944 = vmatmul.mubr.bf16.gmra.mrb[0].mxu0 %v5252
    %v6945 = vpop.f32.mrb[0].mxu0
    %v6946 = vadd.f32 0.0, %v6945
    %v6947 = vpop.f32.mrb[0].mxu0
    %v6948 = vpop.f32.mrb[0].mxu0
    %v6949 = vadd.f32 0.0, %v6948
    %v6950 = vpop.f32.mrb[0].mxu0
    %6951 = vmatprep.mubr.bf16.mxu0 0
    %6952 = vmatmul.mubr.bf16.gmra.mrb[0].mxu0 %v5255
    %v6953 = vpop.f32.mrb[0].mxu0
    %v6954 = vadd.f32 0.0, %v6953
    %v6955 = vpop.f32.mrb[0].mxu0
    %v6956 = vpop.f32.mrb[0].mxu0
    %v6957 = vadd.f32 0.0, %v6956
    %v6958 = vpop.f32.mrb[0].mxu0
    %6959 = vmatprep.mubr.bf16.mxu0 0
    %6960 = vmatmul.mubr.bf16.gmra.mrb[0].mxu0 %v5258
    %v6961 = vpop.f32.mrb[0].mxu0
    %v6962 = vadd.f32 0.0, %v6961
    %v6963 = vpop.f32.mrb[0].mxu0
    %v6964 = vpop.f32.mrb[0].mxu0
    %v6965 = vadd.f32 0.0, %v6964
    %v6966 = vpop.f32.mrb[0].mxu0
    %6967 = vmatprep.mubr.bf16.mxu0 0
    %6968 = vmatmul.mubr.bf16.gmra.mrb[0].mxu0 %v5261
    %v6969 = vpop.f32.mrb[0].mxu0
    %v6970 = vadd.f32 0.0, %v6969
    %v6971 = vpop.f32.mrb[0].mxu0
    %v6972 = vpop.f32.mrb[0].mxu0
    %v6973 = vadd.f32 0.0, %v6972
    %v6974 = vpop.f32.mrb[0].mxu0
    %6975 = vmatprep.mubr.bf16.mxu0 0
    %6976 = vmatmul.mubr.bf16.gmra.mrb[0].mxu0 %v5264
    %v6977 = vpop.f32.mrb[0].mxu0
    %v6978 = vadd.f32 0.0, %v6977
    %v6979 = vpop.f32.mrb[0].mxu0
    %v6980 = vpop.f32.mrb[0].mxu0
    %v6981 = vadd.f32 0.0, %v6980
    %v6982 = vpop.f32.mrb[0].mxu0
    %6983 = vmatprep.mubr.bf16.mxu0 0
    %6984 = vmatmul.mubr.bf16.gmra.mrb[0].mxu0 %v5267
    %v6985 = vpop.f32.mrb[0].mxu0
    %v6986 = vadd.f32 0.0, %v6985
    %v6987 = vpop.f32.mrb[0].mxu0
    %v6988 = vpop.f32.mrb[0].mxu0
    %v6989 = vadd.f32 0.0, %v6988
    %v6990 = vpop.f32.mrb[0].mxu0
    %6991 = vmatprep.mubr.bf16.mxu0 0
    %6992 = vmatmul.mubr.bf16.gmra.mrb[0].mxu0 %v5270
    %v6993 = vpop.f32.mrb[0].mxu0
    %v6994 = vadd.f32 0.0, %v6993
    %v6995 = vpop.f32.mrb[0].mxu0
    %v6996 = vpop.f32.mrb[0].mxu0
    %v6997 = vadd.f32 0.0, %v6996
    %v6998 = vpop.f32.mrb[0].mxu0
    %6999 = vmatprep.mubr.bf16.mxu0 0
    %7000 = vmatmul.mubr.bf16.gmra.mrb[0].mxu0 %v5273
    %v7001 = vpop.f32.mrb[0].mxu0
    %v7002 = vadd.f32 0.0, %v7001
    %v7003 = vpop.f32.mrb[0].mxu0
    %v7004 = vpop.f32.mrb[0].mxu0
    %v7005 = vadd.f32 0.0, %v7004
    %v7006 = vpop.f32.mrb[0].mxu0
    %7007 = vmatprep.mubr.bf16.mxu0 0
    %7008 = vmatmul.mubr.bf16.gmra.mrb[0].mxu0 %v5276
    %v7009 = vpop.f32.mrb[0].mxu0
    %v7010 = vadd.f32 0.0, %v7009
    %v7011 = vpop.f32.mrb[0].mxu0
    %v7012 = vpop.f32.mrb[0].mxu0
    %v7013 = vadd.f32 0.0, %v7012
    %v7014 = vpop.f32.mrb[0].mxu0
    %7015 = vmatprep.mubr.bf16.mxu0 0
    %7016 = vmatmul.mubr.bf16.gmra.mrb[0].mxu0 %v5279
    %v7017 = vpop.f32.mrb[0].mxu0
    %v7018 = vadd.f32 0.0, %v7017
    %v7019 = vpop.f32.mrb[0].mxu0
    %v7020 = vpop.f32.mrb[0].mxu0
    %v7021 = vadd.f32 0.0, %v7020
    %v7022 = vpop.f32.mrb[0].mxu0
    %7023 = vmatprep.mubr.bf16.mxu0 0
    %7024 = vmatmul.mubr.bf16.gmra.mrb[0].mxu0 %v5282
    %v7025 = vpop.f32.mrb[0].mxu0
    %v7026 = vadd.f32 0.0, %v7025
    %v7027 = vpop.f32.mrb[0].mxu0
    %v7028 = vpop.f32.mrb[0].mxu0
    %v7029 = vadd.f32 0.0, %v7028
    %v7030 = vpop.f32.mrb[0].mxu0
    %7031 = vmatprep.mubr.bf16.mxu0 0
    %7032 = vmatmul.mubr.bf16.gmra.mrb[0].mxu0 %v5285
    %v7033 = vpop.f32.mrb[0].mxu0
    %v7034 = vadd.f32 0.0, %v7033
    %v7035 = vpop.f32.mrb[0].mxu0
    %v7036 = vpop.f32.mrb[0].mxu0
    %v7037 = vadd.f32 0.0, %v7036
    %v7038 = vpop.f32.mrb[0].mxu0
    %7039 = vmatprep.mubr.bf16.mxu0 0
    %7040 = vmatmul.mubr.bf16.gmra.mrb[0].mxu0 %v5288
    %v7041 = vpop.f32.mrb[0].mxu0
    %v7042 = vadd.f32 0.0, %v7041
    %v7043 = vpop.f32.mrb[0].mxu0
    %v7044 = vpop.f32.mrb[0].mxu0
    %v7045 = vadd.f32 0.0, %v7044
    %v7046 = vpop.f32.mrb[0].mxu0
    %7047 = vmatprep.mubr.bf16.mxu0 0
    %7048 = vmatmul.mubr.bf16.gmra.mrb[0].mxu0 %v5291
    %v7049 = vpop.f32.mrb[0].mxu0
    %v7050 = vadd.f32 0.0, %v7049
    %v7051 = vpop.f32.mrb[0].mxu0
    %v7052 = vpop.f32.mrb[0].mxu0
    %v7053 = vadd.f32 0.0, %v7052
    %v7054 = vpop.f32.mrb[0].mxu0
    %7055 = vmatprep.mubr.bf16.mxu0 0
    %7056 = vmatmul.mubr.bf16.gmra.mrb[0].mxu0 %v5294
    %v7057 = vpop.f32.mrb[0].mxu0
    %v7058 = vadd.f32 0.0, %v7057
    %v7059 = vpop.f32.mrb[0].mxu0
    %v7060 = vpop.f32.mrb[0].mxu0
    %v7061 = vadd.f32 0.0, %v7060
    %v7062 = vpop.f32.mrb[0].mxu0
    %7063 = vmatprep.mubr.bf16.mxu0 0
    %7064 = vmatmul.mubr.bf16.gmra.mrb[0].mxu0 %v5297
    %v7065 = vpop.f32.mrb[0].mxu0
    %v7066 = vadd.f32 0.0, %v7065
    %v7067 = vpop.f32.mrb[0].mxu0
    %v7068 = vpop.f32.mrb[0].mxu0
    %v7069 = vadd.f32 0.0, %v7068
    %v7070 = vpop.f32.mrb[0].mxu0
    %7071 = vmatprep.mubr.bf16.mxu0 0
    %7072 = vmatmul.mubr.bf16.gmra.mrb[0].mxu0 %v5300
    %v7073 = vpop.f32.mrb[0].mxu0
    %v7074 = vadd.f32 0.0, %v7073
    %v7075 = vpop.f32.mrb[0].mxu0
    %v7076 = vpop.f32.mrb[0].mxu0
    %v7077 = vadd.f32 0.0, %v7076
    %v7078 = vpop.f32.mrb[0].mxu0
    %7079 = vmatprep.mubr.bf16.mxu0 0
    %7080 = vmatmul.mubr.bf16.gmra.mrb[0].mxu0 %v5303
    %v7081 = vpop.f32.mrb[0].mxu0
    %v7082 = vadd.f32 0.0, %v7081
    %v7083 = vpop.f32.mrb[0].mxu0
    %v7084 = vpop.f32.mrb[0].mxu0
    %v7085 = vadd.f32 0.0, %v7084
    %v7086 = vpop.f32.mrb[0].mxu0
    %7087 = vmatprep.mubr.bf16.mxu0 0
    %7088 = vmatmul.mubr.bf16.gmra.mrb[0].mxu0 %v5306
    %v7089 = vpop.f32.mrb[0].mxu0
    %v7090 = vadd.f32 0.0, %v7089
    %v7091 = vpop.f32.mrb[0].mxu0
    %v7092 = vpop.f32.mrb[0].mxu0
    %v7093 = vadd.f32 0.0, %v7092
    %v7094 = vpop.f32.mrb[0].mxu0
    %7095 = vmatprep.mubr.bf16.mxu0 0
    %7096 = vmatmul.mubr.bf16.gmra.mrb[0].mxu0 %v5309
    %v7097 = vpop.f32.mrb[0].mxu0
    %v7098 = vadd.f32 0.0, %v7097
    %v7099 = vpop.f32.mrb[0].mxu0
    %v7100 = vpop.f32.mrb[0].mxu0
    %v7101 = vadd.f32 0.0, %v7100
    %v7102 = vpop.f32.mrb[0].mxu0
    %7103 = vmatprep.mubr.bf16.mxu0 0
    %7104 = vmatmul.mubr.bf16.gmra.mrb[0].mxu0 %v5312
    %v7105 = vpop.f32.mrb[0].mxu0
    %v7106 = vadd.f32 0.0, %v7105
    %v7107 = vpop.f32.mrb[0].mxu0
    %v7108 = vpop.f32.mrb[0].mxu0
    %v7109 = vadd.f32 0.0, %v7108
    %v7110 = vpop.f32.mrb[0].mxu0
    %7111 = vmatprep.mubr.bf16.mxu0 0
    %7112 = vmatmul.mubr.bf16.gmra.mrb[0].mxu0 %v5315
    %v7113 = vpop.f32.mrb[0].mxu0
    %v7114 = vadd.f32 0.0, %v7113
    %v7115 = vpop.f32.mrb[0].mxu0
    %v7116 = vpop.f32.mrb[0].mxu0
    %v7117 = vadd.f32 0.0, %v7116
    %v7118 = vpop.f32.mrb[0].mxu0
    %7119 = vmatprep.mubr.bf16.mxu0 0
    %7120 = vmatmul.mubr.bf16.gmra.mrb[0].mxu0 %v5318
    %v7121 = vpop.f32.mrb[0].mxu0
    %v7122 = vadd.f32 0.0, %v7121
    %v7123 = vpop.f32.mrb[0].mxu0
    %v7124 = vpop.f32.mrb[0].mxu0
    %v7125 = vadd.f32 0.0, %v7124
    %v7126 = vpop.f32.mrb[0].mxu0
    %7127 = vmatprep.mubr.bf16.mxu0 0
    %7128 = vmatmul.mubr.bf16.gmra.mrb[0].mxu0 %v5321
    %v7129 = vpop.f32.mrb[0].mxu0
    %v7130 = vadd.f32 0.0, %v7129
    %v7131 = vpop.f32.mrb[0].mxu0
    %v7132 = vpop.f32.mrb[0].mxu0
    %v7133 = vadd.f32 0.0, %v7132
    %v7134 = vpop.f32.mrb[0].mxu0
    %7135 = vmatprep.mubr.bf16.mxu0 0
    %7136 = vmatmul.mubr.bf16.gmra.mrb[0].mxu0 %v5324
    %v7137 = vpop.f32.mrb[0].mxu0
    %v7138 = vadd.f32 0.0, %v7137
    %v7139 = vpop.f32.mrb[0].mxu0
    %v7140 = vpop.f32.mrb[0].mxu0
    %v7141 = vadd.f32 0.0, %v7140
    %v7142 = vpop.f32.mrb[0].mxu0
    %7143 = vmatprep.mubr.bf16.mxu0 0
    %7144 = vmatmul.mubr.bf16.gmra.mrb[0].mxu0 %v5327
    %v7145 = vpop.f32.mrb[0].mxu0
    %v7146 = vadd.f32 0.0, %v7145
    %v7147 = vpop.f32.mrb[0].mxu0
    %v7148 = vpop.f32.mrb[0].mxu0
    %v7149 = vadd.f32 0.0, %v7148
    %v7150 = vpop.f32.mrb[0].mxu0
    %7151 = vmatprep.mubr.bf16.mxu0 0
    %7152 = vmatmul.mubr.bf16.gmra.mrb[0].mxu0 %v5330
    %v7153 = vpop.f32.mrb[0].mxu0
    %v7154 = vadd.f32 0.0, %v7153
    %v7155 = vpop.f32.mrb[0].mxu0
    %v7156 = vpop.f32.mrb[0].mxu0
    %v7157 = vadd.f32 0.0, %v7156
    %v7158 = vpop.f32.mrb[0].mxu0
    %7159 = vmatprep.mubr.bf16.mxu0 0
    %7160 = vmatmul.mubr.bf16.gmra.mrb[0].mxu0 %v5333
    %v7161 = vpop.f32.mrb[0].mxu0
    %v7162 = vadd.f32 0.0, %v7161
    %v7163 = vpop.f32.mrb[0].mxu0
    %v7164 = vpop.f32.mrb[0].mxu0
    %v7165 = vadd.f32 0.0, %v7164
    %v7166 = vpop.f32.mrb[0].mxu0
    %7167 = vmatprep.mubr.bf16.mxu0 0
    %7168 = vmatmul.mubr.bf16.gmra.mrb[0].mxu0 %v5336
    %v7169 = vpop.f32.mrb[0].mxu0
    %v7170 = vadd.f32 0.0, %v7169
    %v7171 = vpop.f32.mrb[0].mxu0
    %v7172 = vpop.f32.mrb[0].mxu0
    %v7173 = vadd.f32 0.0, %v7172
    %v7174 = vpop.f32.mrb[0].mxu0
    %7175 = vmatprep.mubr.bf16.mxu0 0
    %7176 = vmatmul.mubr.bf16.gmra.mrb[0].mxu0 %v5339
    %v7177 = vpop.f32.mrb[0].mxu0
    %v7178 = vadd.f32 0.0, %v7177
    %v7179 = vpop.f32.mrb[0].mxu0
    %v7180 = vpop.f32.mrb[0].mxu0
    %v7181 = vadd.f32 0.0, %v7180
    %v7182 = vpop.f32.mrb[0].mxu0
    %7183 = vmatprep.mubr.bf16.mxu0 0
    %7184 = vmatmul.mubr.bf16.gmra.mrb[0].mxu0 %v5342
    %v7185 = vpop.f32.mrb[0].mxu0
    %v7186 = vadd.f32 0.0, %v7185
    %v7187 = vpop.f32.mrb[0].mxu0
    %v7188 = vpop.f32.mrb[0].mxu0
    %v7189 = vadd.f32 0.0, %v7188
    %v7190 = vpop.f32.mrb[0].mxu0
    %7191 = vmatprep.mubr.bf16.mxu0 0
    %7192 = vmatmul.mubr.bf16.gmra.mrb[0].mxu0 %v5345
    %v7193 = vpop.f32.mrb[0].mxu0
    %v7194 = vadd.f32 0.0, %v7193
    %v7195 = vpop.f32.mrb[0].mxu0
    %v7196 = vpop.f32.mrb[0].mxu0
    %v7197 = vadd.f32 0.0, %v7196
    %v7198 = vpop.f32.mrb[0].mxu0
    %7199 = vmatprep.mubr.bf16.mxu0 0
    %7200 = vmatmul.mubr.bf16.gmra.mrb[0].mxu0 %v5348
    %v7201 = vpop.f32.mrb[0].mxu0
    %v7202 = vadd.f32 0.0, %v7201
    %v7203 = vpop.f32.mrb[0].mxu0
    %v7204 = vpop.f32.mrb[0].mxu0
    %v7205 = vadd.f32 0.0, %v7204
    %v7206 = vpop.f32.mrb[0].mxu0
    %7207 = vmatprep.mubr.bf16.mxu0 0
    %7208 = vmatmul.mubr.bf16.gmra.mrb[0].mxu0 %v5351
    %v7209 = vpop.f32.mrb[0].mxu0
    %v7210 = vadd.f32 0.0, %v7209
    %v7211 = vpop.f32.mrb[0].mxu0
    %v7212 = vpop.f32.mrb[0].mxu0
    %v7213 = vadd.f32 0.0, %v7212
    %v7214 = vpop.f32.mrb[0].mxu0
    %7215 = vmatprep.mubr.bf16.mxu0 0
    %7216 = vmatmul.mubr.bf16.gmra.mrb[0].mxu0 %v5354
    %v7217 = vpop.f32.mrb[0].mxu0
    %v7218 = vadd.f32 0.0, %v7217
    %v7219 = vpop.f32.mrb[0].mxu0
    %v7220 = vpop.f32.mrb[0].mxu0
    %v7221 = vadd.f32 0.0, %v7220
    %v7222 = vpop.f32.mrb[0].mxu0
    %7223 = vmatprep.mubr.bf16.mxu0 0
    %7224 = vmatmul.mubr.bf16.gmra.mrb[0].mxu0 %v5357
    %v7225 = vpop.f32.mrb[0].mxu0
    %v7226 = vadd.f32 0.0, %v7225
    %v7227 = vpop.f32.mrb[0].mxu0
    %v7228 = vpop.f32.mrb[0].mxu0
    %v7229 = vadd.f32 0.0, %v7228
    %v7230 = vpop.f32.mrb[0].mxu0
    %7231 = vmatprep.mubr.bf16.mxu0 0
    %7232 = vmatmul.mubr.bf16.gmra.mrb[0].mxu0 %v5360
    %v7233 = vpop.f32.mrb[0].mxu0
    %v7234 = vadd.f32 0.0, %v7233
    %v7235 = vpop.f32.mrb[0].mxu0
    %v7236 = vpop.f32.mrb[0].mxu0
    %v7237 = vadd.f32 0.0, %v7236
    %v7238 = vpop.f32.mrb[0].mxu0
    %7239 = vmatprep.mubr.bf16.mxu0 0
    %7240 = vmatmul.mubr.bf16.gmra.mrb[0].mxu0 %v5363
    %v7241 = vpop.f32.mrb[0].mxu0
    %v7242 = vadd.f32 0.0, %v7241
    %v7243 = vpop.f32.mrb[0].mxu0
    %v7244 = vpop.f32.mrb[0].mxu0
    %v7245 = vadd.f32 0.0, %v7244
    %v7246 = vpop.f32.mrb[0].mxu0
    %7247 = vmatprep.mubr.bf16.mxu0 0
    %7248 = vmatmul.mubr.bf16.gmra.mrb[0].mxu0 %v5366
    %v7249 = vpop.f32.mrb[0].mxu0
    %v7250 = vadd.f32 0.0, %v7249
    %v7251 = vpop.f32.mrb[0].mxu0
    %v7252 = vpop.f32.mrb[0].mxu0
    %v7253 = vadd.f32 0.0, %v7252
    %v7254 = vpop.f32.mrb[0].mxu0
    %7255 = vmatprep.mubr.bf16.mxu0 0
    %7256 = vmatmul.mubr.bf16.gmra.mrb[0].mxu0 %v5369
    %v7257 = vpop.f32.mrb[0].mxu0
    %v7258 = vadd.f32 0.0, %v7257
    %v7259 = vpop.f32.mrb[0].mxu0
    %v7260 = vpop.f32.mrb[0].mxu0
    %v7261 = vadd.f32 0.0, %v7260
    %v7262 = vpop.f32.mrb[0].mxu0
    %7263 = vdwg.mxu0
    %v7264 = vld [vmem:[#allocation4] sm:$0xff]
    %v7265 = vld [vmem:[#allocation4 + $0x8] sm:$0xff]
    %v7266 = vld [vmem:[#allocation4 + $0x10] sm:$0xff]
    %v7267 = vld [vmem:[#allocation4 + $0x18] sm:$0xff]
    %v7268 = vld [vmem:[#allocation4 + $0x20] sm:$0xff]
    %v7269 = vld [vmem:[#allocation4 + $0x28] sm:$0xff]
    %v7270 = vld [vmem:[#allocation4 + $0x30] sm:$0xff]
    %v7271 = vld [vmem:[#allocation4 + $0x38] sm:$0xff]
    %v7272 = vld [vmem:[#allocation4 + $0x40] sm:$0xff]
    %v7273 = vld [vmem:[#allocation4 + $0x48] sm:$0xff]
    %v7274 = vld [vmem:[#allocation4 + $0x50] sm:$0xff]
    %v7275 = vld [vmem:[#allocation4 + $0x58] sm:$0xff]
    %v7276 = vld [vmem:[#allocation4 + $0x60] sm:$0xff]
    %v7277 = vld [vmem:[#allocation4 + $0x68] sm:$0xff]
    %v7278 = vld [vmem:[#allocation4 + $0x70] sm:$0xff]
    %v7279 = vld [vmem:[#allocation4 + $0x78] sm:$0xff]
    %v7280 = vld [vmem:[#allocation4 + $0x80] sm:$0xff]
    %v7281 = vld [vmem:[#allocation4 + $0x88] sm:$0xff]
    %v7282 = vld [vmem:[#allocation4 + $0x90] sm:$0xff]
    %v7283 = vld [vmem:[#allocation4 + $0x98] sm:$0xff]
    %v7284 = vld [vmem:[#allocation4 + $0xa0] sm:$0xff]
    %v7285 = vld [vmem:[#allocation4 + $0xa8] sm:$0xff]
    %v7286 = vld [vmem:[#allocation4 + $0xb0] sm:$0xff]
    %v7287 = vld [vmem:[#allocation4 + $0xb8] sm:$0xff]
    %v7288 = vld [vmem:[#allocation4 + $0xc0] sm:$0xff]
    %v7289 = vld [vmem:[#allocation4 + $0xc8] sm:$0xff]
    %v7290 = vld [vmem:[#allocation4 + $0xd0] sm:$0xff]
    %v7291 = vld [vmem:[#allocation4 + $0xd8] sm:$0xff]
    %v7292 = vld [vmem:[#allocation4 + $0xe0] sm:$0xff]
    %v7293 = vld [vmem:[#allocation4 + $0xe8] sm:$0xff]
    %v7294 = vld [vmem:[#allocation4 + $0xf0] sm:$0xff]
    %v7295 = vld [vmem:[#allocation4 + $0xf8] sm:$0xff]
    %v7296 = vld [vmem:[#allocation4 + $0x100] sm:$0xff]
    %v7297 = vld [vmem:[#allocation4 + $0x108] sm:$0xff]
    %v7298 = vld [vmem:[#allocation4 + $0x110] sm:$0xff]
    %v7299 = vld [vmem:[#allocation4 + $0x118] sm:$0xff]
    %v7300 = vld [vmem:[#allocation4 + $0x120] sm:$0xff]
    %v7301 = vld [vmem:[#allocation4 + $0x128] sm:$0xff]
    %v7302 = vld [vmem:[#allocation4 + $0x130] sm:$0xff]
    %v7303 = vld [vmem:[#allocation4 + $0x138] sm:$0xff]
    %v7304 = vld [vmem:[#allocation4 + $0x140] sm:$0xff]
    %v7305 = vld [vmem:[#allocation4 + $0x148] sm:$0xff]
    %v7306 = vld [vmem:[#allocation4 + $0x150] sm:$0xff]
    %v7307 = vld [vmem:[#allocation4 + $0x158] sm:$0xff]
    %v7308 = vld [vmem:[#allocation4 + $0x160] sm:$0xff]
    %v7309 = vld [vmem:[#allocation4 + $0x168] sm:$0xff]
    %v7310 = vld [vmem:[#allocation4 + $0x170] sm:$0xff]
    %v7311 = vld [vmem:[#allocation4 + $0x178] sm:$0xff]
    %v7312 = vld [vmem:[#allocation4 + $0x180] sm:$0xff]
    %v7313 = vld [vmem:[#allocation4 + $0x188] sm:$0xff]
    %v7314 = vld [vmem:[#allocation4 + $0x190] sm:$0xff]
    %v7315 = vld [vmem:[#allocation4 + $0x198] sm:$0xff]
    %v7316 = vld [vmem:[#allocation4 + $0x1a0] sm:$0xff]
    %v7317 = vld [vmem:[#allocation4 + $0x1a8] sm:$0xff]
    %v7318 = vld [vmem:[#allocation4 + $0x1b0] sm:$0xff]
    %v7319 = vld [vmem:[#allocation4 + $0x1b8] sm:$0xff]
    %v7320 = vld [vmem:[#allocation4 + $0x1c0] sm:$0xff]
    %v7321 = vld [vmem:[#allocation4 + $0x1c8] sm:$0xff]
    %v7322 = vld [vmem:[#allocation4 + $0x1d0] sm:$0xff]
    %v7323 = vld [vmem:[#allocation4 + $0x1d8] sm:$0xff]
    %v7324 = vld [vmem:[#allocation4 + $0x1e0] sm:$0xff]
    %v7325 = vld [vmem:[#allocation4 + $0x1e8] sm:$0xff]
    %v7326 = vld [vmem:[#allocation4 + $0x1f0] sm:$0xff]
    %v7327 = vld [vmem:[#allocation4 + $0x1f8] sm:$0xff]
    %v7328 = vld [vmem:[#allocation4 + $0x200] sm:$0xff]
    %v7329 = vld [vmem:[#allocation4 + $0x208] sm:$0xff]
    %v7330 = vld [vmem:[#allocation4 + $0x210] sm:$0xff]
    %v7331 = vld [vmem:[#allocation4 + $0x218] sm:$0xff]
    %v7332 = vld [vmem:[#allocation4 + $0x220] sm:$0xff]
    %v7333 = vld [vmem:[#allocation4 + $0x228] sm:$0xff]
    %v7334 = vld [vmem:[#allocation4 + $0x230] sm:$0xff]
    %v7335 = vld [vmem:[#allocation4 + $0x238] sm:$0xff]
    %v7336 = vld [vmem:[#allocation4 + $0x240] sm:$0xff]
    %v7337 = vld [vmem:[#allocation4 + $0x248] sm:$0xff]
    %v7338 = vld [vmem:[#allocation4 + $0x250] sm:$0xff]
    %v7339 = vld [vmem:[#allocation4 + $0x258] sm:$0xff]
    %v7340 = vld [vmem:[#allocation4 + $0x260] sm:$0xff]
    %v7341 = vld [vmem:[#allocation4 + $0x268] sm:$0xff]
    %v7342 = vld [vmem:[#allocation4 + $0x270] sm:$0xff]
    %v7343 = vld [vmem:[#allocation4 + $0x278] sm:$0xff]
    %v7344 = vld [vmem:[#allocation4 + $0x280] sm:$0xff]
    %v7345 = vld [vmem:[#allocation4 + $0x288] sm:$0xff]
    %v7346 = vld [vmem:[#allocation4 + $0x290] sm:$0xff]
    %v7347 = vld [vmem:[#allocation4 + $0x298] sm:$0xff]
    %v7348 = vld [vmem:[#allocation4 + $0x2a0] sm:$0xff]
    %v7349 = vld [vmem:[#allocation4 + $0x2a8] sm:$0xff]
    %v7350 = vld [vmem:[#allocation4 + $0x2b0] sm:$0xff]
    %v7351 = vld [vmem:[#allocation4 + $0x2b8] sm:$0xff]
    %v7352 = vld [vmem:[#allocation4 + $0x2c0] sm:$0xff]
    %v7353 = vld [vmem:[#allocation4 + $0x2c8] sm:$0xff]
    %v7354 = vld [vmem:[#allocation4 + $0x2d0] sm:$0xff]
    %v7355 = vld [vmem:[#allocation4 + $0x2d8] sm:$0xff]
    %v7356 = vld [vmem:[#allocation4 + $0x2e0] sm:$0xff]
    %v7357 = vld [vmem:[#allocation4 + $0x2e8] sm:$0xff]
    %v7358 = vld [vmem:[#allocation4 + $0x2f0] sm:$0xff]
    %v7359 = vld [vmem:[#allocation4 + $0x2f8] sm:$0xff]
    %v7360 = vadd.f32 %v7264, %v6882
    %v7361 = vadd.f32 %v7265, %v6885
    %v7362 = vadd.f32 %v7266, %v6890
    %v7363 = vadd.f32 %v7267, %v6893
    %v7364 = vadd.f32 %v7268, %v6898
    %v7365 = vadd.f32 %v7269, %v6901
    %v7366 = vadd.f32 %v7270, %v6906
    %v7367 = vadd.f32 %v7271, %v6909
    %v7368 = vadd.f32 %v7272, %v6914
    %v7369 = vadd.f32 %v7273, %v6917
    %v7370 = vadd.f32 %v7274, %v6922
    %v7371 = vadd.f32 %v7275, %v6925
    %v7372 = vadd.f32 %v7276, %v6930
    %v7373 = vadd.f32 %v7277, %v6933
    %v7374 = vadd.f32 %v7278, %v6938
    %v7375 = vadd.f32 %v7279, %v6941
    %v7376 = vadd.f32 %v7280, %v6946
    %v7377 = vadd.f32 %v7281, %v6949
    %v7378 = vadd.f32 %v7282, %v6954
    %v7379 = vadd.f32 %v7283, %v6957
    %v7380 = vadd.f32 %v7284, %v6962
    %v7381 = vadd.f32 %v7285, %v6965
    %v7382 = vadd.f32 %v7286, %v6970
    %v7383 = vadd.f32 %v7287, %v6973
    %v7384 = vadd.f32 %v7288, %v6978
    %v7385 = vadd.f32 %v7289, %v6981
    %v7386 = vadd.f32 %v7290, %v6986
    %v7387 = vadd.f32 %v7291, %v6989
    %v7388 = vadd.f32 %v7292, %v6994
    %v7389 = vadd.f32 %v7293, %v6997
    %v7390 = vadd.f32 %v7294, %v7002
    %v7391 = vadd.f32 %v7295, %v7005
    %v7392 = vadd.f32 %v7296, %v7010
    %v7393 = vadd.f32 %v7297, %v7013
    %v7394 = vadd.f32 %v7298, %v7018
    %v7395 = vadd.f32 %v7299, %v7021
    %v7396 = vadd.f32 %v7300, %v7026
    %v7397 = vadd.f32 %v7301, %v7029
    %v7398 = vadd.f32 %v7302, %v7034
    %v7399 = vadd.f32 %v7303, %v7037
    %v7400 = vadd.f32 %v7304, %v7042
    %v7401 = vadd.f32 %v7305, %v7045
    %v7402 = vadd.f32 %v7306, %v7050
    %v7403 = vadd.f32 %v7307, %v7053
    %v7404 = vadd.f32 %v7308, %v7058
    %v7405 = vadd.f32 %v7309, %v7061
    %v7406 = vadd.f32 %v7310, %v7066
    %v7407 = vadd.f32 %v7311, %v7069
    %v7408 = vadd.f32 %v7312, %v7074
    %v7409 = vadd.f32 %v7313, %v7077
    %v7410 = vadd.f32 %v7314, %v7082
    %v7411 = vadd.f32 %v7315, %v7085
    %v7412 = vadd.f32 %v7316, %v7090
    %v7413 = vadd.f32 %v7317, %v7093
    %v7414 = vadd.f32 %v7318, %v7098
    %v7415 = vadd.f32 %v7319, %v7101
    %v7416 = vadd.f32 %v7320, %v7106
    %v7417 = vadd.f32 %v7321, %v7109
    %v7418 = vadd.f32 %v7322, %v7114
    %v7419 = vadd.f32 %v7323, %v7117
    %v7420 = vadd.f32 %v7324, %v7122
    %v7421 = vadd.f32 %v7325, %v7125
    %v7422 = vadd.f32 %v7326, %v7130
    %v7423 = vadd.f32 %v7327, %v7133
    %v7424 = vadd.f32 %v7328, %v7138
    %v7425 = vadd.f32 %v7329, %v7141
    %v7426 = vadd.f32 %v7330, %v7146
    %v7427 = vadd.f32 %v7331, %v7149
    %v7428 = vadd.f32 %v7332, %v7154
    %v7429 = vadd.f32 %v7333, %v7157
    %v7430 = vadd.f32 %v7334, %v7162
    %v7431 = vadd.f32 %v7335, %v7165
    %v7432 = vadd.f32 %v7336, %v7170
    %v7433 = vadd.f32 %v7337, %v7173
    %v7434 = vadd.f32 %v7338, %v7178
    %v7435 = vadd.f32 %v7339, %v7181
    %v7436 = vadd.f32 %v7340, %v7186
    %v7437 = vadd.f32 %v7341, %v7189
    %v7438 = vadd.f32 %v7342, %v7194
    %v7439 = vadd.f32 %v7343, %v7197
    %v7440 = vadd.f32 %v7344, %v7202
    %v7441 = vadd.f32 %v7345, %v7205
    %v7442 = vadd.f32 %v7346, %v7210
    %v7443 = vadd.f32 %v7347, %v7213
    %v7444 = vadd.f32 %v7348, %v7218
    %v7445 = vadd.f32 %v7349, %v7221
    %v7446 = vadd.f32 %v7350, %v7226
    %v7447 = vadd.f32 %v7351, %v7229
    %v7448 = vadd.f32 %v7352, %v7234
    %v7449 = vadd.f32 %v7353, %v7237
    %v7450 = vadd.f32 %v7354, %v7242
    %v7451 = vadd.f32 %v7355, %v7245
    %v7452 = vadd.f32 %v7356, %v7250
    %v7453 = vadd.f32 %v7357, %v7253
    %v7454 = vadd.f32 %v7358, %v7258
    %v7455 = vadd.f32 %v7359, %v7261
    %7456 = vst [vmem:[#allocation4] sm:$0xff] %v7360
    %7457 = vst [vmem:[#allocation4 + $0x8] sm:$0xff] %v7361
    %7458 = vst [vmem:[#allocation4 + $0x10] sm:$0xff] %v7362
    %7459 = vst [vmem:[#allocation4 + $0x18] sm:$0xff] %v7363
    %7460 = vst [vmem:[#allocation4 + $0x20] sm:$0xff] %v7364
    %7461 = vst [vmem:[#allocation4 + $0x28] sm:$0xff] %v7365
    %7462 = vst [vmem:[#allocation4 + $0x30] sm:$0xff] %v7366
    %7463 = vst [vmem:[#allocation4 + $0x38] sm:$0xff] %v7367
    %7464 = vst [vmem:[#allocation4 + $0x40] sm:$0xff] %v7368
    %7465 = vst [vmem:[#allocation4 + $0x48] sm:$0xff] %v7369
    %7466 = vst [vmem:[#allocation4 + $0x50] sm:$0xff] %v7370
    %7467 = vst [vmem:[#allocation4 + $0x58] sm:$0xff] %v7371
    %7468 = vst [vmem:[#allocation4 + $0x60] sm:$0xff] %v7372
    %7469 = vst [vmem:[#allocation4 + $0x68] sm:$0xff] %v7373
    %7470 = vst [vmem:[#allocation4 + $0x70] sm:$0xff] %v7374
    %7471 = vst [vmem:[#allocation4 + $0x78] sm:$0xff] %v7375
    %7472 = vst [vmem:[#allocation4 + $0x80] sm:$0xff] %v7376
    %7473 = vst [vmem:[#allocation4 + $0x88] sm:$0xff] %v7377
    %7474 = vst [vmem:[#allocation4 + $0x90] sm:$0xff] %v7378
    %7475 = vst [vmem:[#allocation4 + $0x98] sm:$0xff] %v7379
    %7476 = vst [vmem:[#allocation4 + $0xa0] sm:$0xff] %v7380
    %7477 = vst [vmem:[#allocation4 + $0xa8] sm:$0xff] %v7381
    %7478 = vst [vmem:[#allocation4 + $0xb0] sm:$0xff] %v7382
    %7479 = vst [vmem:[#allocation4 + $0xb8] sm:$0xff] %v7383
    %7480 = vst [vmem:[#allocation4 + $0xc0] sm:$0xff] %v7384
    %7481 = vst [vmem:[#allocation4 + $0xc8] sm:$0xff] %v7385
    %7482 = vst [vmem:[#allocation4 + $0xd0] sm:$0xff] %v7386
    %7483 = vst [vmem:[#allocation4 + $0xd8] sm:$0xff] %v7387
    %7484 = vst [vmem:[#allocation4 + $0xe0] sm:$0xff] %v7388
    %7485 = vst [vmem:[#allocation4 + $0xe8] sm:$0xff] %v7389
    %7486 = vst [vmem:[#allocation4 + $0xf0] sm:$0xff] %v7390
    %7487 = vst [vmem:[#allocation4 + $0xf8] sm:$0xff] %v7391
    %7488 = vst [vmem:[#allocation4 + $0x100] sm:$0xff] %v7392
    %7489 = vst [vmem:[#allocation4 + $0x108] sm:$0xff] %v7393
    %7490 = vst [vmem:[#allocation4 + $0x110] sm:$0xff] %v7394
    %7491 = vst [vmem:[#allocation4 + $0x118] sm:$0xff] %v7395
    %7492 = vst [vmem:[#allocation4 + $0x120] sm:$0xff] %v7396
    %7493 = vst [vmem:[#allocation4 + $0x128] sm:$0xff] %v7397
    %7494 = vst [vmem:[#allocation4 + $0x130] sm:$0xff] %v7398
    %7495 = vst [vmem:[#allocation4 + $0x138] sm:$0xff] %v7399
    %7496 = vst [vmem:[#allocation4 + $0x140] sm:$0xff] %v7400
    %7497 = vst [vmem:[#allocation4 + $0x148] sm:$0xff] %v7401
    %7498 = vst [vmem:[#allocation4 + $0x150] sm:$0xff] %v7402
    %7499 = vst [vmem:[#allocation4 + $0x158] sm:$0xff] %v7403
    %7500 = vst [vmem:[#allocation4 + $0x160] sm:$0xff] %v7404
    %7501 = vst [vmem:[#allocation4 + $0x168] sm:$0xff] %v7405
    %7502 = vst [vmem:[#allocation4 + $0x170] sm:$0xff] %v7406
    %7503 = vst [vmem:[#allocation4 + $0x178] sm:$0xff] %v7407
    %7504 = vst [vmem:[#allocation4 + $0x180] sm:$0xff] %v7408
    %7505 = vst [vmem:[#allocation4 + $0x188] sm:$0xff] %v7409
    %7506 = vst [vmem:[#allocation4 + $0x190] sm:$0xff] %v7410
    %7507 = vst [vmem:[#allocation4 + $0x198] sm:$0xff] %v7411
    %7508 = vst [vmem:[#allocation4 + $0x1a0] sm:$0xff] %v7412
    %7509 = vst [vmem:[#allocation4 + $0x1a8] sm:$0xff] %v7413
    %7510 = vst [vmem:[#allocation4 + $0x1b0] sm:$0xff] %v7414
    %7511 = vst [vmem:[#allocation4 + $0x1b8] sm:$0xff] %v7415
    %7512 = vst [vmem:[#allocation4 + $0x1c0] sm:$0xff] %v7416
    %7513 = vst [vmem:[#allocation4 + $0x1c8] sm:$0xff] %v7417
    %7514 = vst [vmem:[#allocation4 + $0x1d0] sm:$0xff] %v7418
    %7515 = vst [vmem:[#allocation4 + $0x1d8] sm:$0xff] %v7419
    %7516 = vst [vmem:[#allocation4 + $0x1e0] sm:$0xff] %v7420
    %7517 = vst [vmem:[#allocation4 + $0x1e8] sm:$0xff] %v7421
    %7518 = vst [vmem:[#allocation4 + $0x1f0] sm:$0xff] %v7422
    %7519 = vst [vmem:[#allocation4 + $0x1f8] sm:$0xff] %v7423
    %7520 = vst [vmem:[#allocation4 + $0x200] sm:$0xff] %v7424
    %7521 = vst [vmem:[#allocation4 + $0x208] sm:$0xff] %v7425
    %7522 = vst [vmem:[#allocation4 + $0x210] sm:$0xff] %v7426
    %7523 = vst [vmem:[#allocation4 + $0x218] sm:$0xff] %v7427
    %7524 = vst [vmem:[#allocation4 + $0x220] sm:$0xff] %v7428
    %7525 = vst [vmem:[#allocation4 + $0x228] sm:$0xff] %v7429
    %7526 = vst [vmem:[#allocation4 + $0x230] sm:$0xff] %v7430
    %7527 = vst [vmem:[#allocation4 + $0x238] sm:$0xff] %v7431
    %7528 = vst [vmem:[#allocation4 + $0x240] sm:$0xff] %v7432
    %7529 = vst [vmem:[#allocation4 + $0x248] sm:$0xff] %v7433
    %7530 = vst [vmem:[#allocation4 + $0x250] sm:$0xff] %v7434
    %7531 = vst [vmem:[#allocation4 + $0x258] sm:$0xff] %v7435
    %7532 = vst [vmem:[#allocation4 + $0x260] sm:$0xff] %v7436
    %7533 = vst [vmem:[#allocation4 + $0x268] sm:$0xff] %v7437
    %7534 = vst [vmem:[#allocation4 + $0x270] sm:$0xff] %v7438
    %7535 = vst [vmem:[#allocation4 + $0x278] sm:$0xff] %v7439
    %7536 = vst [vmem:[#allocation4 + $0x280] sm:$0xff] %v7440
    %7537 = vst [vmem:[#allocation4 + $0x288] sm:$0xff] %v7441
    %7538 = vst [vmem:[#allocation4 + $0x290] sm:$0xff] %v7442
    %7539 = vst [vmem:[#allocation4 + $0x298] sm:$0xff] %v7443
    %7540 = vst [vmem:[#allocation4 + $0x2a0] sm:$0xff] %v7444
    %7541 = vst [vmem:[#allocation4 + $0x2a8] sm:$0xff] %v7445
    %7542 = vst [vmem:[#allocation4 + $0x2b0] sm:$0xff] %v7446
    %7543 = vst [vmem:[#allocation4 + $0x2b8] sm:$0xff] %v7447
    %7544 = vst [vmem:[#allocation4 + $0x2c0] sm:$0xff] %v7448
    %7545 = vst [vmem:[#allocation4 + $0x2c8] sm:$0xff] %v7449
    %7546 = vst [vmem:[#allocation4 + $0x2d0] sm:$0xff] %v7450
    %7547 = vst [vmem:[#allocation4 + $0x2d8] sm:$0xff] %v7451
    %7548 = vst [vmem:[#allocation4 + $0x2e0] sm:$0xff] %v7452
    %7549 = vst [vmem:[#allocation4 + $0x2e8] sm:$0xff] %v7453
    %7550 = vst [vmem:[#allocation4 + $0x2f0] sm:$0xff] %v7454
    %7551 = vst [vmem:[#allocation4 + $0x2f8] sm:$0xff] %v7455
    %v7552 = vld [vmem:[#allocation2] sm:$0xff]
    %v7553 = vld [vmem:[#allocation2 + $0x8] sm:$0xff]
    %v7554 = vld [vmem:[#allocation2 + $0x18] sm:$0xff]
    %v7555 = vld [vmem:[#allocation2 + $0x20] sm:$0xff]
    %v7556 = vld [vmem:[#allocation2 + $0x30] sm:$0xff]
    %v7557 = vld [vmem:[#allocation2 + $0x38] sm:$0xff]
    %v7558 = vld [vmem:[#allocation2 + $0x48] sm:$0xff]
    %v7559 = vld [vmem:[#allocation2 + $0x50] sm:$0xff]
    %v7560 = vld [vmem:[#allocation2 + $0x60] sm:$0xff]
    %v7561 = vld [vmem:[#allocation2 + $0x68] sm:$0xff]
    %v7562 = vld [vmem:[#allocation2 + $0x78] sm:$0xff]
    %v7563 = vld [vmem:[#allocation2 + $0x80] sm:$0xff]
    %v7564 = vld [vmem:[#allocation2 + $0x90] sm:$0xff]
    %v7565 = vld [vmem:[#allocation2 + $0x98] sm:$0xff]
    %v7566 = vld [vmem:[#allocation2 + $0xa8] sm:$0xff]
    %v7567 = vld [vmem:[#allocation2 + $0xb0] sm:$0xff]
    %v7568 = vld [vmem:[#allocation2 + $0xc0] sm:$0xff]
    %v7569 = vld [vmem:[#allocation2 + $0xc8] sm:$0xff]
    %v7570 = vld [vmem:[#allocation2 + $0xd8] sm:$0xff]
    %v7571 = vld [vmem:[#allocation2 + $0xe0] sm:$0xff]
    %v7572 = vld [vmem:[#allocation2 + $0xf0] sm:$0xff]
    %v7573 = vld [vmem:[#allocation2 + $0xf8] sm:$0xff]
    %v7574 = vld [vmem:[#allocation2 + $0x108] sm:$0xff]
    %v7575 = vld [vmem:[#allocation2 + $0x110] sm:$0xff]
    %v7576 = vld [vmem:[#allocation2 + $0x120] sm:$0xff]
    %v7577 = vld [vmem:[#allocation2 + $0x128] sm:$0xff]
    %v7578 = vld [vmem:[#allocation2 + $0x138] sm:$0xff]
    %v7579 = vld [vmem:[#allocation2 + $0x140] sm:$0xff]
    %v7580 = vld [vmem:[#allocation2 + $0x150] sm:$0xff]
    %v7581 = vld [vmem:[#allocation2 + $0x158] sm:$0xff]
    %v7582 = vld [vmem:[#allocation2 + $0x168] sm:$0xff]
    %v7583 = vld [vmem:[#allocation2 + $0x170] sm:$0xff]
    %v7584 = vld [vmem:[#allocation2 + $0x180] sm:$0xff]
    %v7585 = vld [vmem:[#allocation2 + $0x188] sm:$0xff]
    %v7586 = vld [vmem:[#allocation2 + $0x198] sm:$0xff]
    %v7587 = vld [vmem:[#allocation2 + $0x1a0] sm:$0xff]
    %v7588 = vld [vmem:[#allocation2 + $0x1b0] sm:$0xff]
    %v7589 = vld [vmem:[#allocation2 + $0x1b8] sm:$0xff]
    %v7590 = vld [vmem:[#allocation2 + $0x1c8] sm:$0xff]
    %v7591 = vld [vmem:[#allocation2 + $0x1d0] sm:$0xff]
    %v7592 = vld [vmem:[#allocation2 + $0x1e0] sm:$0xff]
    %v7593 = vld [vmem:[#allocation2 + $0x1e8] sm:$0xff]
    %v7594 = vld [vmem:[#allocation2 + $0x1f8] sm:$0xff]
    %v7595 = vld [vmem:[#allocation2 + $0x200] sm:$0xff]
    %v7596 = vld [vmem:[#allocation2 + $0x210] sm:$0xff]
    %v7597 = vld [vmem:[#allocation2 + $0x218] sm:$0xff]
    %v7598 = vld [vmem:[#allocation2 + $0x228] sm:$0xff]
    %v7599 = vld [vmem:[#allocation2 + $0x230] sm:$0xff]
    %v7600 = vld [vmem:[#allocation2 + $0x240] sm:$0xff]
    %v7601 = vld [vmem:[#allocation2 + $0x248] sm:$0xff]
    %v7602 = vld [vmem:[#allocation2 + $0x258] sm:$0xff]
    %v7603 = vld [vmem:[#allocation2 + $0x260] sm:$0xff]
    %v7604 = vld [vmem:[#allocation2 + $0x270] sm:$0xff]
    %v7605 = vld [vmem:[#allocation2 + $0x278] sm:$0xff]
    %v7606 = vld [vmem:[#allocation2 + $0x288] sm:$0xff]
    %v7607 = vld [vmem:[#allocation2 + $0x290] sm:$0xff]
    %v7608 = vld [vmem:[#allocation2 + $0x2a0] sm:$0xff]
    %v7609 = vld [vmem:[#allocation2 + $0x2a8] sm:$0xff]
    %v7610 = vld [vmem:[#allocation2 + $0x2b8] sm:$0xff]
    %v7611 = vld [vmem:[#allocation2 + $0x2c0] sm:$0xff]
    %v7612 = vld [vmem:[#allocation2 + $0x2d0] sm:$0xff]
    %v7613 = vld [vmem:[#allocation2 + $0x2d8] sm:$0xff]
    %v7614 = vld [vmem:[#allocation2 + $0x2e8] sm:$0xff]
    %v7615 = vld [vmem:[#allocation2 + $0x2f0] sm:$0xff]
    %v7616 = vld [vmem:[#allocation3 + $0x1] sm:$0xff]
    %v7617 = vld [vmem:[#allocation3 + $0x9] sm:$0xff]
    %v7618 = vld [vmem:[#allocation3 + $0x19] sm:$0xff]
    %v7619 = vld [vmem:[#allocation3 + $0x21] sm:$0xff]
    %v7620 = vld [vmem:[#allocation3 + $0x31] sm:$0xff]
    %v7621 = vld [vmem:[#allocation3 + $0x39] sm:$0xff]
    %v7622 = vld [vmem:[#allocation3 + $0x49] sm:$0xff]
    %v7623 = vld [vmem:[#allocation3 + $0x51] sm:$0xff]
    %v7624 = vld [vmem:[#allocation3 + $0x61] sm:$0xff]
    %v7625 = vld [vmem:[#allocation3 + $0x69] sm:$0xff]
    %v7626 = vld [vmem:[#allocation3 + $0x79] sm:$0xff]
    %v7627 = vld [vmem:[#allocation3 + $0x81] sm:$0xff]
    %v7628 = vld [vmem:[#allocation3 + $0x91] sm:$0xff]
    %v7629 = vld [vmem:[#allocation3 + $0x99] sm:$0xff]
    %v7630 = vld [vmem:[#allocation3 + $0xa9] sm:$0xff]
    %v7631 = vld [vmem:[#allocation3 + $0xb1] sm:$0xff]
    %v7632 = vld [vmem:[#allocation3 + $0xc1] sm:$0xff]
    %v7633 = vld [vmem:[#allocation3 + $0xc9] sm:$0xff]
    %v7634 = vld [vmem:[#allocation3 + $0xd9] sm:$0xff]
    %v7635 = vld [vmem:[#allocation3 + $0xe1] sm:$0xff]
    %v7636 = vld [vmem:[#allocation3 + $0xf1] sm:$0xff]
    %v7637 = vld [vmem:[#allocation3 + $0xf9] sm:$0xff]
    %v7638 = vld [vmem:[#allocation3 + $0x109] sm:$0xff]
    %v7639 = vld [vmem:[#allocation3 + $0x111] sm:$0xff]
    %v7640 = vld [vmem:[#allocation3 + $0x121] sm:$0xff]
    %v7641 = vld [vmem:[#allocation3 + $0x129] sm:$0xff]
    %v7642 = vld [vmem:[#allocation3 + $0x139] sm:$0xff]
    %v7643 = vld [vmem:[#allocation3 + $0x141] sm:$0xff]
    %v7644 = vld [vmem:[#allocation3 + $0x151] sm:$0xff]
    %v7645 = vld [vmem:[#allocation3 + $0x159] sm:$0xff]
    %v7646 = vld [vmem:[#allocation3 + $0x169] sm:$0xff]
    %v7647 = vld [vmem:[#allocation3 + $0x171] sm:$0xff]
    %v7648 = vld [vmem:[#allocation3 + $0x181] sm:$0xff]
    %v7649 = vld [vmem:[#allocation3 + $0x189] sm:$0xff]
    %v7650 = vld [vmem:[#allocation3 + $0x199] sm:$0xff]
    %v7651 = vld [vmem:[#allocation3 + $0x1a1] sm:$0xff]
    %v7652 = vld [vmem:[#allocation3 + $0x1b1] sm:$0xff]
    %v7653 = vld [vmem:[#allocation3 + $0x1b9] sm:$0xff]
    %v7654 = vld [vmem:[#allocation3 + $0x1c9] sm:$0xff]
    %v7655 = vld [vmem:[#allocation3 + $0x1d1] sm:$0xff]
    %v7656 = vld [vmem:[#allocation3 + $0x1e1] sm:$0xff]
    %v7657 = vld [vmem:[#allocation3 + $0x1e9] sm:$0xff]
    %v7658 = vld [vmem:[#allocation3 + $0x1f9] sm:$0xff]
    %v7659 = vld [vmem:[#allocation3 + $0x201] sm:$0xff]
    %v7660 = vld [vmem:[#allocation3 + $0x211] sm:$0xff]
    %v7661 = vld [vmem:[#allocation3 + $0x219] sm:$0xff]
    %v7662 = vld [vmem:[#allocation3 + $0x229] sm:$0xff]
    %v7663 = vld [vmem:[#allocation3 + $0x231] sm:$0xff]
    %v7664 = vld [vmem:[#allocation3 + $0x241] sm:$0xff]
    %v7665 = vld [vmem:[#allocation3 + $0x249] sm:$0xff]
    %v7666 = vld [vmem:[#allocation3 + $0x259] sm:$0xff]
    %v7667 = vld [vmem:[#allocation3 + $0x261] sm:$0xff]
    %v7668 = vld [vmem:[#allocation3 + $0x271] sm:$0xff]
    %v7669 = vld [vmem:[#allocation3 + $0x279] sm:$0xff]
    %v7670 = vld [vmem:[#allocation3 + $0x289] sm:$0xff]
    %v7671 = vld [vmem:[#allocation3 + $0x291] sm:$0xff]
    %v7672 = vld [vmem:[#allocation3 + $0x2a1] sm:$0xff]
    %v7673 = vld [vmem:[#allocation3 + $0x2a9] sm:$0xff]
    %v7674 = vld [vmem:[#allocation3 + $0x2b9] sm:$0xff]
    %v7675 = vld [vmem:[#allocation3 + $0x2c1] sm:$0xff]
    %v7676 = vld [vmem:[#allocation3 + $0x2d1] sm:$0xff]
    %v7677 = vld [vmem:[#allocation3 + $0x2d9] sm:$0xff]
    %v7678 = vld [vmem:[#allocation3 + $0x2e9] sm:$0xff]
    %v7679 = vld [vmem:[#allocation3 + $0x2f1] sm:$0xff]
    %v7680 = vadd.f32 %v7552, %v7616
    %v7681 = vadd.f32 %v7553, %v7617
    %v7682 = vadd.f32 %v7554, %v7618
    %v7683 = vadd.f32 %v7555, %v7619
    %v7684 = vadd.f32 %v7556, %v7620
    %v7685 = vadd.f32 %v7557, %v7621
    %v7686 = vadd.f32 %v7558, %v7622
    %v7687 = vadd.f32 %v7559, %v7623
    %v7688 = vadd.f32 %v7560, %v7624
    %v7689 = vadd.f32 %v7561, %v7625
    %v7690 = vadd.f32 %v7562, %v7626
    %v7691 = vadd.f32 %v7563, %v7627
    %v7692 = vadd.f32 %v7564, %v7628
    %v7693 = vadd.f32 %v7565, %v7629
    %v7694 = vadd.f32 %v7566, %v7630
    %v7695 = vadd.f32 %v7567, %v7631
    %v7696 = vadd.f32 %v7568, %v7632
    %v7697 = vadd.f32 %v7569, %v7633
    %v7698 = vadd.f32 %v7570, %v7634
    %v7699 = vadd.f32 %v7571, %v7635
    %v7700 = vadd.f32 %v7572, %v7636
    %v7701 = vadd.f32 %v7573, %v7637
    %v7702 = vadd.f32 %v7574, %v7638
    %v7703 = vadd.f32 %v7575, %v7639
    %v7704 = vadd.f32 %v7576, %v7640
    %v7705 = vadd.f32 %v7577, %v7641
    %v7706 = vadd.f32 %v7578, %v7642
    %v7707 = vadd.f32 %v7579, %v7643
    %v7708 = vadd.f32 %v7580, %v7644
    %v7709 = vadd.f32 %v7581, %v7645
    %v7710 = vadd.f32 %v7582, %v7646
    %v7711 = vadd.f32 %v7583, %v7647
    %v7712 = vadd.f32 %v7584, %v7648
    %v7713 = vadd.f32 %v7585, %v7649
    %v7714 = vadd.f32 %v7586, %v7650
    %v7715 = vadd.f32 %v7587, %v7651
    %v7716 = vadd.f32 %v7588, %v7652
    %v7717 = vadd.f32 %v7589, %v7653
    %v7718 = vadd.f32 %v7590, %v7654
    %v7719 = vadd.f32 %v7591, %v7655
    %v7720 = vadd.f32 %v7592, %v7656
    %v7721 = vadd.f32 %v7593, %v7657
    %v7722 = vadd.f32 %v7594, %v7658
    %v7723 = vadd.f32 %v7595, %v7659
    %v7724 = vadd.f32 %v7596, %v7660
    %v7725 = vadd.f32 %v7597, %v7661
    %v7726 = vadd.f32 %v7598, %v7662
    %v7727 = vadd.f32 %v7599, %v7663
    %v7728 = vadd.f32 %v7600, %v7664
    %v7729 = vadd.f32 %v7601, %v7665
    %v7730 = vadd.f32 %v7602, %v7666
    %v7731 = vadd.f32 %v7603, %v7667
    %v7732 = vadd.f32 %v7604, %v7668
    %v7733 = vadd.f32 %v7605, %v7669
    %v7734 = vadd.f32 %v7606, %v7670
    %v7735 = vadd.f32 %v7607, %v7671
    %v7736 = vadd.f32 %v7608, %v7672
    %v7737 = vadd.f32 %v7609, %v7673
    %v7738 = vadd.f32 %v7610, %v7674
    %v7739 = vadd.f32 %v7611, %v7675
    %v7740 = vadd.f32 %v7612, %v7676
    %v7741 = vadd.f32 %v7613, %v7677
    %v7742 = vadd.f32 %v7614, %v7678
    %v7743 = vadd.f32 %v7615, %v7679
    %v7744 = vld [vmem:[#allocation4 + $0x2] sm:$0xff]
    %v7745 = vld [vmem:[#allocation4 + $0xa] sm:$0xff]
    %v7746 = vld [vmem:[#allocation4 + $0x1a] sm:$0xff]
    %v7747 = vld [vmem:[#allocation4 + $0x22] sm:$0xff]
    %v7748 = vld [vmem:[#allocation4 + $0x32] sm:$0xff]
    %v7749 = vld [vmem:[#allocation4 + $0x3a] sm:$0xff]
    %v7750 = vld [vmem:[#allocation4 + $0x4a] sm:$0xff]
    %v7751 = vld [vmem:[#allocation4 + $0x52] sm:$0xff]
    %v7752 = vld [vmem:[#allocation4 + $0x62] sm:$0xff]
    %v7753 = vld [vmem:[#allocation4 + $0x6a] sm:$0xff]
    %v7754 = vld [vmem:[#allocation4 + $0x7a] sm:$0xff]
    %v7755 = vld [vmem:[#allocation4 + $0x82] sm:$0xff]
    %v7756 = vld [vmem:[#allocation4 + $0x92] sm:$0xff]
    %v7757 = vld [vmem:[#allocation4 + $0x9a] sm:$0xff]
    %v7758 = vld [vmem:[#allocation4 + $0xaa] sm:$0xff]
    %v7759 = vld [vmem:[#allocation4 + $0xb2] sm:$0xff]
    %v7760 = vld [vmem:[#allocation4 + $0xc2] sm:$0xff]
    %v7761 = vld [vmem:[#allocation4 + $0xca] sm:$0xff]
    %v7762 = vld [vmem:[#allocation4 + $0xda] sm:$0xff]
    %v7763 = vld [vmem:[#allocation4 + $0xe2] sm:$0xff]
    %v7764 = vld [vmem:[#allocation4 + $0xf2] sm:$0xff]
    %v7765 = vld [vmem:[#allocation4 + $0xfa] sm:$0xff]
    %v7766 = vld [vmem:[#allocation4 + $0x10a] sm:$0xff]
    %v7767 = vld [vmem:[#allocation4 + $0x112] sm:$0xff]
    %v7768 = vld [vmem:[#allocation4 + $0x122] sm:$0xff]
    %v7769 = vld [vmem:[#allocation4 + $0x12a] sm:$0xff]
    %v7770 = vld [vmem:[#allocation4 + $0x13a] sm:$0xff]
    %v7771 = vld [vmem:[#allocation4 + $0x142] sm:$0xff]
    %v7772 = vld [vmem:[#allocation4 + $0x152] sm:$0xff]
    %v7773 = vld [vmem:[#allocation4 + $0x15a] sm:$0xff]
    %v7774 = vld [vmem:[#allocation4 + $0x16a] sm:$0xff]
    %v7775 = vld [vmem:[#allocation4 + $0x172] sm:$0xff]
    %v7776 = vld [vmem:[#allocation4 + $0x182] sm:$0xff]
    %v7777 = vld [vmem:[#allocation4 + $0x18a] sm:$0xff]
    %v7778 = vld [vmem:[#allocation4 + $0x19a] sm:$0xff]
    %v7779 = vld [vmem:[#allocation4 + $0x1a2] sm:$0xff]
    %v7780 = vld [vmem:[#allocation4 + $0x1b2] sm:$0xff]
    %v7781 = vld [vmem:[#allocation4 + $0x1ba] sm:$0xff]
    %v7782 = vld [vmem:[#allocation4 + $0x1ca] sm:$0xff]
    %v7783 = vld [vmem:[#allocation4 + $0x1d2] sm:$0xff]
    %v7784 = vld [vmem:[#allocation4 + $0x1e2] sm:$0xff]
    %v7785 = vld [vmem:[#allocation4 + $0x1ea] sm:$0xff]
    %v7786 = vld [vmem:[#allocation4 + $0x1fa] sm:$0xff]
    %v7787 = vld [vmem:[#allocation4 + $0x202] sm:$0xff]
    %v7788 = vld [vmem:[#allocation4 + $0x212] sm:$0xff]
    %v7789 = vld [vmem:[#allocation4 + $0x21a] sm:$0xff]
    %v7790 = vld [vmem:[#allocation4 + $0x22a] sm:$0xff]
    %v7791 = vld [vmem:[#allocation4 + $0x232] sm:$0xff]
    %v7792 = vld [vmem:[#allocation4 + $0x242] sm:$0xff]
    %v7793 = vld [vmem:[#allocation4 + $0x24a] sm:$0xff]
    %v7794 = vld [vmem:[#allocation4 + $0x25a] sm:$0xff]
    %v7795 = vld [vmem:[#allocation4 + $0x262] sm:$0xff]
    %v7796 = vld [vmem:[#allocation4 + $0x272] sm:$0xff]
    %v7797 = vld [vmem:[#allocation4 + $0x27a] sm:$0xff]
    %v7798 = vld [vmem:[#allocation4 + $0x28a] sm:$0xff]
    %v7799 = vld [vmem:[#allocation4 + $0x292] sm:$0xff]
    %v7800 = vld [vmem:[#allocation4 + $0x2a2] sm:$0xff]
    %v7801 = vld [vmem:[#allocation4 + $0x2aa] sm:$0xff]
    %v7802 = vld [vmem:[#allocation4 + $0x2ba] sm:$0xff]
    %v7803 = vld [vmem:[#allocation4 + $0x2c2] sm:$0xff]
    %v7804 = vld [vmem:[#allocation4 + $0x2d2] sm:$0xff]
    %v7805 = vld [vmem:[#allocation4 + $0x2da] sm:$0xff]
    %v7806 = vld [vmem:[#allocation4 + $0x2ea] sm:$0xff]
    %v7807 = vld [vmem:[#allocation4 + $0x2f2] sm:$0xff]
    %v7808 = vadd.f32 %v7680, %v7744
    %v7809 = vadd.f32 %v7681, %v7745
    %v7810 = vadd.f32 %v7682, %v7746
    %v7811 = vadd.f32 %v7683, %v7747
    %v7812 = vadd.f32 %v7684, %v7748
    %v7813 = vadd.f32 %v7685, %v7749
    %v7814 = vadd.f32 %v7686, %v7750
    %v7815 = vadd.f32 %v7687, %v7751
    %v7816 = vadd.f32 %v7688, %v7752
    %v7817 = vadd.f32 %v7689, %v7753
    %v7818 = vadd.f32 %v7690, %v7754
    %v7819 = vadd.f32 %v7691, %v7755
    %v7820 = vadd.f32 %v7692, %v7756
    %v7821 = vadd.f32 %v7693, %v7757
    %v7822 = vadd.f32 %v7694, %v7758
    %v7823 = vadd.f32 %v7695, %v7759
    %v7824 = vadd.f32 %v7696, %v7760
    %v7825 = vadd.f32 %v7697, %v7761
    %v7826 = vadd.f32 %v7698, %v7762
    %v7827 = vadd.f32 %v7699, %v7763
    %v7828 = vadd.f32 %v7700, %v7764
    %v7829 = vadd.f32 %v7701, %v7765
    %v7830 = vadd.f32 %v7702, %v7766
    %v7831 = vadd.f32 %v7703, %v7767
    %v7832 = vadd.f32 %v7704, %v7768
    %v7833 = vadd.f32 %v7705, %v7769
    %v7834 = vadd.f32 %v7706, %v7770
    %v7835 = vadd.f32 %v7707, %v7771
    %v7836 = vadd.f32 %v7708, %v7772
    %v7837 = vadd.f32 %v7709, %v7773
    %v7838 = vadd.f32 %v7710, %v7774
    %v7839 = vadd.f32 %v7711, %v7775
    %v7840 = vadd.f32 %v7712, %v7776
    %v7841 = vadd.f32 %v7713, %v7777
    %v7842 = vadd.f32 %v7714, %v7778
    %v7843 = vadd.f32 %v7715, %v7779
    %v7844 = vadd.f32 %v7716, %v7780
    %v7845 = vadd.f32 %v7717, %v7781
    %v7846 = vadd.f32 %v7718, %v7782
    %v7847 = vadd.f32 %v7719, %v7783
    %v7848 = vadd.f32 %v7720, %v7784
    %v7849 = vadd.f32 %v7721, %v7785
    %v7850 = vadd.f32 %v7722, %v7786
    %v7851 = vadd.f32 %v7723, %v7787
    %v7852 = vadd.f32 %v7724, %v7788
    %v7853 = vadd.f32 %v7725, %v7789
    %v7854 = vadd.f32 %v7726, %v7790
    %v7855 = vadd.f32 %v7727, %v7791
    %v7856 = vadd.f32 %v7728, %v7792
    %v7857 = vadd.f32 %v7729, %v7793
    %v7858 = vadd.f32 %v7730, %v7794
    %v7859 = vadd.f32 %v7731, %v7795
    %v7860 = vadd.f32 %v7732, %v7796
    %v7861 = vadd.f32 %v7733, %v7797
    %v7862 = vadd.f32 %v7734, %v7798
    %v7863 = vadd.f32 %v7735, %v7799
    %v7864 = vadd.f32 %v7736, %v7800
    %v7865 = vadd.f32 %v7737, %v7801
    %v7866 = vadd.f32 %v7738, %v7802
    %v7867 = vadd.f32 %v7739, %v7803
    %v7868 = vadd.f32 %v7740, %v7804
    %v7869 = vadd.f32 %v7741, %v7805
    %v7870 = vadd.f32 %v7742, %v7806
    %v7871 = vadd.f32 %v7743, %v7807
    %v7872 = vld [vmem:[%s2] sm:$0x1]
    %v7874 = vlaneseq
    %v7875 = vshrl.u32 %v7874, 7
    %v7876 = vsub.s32 0, %v7875
    %v7877 = vrot.slane %v7872, %v7876
    %v7879 = vadd.f32 %v7808, %v7877
    %v7880 = vadd.f32 %v7809, %v7877
    %v7881 = vadd.f32 %v7810, %v7877
    %v7882 = vadd.f32 %v7811, %v7877
    %v7883 = vadd.f32 %v7812, %v7877
    %v7884 = vadd.f32 %v7813, %v7877
    %v7885 = vadd.f32 %v7814, %v7877
    %v7886 = vadd.f32 %v7815, %v7877
    %v7887 = vadd.f32 %v7816, %v7877
    %v7888 = vadd.f32 %v7817, %v7877
    %v7889 = vadd.f32 %v7818, %v7877
    %v7890 = vadd.f32 %v7819, %v7877
    %v7891 = vadd.f32 %v7820, %v7877
    %v7892 = vadd.f32 %v7821, %v7877
    %v7893 = vadd.f32 %v7822, %v7877
    %v7894 = vadd.f32 %v7823, %v7877
    %v7895 = vadd.f32 %v7824, %v7877
    %v7896 = vadd.f32 %v7825, %v7877
    %v7897 = vadd.f32 %v7826, %v7877
    %v7898 = vadd.f32 %v7827, %v7877
    %v7899 = vadd.f32 %v7828, %v7877
    %v7900 = vadd.f32 %v7829, %v7877
    %v7901 = vadd.f32 %v7830, %v7877
    %v7902 = vadd.f32 %v7831, %v7877
    %v7903 = vadd.f32 %v7832, %v7877
    %v7904 = vadd.f32 %v7833, %v7877
    %v7905 = vadd.f32 %v7834, %v7877
    %v7906 = vadd.f32 %v7835, %v7877
    %v7907 = vadd.f32 %v7836, %v7877
    %v7908 = vadd.f32 %v7837, %v7877
    %v7909 = vadd.f32 %v7838, %v7877
    %v7910 = vadd.f32 %v7839, %v7877
    %v7911 = vadd.f32 %v7840, %v7877
    %v7912 = vadd.f32 %v7841, %v7877
    %v7913 = vadd.f32 %v7842, %v7877
    %v7914 = vadd.f32 %v7843, %v7877
    %v7915 = vadd.f32 %v7844, %v7877
    %v7916 = vadd.f32 %v7845, %v7877
    %v7917 = vadd.f32 %v7846, %v7877
    %v7918 = vadd.f32 %v7847, %v7877
    %v7919 = vadd.f32 %v7848, %v7877
    %v7920 = vadd.f32 %v7849, %v7877
    %v7921 = vadd.f32 %v7850, %v7877
    %v7922 = vadd.f32 %v7851, %v7877
    %v7923 = vadd.f32 %v7852, %v7877
    %v7924 = vadd.f32 %v7853, %v7877
    %v7925 = vadd.f32 %v7854, %v7877
    %v7926 = vadd.f32 %v7855, %v7877
    %v7927 = vadd.f32 %v7856, %v7877
    %v7928 = vadd.f32 %v7857, %v7877
    %v7929 = vadd.f32 %v7858, %v7877
    %v7930 = vadd.f32 %v7859, %v7877
    %v7931 = vadd.f32 %v7860, %v7877
    %v7932 = vadd.f32 %v7861, %v7877
    %v7933 = vadd.f32 %v7862, %v7877
    %v7934 = vadd.f32 %v7863, %v7877
    %v7935 = vadd.f32 %v7864, %v7877
    %v7936 = vadd.f32 %v7865, %v7877
    %v7937 = vadd.f32 %v7866, %v7877
    %v7938 = vadd.f32 %v7867, %v7877
    %v7939 = vadd.f32 %v7868, %v7877
    %v7940 = vadd.f32 %v7869, %v7877
    %v7941 = vadd.f32 %v7870, %v7877
    %v7942 = vadd.f32 %v7871, %v7877
    %v7943 = vmax.f32 %v7879, 0.0
    %v7944 = vmax.f32 %v7880, 0.0
    %v7945 = vmax.f32 %v7881, 0.0
    %v7946 = vmax.f32 %v7882, 0.0
    %v7947 = vmax.f32 %v7883, 0.0
    %v7948 = vmax.f32 %v7884, 0.0
    %v7949 = vmax.f32 %v7885, 0.0
    %v7950 = vmax.f32 %v7886, 0.0
    %v7951 = vmax.f32 %v7887, 0.0
    %v7952 = vmax.f32 %v7888, 0.0
    %v7953 = vmax.f32 %v7889, 0.0
    %v7954 = vmax.f32 %v7890, 0.0
    %v7955 = vmax.f32 %v7891, 0.0
    %v7956 = vmax.f32 %v7892, 0.0
    %v7957 = vmax.f32 %v7893, 0.0
    %v7958 = vmax.f32 %v7894, 0.0
    %v7959 = vmax.f32 %v7895, 0.0
    %v7960 = vmax.f32 %v7896, 0.0
    %v7961 = vmax.f32 %v7897, 0.0
    %v7962 = vmax.f32 %v7898, 0.0
    %v7963 = vmax.f32 %v7899, 0.0
    %v7964 = vmax.f32 %v7900, 0.0
    %v7965 = vmax.f32 %v7901, 0.0
    %v7966 = vmax.f32 %v7902, 0.0
    %v7967 = vmax.f32 %v7903, 0.0
    %v7968 = vmax.f32 %v7904, 0.0
    %v7969 = vmax.f32 %v7905, 0.0
    %v7970 = vmax.f32 %v7906, 0.0
    %v7971 = vmax.f32 %v7907, 0.0
    %v7972 = vmax.f32 %v7908, 0.0
    %v7973 = vmax.f32 %v7909, 0.0
    %v7974 = vmax.f32 %v7910, 0.0
    %v7975 = vmax.f32 %v7911, 0.0
    %v7976 = vmax.f32 %v7912, 0.0
    %v7977 = vmax.f32 %v7913, 0.0
    %v7978 = vmax.f32 %v7914, 0.0
    %v7979 = vmax.f32 %v7915, 0.0
    %v7980 = vmax.f32 %v7916, 0.0
    %v7981 = vmax.f32 %v7917, 0.0
    %v7982 = vmax.f32 %v7918, 0.0
    %v7983 = vmax.f32 %v7919, 0.0
    %v7984 = vmax.f32 %v7920, 0.0
    %v7985 = vmax.f32 %v7921, 0.0
    %v7986 = vmax.f32 %v7922, 0.0
    %v7987 = vmax.f32 %v7923, 0.0
    %v7988 = vmax.f32 %v7924, 0.0
    %v7989 = vmax.f32 %v7925, 0.0
    %v7990 = vmax.f32 %v7926, 0.0
    %v7991 = vmax.f32 %v7927, 0.0
    %v7992 = vmax.f32 %v7928, 0.0
    %v7993 = vmax.f32 %v7929, 0.0
    %v7994 = vmax.f32 %v7930, 0.0
    %v7995 = vmax.f32 %v7931, 0.0
    %v7996 = vmax.f32 %v7932, 0.0
    %v7997 = vmax.f32 %v7933, 0.0
    %v7998 = vmax.f32 %v7934, 0.0
    %v7999 = vmax.f32 %v7935, 0.0
    %v8000 = vmax.f32 %v7936, 0.0
    %v8001 = vmax.f32 %v7937, 0.0
    %v8002 = vmax.f32 %v7938, 0.0
    %v8003 = vmax.f32 %v7939, 0.0
    %v8004 = vmax.f32 %v7940, 0.0
    %v8005 = vmax.f32 %v7941, 0.0
    %v8006 = vmax.f32 %v7942, 0.0
    %8007 = vst [vmem:[#allocation10] sm:$0xff] %v7943
    %8008 = vst [vmem:[#allocation10 + $0x8] sm:$0xff] %v7944
    %8009 = vst [vmem:[#allocation10 + $0x10] sm:$0xff] %v7945
    %8010 = vst [vmem:[#allocation10 + $0x18] sm:$0xff] %v7946
    %8011 = vst [vmem:[#allocation10 + $0x20] sm:$0xff] %v7947
    %8012 = vst [vmem:[#allocation10 + $0x28] sm:$0xff] %v7948
    %8013 = vst [vmem:[#allocation10 + $0x30] sm:$0xff] %v7949
    %8014 = vst [vmem:[#allocation10 + $0x38] sm:$0xff] %v7950
    %8015 = vst [vmem:[#allocation10 + $0x40] sm:$0xff] %v7951
    %8016 = vst [vmem:[#allocation10 + $0x48] sm:$0xff] %v7952
    %8017 = vst [vmem:[#allocation10 + $0x50] sm:$0xff] %v7953
    %8018 = vst [vmem:[#allocation10 + $0x58] sm:$0xff] %v7954
    %8019 = vst [vmem:[#allocation10 + $0x60] sm:$0xff] %v7955
    %8020 = vst [vmem:[#allocation10 + $0x68] sm:$0xff] %v7956
    %8021 = vst [vmem:[#allocation10 + $0x70] sm:$0xff] %v7957
    %8022 = vst [vmem:[#allocation10 + $0x78] sm:$0xff] %v7958
    %8023 = vst [vmem:[#allocation10 + $0x80] sm:$0xff] %v7959
    %8024 = vst [vmem:[#allocation10 + $0x88] sm:$0xff] %v7960
    %8025 = vst [vmem:[#allocation10 + $0x90] sm:$0xff] %v7961
    %8026 = vst [vmem:[#allocation10 + $0x98] sm:$0xff] %v7962
    %8027 = vst [vmem:[#allocation10 + $0xa0] sm:$0xff] %v7963
    %8028 = vst [vmem:[#allocation10 + $0xa8] sm:$0xff] %v7964
    %8029 = vst [vmem:[#allocation10 + $0xb0] sm:$0xff] %v7965
    %8030 = vst [vmem:[#allocation10 + $0xb8] sm:$0xff] %v7966
    %8031 = vst [vmem:[#allocation10 + $0xc0] sm:$0xff] %v7967
    %8032 = vst [vmem:[#allocation10 + $0xc8] sm:$0xff] %v7968
    %8033 = vst [vmem:[#allocation10 + $0xd0] sm:$0xff] %v7969
    %8034 = vst [vmem:[#allocation10 + $0xd8] sm:$0xff] %v7970
    %8035 = vst [vmem:[#allocation10 + $0xe0] sm:$0xff] %v7971
    %8036 = vst [vmem:[#allocation10 + $0xe8] sm:$0xff] %v7972
    %8037 = vst [vmem:[#allocation10 + $0xf0] sm:$0xff] %v7973
    %8038 = vst [vmem:[#allocation10 + $0xf8] sm:$0xff] %v7974
    %8039 = vst [vmem:[#allocation10 + $0x100] sm:$0xff] %v7975
    %8040 = vst [vmem:[#allocation10 + $0x108] sm:$0xff] %v7976
    %8041 = vst [vmem:[#allocation10 + $0x110] sm:$0xff] %v7977
    %8042 = vst [vmem:[#allocation10 + $0x118] sm:$0xff] %v7978
    %8043 = vst [vmem:[#allocation10 + $0x120] sm:$0xff] %v7979
    %8044 = vst [vmem:[#allocation10 + $0x128] sm:$0xff] %v7980
    %8045 = vst [vmem:[#allocation10 + $0x130] sm:$0xff] %v7981
    %8046 = vst [vmem:[#allocation10 + $0x138] sm:$0xff] %v7982
    %8047 = vst [vmem:[#allocation10 + $0x140] sm:$0xff] %v7983
    %8048 = vst [vmem:[#allocation10 + $0x148] sm:$0xff] %v7984
    %8049 = vst [vmem:[#allocation10 + $0x150] sm:$0xff] %v7985
    %8050 = vst [vmem:[#allocation10 + $0x158] sm:$0xff] %v7986
    %8051 = vst [vmem:[#allocation10 + $0x160] sm:$0xff] %v7987
    %8052 = vst [vmem:[#allocation10 + $0x168] sm:$0xff] %v7988
    %8053 = vst [vmem:[#allocation10 + $0x170] sm:$0xff] %v7989
    %8054 = vst [vmem:[#allocation10 + $0x178] sm:$0xff] %v7990
    %8055 = vst [vmem:[#allocation10 + $0x180] sm:$0xff] %v7991
    %8056 = vst [vmem:[#allocation10 + $0x188] sm:$0xff] %v7992
    %8057 = vst [vmem:[#allocation10 + $0x190] sm:$0xff] %v7993
    %8058 = vst [vmem:[#allocation10 + $0x198] sm:$0xff] %v7994
    %8059 = vst [vmem:[#allocation10 + $0x1a0] sm:$0xff] %v7995
    %8060 = vst [vmem:[#allocation10 + $0x1a8] sm:$0xff] %v7996
    %8061 = vst [vmem:[#allocation10 + $0x1b0] sm:$0xff] %v7997
    %8062 = vst [vmem:[#allocation10 + $0x1b8] sm:$0xff] %v7998
    %8063 = vst [vmem:[#allocation10 + $0x1c0] sm:$0xff] %v7999
    %8064 = vst [vmem:[#allocation10 + $0x1c8] sm:$0xff] %v8000
    %8065 = vst [vmem:[#allocation10 + $0x1d0] sm:$0xff] %v8001
    %8066 = vst [vmem:[#allocation10 + $0x1d8] sm:$0xff] %v8002
    %8067 = vst [vmem:[#allocation10 + $0x1e0] sm:$0xff] %v8003
    %8068 = vst [vmem:[#allocation10 + $0x1e8] sm:$0xff] %v8004
    %8069 = vst [vmem:[#allocation10 + $0x1f0] sm:$0xff] %v8005
    %8070 = vst [vmem:[#allocation10 + $0x1f8] sm:$0xff] %v8006
    // Predicated region
    $region22: #{tpu_custom_call.1} parent=1 // pred_check
      _
    $region23: #{tpu_custom_call.1} parent=1 // pred_check_branch
      %8072 = sbr.rel (0) target = $region25
    $region24: #{tpu_custom_call.1} parent=1 // pred_region
      %s8074 = ssub.s32 8192, 8192
      %8075 = vsyncadd [#allocation7], %s8074
      %s8076 = sshll.u32 [#allocation10], 4
      %s8077 = int_to_ptr.vmem [resolvable:$true] %s8076
      %8082 = dma.vmem_to_hbm [thread:$0]  %s8077, 8192, %s3, [#allocation7], 128, 128, 8
    $region25: #{tpu_custom_call.1} parent=1 // pred_fallthru
      _
    // Predicated region
    $region26: #{tpu_custom_call.1} parent=1 // pred_check
      _
    $region27: #{tpu_custom_call.1} parent=1 // pred_check_branch
      %8084 = sbr.rel (0) target = $region29
    $region28: #{tpu_custom_call.1} parent=1 // pred_region
      %8085 = dma.done [#allocation7], 8192
    $region29: #{tpu_custom_call.1} parent=1 // pred_fallthru
      _
    %8086 = vsyncpa [#allocation6], 1
    %8087 = vsyncpa [#allocation9], 1
    %8088 = vsyncpa [#allocation7], 1

</llo_original>
